<compile_context>
chip_gen: v6e
topology: v6e:2x2x1
jax: 0.10.0
libtpu: 0.0.40
codegen_flags: <defaults>
</compile_context>

<pallas_src>
import math

import jax
import jax.numpy as jnp
from jax.experimental import pallas as pl
from jax.experimental.pallas import tpu as pltpu

EPS = 1e-5
# Safe on every generation (v5e default scoped VMEM is only 16 MiB; v7x physical
# is 64 MiB).  Per-image working sets here are tiny, so no need to go higher.
VMEM_LIMIT = 32 * 1024 * 1024


def _round_up(x, m):
    return ((x + m - 1) // m) * m


# ----------------------------------------------------------------------------- #
# Pallas kernels
# ----------------------------------------------------------------------------- #
def conv_pool_stats_kernel(xv_ref, wk_ref, pmm_ref, stats_ref):
    """Per-image fused conv3x3 + online 2x2 max/min pool + partial BN stats.

    xv_ref   : (1, 2, (Hh+1)*Wh, 4*Cp) bf16  row-parity / 4-horizontal-tap slab
    wk_ref   : (2, 3, 4*Cp, Cout)      bf16  per (dj, dy) tap-row weights
    pmm_ref  : (1, M, 2*Cout)          bf16  [max || min] of raw conv over phases
    stats_ref: (1, 8, Cout)            f32   row0 = sum(y), row1 = sum(y*y)
    """
    M = pmm_ref.shape[1]               # Hh * Wh pooled positions
    Wh = xv_ref.shape[2] - M           # (Hh+1)*Wh - Hh*Wh
    Cout = stats_ref.shape[2]

    pmax = pmin = ssum = sqsum = None
    for di in range(2):                # pool-phase row offset
        for dj in range(2):            # pool-phase col offset
            y = jnp.zeros((M, Cout), jnp.float32)
            for dy in range(3):        # conv tap row; dx taps folded into K
                r = di + dy
                a, rh = r % 2, r // 2
                xs = xv_ref[0, a, rh * Wh:rh * Wh + M, :]        # (M, 4*Cp)
                y = y + jnp.dot(xs, wk_ref[dj, dy],
                                preferred_element_type=jnp.float32)
            s = jnp.sum(y, axis=0, keepdims=True)
            sq = jnp.sum(y * y, axis=0, keepdims=True)
            if pmax is None:
                pmax, pmin, ssum, sqsum = y, y, s, sq
            else:
                pmax = jnp.maximum(pmax, y)
                pmin = jnp.minimum(pmin, y)
                ssum, sqsum = ssum + s, sqsum + sq

    # Lane-dense(r) single store: [max || min] -> 2*Cout lanes.
    pmm_ref[0] = jnp.concatenate([pmax, pmin], axis=-1).astype(pmm_ref.dtype)
    stats_ref[0] = jnp.concatenate(
        [ssum, sqsum, jnp.zeros((6, Cout), jnp.float32)], axis=0)


def bn_relu_kernel(pmm_ref, scale_ref, shift_ref, out_ref):
    """Epilogue: BN affine (hoisted scale/shift) + ReLU on the pooled slab.

    max-pool(relu(y*scale+shift)) == relu(select(scale>=0, max(y), min(y))*scale+shift)
    """
    cout = out_ref.shape[-1]
    pmm = pmm_ref[0].astype(jnp.float32)          # (M, 2*Cout)
    pmax = pmm[:, :cout]
    pmin = pmm[:, cout:]
    scale = scale_ref[...]                        # (1, Cout) f32
    shift = shift_ref[...]
    y = jnp.where(scale >= 0.0, pmax, pmin)
    out_ref[0] = jnp.maximum(y * scale + shift, 0.0).astype(out_ref.dtype)


def bn1d_kernel(x_ref, gamma_ref, beta_ref, out_ref):
    """BatchNorm1d (training-mode batch statistics) on the tiny (N, F) slab."""
    x = x_ref[...].astype(jnp.float32)
    n = x.shape[0]
    mean = jnp.sum(x, axis=0, keepdims=True) / n
    d = x - mean
    var = jnp.sum(d * d, axis=0, keepdims=True) / n
    out_ref[...] = d * jax.lax.rsqrt(var + EPS) * gamma_ref[...] + beta_ref[...]


# ----------------------------------------------------------------------------- #
# XLA glue: compact slab / weight layout (no 9x im2col), O(Cout) BN finalize.
# ----------------------------------------------------------------------------- #
def _build_conv_slabs(x_bf16):
    """(N,H,W,C) bf16 -> (N, 2, (Hh+1)*Wh, 4*Cp) bf16 slab + Cp.

    slab[n, a, i*Wh + ow, t*Cp + c] = xpad[n, 2i + a, 2*ow + t, c]
    so every (phase, tap-row) matrix the kernel needs is a contiguous
    (M, 4*Cp) sublane window.  ~2x the activation bytes (vs 9x for im2col).
    """
    N, H, W, C = x_bf16.shape
    Hh, Wh = H // 2, W // 2
    Cp = _round_up(max(C, 8), 8)                    # zero-pad lanes to mult of 8
    xp = jnp.pad(x_bf16, ((0, 0), (1, 1), (1, 1), (0, Cp - C)))
    planes = []
    for a in range(2):
        rows = xp[:, a::2, :, :]                    # (N, Hh+1, W+2, Cp)
        taps = [rows[:, :, t:t + 2 * Wh:2, :] for t in range(4)]
        v = jnp.concatenate(taps, axis=-1)          # (N, Hh+1, Wh, 4*Cp)
        planes.append(v.reshape(N, (Hh + 1) * Wh, 4 * Cp))
    return jnp.stack(planes, axis=1), Cp


def _build_tap_weights(w, Cp):
    """(9, Cin, Cout) f32 -> (2, 3, 4*Cp, Cout) bf16.

    Wk[dj, dy] multiplies a 4-tap-wide slab row; tap block t holds w[dy, t-dj]
    (zeros where t-dj is outside [0, 3)).  Zero-padded Cin rows are exact.
    """
    _, cin, cout = w.shape
    wp = jnp.pad(w, ((0, 0), (0, Cp - cin), (0, 0)))
    z = jnp.zeros((Cp, cout), w.dtype)
    mats = []
    for dj in range(2):
        for dy in range(3):
            blocks = []
            for t in range(4):
                dx = t - dj
                blocks.append(wp[dy * 3 + dx] if 0 <= dx <= 2 else z)
            mats.append(jnp.concatenate(blocks, axis=0))
    return jnp.stack(mats, 0).reshape(2, 3, 4 * Cp, cout).astype(jnp.bfloat16)


def conv_block(x_nhwc, w, gamma, beta):
    """ConvBlock: conv3x3(pad=1, bias folded out) -> BN2d(batch stats) -> ReLU -> MaxPool2x2."""
    N, H, W, Cin = x_nhwc.shape
    assert H % 2 == 0 and W % 2 == 0, "even spatial dims assumed per block"
    Hh, Wh = H // 2, W // 2
    M = Hh * Wh
    Cout = w.shape[-1]

    xv, Cp = _build_conv_slabs(x_nhwc.astype(jnp.bfloat16))
    wk = _build_tap_weights(w, Cp)

    cparams = pltpu.CompilerParams(
        dimension_semantics=("parallel",),          # image grid -> both v7x TCs
        vmem_limit_bytes=VMEM_LIMIT,
    )

    pmm, stats = pl.pallas_call(
        conv_pool_stats_kernel,
        grid=(N,),
        out_shape=(
            jax.ShapeDtypeStruct((N, M, 2 * Cout), jnp.bfloat16),
            jax.ShapeDtypeStruct((N, 8, Cout), jnp.float32),
        ),
        in_specs=[
            pl.BlockSpec((1, 2, (Hh + 1) * Wh, 4 * Cp), lambda n: (n, 0, 0, 0)),
            pl.BlockSpec((2, 3, 4 * Cp, Cout), lambda n: (0, 0, 0, 0)),
        ],
        out_specs=(
            pl.BlockSpec((1, M, 2 * Cout), lambda n: (n, 0, 0)),
            pl.BlockSpec((1, 8, Cout), lambda n: (n, 0, 0)),
        ),
        compiler_params=cparams,
    )(xv, wk)

    # Finalize train-mode BN batch stats (biased variance).  Per-image partials
    # are merged with a mean-shifted (Chan) formula + clamp to limit f32
    # cancellation (per review); counts are exact (no padded rows, no bias).
    cnt_i = jnp.float32(4 * M)                         # conv positions / image
    total = jnp.float32(N) * cnt_i
    mean_i = stats[:, 0, :] / cnt_i                    # (N, Cout)
    m2_i = jnp.maximum(stats[:, 1, :] - cnt_i * mean_i * mean_i, 0.0)
    mean = jnp.mean(mean_i, axis=0)                    # equal per-image counts
    var = (jnp.sum(m2_i, axis=0)
           + cnt_i * jnp.sum((mean_i - mean) ** 2, axis=0)) / total
    scale = gamma * jax.lax.rsqrt(var + EPS)
    shift = beta - mean * scale

    out = pl.pallas_call(
        bn_relu_kernel,
        grid=(N,),
        out_shape=jax.ShapeDtypeStruct((N, M, Cout), jnp.bfloat16),
        in_specs=[
            pl.BlockSpec((1, M, 2 * Cout), lambda n: (n, 0, 0)),
            pl.BlockSpec((1, Cout), lambda n: (0, 0)),
            pl.BlockSpec((1, Cout), lambda n: (0, 0)),
        ],
        out_specs=pl.BlockSpec((1, M, Cout), lambda n: (n, 0, 0)),
        compiler_params=cparams,
    )(pmm, scale.reshape(1, Cout), shift.reshape(1, Cout))

    return out.reshape(N, Hh, Wh, Cout)                # bf16, next block's input


def batch_norm_1d(x, gamma, beta):
    N, F = x.shape
    return pl.pallas_call(
        bn1d_kernel,
        out_shape=jax.ShapeDtypeStruct((N, F), jnp.float32),
        in_specs=[pl.BlockSpec(memory_space=pltpu.MemorySpace.VMEM)] * 3,
        out_specs=pl.BlockSpec(memory_space=pltpu.MemorySpace.VMEM),
    )(x, gamma.reshape(1, F), beta.reshape(1, F))


def cnn4_dsvdd_forward(x_nchw, params):
    """Forward matching CNN4DSVDD.forward: returns (batch_norm(features(x)), center)."""
    blocks, (bn_gamma, bn_beta), center = params

    x = jnp.transpose(x_nchw, (0, 2, 3, 1)).astype(jnp.bfloat16)  # NCHW -> NHWC
    for (w, gamma, beta) in blocks:
        x = conv_block(x, w, gamma, beta)

    # PyTorch flattens NCHW, so transpose back before reshape.
    feat = jnp.transpose(x, (0, 3, 1, 2)).reshape(x.shape[0], -1)
    out = batch_norm_1d(feat, bn_gamma, bn_beta)
    return out, center


# ----------------------------------------------------------------------------- #
# Deterministic parameter init (mirrors the PyTorch __init__ scheme).
# Conv bias is omitted: it is initialized to 0 in PyTorch and any per-channel
# bias cancels exactly under training-mode BN mean subtraction.
# ----------------------------------------------------------------------------- #
def init_params(key, config, channels):
    hidden = config["hidden_size"]
    layers = config["layers"]
    out_size = config["output_size"]
    assert 4 // layers == 1, "2x2 max-pool assumed (layers must be 3 or 4)"

    keys = jax.random.split(key, 2 * layers + 2)
    blocks = []
    cin = channels
    for l in range(layers):
        kw, kg = keys[2 * l], keys[2 * l + 1]
        fan_in, fan_out = cin * 9, hidden * 9
        bound = math.sqrt(6.0 / (fan_in + fan_out))   # xavier_uniform, gain=1.0
        w = jax.random.uniform(kw, (9, cin, hidden), jnp.float32, -bound, bound)
        gamma = jax.random.uniform(kg, (hidden,), jnp.float32, 0.0, 1.0)  # uniform_(bn.weight)
        beta = jnp.zeros((hidden,), jnp.float32)
        blocks.append((w, gamma, beta))
        cin = hidden

    bn_gamma = jax.random.uniform(keys[-2], (out_size,), jnp.float32, 0.0, 1.0)
    bn_beta = jnp.zeros((out_size,), jnp.float32)
    center = jax.random.normal(keys[-1], (out_size,), jnp.float32)  # normal_(center)
    return blocks, (bn_gamma, bn_beta), center


# ----------------------------------------------------------------------------- #
if __name__ == "__main__":
    # 4 layers with 2x2 max-pool, 16x16 input -> spatial 16 -> 8 -> 4 -> 2 -> 1,
    # so the flattened feature dim equals hidden_size == output_size (BatchNorm1d).
    config = {"output_size": 32, "hidden_size": 32, "layers": 4, "bn_affine": True}
    N, C, H, W = 2, 3, 16, 16

    key = jax.random.PRNGKey(0)
    pkey, xkey = jax.random.split(key)
    params = init_params(pkey, config, channels=C)
    x = jax.random.normal(xkey, (N, C, H, W), jnp.float32)

    fwd = jax.jit(cnn4_dsvdd_forward)
    out, center = fwd(x, params)
    jax.block_until_ready(out)
    jax.block_until_ready(center)

    assert out.shape == (N, config["output_size"])
    assert center.shape == (config["output_size"],)
    assert bool(jnp.all(jnp.isfinite(out)))
    print("KERNEL_OK")
</pallas_src>

<mosaic_0001>
module attributes {stable_mosaic.version = 11 : i64} {
  func.func @conv_pool_stats_kernel(%arg0: i32, %arg1: memref<1x2x72x32xbf16, #tpu.memory_space<vmem>>, %arg2: memref<2x3x32x32xbf16, #tpu.memory_space<vmem>>, %arg3: memref<1x64x64xbf16, #tpu.memory_space<vmem>>, %arg4: memref<1x8x32xf32, #tpu.memory_space<vmem>>) attributes {dimension_semantics = [#tpu.dimension_semantics<parallel>], iteration_bounds = array<i64: 2>, scalar_prefetch = 0 : i64, scratch_operands = 0 : i64, tpu.core_type = #tpu.core_type<tc>, window_params = [{transform_indices = @transform_0, window_bounds = array<i64: 1, 2, 72, 32>}, {pipeline_mode = #tpu.pipeline_mode<synchronous>, transform_indices = @transform_1, window_bounds = array<i64: 2, 3, 32, 32>}, {transform_indices = @transform_2, window_bounds = array<i64: 1, 64, 64>}, {transform_indices = @transform_3, window_bounds = array<i64: 1, 8, 32>}]} {
    %cst = arith.constant 0.000000e+00 : f32
    %0 = vector.broadcast %cst : f32 to vector<64x32xf32>
    %c0 = arith.constant 0 : index
    %c0_0 = arith.constant 0 : index
    %c0_1 = arith.constant 0 : index
    %c0_2 = arith.constant 0 : index
    %1 = vector.load %arg1[%c0, %c0_0, %c0_1, %c0_2] : memref<1x2x72x32xbf16, #tpu.memory_space<vmem>>, vector<1x1x64x32xbf16>
    %2 = vector.shape_cast %1 : vector<1x1x64x32xbf16> to vector<64x32xbf16>
    %c0_3 = arith.constant 0 : index
    %c0_4 = arith.constant 0 : index
    %c0_5 = arith.constant 0 : index
    %c0_6 = arith.constant 0 : index
    %3 = vector.load %arg2[%c0_3, %c0_4, %c0_5, %c0_6] : memref<2x3x32x32xbf16, #tpu.memory_space<vmem>>, vector<1x1x32x32xbf16>
    %4 = vector.shape_cast %3 : vector<1x1x32x32xbf16> to vector<32x32xbf16>
    %cst_7 = arith.constant dense<0.000000e+00> : vector<64x32xf32>
    %5 = tpu.matmul %2, %4, %cst_7 {dimension_numbers = #tpu.dot_dimension_numbers<[1], [0], [0], [1], [0, 0, 1, 1], [], []>} : vector<64x32xbf16>, vector<32x32xbf16>, vector<64x32xf32> -> vector<64x32xf32>
    %6 = arith.addf %0, %5 : vector<64x32xf32>
    %c0_8 = arith.constant 0 : index
    %c1 = arith.constant 1 : index
    %c0_9 = arith.constant 0 : index
    %c0_10 = arith.constant 0 : index
    %7 = vector.load %arg1[%c0_8, %c1, %c0_9, %c0_10] : memref<1x2x72x32xbf16, #tpu.memory_space<vmem>>, vector<1x1x64x32xbf16>
    %8 = vector.shape_cast %7 : vector<1x1x64x32xbf16> to vector<64x32xbf16>
    %c0_11 = arith.constant 0 : index
    %c1_12 = arith.constant 1 : index
    %c0_13 = arith.constant 0 : index
    %c0_14 = arith.constant 0 : index
    %9 = vector.load %arg2[%c0_11, %c1_12, %c0_13, %c0_14] : memref<2x3x32x32xbf16, #tpu.memory_space<vmem>>, vector<1x1x32x32xbf16>
    %10 = vector.shape_cast %9 : vector<1x1x32x32xbf16> to vector<32x32xbf16>
    %cst_15 = arith.constant dense<0.000000e+00> : vector<64x32xf32>
    %11 = tpu.matmul %8, %10, %cst_15 {dimension_numbers = #tpu.dot_dimension_numbers<[1], [0], [0], [1], [0, 0, 1, 1], [], []>} : vector<64x32xbf16>, vector<32x32xbf16>, vector<64x32xf32> -> vector<64x32xf32>
    %12 = arith.addf %6, %11 : vector<64x32xf32>
    %c0_16 = arith.constant 0 : index
    %c0_17 = arith.constant 0 : index
    %c8 = arith.constant 8 : index
    %c0_18 = arith.constant 0 : index
    %13 = vector.load %arg1[%c0_16, %c0_17, %c8, %c0_18] : memref<1x2x72x32xbf16, #tpu.memory_space<vmem>>, vector<1x1x64x32xbf16>
    %14 = vector.shape_cast %13 : vector<1x1x64x32xbf16> to vector<64x32xbf16>
    %c0_19 = arith.constant 0 : index
    %c2 = arith.constant 2 : index
    %c0_20 = arith.constant 0 : index
    %c0_21 = arith.constant 0 : index
    %15 = vector.load %arg2[%c0_19, %c2, %c0_20, %c0_21] : memref<2x3x32x32xbf16, #tpu.memory_space<vmem>>, vector<1x1x32x32xbf16>
    %16 = vector.shape_cast %15 : vector<1x1x32x32xbf16> to vector<32x32xbf16>
    %cst_22 = arith.constant dense<0.000000e+00> : vector<64x32xf32>
    %17 = tpu.matmul %14, %16, %cst_22 {dimension_numbers = #tpu.dot_dimension_numbers<[1], [0], [0], [1], [0, 0, 1, 1], [], []>} : vector<64x32xbf16>, vector<32x32xbf16>, vector<64x32xf32> -> vector<64x32xf32>
    %18 = arith.addf %12, %17 : vector<64x32xf32>
    %cst_23 = arith.constant dense<0.000000e+00> : vector<32xf32>
    %19 = vector.multi_reduction <add>, %18, %cst_23 [0] : vector<64x32xf32> to vector<32xf32>
    %20 = vector.shape_cast %19 : vector<32xf32> to vector<1x32xf32>
    %21 = arith.mulf %18, %18 : vector<64x32xf32>
    %cst_24 = arith.constant dense<0.000000e+00> : vector<32xf32>
    %22 = vector.multi_reduction <add>, %21, %cst_24 [0] : vector<64x32xf32> to vector<32xf32>
    %23 = vector.shape_cast %22 : vector<32xf32> to vector<1x32xf32>
    %cst_25 = arith.constant 0.000000e+00 : f32
    %24 = vector.broadcast %cst_25 : f32 to vector<64x32xf32>
    %c0_26 = arith.constant 0 : index
    %c0_27 = arith.constant 0 : index
    %c0_28 = arith.constant 0 : index
    %c0_29 = arith.constant 0 : index
    %25 = vector.load %arg1[%c0_26, %c0_27, %c0_28, %c0_29] : memref<1x2x72x32xbf16, #tpu.memory_space<vmem>>, vector<1x1x64x32xbf16>
    %26 = vector.shape_cast %25 : vector<1x1x64x32xbf16> to vector<64x32xbf16>
    %c1_30 = arith.constant 1 : index
    %c0_31 = arith.constant 0 : index
    %c0_32 = arith.constant 0 : index
    %c0_33 = arith.constant 0 : index
    %27 = vector.load %arg2[%c1_30, %c0_31, %c0_32, %c0_33] : memref<2x3x32x32xbf16, #tpu.memory_space<vmem>>, vector<1x1x32x32xbf16>
    %28 = vector.shape_cast %27 : vector<1x1x32x32xbf16> to vector<32x32xbf16>
    %cst_34 = arith.constant dense<0.000000e+00> : vector<64x32xf32>
    %29 = tpu.matmul %26, %28, %cst_34 {dimension_numbers = #tpu.dot_dimension_numbers<[1], [0], [0], [1], [0, 0, 1, 1], [], []>} : vector<64x32xbf16>, vector<32x32xbf16>, vector<64x32xf32> -> vector<64x32xf32>
    %30 = arith.addf %24, %29 : vector<64x32xf32>
    %c0_35 = arith.constant 0 : index
    %c1_36 = arith.constant 1 : index
    %c0_37 = arith.constant 0 : index
    %c0_38 = arith.constant 0 : index
    %31 = vector.load %arg1[%c0_35, %c1_36, %c0_37, %c0_38] : memref<1x2x72x32xbf16, #tpu.memory_space<vmem>>, vector<1x1x64x32xbf16>
    %32 = vector.shape_cast %31 : vector<1x1x64x32xbf16> to vector<64x32xbf16>
    %c1_39 = arith.constant 1 : index
    %c1_40 = arith.constant 1 : index
    %c0_41 = arith.constant 0 : index
    %c0_42 = arith.constant 0 : index
    %33 = vector.load %arg2[%c1_39, %c1_40, %c0_41, %c0_42] : memref<2x3x32x32xbf16, #tpu.memory_space<vmem>>, vector<1x1x32x32xbf16>
    %34 = vector.shape_cast %33 : vector<1x1x32x32xbf16> to vector<32x32xbf16>
    %cst_43 = arith.constant dense<0.000000e+00> : vector<64x32xf32>
    %35 = tpu.matmul %32, %34, %cst_43 {dimension_numbers = #tpu.dot_dimension_numbers<[1], [0], [0], [1], [0, 0, 1, 1], [], []>} : vector<64x32xbf16>, vector<32x32xbf16>, vector<64x32xf32> -> vector<64x32xf32>
    %36 = arith.addf %30, %35 : vector<64x32xf32>
    %c0_44 = arith.constant 0 : index
    %c0_45 = arith.constant 0 : index
    %c8_46 = arith.constant 8 : index
    %c0_47 = arith.constant 0 : index
    %37 = vector.load %arg1[%c0_44, %c0_45, %c8_46, %c0_47] : memref<1x2x72x32xbf16, #tpu.memory_space<vmem>>, vector<1x1x64x32xbf16>
    %38 = vector.shape_cast %37 : vector<1x1x64x32xbf16> to vector<64x32xbf16>
    %c1_48 = arith.constant 1 : index
    %c2_49 = arith.constant 2 : index
    %c0_50 = arith.constant 0 : index
    %c0_51 = arith.constant 0 : index
    %39 = vector.load %arg2[%c1_48, %c2_49, %c0_50, %c0_51] : memref<2x3x32x32xbf16, #tpu.memory_space<vmem>>, vector<1x1x32x32xbf16>
    %40 = vector.shape_cast %39 : vector<1x1x32x32xbf16> to vector<32x32xbf16>
    %cst_52 = arith.constant dense<0.000000e+00> : vector<64x32xf32>
    %41 = tpu.matmul %38, %40, %cst_52 {dimension_numbers = #tpu.dot_dimension_numbers<[1], [0], [0], [1], [0, 0, 1, 1], [], []>} : vector<64x32xbf16>, vector<32x32xbf16>, vector<64x32xf32> -> vector<64x32xf32>
    %42 = arith.addf %36, %41 : vector<64x32xf32>
    %cst_53 = arith.constant dense<0.000000e+00> : vector<32xf32>
    %43 = vector.multi_reduction <add>, %42, %cst_53 [0] : vector<64x32xf32> to vector<32xf32>
    %44 = vector.shape_cast %43 : vector<32xf32> to vector<1x32xf32>
    %45 = arith.mulf %42, %42 : vector<64x32xf32>
    %cst_54 = arith.constant dense<0.000000e+00> : vector<32xf32>
    %46 = vector.multi_reduction <add>, %45, %cst_54 [0] : vector<64x32xf32> to vector<32xf32>
    %47 = vector.shape_cast %46 : vector<32xf32> to vector<1x32xf32>
    %48 = arith.maximumf %18, %42 : vector<64x32xf32>
    %49 = arith.minimumf %18, %42 : vector<64x32xf32>
    %50 = arith.addf %20, %44 : vector<1x32xf32>
    %51 = arith.addf %23, %47 : vector<1x32xf32>
    %cst_55 = arith.constant 0.000000e+00 : f32
    %52 = vector.broadcast %cst_55 : f32 to vector<64x32xf32>
    %c0_56 = arith.constant 0 : index
    %c1_57 = arith.constant 1 : index
    %c0_58 = arith.constant 0 : index
    %c0_59 = arith.constant 0 : index
    %53 = vector.load %arg1[%c0_56, %c1_57, %c0_58, %c0_59] : memref<1x2x72x32xbf16, #tpu.memory_space<vmem>>, vector<1x1x64x32xbf16>
    %54 = vector.shape_cast %53 : vector<1x1x64x32xbf16> to vector<64x32xbf16>
    %c0_60 = arith.constant 0 : index
    %c0_61 = arith.constant 0 : index
    %c0_62 = arith.constant 0 : index
    %c0_63 = arith.constant 0 : index
    %55 = vector.load %arg2[%c0_60, %c0_61, %c0_62, %c0_63] : memref<2x3x32x32xbf16, #tpu.memory_space<vmem>>, vector<1x1x32x32xbf16>
    %56 = vector.shape_cast %55 : vector<1x1x32x32xbf16> to vector<32x32xbf16>
    %cst_64 = arith.constant dense<0.000000e+00> : vector<64x32xf32>
    %57 = tpu.matmul %54, %56, %cst_64 {dimension_numbers = #tpu.dot_dimension_numbers<[1], [0], [0], [1], [0, 0, 1, 1], [], []>} : vector<64x32xbf16>, vector<32x32xbf16>, vector<64x32xf32> -> vector<64x32xf32>
    %58 = arith.addf %52, %57 : vector<64x32xf32>
    %c0_65 = arith.constant 0 : index
    %c0_66 = arith.constant 0 : index
    %c8_67 = arith.constant 8 : index
    %c0_68 = arith.constant 0 : index
    %59 = vector.load %arg1[%c0_65, %c0_66, %c8_67, %c0_68] : memref<1x2x72x32xbf16, #tpu.memory_space<vmem>>, vector<1x1x64x32xbf16>
    %60 = vector.shape_cast %59 : vector<1x1x64x32xbf16> to vector<64x32xbf16>
    %c0_69 = arith.constant 0 : index
    %c1_70 = arith.constant 1 : index
    %c0_71 = arith.constant 0 : index
    %c0_72 = arith.constant 0 : index
    %61 = vector.load %arg2[%c0_69, %c1_70, %c0_71, %c0_72] : memref<2x3x32x32xbf16, #tpu.memory_space<vmem>>, vector<1x1x32x32xbf16>
    %62 = vector.shape_cast %61 : vector<1x1x32x32xbf16> to vector<32x32xbf16>
    %cst_73 = arith.constant dense<0.000000e+00> : vector<64x32xf32>
    %63 = tpu.matmul %60, %62, %cst_73 {dimension_numbers = #tpu.dot_dimension_numbers<[1], [0], [0], [1], [0, 0, 1, 1], [], []>} : vector<64x32xbf16>, vector<32x32xbf16>, vector<64x32xf32> -> vector<64x32xf32>
    %64 = arith.addf %58, %63 : vector<64x32xf32>
    %c0_74 = arith.constant 0 : index
    %c1_75 = arith.constant 1 : index
    %c8_76 = arith.constant 8 : index
    %c0_77 = arith.constant 0 : index
    %65 = vector.load %arg1[%c0_74, %c1_75, %c8_76, %c0_77] : memref<1x2x72x32xbf16, #tpu.memory_space<vmem>>, vector<1x1x64x32xbf16>
    %66 = vector.shape_cast %65 : vector<1x1x64x32xbf16> to vector<64x32xbf16>
    %c0_78 = arith.constant 0 : index
    %c2_79 = arith.constant 2 : index
    %c0_80 = arith.constant 0 : index
    %c0_81 = arith.constant 0 : index
    %67 = vector.load %arg2[%c0_78, %c2_79, %c0_80, %c0_81] : memref<2x3x32x32xbf16, #tpu.memory_space<vmem>>, vector<1x1x32x32xbf16>
    %68 = vector.shape_cast %67 : vector<1x1x32x32xbf16> to vector<32x32xbf16>
    %cst_82 = arith.constant dense<0.000000e+00> : vector<64x32xf32>
    %69 = tpu.matmul %66, %68, %cst_82 {dimension_numbers = #tpu.dot_dimension_numbers<[1], [0], [0], [1], [0, 0, 1, 1], [], []>} : vector<64x32xbf16>, vector<32x32xbf16>, vector<64x32xf32> -> vector<64x32xf32>
    %70 = arith.addf %64, %69 : vector<64x32xf32>
    %cst_83 = arith.constant dense<0.000000e+00> : vector<32xf32>
    %71 = vector.multi_reduction <add>, %70, %cst_83 [0] : vector<64x32xf32> to vector<32xf32>
    %72 = vector.shape_cast %71 : vector<32xf32> to vector<1x32xf32>
    %73 = arith.mulf %70, %70 : vector<64x32xf32>
    %cst_84 = arith.constant dense<0.000000e+00> : vector<32xf32>
    %74 = vector.multi_reduction <add>, %73, %cst_84 [0] : vector<64x32xf32> to vector<32xf32>
    %75 = vector.shape_cast %74 : vector<32xf32> to vector<1x32xf32>
    %76 = arith.maximumf %48, %70 : vector<64x32xf32>
    %77 = arith.minimumf %49, %70 : vector<64x32xf32>
    %78 = arith.addf %50, %72 : vector<1x32xf32>
    %79 = arith.addf %51, %75 : vector<1x32xf32>
    %cst_85 = arith.constant 0.000000e+00 : f32
    %80 = vector.broadcast %cst_85 : f32 to vector<64x32xf32>
    %c0_86 = arith.constant 0 : index
    %c1_87 = arith.constant 1 : index
    %c0_88 = arith.constant 0 : index
    %c0_89 = arith.constant 0 : index
    %81 = vector.load %arg1[%c0_86, %c1_87, %c0_88, %c0_89] : memref<1x2x72x32xbf16, #tpu.memory_space<vmem>>, vector<1x1x64x32xbf16>
    %82 = vector.shape_cast %81 : vector<1x1x64x32xbf16> to vector<64x32xbf16>
    %c1_90 = arith.constant 1 : index
    %c0_91 = arith.constant 0 : index
    %c0_92 = arith.constant 0 : index
    %c0_93 = arith.constant 0 : index
    %83 = vector.load %arg2[%c1_90, %c0_91, %c0_92, %c0_93] : memref<2x3x32x32xbf16, #tpu.memory_space<vmem>>, vector<1x1x32x32xbf16>
    %84 = vector.shape_cast %83 : vector<1x1x32x32xbf16> to vector<32x32xbf16>
    %cst_94 = arith.constant dense<0.000000e+00> : vector<64x32xf32>
    %85 = tpu.matmul %82, %84, %cst_94 {dimension_numbers = #tpu.dot_dimension_numbers<[1], [0], [0], [1], [0, 0, 1, 1], [], []>} : vector<64x32xbf16>, vector<32x32xbf16>, vector<64x32xf32> -> vector<64x32xf32>
    %86 = arith.addf %80, %85 : vector<64x32xf32>
    %c0_95 = arith.constant 0 : index
    %c0_96 = arith.constant 0 : index
    %c8_97 = arith.constant 8 : index
    %c0_98 = arith.constant 0 : index
    %87 = vector.load %arg1[%c0_95, %c0_96, %c8_97, %c0_98] : memref<1x2x72x32xbf16, #tpu.memory_space<vmem>>, vector<1x1x64x32xbf16>
    %88 = vector.shape_cast %87 : vector<1x1x64x32xbf16> to vector<64x32xbf16>
    %c1_99 = arith.constant 1 : index
    %c1_100 = arith.constant 1 : index
    %c0_101 = arith.constant 0 : index
    %c0_102 = arith.constant 0 : index
    %89 = vector.load %arg2[%c1_99, %c1_100, %c0_101, %c0_102] : memref<2x3x32x32xbf16, #tpu.memory_space<vmem>>, vector<1x1x32x32xbf16>
    %90 = vector.shape_cast %89 : vector<1x1x32x32xbf16> to vector<32x32xbf16>
    %cst_103 = arith.constant dense<0.000000e+00> : vector<64x32xf32>
    %91 = tpu.matmul %88, %90, %cst_103 {dimension_numbers = #tpu.dot_dimension_numbers<[1], [0], [0], [1], [0, 0, 1, 1], [], []>} : vector<64x32xbf16>, vector<32x32xbf16>, vector<64x32xf32> -> vector<64x32xf32>
    %92 = arith.addf %86, %91 : vector<64x32xf32>
    %c0_104 = arith.constant 0 : index
    %c1_105 = arith.constant 1 : index
    %c8_106 = arith.constant 8 : index
    %c0_107 = arith.constant 0 : index
    %93 = vector.load %arg1[%c0_104, %c1_105, %c8_106, %c0_107] : memref<1x2x72x32xbf16, #tpu.memory_space<vmem>>, vector<1x1x64x32xbf16>
    %94 = vector.shape_cast %93 : vector<1x1x64x32xbf16> to vector<64x32xbf16>
    %c1_108 = arith.constant 1 : index
    %c2_109 = arith.constant 2 : index
    %c0_110 = arith.constant 0 : index
    %c0_111 = arith.constant 0 : index
    %95 = vector.load %arg2[%c1_108, %c2_109, %c0_110, %c0_111] : memref<2x3x32x32xbf16, #tpu.memory_space<vmem>>, vector<1x1x32x32xbf16>
    %96 = vector.shape_cast %95 : vector<1x1x32x32xbf16> to vector<32x32xbf16>
    %cst_112 = arith.constant dense<0.000000e+00> : vector<64x32xf32>
    %97 = tpu.matmul %94, %96, %cst_112 {dimension_numbers = #tpu.dot_dimension_numbers<[1], [0], [0], [1], [0, 0, 1, 1], [], []>} : vector<64x32xbf16>, vector<32x32xbf16>, vector<64x32xf32> -> vector<64x32xf32>
    %98 = arith.addf %92, %97 : vector<64x32xf32>
    %cst_113 = arith.constant dense<0.000000e+00> : vector<32xf32>
    %99 = vector.multi_reduction <add>, %98, %cst_113 [0] : vector<64x32xf32> to vector<32xf32>
    %100 = vector.shape_cast %99 : vector<32xf32> to vector<1x32xf32>
    %101 = arith.mulf %98, %98 : vector<64x32xf32>
    %cst_114 = arith.constant dense<0.000000e+00> : vector<32xf32>
    %102 = vector.multi_reduction <add>, %101, %cst_114 [0] : vector<64x32xf32> to vector<32xf32>
    %103 = vector.shape_cast %102 : vector<32xf32> to vector<1x32xf32>
    %104 = arith.maximumf %76, %98 : vector<64x32xf32>
    %105 = arith.minimumf %77, %98 : vector<64x32xf32>
    %106 = arith.addf %78, %100 : vector<1x32xf32>
    %107 = arith.addf %79, %103 : vector<1x32xf32>
    %108 = tpu.concatenate %104, %105 in 1 : vector<64x32xf32>, vector<64x32xf32> -> vector<64x64xf32>
    %109 = arith.truncf %108 : vector<64x64xf32> to vector<64x64xbf16>
    %c0_115 = arith.constant 0 : index
    %c0_116 = arith.constant 0 : index
    %c0_117 = arith.constant 0 : index
    %110 = vector.load %arg3[%c0_115, %c0_116, %c0_117] : memref<1x64x64xbf16, #tpu.memory_space<vmem>>, vector<1x64x64xbf16>
    %111 = vector.shape_cast %110 : vector<1x64x64xbf16> to vector<64x64xbf16>
    %112 = vector.shape_cast %109 : vector<64x64xbf16> to vector<1x64x64xbf16>
    tpu.vector_store %arg3[%c0_115, %c0_116, %c0_117], %112 {strides = array<i32>} : memref<1x64x64xbf16, #tpu.memory_space<vmem>>, vector<1x64x64xbf16>,
    %cst_118 = arith.constant 0.000000e+00 : f32
    %113 = vector.broadcast %cst_118 : f32 to vector<6x32xf32>
    %114 = tpu.concatenate %106, %107, %113 in 0 : vector<1x32xf32>, vector<1x32xf32>, vector<6x32xf32> -> vector<8x32xf32>
    %c0_119 = arith.constant 0 : index
    %c0_120 = arith.constant 0 : index
    %c0_121 = arith.constant 0 : index
    %115 = vector.load %arg4[%c0_119, %c0_120, %c0_121] : memref<1x8x32xf32, #tpu.memory_space<vmem>>, vector<1x8x32xf32>
    %116 = vector.shape_cast %115 : vector<1x8x32xf32> to vector<8x32xf32>
    %117 = vector.shape_cast %114 : vector<8x32xf32> to vector<1x8x32xf32>
    tpu.vector_store %arg4[%c0_119, %c0_120, %c0_121], %117 {strides = array<i32>} : memref<1x8x32xf32, #tpu.memory_space<vmem>>, vector<1x8x32xf32>,
    return
  }
  func.func @transform_0(%arg0: i32) -> (i32, i32, i32, i32) {
    %c0_i32 = arith.constant 0 : i32
    %c0_i32_0 = arith.constant 0 : i32
    %c0_i32_1 = arith.constant 0 : i32
    %c0_i32_2 = arith.constant 0 : i32
    return %arg0, %c0_i32, %c0_i32_0, %c0_i32_1 : i32, i32, i32, i32
  }
  func.func @transform_1(%arg0: i32) -> (i32, i32, i32, i32) {
    %c0_i32 = arith.constant 0 : i32
    %c0_i32_0 = arith.constant 0 : i32
    %c0_i32_1 = arith.constant 0 : i32
    %c0_i32_2 = arith.constant 0 : i32
    %c0_i32_3 = arith.constant 0 : i32
    return %c0_i32, %c0_i32_0, %c0_i32_1, %c0_i32_2 : i32, i32, i32, i32
  }
  func.func @transform_2(%arg0: i32) -> (i32, i32, i32) {
    %c0_i32 = arith.constant 0 : i32
    %c0_i32_0 = arith.constant 0 : i32
    %c0_i32_1 = arith.constant 0 : i32
    return %arg0, %c0_i32, %c0_i32_0 : i32, i32, i32
  }
  func.func @transform_3(%arg0: i32) -> (i32, i32, i32) {
    %c0_i32 = arith.constant 0 : i32
    %c0_i32_0 = arith.constant 0 : i32
    %c0_i32_1 = arith.constant 0 : i32
    return %arg0, %c0_i32, %c0_i32_0 : i32, i32, i32
  }
}

module attributes {stable_mosaic.version = 11 : i64} {
  func.func @bn_relu_kernel(%arg0: i32, %arg1: memref<1x64x64xbf16, #tpu.memory_space<vmem>>, %arg2: memref<1x32xf32, #tpu.memory_space<vmem>>, %arg3: memref<1x32xf32, #tpu.memory_space<vmem>>, %arg4: memref<1x64x32xbf16, #tpu.memory_space<vmem>>) attributes {dimension_semantics = [#tpu.dimension_semantics<parallel>], iteration_bounds = array<i64: 2>, scalar_prefetch = 0 : i64, scratch_operands = 0 : i64, tpu.core_type = #tpu.core_type<tc>, window_params = [{transform_indices = @transform_0, window_bounds = array<i64: 1, 64, 64>}, {pipeline_mode = #tpu.pipeline_mode<synchronous>, transform_indices = @transform_1, window_bounds = array<i64: 1, 32>}, {pipeline_mode = #tpu.pipeline_mode<synchronous>, transform_indices = @transform_2, window_bounds = array<i64: 1, 32>}, {transform_indices = @transform_3, window_bounds = array<i64: 1, 64, 32>}]} {
    %c0 = arith.constant 0 : index
    %c0_0 = arith.constant 0 : index
    %c0_1 = arith.constant 0 : index
    %0 = vector.load %arg1[%c0, %c0_0, %c0_1] : memref<1x64x64xbf16, #tpu.memory_space<vmem>>, vector<1x64x64xbf16>
    %1 = vector.shape_cast %0 : vector<1x64x64xbf16> to vector<64x64xbf16>
    %2 = arith.extf %1 : vector<64x64xbf16> to vector<64x64xf32>
    %3 = vector.extract_strided_slice %2 {offsets = [0, 0], sizes = [64, 32], strides = [1, 1]} : vector<64x64xf32> to vector<64x32xf32>
    %4 = vector.extract_strided_slice %2 {offsets = [0, 32], sizes = [64, 32], strides = [1, 1]} : vector<64x64xf32> to vector<64x32xf32>
    %c0_2 = arith.constant 0 : index
    %c0_3 = arith.constant 0 : index
    %5 = vector.load %arg2[%c0_2, %c0_3] : memref<1x32xf32, #tpu.memory_space<vmem>>, vector<1x32xf32>
    %c0_4 = arith.constant 0 : index
    %c0_5 = arith.constant 0 : index
    %6 = vector.load %arg3[%c0_4, %c0_5] : memref<1x32xf32, #tpu.memory_space<vmem>>, vector<1x32xf32>
    %cst = arith.constant 0.000000e+00 : f32
    %7 = vector.broadcast %cst : f32 to vector<1x32xf32>
    %8 = arith.cmpf oge, %5, %7 : vector<1x32xf32>
    %9 = vector.shape_cast %8 : vector<1x32xi1> to vector<1x32xi1>
    %10 = vector.broadcast %9 : vector<1x32xi1> to vector<64x32xi1>
    %11 = arith.select %10, %3, %4 : vector<64x32xi1>, vector<64x32xf32>
    %12 = vector.broadcast %5 : vector<1x32xf32> to vector<64x32xf32>
    %13 = arith.mulf %11, %12 : vector<64x32xf32>
    %14 = vector.broadcast %6 : vector<1x32xf32> to vector<64x32xf32>
    %15 = arith.addf %13, %14 : vector<64x32xf32>
    %cst_6 = arith.constant 0.000000e+00 : f32
    %16 = vector.broadcast %cst_6 : f32 to vector<64x32xf32>
    %17 = arith.maximumf %15, %16 : vector<64x32xf32>
    %18 = arith.truncf %17 : vector<64x32xf32> to vector<64x32xbf16>
    %c0_7 = arith.constant 0 : index
    %c0_8 = arith.constant 0 : index
    %c0_9 = arith.constant 0 : index
    %19 = vector.load %arg4[%c0_7, %c0_8, %c0_9] : memref<1x64x32xbf16, #tpu.memory_space<vmem>>, vector<1x64x32xbf16>
    %20 = vector.shape_cast %19 : vector<1x64x32xbf16> to vector<64x32xbf16>
    %21 = vector.shape_cast %18 : vector<64x32xbf16> to vector<1x64x32xbf16>
    tpu.vector_store %arg4[%c0_7, %c0_8, %c0_9], %21 {strides = array<i32>} : memref<1x64x32xbf16, #tpu.memory_space<vmem>>, vector<1x64x32xbf16>,
    return
  }
  func.func @transform_0(%arg0: i32) -> (i32, i32, i32) {
    %c0_i32 = arith.constant 0 : i32
    %c0_i32_0 = arith.constant 0 : i32
    %c0_i32_1 = arith.constant 0 : i32
    return %arg0, %c0_i32, %c0_i32_0 : i32, i32, i32
  }
  func.func @transform_1(%arg0: i32) -> (i32, i32) {
    %c0_i32 = arith.constant 0 : i32
    %c0_i32_0 = arith.constant 0 : i32
    %c0_i32_1 = arith.constant 0 : i32
    return %c0_i32, %c0_i32_0 : i32, i32
  }
  func.func @transform_2(%arg0: i32) -> (i32, i32) {
    %c0_i32 = arith.constant 0 : i32
    %c0_i32_0 = arith.constant 0 : i32
    %c0_i32_1 = arith.constant 0 : i32
    return %c0_i32, %c0_i32_0 : i32, i32
  }
  func.func @transform_3(%arg0: i32) -> (i32, i32, i32) {
    %c0_i32 = arith.constant 0 : i32
    %c0_i32_0 = arith.constant 0 : i32
    %c0_i32_1 = arith.constant 0 : i32
    return %arg0, %c0_i32, %c0_i32_0 : i32, i32, i32
  }
}

module attributes {stable_mosaic.version = 11 : i64} {
  func.func @bn_relu_kernel(%arg0: i32, %arg1: memref<1x16x64xbf16, #tpu.memory_space<vmem>>, %arg2: memref<1x32xf32, #tpu.memory_space<vmem>>, %arg3: memref<1x32xf32, #tpu.memory_space<vmem>>, %arg4: memref<1x16x32xbf16, #tpu.memory_space<vmem>>) attributes {dimension_semantics = [#tpu.dimension_semantics<parallel>], iteration_bounds = array<i64: 2>, scalar_prefetch = 0 : i64, scratch_operands = 0 : i64, tpu.core_type = #tpu.core_type<tc>, window_params = [{transform_indices = @transform_0, window_bounds = array<i64: 1, 16, 64>}, {pipeline_mode = #tpu.pipeline_mode<synchronous>, transform_indices = @transform_1, window_bounds = array<i64: 1, 32>}, {pipeline_mode = #tpu.pipeline_mode<synchronous>, transform_indices = @transform_2, window_bounds = array<i64: 1, 32>}, {transform_indices = @transform_3, window_bounds = array<i64: 1, 16, 32>}]} {
    %c0 = arith.constant 0 : index
    %c0_0 = arith.constant 0 : index
    %c0_1 = arith.constant 0 : index
    %0 = vector.load %arg1[%c0, %c0_0, %c0_1] : memref<1x16x64xbf16, #tpu.memory_space<vmem>>, vector<1x16x64xbf16>
    %1 = vector.shape_cast %0 : vector<1x16x64xbf16> to vector<16x64xbf16>
    %2 = arith.extf %1 : vector<16x64xbf16> to vector<16x64xf32>
    %3 = vector.extract_strided_slice %2 {offsets = [0, 0], sizes = [16, 32], strides = [1, 1]} : vector<16x64xf32> to vector<16x32xf32>
    %4 = vector.extract_strided_slice %2 {offsets = [0, 32], sizes = [16, 32], strides = [1, 1]} : vector<16x64xf32> to vector<16x32xf32>
    %c0_2 = arith.constant 0 : index
    %c0_3 = arith.constant 0 : index
    %5 = vector.load %arg2[%c0_2, %c0_3] : memref<1x32xf32, #tpu.memory_space<vmem>>, vector<1x32xf32>
    %c0_4 = arith.constant 0 : index
    %c0_5 = arith.constant 0 : index
    %6 = vector.load %arg3[%c0_4, %c0_5] : memref<1x32xf32, #tpu.memory_space<vmem>>, vector<1x32xf32>
    %cst = arith.constant 0.000000e+00 : f32
    %7 = vector.broadcast %cst : f32 to vector<1x32xf32>
    %8 = arith.cmpf oge, %5, %7 : vector<1x32xf32>
    %9 = vector.shape_cast %8 : vector<1x32xi1> to vector<1x32xi1>
    %10 = vector.broadcast %9 : vector<1x32xi1> to vector<16x32xi1>
    %11 = arith.select %10, %3, %4 : vector<16x32xi1>, vector<16x32xf32>
    %12 = vector.broadcast %5 : vector<1x32xf32> to vector<16x32xf32>
    %13 = arith.mulf %11, %12 : vector<16x32xf32>
    %14 = vector.broadcast %6 : vector<1x32xf32> to vector<16x32xf32>
    %15 = arith.addf %13, %14 : vector<16x32xf32>
    %cst_6 = arith.constant 0.000000e+00 : f32
    %16 = vector.broadcast %cst_6 : f32 to vector<16x32xf32>
    %17 = arith.maximumf %15, %16 : vector<16x32xf32>
    %18 = arith.truncf %17 : vector<16x32xf32> to vector<16x32xbf16>
    %c0_7 = arith.constant 0 : index
    %c0_8 = arith.constant 0 : index
    %c0_9 = arith.constant 0 : index
    %19 = vector.load %arg4[%c0_7, %c0_8, %c0_9] : memref<1x16x32xbf16, #tpu.memory_space<vmem>>, vector<1x16x32xbf16>
    %20 = vector.shape_cast %19 : vector<1x16x32xbf16> to vector<16x32xbf16>
    %21 = vector.shape_cast %18 : vector<16x32xbf16> to vector<1x16x32xbf16>
    tpu.vector_store %arg4[%c0_7, %c0_8, %c0_9], %21 {strides = array<i32>} : memref<1x16x32xbf16, #tpu.memory_space<vmem>>, vector<1x16x32xbf16>,
    return
  }
  func.func @transform_0(%arg0: i32) -> (i32, i32, i32) {
    %c0_i32 = arith.constant 0 : i32
    %c0_i32_0 = arith.constant 0 : i32
    %c0_i32_1 = arith.constant 0 : i32
    return %arg0, %c0_i32, %c0_i32_0 : i32, i32, i32
  }
  func.func @transform_1(%arg0: i32) -> (i32, i32) {
    %c0_i32 = arith.constant 0 : i32
    %c0_i32_0 = arith.constant 0 : i32
    %c0_i32_1 = arith.constant 0 : i32
    return %c0_i32, %c0_i32_0 : i32, i32
  }
  func.func @transform_2(%arg0: i32) -> (i32, i32) {
    %c0_i32 = arith.constant 0 : i32
    %c0_i32_0 = arith.constant 0 : i32
    %c0_i32_1 = arith.constant 0 : i32
    return %c0_i32, %c0_i32_0 : i32, i32
  }
  func.func @transform_3(%arg0: i32) -> (i32, i32, i32) {
    %c0_i32 = arith.constant 0 : i32
    %c0_i32_0 = arith.constant 0 : i32
    %c0_i32_1 = arith.constant 0 : i32
    return %arg0, %c0_i32, %c0_i32_0 : i32, i32, i32
  }
}

module attributes {stable_mosaic.version = 11 : i64} {
  func.func @conv_pool_stats_kernel(%arg0: i32, %arg1: memref<1x2x20x128xbf16, #tpu.memory_space<vmem>>, %arg2: memref<2x3x128x32xbf16, #tpu.memory_space<vmem>>, %arg3: memref<1x16x64xbf16, #tpu.memory_space<vmem>>, %arg4: memref<1x8x32xf32, #tpu.memory_space<vmem>>) attributes {dimension_semantics = [#tpu.dimension_semantics<parallel>], iteration_bounds = array<i64: 2>, scalar_prefetch = 0 : i64, scratch_operands = 0 : i64, tpu.core_type = #tpu.core_type<tc>, window_params = [{transform_indices = @transform_0, window_bounds = array<i64: 1, 2, 20, 128>}, {pipeline_mode = #tpu.pipeline_mode<synchronous>, transform_indices = @transform_1, window_bounds = array<i64: 2, 3, 128, 32>}, {transform_indices = @transform_2, window_bounds = array<i64: 1, 16, 64>}, {transform_indices = @transform_3, window_bounds = array<i64: 1, 8, 32>}]} {
    %cst = arith.constant 0.000000e+00 : f32
    %0 = vector.broadcast %cst : f32 to vector<16x32xf32>
    %c0 = arith.constant 0 : index
    %c0_0 = arith.constant 0 : index
    %c0_1 = arith.constant 0 : index
    %c0_2 = arith.constant 0 : index
    %1 = vector.load %arg1[%c0, %c0_0, %c0_1, %c0_2] : memref<1x2x20x128xbf16, #tpu.memory_space<vmem>>, vector<1x1x16x128xbf16>
    %2 = vector.shape_cast %1 : vector<1x1x16x128xbf16> to vector<16x128xbf16>
    %c0_3 = arith.constant 0 : index
    %c0_4 = arith.constant 0 : index
    %c0_5 = arith.constant 0 : index
    %c0_6 = arith.constant 0 : index
    %3 = vector.load %arg2[%c0_3, %c0_4, %c0_5, %c0_6] : memref<2x3x128x32xbf16, #tpu.memory_space<vmem>>, vector<1x1x128x32xbf16>
    %4 = vector.shape_cast %3 : vector<1x1x128x32xbf16> to vector<128x32xbf16>
    %cst_7 = arith.constant dense<0.000000e+00> : vector<16x32xf32>
    %5 = tpu.matmul %2, %4, %cst_7 {dimension_numbers = #tpu.dot_dimension_numbers<[1], [0], [0], [1], [0, 0, 1, 1], [], []>} : vector<16x128xbf16>, vector<128x32xbf16>, vector<16x32xf32> -> vector<16x32xf32>
    %6 = arith.addf %0, %5 : vector<16x32xf32>
    %c0_8 = arith.constant 0 : index
    %c1 = arith.constant 1 : index
    %c0_9 = arith.constant 0 : index
    %c0_10 = arith.constant 0 : index
    %7 = vector.load %arg1[%c0_8, %c1, %c0_9, %c0_10] : memref<1x2x20x128xbf16, #tpu.memory_space<vmem>>, vector<1x1x16x128xbf16>
    %8 = vector.shape_cast %7 : vector<1x1x16x128xbf16> to vector<16x128xbf16>
    %c0_11 = arith.constant 0 : index
    %c1_12 = arith.constant 1 : index
    %c0_13 = arith.constant 0 : index
    %c0_14 = arith.constant 0 : index
    %9 = vector.load %arg2[%c0_11, %c1_12, %c0_13, %c0_14] : memref<2x3x128x32xbf16, #tpu.memory_space<vmem>>, vector<1x1x128x32xbf16>
    %10 = vector.shape_cast %9 : vector<1x1x128x32xbf16> to vector<128x32xbf16>
    %cst_15 = arith.constant dense<0.000000e+00> : vector<16x32xf32>
    %11 = tpu.matmul %8, %10, %cst_15 {dimension_numbers = #tpu.dot_dimension_numbers<[1], [0], [0], [1], [0, 0, 1, 1], [], []>} : vector<16x128xbf16>, vector<128x32xbf16>, vector<16x32xf32> -> vector<16x32xf32>
    %12 = arith.addf %6, %11 : vector<16x32xf32>
    %c0_16 = arith.constant 0 : index
    %c0_17 = arith.constant 0 : index
    %c4 = arith.constant 4 : index
    %c0_18 = arith.constant 0 : index
    %13 = vector.load %arg1[%c0_16, %c0_17, %c4, %c0_18] : memref<1x2x20x128xbf16, #tpu.memory_space<vmem>>, vector<1x1x16x128xbf16>
    %14 = vector.shape_cast %13 : vector<1x1x16x128xbf16> to vector<16x128xbf16>
    %c0_19 = arith.constant 0 : index
    %c2 = arith.constant 2 : index
    %c0_20 = arith.constant 0 : index
    %c0_21 = arith.constant 0 : index
    %15 = vector.load %arg2[%c0_19, %c2, %c0_20, %c0_21] : memref<2x3x128x32xbf16, #tpu.memory_space<vmem>>, vector<1x1x128x32xbf16>
    %16 = vector.shape_cast %15 : vector<1x1x128x32xbf16> to vector<128x32xbf16>
    %cst_22 = arith.constant dense<0.000000e+00> : vector<16x32xf32>
    %17 = tpu.matmul %14, %16, %cst_22 {dimension_numbers = #tpu.dot_dimension_numbers<[1], [0], [0], [1], [0, 0, 1, 1], [], []>} : vector<16x128xbf16>, vector<128x32xbf16>, vector<16x32xf32> -> vector<16x32xf32>
    %18 = arith.addf %12, %17 : vector<16x32xf32>
    %cst_23 = arith.constant dense<0.000000e+00> : vector<32xf32>
    %19 = vector.multi_reduction <add>, %18, %cst_23 [0] : vector<16x32xf32> to vector<32xf32>
    %20 = vector.shape_cast %19 : vector<32xf32> to vector<1x32xf32>
    %21 = arith.mulf %18, %18 : vector<16x32xf32>
    %cst_24 = arith.constant dense<0.000000e+00> : vector<32xf32>
    %22 = vector.multi_reduction <add>, %21, %cst_24 [0] : vector<16x32xf32> to vector<32xf32>
    %23 = vector.shape_cast %22 : vector<32xf32> to vector<1x32xf32>
    %cst_25 = arith.constant 0.000000e+00 : f32
    %24 = vector.broadcast %cst_25 : f32 to vector<16x32xf32>
    %c0_26 = arith.constant 0 : index
    %c0_27 = arith.constant 0 : index
    %c0_28 = arith.constant 0 : index
    %c0_29 = arith.constant 0 : index
    %25 = vector.load %arg1[%c0_26, %c0_27, %c0_28, %c0_29] : memref<1x2x20x128xbf16, #tpu.memory_space<vmem>>, vector<1x1x16x128xbf16>
    %26 = vector.shape_cast %25 : vector<1x1x16x128xbf16> to vector<16x128xbf16>
    %c1_30 = arith.constant 1 : index
    %c0_31 = arith.constant 0 : index
    %c0_32 = arith.constant 0 : index
    %c0_33 = arith.constant 0 : index
    %27 = vector.load %arg2[%c1_30, %c0_31, %c0_32, %c0_33] : memref<2x3x128x32xbf16, #tpu.memory_space<vmem>>, vector<1x1x128x32xbf16>
    %28 = vector.shape_cast %27 : vector<1x1x128x32xbf16> to vector<128x32xbf16>
    %cst_34 = arith.constant dense<0.000000e+00> : vector<16x32xf32>
    %29 = tpu.matmul %26, %28, %cst_34 {dimension_numbers = #tpu.dot_dimension_numbers<[1], [0], [0], [1], [0, 0, 1, 1], [], []>} : vector<16x128xbf16>, vector<128x32xbf16>, vector<16x32xf32> -> vector<16x32xf32>
    %30 = arith.addf %24, %29 : vector<16x32xf32>
    %c0_35 = arith.constant 0 : index
    %c1_36 = arith.constant 1 : index
    %c0_37 = arith.constant 0 : index
    %c0_38 = arith.constant 0 : index
    %31 = vector.load %arg1[%c0_35, %c1_36, %c0_37, %c0_38] : memref<1x2x20x128xbf16, #tpu.memory_space<vmem>>, vector<1x1x16x128xbf16>
    %32 = vector.shape_cast %31 : vector<1x1x16x128xbf16> to vector<16x128xbf16>
    %c1_39 = arith.constant 1 : index
    %c1_40 = arith.constant 1 : index
    %c0_41 = arith.constant 0 : index
    %c0_42 = arith.constant 0 : index
    %33 = vector.load %arg2[%c1_39, %c1_40, %c0_41, %c0_42] : memref<2x3x128x32xbf16, #tpu.memory_space<vmem>>, vector<1x1x128x32xbf16>
    %34 = vector.shape_cast %33 : vector<1x1x128x32xbf16> to vector<128x32xbf16>
    %cst_43 = arith.constant dense<0.000000e+00> : vector<16x32xf32>
    %35 = tpu.matmul %32, %34, %cst_43 {dimension_numbers = #tpu.dot_dimension_numbers<[1], [0], [0], [1], [0, 0, 1, 1], [], []>} : vector<16x128xbf16>, vector<128x32xbf16>, vector<16x32xf32> -> vector<16x32xf32>
    %36 = arith.addf %30, %35 : vector<16x32xf32>
    %c0_44 = arith.constant 0 : index
    %c0_45 = arith.constant 0 : index
    %c4_46 = arith.constant 4 : index
    %c0_47 = arith.constant 0 : index
    %37 = vector.load %arg1[%c0_44, %c0_45, %c4_46, %c0_47] : memref<1x2x20x128xbf16, #tpu.memory_space<vmem>>, vector<1x1x16x128xbf16>
    %38 = vector.shape_cast %37 : vector<1x1x16x128xbf16> to vector<16x128xbf16>
    %c1_48 = arith.constant 1 : index
    %c2_49 = arith.constant 2 : index
    %c0_50 = arith.constant 0 : index
    %c0_51 = arith.constant 0 : index
    %39 = vector.load %arg2[%c1_48, %c2_49, %c0_50, %c0_51] : memref<2x3x128x32xbf16, #tpu.memory_space<vmem>>, vector<1x1x128x32xbf16>
    %40 = vector.shape_cast %39 : vector<1x1x128x32xbf16> to vector<128x32xbf16>
    %cst_52 = arith.constant dense<0.000000e+00> : vector<16x32xf32>
    %41 = tpu.matmul %38, %40, %cst_52 {dimension_numbers = #tpu.dot_dimension_numbers<[1], [0], [0], [1], [0, 0, 1, 1], [], []>} : vector<16x128xbf16>, vector<128x32xbf16>, vector<16x32xf32> -> vector<16x32xf32>
    %42 = arith.addf %36, %41 : vector<16x32xf32>
    %cst_53 = arith.constant dense<0.000000e+00> : vector<32xf32>
    %43 = vector.multi_reduction <add>, %42, %cst_53 [0] : vector<16x32xf32> to vector<32xf32>
    %44 = vector.shape_cast %43 : vector<32xf32> to vector<1x32xf32>
    %45 = arith.mulf %42, %42 : vector<16x32xf32>
    %cst_54 = arith.constant dense<0.000000e+00> : vector<32xf32>
    %46 = vector.multi_reduction <add>, %45, %cst_54 [0] : vector<16x32xf32> to vector<32xf32>
    %47 = vector.shape_cast %46 : vector<32xf32> to vector<1x32xf32>
    %48 = arith.maximumf %18, %42 : vector<16x32xf32>
    %49 = arith.minimumf %18, %42 : vector<16x32xf32>
    %50 = arith.addf %20, %44 : vector<1x32xf32>
    %51 = arith.addf %23, %47 : vector<1x32xf32>
    %cst_55 = arith.constant 0.000000e+00 : f32
    %52 = vector.broadcast %cst_55 : f32 to vector<16x32xf32>
    %c0_56 = arith.constant 0 : index
    %c1_57 = arith.constant 1 : index
    %c0_58 = arith.constant 0 : index
    %c0_59 = arith.constant 0 : index
    %53 = vector.load %arg1[%c0_56, %c1_57, %c0_58, %c0_59] : memref<1x2x20x128xbf16, #tpu.memory_space<vmem>>, vector<1x1x16x128xbf16>
    %54 = vector.shape_cast %53 : vector<1x1x16x128xbf16> to vector<16x128xbf16>
    %c0_60 = arith.constant 0 : index
    %c0_61 = arith.constant 0 : index
    %c0_62 = arith.constant 0 : index
    %c0_63 = arith.constant 0 : index
    %55 = vector.load %arg2[%c0_60, %c0_61, %c0_62, %c0_63] : memref<2x3x128x32xbf16, #tpu.memory_space<vmem>>, vector<1x1x128x32xbf16>
    %56 = vector.shape_cast %55 : vector<1x1x128x32xbf16> to vector<128x32xbf16>
    %cst_64 = arith.constant dense<0.000000e+00> : vector<16x32xf32>
    %57 = tpu.matmul %54, %56, %cst_64 {dimension_numbers = #tpu.dot_dimension_numbers<[1], [0], [0], [1], [0, 0, 1, 1], [], []>} : vector<16x128xbf16>, vector<128x32xbf16>, vector<16x32xf32> -> vector<16x32xf32>
    %58 = arith.addf %52, %57 : vector<16x32xf32>
    %c0_65 = arith.constant 0 : index
    %c0_66 = arith.constant 0 : index
    %c4_67 = arith.constant 4 : index
    %c0_68 = arith.constant 0 : index
    %59 = vector.load %arg1[%c0_65, %c0_66, %c4_67, %c0_68] : memref<1x2x20x128xbf16, #tpu.memory_space<vmem>>, vector<1x1x16x128xbf16>
    %60 = vector.shape_cast %59 : vector<1x1x16x128xbf16> to vector<16x128xbf16>
    %c0_69 = arith.constant 0 : index
    %c1_70 = arith.constant 1 : index
    %c0_71 = arith.constant 0 : index
    %c0_72 = arith.constant 0 : index
    %61 = vector.load %arg2[%c0_69, %c1_70, %c0_71, %c0_72] : memref<2x3x128x32xbf16, #tpu.memory_space<vmem>>, vector<1x1x128x32xbf16>
    %62 = vector.shape_cast %61 : vector<1x1x128x32xbf16> to vector<128x32xbf16>
    %cst_73 = arith.constant dense<0.000000e+00> : vector<16x32xf32>
    %63 = tpu.matmul %60, %62, %cst_73 {dimension_numbers = #tpu.dot_dimension_numbers<[1], [0], [0], [1], [0, 0, 1, 1], [], []>} : vector<16x128xbf16>, vector<128x32xbf16>, vector<16x32xf32> -> vector<16x32xf32>
    %64 = arith.addf %58, %63 : vector<16x32xf32>
    %c0_74 = arith.constant 0 : index
    %c1_75 = arith.constant 1 : index
    %c4_76 = arith.constant 4 : index
    %c0_77 = arith.constant 0 : index
    %65 = vector.load %arg1[%c0_74, %c1_75, %c4_76, %c0_77] : memref<1x2x20x128xbf16, #tpu.memory_space<vmem>>, vector<1x1x16x128xbf16>
    %66 = vector.shape_cast %65 : vector<1x1x16x128xbf16> to vector<16x128xbf16>
    %c0_78 = arith.constant 0 : index
    %c2_79 = arith.constant 2 : index
    %c0_80 = arith.constant 0 : index
    %c0_81 = arith.constant 0 : index
    %67 = vector.load %arg2[%c0_78, %c2_79, %c0_80, %c0_81] : memref<2x3x128x32xbf16, #tpu.memory_space<vmem>>, vector<1x1x128x32xbf16>
    %68 = vector.shape_cast %67 : vector<1x1x128x32xbf16> to vector<128x32xbf16>
    %cst_82 = arith.constant dense<0.000000e+00> : vector<16x32xf32>
    %69 = tpu.matmul %66, %68, %cst_82 {dimension_numbers = #tpu.dot_dimension_numbers<[1], [0], [0], [1], [0, 0, 1, 1], [], []>} : vector<16x128xbf16>, vector<128x32xbf16>, vector<16x32xf32> -> vector<16x32xf32>
    %70 = arith.addf %64, %69 : vector<16x32xf32>
    %cst_83 = arith.constant dense<0.000000e+00> : vector<32xf32>
    %71 = vector.multi_reduction <add>, %70, %cst_83 [0] : vector<16x32xf32> to vector<32xf32>
    %72 = vector.shape_cast %71 : vector<32xf32> to vector<1x32xf32>
    %73 = arith.mulf %70, %70 : vector<16x32xf32>
    %cst_84 = arith.constant dense<0.000000e+00> : vector<32xf32>
    %74 = vector.multi_reduction <add>, %73, %cst_84 [0] : vector<16x32xf32> to vector<32xf32>
    %75 = vector.shape_cast %74 : vector<32xf32> to vector<1x32xf32>
    %76 = arith.maximumf %48, %70 : vector<16x32xf32>
    %77 = arith.minimumf %49, %70 : vector<16x32xf32>
    %78 = arith.addf %50, %72 : vector<1x32xf32>
    %79 = arith.addf %51, %75 : vector<1x32xf32>
    %cst_85 = arith.constant 0.000000e+00 : f32
    %80 = vector.broadcast %cst_85 : f32 to vector<16x32xf32>
    %c0_86 = arith.constant 0 : index
    %c1_87 = arith.constant 1 : index
    %c0_88 = arith.constant 0 : index
    %c0_89 = arith.constant 0 : index
    %81 = vector.load %arg1[%c0_86, %c1_87, %c0_88, %c0_89] : memref<1x2x20x128xbf16, #tpu.memory_space<vmem>>, vector<1x1x16x128xbf16>
    %82 = vector.shape_cast %81 : vector<1x1x16x128xbf16> to vector<16x128xbf16>
    %c1_90 = arith.constant 1 : index
    %c0_91 = arith.constant 0 : index
    %c0_92 = arith.constant 0 : index
    %c0_93 = arith.constant 0 : index
    %83 = vector.load %arg2[%c1_90, %c0_91, %c0_92, %c0_93] : memref<2x3x128x32xbf16, #tpu.memory_space<vmem>>, vector<1x1x128x32xbf16>
    %84 = vector.shape_cast %83 : vector<1x1x128x32xbf16> to vector<128x32xbf16>
    %cst_94 = arith.constant dense<0.000000e+00> : vector<16x32xf32>
    %85 = tpu.matmul %82, %84, %cst_94 {dimension_numbers = #tpu.dot_dimension_numbers<[1], [0], [0], [1], [0, 0, 1, 1], [], []>} : vector<16x128xbf16>, vector<128x32xbf16>, vector<16x32xf32> -> vector<16x32xf32>
    %86 = arith.addf %80, %85 : vector<16x32xf32>
    %c0_95 = arith.constant 0 : index
    %c0_96 = arith.constant 0 : index
    %c4_97 = arith.constant 4 : index
    %c0_98 = arith.constant 0 : index
    %87 = vector.load %arg1[%c0_95, %c0_96, %c4_97, %c0_98] : memref<1x2x20x128xbf16, #tpu.memory_space<vmem>>, vector<1x1x16x128xbf16>
    %88 = vector.shape_cast %87 : vector<1x1x16x128xbf16> to vector<16x128xbf16>
    %c1_99 = arith.constant 1 : index
    %c1_100 = arith.constant 1 : index
    %c0_101 = arith.constant 0 : index
    %c0_102 = arith.constant 0 : index
    %89 = vector.load %arg2[%c1_99, %c1_100, %c0_101, %c0_102] : memref<2x3x128x32xbf16, #tpu.memory_space<vmem>>, vector<1x1x128x32xbf16>
    %90 = vector.shape_cast %89 : vector<1x1x128x32xbf16> to vector<128x32xbf16>
    %cst_103 = arith.constant dense<0.000000e+00> : vector<16x32xf32>
    %91 = tpu.matmul %88, %90, %cst_103 {dimension_numbers = #tpu.dot_dimension_numbers<[1], [0], [0], [1], [0, 0, 1, 1], [], []>} : vector<16x128xbf16>, vector<128x32xbf16>, vector<16x32xf32> -> vector<16x32xf32>
    %92 = arith.addf %86, %91 : vector<16x32xf32>
    %c0_104 = arith.constant 0 : index
    %c1_105 = arith.constant 1 : index
    %c4_106 = arith.constant 4 : index
    %c0_107 = arith.constant 0 : index
    %93 = vector.load %arg1[%c0_104, %c1_105, %c4_106, %c0_107] : memref<1x2x20x128xbf16, #tpu.memory_space<vmem>>, vector<1x1x16x128xbf16>
    %94 = vector.shape_cast %93 : vector<1x1x16x128xbf16> to vector<16x128xbf16>
    %c1_108 = arith.constant 1 : index
    %c2_109 = arith.constant 2 : index
    %c0_110 = arith.constant 0 : index
    %c0_111 = arith.constant 0 : index
    %95 = vector.load %arg2[%c1_108, %c2_109, %c0_110, %c0_111] : memref<2x3x128x32xbf16, #tpu.memory_space<vmem>>, vector<1x1x128x32xbf16>
    %96 = vector.shape_cast %95 : vector<1x1x128x32xbf16> to vector<128x32xbf16>
    %cst_112 = arith.constant dense<0.000000e+00> : vector<16x32xf32>
    %97 = tpu.matmul %94, %96, %cst_112 {dimension_numbers = #tpu.dot_dimension_numbers<[1], [0], [0], [1], [0, 0, 1, 1], [], []>} : vector<16x128xbf16>, vector<128x32xbf16>, vector<16x32xf32> -> vector<16x32xf32>
    %98 = arith.addf %92, %97 : vector<16x32xf32>
    %cst_113 = arith.constant dense<0.000000e+00> : vector<32xf32>
    %99 = vector.multi_reduction <add>, %98, %cst_113 [0] : vector<16x32xf32> to vector<32xf32>
    %100 = vector.shape_cast %99 : vector<32xf32> to vector<1x32xf32>
    %101 = arith.mulf %98, %98 : vector<16x32xf32>
    %cst_114 = arith.constant dense<0.000000e+00> : vector<32xf32>
    %102 = vector.multi_reduction <add>, %101, %cst_114 [0] : vector<16x32xf32> to vector<32xf32>
    %103 = vector.shape_cast %102 : vector<32xf32> to vector<1x32xf32>
    %104 = arith.maximumf %76, %98 : vector<16x32xf32>
    %105 = arith.minimumf %77, %98 : vector<16x32xf32>
    %106 = arith.addf %78, %100 : vector<1x32xf32>
    %107 = arith.addf %79, %103 : vector<1x32xf32>
    %108 = tpu.concatenate %104, %105 in 1 : vector<16x32xf32>, vector<16x32xf32> -> vector<16x64xf32>
    %109 = arith.truncf %108 : vector<16x64xf32> to vector<16x64xbf16>
    %c0_115 = arith.constant 0 : index
    %c0_116 = arith.constant 0 : index
    %c0_117 = arith.constant 0 : index
    %110 = vector.load %arg3[%c0_115, %c0_116, %c0_117] : memref<1x16x64xbf16, #tpu.memory_space<vmem>>, vector<1x16x64xbf16>
    %111 = vector.shape_cast %110 : vector<1x16x64xbf16> to vector<16x64xbf16>
    %112 = vector.shape_cast %109 : vector<16x64xbf16> to vector<1x16x64xbf16>
    tpu.vector_store %arg3[%c0_115, %c0_116, %c0_117], %112 {strides = array<i32>} : memref<1x16x64xbf16, #tpu.memory_space<vmem>>, vector<1x16x64xbf16>,
    %cst_118 = arith.constant 0.000000e+00 : f32
    %113 = vector.broadcast %cst_118 : f32 to vector<6x32xf32>
    %114 = tpu.concatenate %106, %107, %113 in 0 : vector<1x32xf32>, vector<1x32xf32>, vector<6x32xf32> -> vector<8x32xf32>
    %c0_119 = arith.constant 0 : index
    %c0_120 = arith.constant 0 : index
    %c0_121 = arith.constant 0 : index
    %115 = vector.load %arg4[%c0_119, %c0_120, %c0_121] : memref<1x8x32xf32, #tpu.memory_space<vmem>>, vector<1x8x32xf32>
    %116 = vector.shape_cast %115 : vector<1x8x32xf32> to vector<8x32xf32>
    %117 = vector.shape_cast %114 : vector<8x32xf32> to vector<1x8x32xf32>
    tpu.vector_store %arg4[%c0_119, %c0_120, %c0_121], %117 {strides = array<i32>} : memref<1x8x32xf32, #tpu.memory_space<vmem>>, vector<1x8x32xf32>,
    return
  }
  func.func @transform_0(%arg0: i32) -> (i32, i32, i32, i32) {
    %c0_i32 = arith.constant 0 : i32
    %c0_i32_0 = arith.constant 0 : i32
    %c0_i32_1 = arith.constant 0 : i32
    %c0_i32_2 = arith.constant 0 : i32
    return %arg0, %c0_i32, %c0_i32_0, %c0_i32_1 : i32, i32, i32, i32
  }
  func.func @transform_1(%arg0: i32) -> (i32, i32, i32, i32) {
    %c0_i32 = arith.constant 0 : i32
    %c0_i32_0 = arith.constant 0 : i32
    %c0_i32_1 = arith.constant 0 : i32
    %c0_i32_2 = arith.constant 0 : i32
    %c0_i32_3 = arith.constant 0 : i32
    return %c0_i32, %c0_i32_0, %c0_i32_1, %c0_i32_2 : i32, i32, i32, i32
  }
  func.func @transform_2(%arg0: i32) -> (i32, i32, i32) {
    %c0_i32 = arith.constant 0 : i32
    %c0_i32_0 = arith.constant 0 : i32
    %c0_i32_1 = arith.constant 0 : i32
    return %arg0, %c0_i32, %c0_i32_0 : i32, i32, i32
  }
  func.func @transform_3(%arg0: i32) -> (i32, i32, i32) {
    %c0_i32 = arith.constant 0 : i32
    %c0_i32_0 = arith.constant 0 : i32
    %c0_i32_1 = arith.constant 0 : i32
    return %arg0, %c0_i32, %c0_i32_0 : i32, i32, i32
  }
}

module attributes {stable_mosaic.version = 11 : i64} {
  func.func @conv_pool_stats_kernel(%arg0: i32, %arg1: memref<1x2x6x128xbf16, #tpu.memory_space<vmem>>, %arg2: memref<2x3x128x32xbf16, #tpu.memory_space<vmem>>, %arg3: memref<1x4x64xbf16, #tpu.memory_space<vmem>>, %arg4: memref<1x8x32xf32, #tpu.memory_space<vmem>>) attributes {dimension_semantics = [#tpu.dimension_semantics<parallel>], iteration_bounds = array<i64: 2>, scalar_prefetch = 0 : i64, scratch_operands = 0 : i64, tpu.core_type = #tpu.core_type<tc>, window_params = [{transform_indices = @transform_0, window_bounds = array<i64: 1, 2, 6, 128>}, {pipeline_mode = #tpu.pipeline_mode<synchronous>, transform_indices = @transform_1, window_bounds = array<i64: 2, 3, 128, 32>}, {transform_indices = @transform_2, window_bounds = array<i64: 1, 4, 64>}, {transform_indices = @transform_3, window_bounds = array<i64: 1, 8, 32>}]} {
    %cst = arith.constant 0.000000e+00 : f32
    %0 = vector.broadcast %cst : f32 to vector<4x32xf32>
    %c0 = arith.constant 0 : index
    %c0_0 = arith.constant 0 : index
    %c0_1 = arith.constant 0 : index
    %c0_2 = arith.constant 0 : index
    %1 = vector.load %arg1[%c0, %c0_0, %c0_1, %c0_2] : memref<1x2x6x128xbf16, #tpu.memory_space<vmem>>, vector<1x1x4x128xbf16>
    %2 = vector.shape_cast %1 : vector<1x1x4x128xbf16> to vector<4x128xbf16>
    %c0_3 = arith.constant 0 : index
    %c0_4 = arith.constant 0 : index
    %c0_5 = arith.constant 0 : index
    %c0_6 = arith.constant 0 : index
    %3 = vector.load %arg2[%c0_3, %c0_4, %c0_5, %c0_6] : memref<2x3x128x32xbf16, #tpu.memory_space<vmem>>, vector<1x1x128x32xbf16>
    %4 = vector.shape_cast %3 : vector<1x1x128x32xbf16> to vector<128x32xbf16>
    %cst_7 = arith.constant dense<0.000000e+00> : vector<4x32xf32>
    %5 = tpu.matmul %2, %4, %cst_7 {dimension_numbers = #tpu.dot_dimension_numbers<[1], [0], [0], [1], [0, 0, 1, 1], [], []>} : vector<4x128xbf16>, vector<128x32xbf16>, vector<4x32xf32> -> vector<4x32xf32>
    %6 = arith.addf %0, %5 : vector<4x32xf32>
    %c0_8 = arith.constant 0 : index
    %c1 = arith.constant 1 : index
    %c0_9 = arith.constant 0 : index
    %c0_10 = arith.constant 0 : index
    %7 = vector.load %arg1[%c0_8, %c1, %c0_9, %c0_10] : memref<1x2x6x128xbf16, #tpu.memory_space<vmem>>, vector<1x1x4x128xbf16>
    %8 = vector.shape_cast %7 : vector<1x1x4x128xbf16> to vector<4x128xbf16>
    %c0_11 = arith.constant 0 : index
    %c1_12 = arith.constant 1 : index
    %c0_13 = arith.constant 0 : index
    %c0_14 = arith.constant 0 : index
    %9 = vector.load %arg2[%c0_11, %c1_12, %c0_13, %c0_14] : memref<2x3x128x32xbf16, #tpu.memory_space<vmem>>, vector<1x1x128x32xbf16>
    %10 = vector.shape_cast %9 : vector<1x1x128x32xbf16> to vector<128x32xbf16>
    %cst_15 = arith.constant dense<0.000000e+00> : vector<4x32xf32>
    %11 = tpu.matmul %8, %10, %cst_15 {dimension_numbers = #tpu.dot_dimension_numbers<[1], [0], [0], [1], [0, 0, 1, 1], [], []>} : vector<4x128xbf16>, vector<128x32xbf16>, vector<4x32xf32> -> vector<4x32xf32>
    %12 = arith.addf %6, %11 : vector<4x32xf32>
    %c0_16 = arith.constant 0 : index
    %c0_17 = arith.constant 0 : index
    %c2 = arith.constant 2 : index
    %c0_18 = arith.constant 0 : index
    %13 = vector.load %arg1[%c0_16, %c0_17, %c2, %c0_18] : memref<1x2x6x128xbf16, #tpu.memory_space<vmem>>, vector<1x1x4x128xbf16>
    %14 = vector.shape_cast %13 : vector<1x1x4x128xbf16> to vector<4x128xbf16>
    %c0_19 = arith.constant 0 : index
    %c2_20 = arith.constant 2 : index
    %c0_21 = arith.constant 0 : index
    %c0_22 = arith.constant 0 : index
    %15 = vector.load %arg2[%c0_19, %c2_20, %c0_21, %c0_22] : memref<2x3x128x32xbf16, #tpu.memory_space<vmem>>, vector<1x1x128x32xbf16>
    %16 = vector.shape_cast %15 : vector<1x1x128x32xbf16> to vector<128x32xbf16>
    %cst_23 = arith.constant dense<0.000000e+00> : vector<4x32xf32>
    %17 = tpu.matmul %14, %16, %cst_23 {dimension_numbers = #tpu.dot_dimension_numbers<[1], [0], [0], [1], [0, 0, 1, 1], [], []>} : vector<4x128xbf16>, vector<128x32xbf16>, vector<4x32xf32> -> vector<4x32xf32>
    %18 = arith.addf %12, %17 : vector<4x32xf32>
    %cst_24 = arith.constant dense<0.000000e+00> : vector<32xf32>
    %19 = vector.multi_reduction <add>, %18, %cst_24 [0] : vector<4x32xf32> to vector<32xf32>
    %20 = vector.shape_cast %19 : vector<32xf32> to vector<1x32xf32>
    %21 = arith.mulf %18, %18 : vector<4x32xf32>
    %cst_25 = arith.constant dense<0.000000e+00> : vector<32xf32>
    %22 = vector.multi_reduction <add>, %21, %cst_25 [0] : vector<4x32xf32> to vector<32xf32>
    %23 = vector.shape_cast %22 : vector<32xf32> to vector<1x32xf32>
    %cst_26 = arith.constant 0.000000e+00 : f32
    %24 = vector.broadcast %cst_26 : f32 to vector<4x32xf32>
    %c0_27 = arith.constant 0 : index
    %c0_28 = arith.constant 0 : index
    %c0_29 = arith.constant 0 : index
    %c0_30 = arith.constant 0 : index
    %25 = vector.load %arg1[%c0_27, %c0_28, %c0_29, %c0_30] : memref<1x2x6x128xbf16, #tpu.memory_space<vmem>>, vector<1x1x4x128xbf16>
    %26 = vector.shape_cast %25 : vector<1x1x4x128xbf16> to vector<4x128xbf16>
    %c1_31 = arith.constant 1 : index
    %c0_32 = arith.constant 0 : index
    %c0_33 = arith.constant 0 : index
    %c0_34 = arith.constant 0 : index
    %27 = vector.load %arg2[%c1_31, %c0_32, %c0_33, %c0_34] : memref<2x3x128x32xbf16, #tpu.memory_space<vmem>>, vector<1x1x128x32xbf16>
    %28 = vector.shape_cast %27 : vector<1x1x128x32xbf16> to vector<128x32xbf16>
    %cst_35 = arith.constant dense<0.000000e+00> : vector<4x32xf32>
    %29 = tpu.matmul %26, %28, %cst_35 {dimension_numbers = #tpu.dot_dimension_numbers<[1], [0], [0], [1], [0, 0, 1, 1], [], []>} : vector<4x128xbf16>, vector<128x32xbf16>, vector<4x32xf32> -> vector<4x32xf32>
    %30 = arith.addf %24, %29 : vector<4x32xf32>
    %c0_36 = arith.constant 0 : index
    %c1_37 = arith.constant 1 : index
    %c0_38 = arith.constant 0 : index
    %c0_39 = arith.constant 0 : index
    %31 = vector.load %arg1[%c0_36, %c1_37, %c0_38, %c0_39] : memref<1x2x6x128xbf16, #tpu.memory_space<vmem>>, vector<1x1x4x128xbf16>
    %32 = vector.shape_cast %31 : vector<1x1x4x128xbf16> to vector<4x128xbf16>
    %c1_40 = arith.constant 1 : index
    %c1_41 = arith.constant 1 : index
    %c0_42 = arith.constant 0 : index
    %c0_43 = arith.constant 0 : index
    %33 = vector.load %arg2[%c1_40, %c1_41, %c0_42, %c0_43] : memref<2x3x128x32xbf16, #tpu.memory_space<vmem>>, vector<1x1x128x32xbf16>
    %34 = vector.shape_cast %33 : vector<1x1x128x32xbf16> to vector<128x32xbf16>
    %cst_44 = arith.constant dense<0.000000e+00> : vector<4x32xf32>
    %35 = tpu.matmul %32, %34, %cst_44 {dimension_numbers = #tpu.dot_dimension_numbers<[1], [0], [0], [1], [0, 0, 1, 1], [], []>} : vector<4x128xbf16>, vector<128x32xbf16>, vector<4x32xf32> -> vector<4x32xf32>
    %36 = arith.addf %30, %35 : vector<4x32xf32>
    %c0_45 = arith.constant 0 : index
    %c0_46 = arith.constant 0 : index
    %c2_47 = arith.constant 2 : index
    %c0_48 = arith.constant 0 : index
    %37 = vector.load %arg1[%c0_45, %c0_46, %c2_47, %c0_48] : memref<1x2x6x128xbf16, #tpu.memory_space<vmem>>, vector<1x1x4x128xbf16>
    %38 = vector.shape_cast %37 : vector<1x1x4x128xbf16> to vector<4x128xbf16>
    %c1_49 = arith.constant 1 : index
    %c2_50 = arith.constant 2 : index
    %c0_51 = arith.constant 0 : index
    %c0_52 = arith.constant 0 : index
    %39 = vector.load %arg2[%c1_49, %c2_50, %c0_51, %c0_52] : memref<2x3x128x32xbf16, #tpu.memory_space<vmem>>, vector<1x1x128x32xbf16>
    %40 = vector.shape_cast %39 : vector<1x1x128x32xbf16> to vector<128x32xbf16>
    %cst_53 = arith.constant dense<0.000000e+00> : vector<4x32xf32>
    %41 = tpu.matmul %38, %40, %cst_53 {dimension_numbers = #tpu.dot_dimension_numbers<[1], [0], [0], [1], [0, 0, 1, 1], [], []>} : vector<4x128xbf16>, vector<128x32xbf16>, vector<4x32xf32> -> vector<4x32xf32>
    %42 = arith.addf %36, %41 : vector<4x32xf32>
    %cst_54 = arith.constant dense<0.000000e+00> : vector<32xf32>
    %43 = vector.multi_reduction <add>, %42, %cst_54 [0] : vector<4x32xf32> to vector<32xf32>
    %44 = vector.shape_cast %43 : vector<32xf32> to vector<1x32xf32>
    %45 = arith.mulf %42, %42 : vector<4x32xf32>
    %cst_55 = arith.constant dense<0.000000e+00> : vector<32xf32>
    %46 = vector.multi_reduction <add>, %45, %cst_55 [0] : vector<4x32xf32> to vector<32xf32>
    %47 = vector.shape_cast %46 : vector<32xf32> to vector<1x32xf32>
    %48 = arith.maximumf %18, %42 : vector<4x32xf32>
    %49 = arith.minimumf %18, %42 : vector<4x32xf32>
    %50 = arith.addf %20, %44 : vector<1x32xf32>
    %51 = arith.addf %23, %47 : vector<1x32xf32>
    %cst_56 = arith.constant 0.000000e+00 : f32
    %52 = vector.broadcast %cst_56 : f32 to vector<4x32xf32>
    %c0_57 = arith.constant 0 : index
    %c1_58 = arith.constant 1 : index
    %c0_59 = arith.constant 0 : index
    %c0_60 = arith.constant 0 : index
    %53 = vector.load %arg1[%c0_57, %c1_58, %c0_59, %c0_60] : memref<1x2x6x128xbf16, #tpu.memory_space<vmem>>, vector<1x1x4x128xbf16>
    %54 = vector.shape_cast %53 : vector<1x1x4x128xbf16> to vector<4x128xbf16>
    %c0_61 = arith.constant 0 : index
    %c0_62 = arith.constant 0 : index
    %c0_63 = arith.constant 0 : index
    %c0_64 = arith.constant 0 : index
    %55 = vector.load %arg2[%c0_61, %c0_62, %c0_63, %c0_64] : memref<2x3x128x32xbf16, #tpu.memory_space<vmem>>, vector<1x1x128x32xbf16>
    %56 = vector.shape_cast %55 : vector<1x1x128x32xbf16> to vector<128x32xbf16>
    %cst_65 = arith.constant dense<0.000000e+00> : vector<4x32xf32>
    %57 = tpu.matmul %54, %56, %cst_65 {dimension_numbers = #tpu.dot_dimension_numbers<[1], [0], [0], [1], [0, 0, 1, 1], [], []>} : vector<4x128xbf16>, vector<128x32xbf16>, vector<4x32xf32> -> vector<4x32xf32>
    %58 = arith.addf %52, %57 : vector<4x32xf32>
    %c0_66 = arith.constant 0 : index
    %c0_67 = arith.constant 0 : index
    %c2_68 = arith.constant 2 : index
    %c0_69 = arith.constant 0 : index
    %59 = vector.load %arg1[%c0_66, %c0_67, %c2_68, %c0_69] : memref<1x2x6x128xbf16, #tpu.memory_space<vmem>>, vector<1x1x4x128xbf16>
    %60 = vector.shape_cast %59 : vector<1x1x4x128xbf16> to vector<4x128xbf16>
    %c0_70 = arith.constant 0 : index
    %c1_71 = arith.constant 1 : index
    %c0_72 = arith.constant 0 : index
    %c0_73 = arith.constant 0 : index
    %61 = vector.load %arg2[%c0_70, %c1_71, %c0_72, %c0_73] : memref<2x3x128x32xbf16, #tpu.memory_space<vmem>>, vector<1x1x128x32xbf16>
    %62 = vector.shape_cast %61 : vector<1x1x128x32xbf16> to vector<128x32xbf16>
    %cst_74 = arith.constant dense<0.000000e+00> : vector<4x32xf32>
    %63 = tpu.matmul %60, %62, %cst_74 {dimension_numbers = #tpu.dot_dimension_numbers<[1], [0], [0], [1], [0, 0, 1, 1], [], []>} : vector<4x128xbf16>, vector<128x32xbf16>, vector<4x32xf32> -> vector<4x32xf32>
    %64 = arith.addf %58, %63 : vector<4x32xf32>
    %c0_75 = arith.constant 0 : index
    %c1_76 = arith.constant 1 : index
    %c2_77 = arith.constant 2 : index
    %c0_78 = arith.constant 0 : index
    %65 = vector.load %arg1[%c0_75, %c1_76, %c2_77, %c0_78] : memref<1x2x6x128xbf16, #tpu.memory_space<vmem>>, vector<1x1x4x128xbf16>
    %66 = vector.shape_cast %65 : vector<1x1x4x128xbf16> to vector<4x128xbf16>
    %c0_79 = arith.constant 0 : index
    %c2_80 = arith.constant 2 : index
    %c0_81 = arith.constant 0 : index
    %c0_82 = arith.constant 0 : index
    %67 = vector.load %arg2[%c0_79, %c2_80, %c0_81, %c0_82] : memref<2x3x128x32xbf16, #tpu.memory_space<vmem>>, vector<1x1x128x32xbf16>
    %68 = vector.shape_cast %67 : vector<1x1x128x32xbf16> to vector<128x32xbf16>
    %cst_83 = arith.constant dense<0.000000e+00> : vector<4x32xf32>
    %69 = tpu.matmul %66, %68, %cst_83 {dimension_numbers = #tpu.dot_dimension_numbers<[1], [0], [0], [1], [0, 0, 1, 1], [], []>} : vector<4x128xbf16>, vector<128x32xbf16>, vector<4x32xf32> -> vector<4x32xf32>
    %70 = arith.addf %64, %69 : vector<4x32xf32>
    %cst_84 = arith.constant dense<0.000000e+00> : vector<32xf32>
    %71 = vector.multi_reduction <add>, %70, %cst_84 [0] : vector<4x32xf32> to vector<32xf32>
    %72 = vector.shape_cast %71 : vector<32xf32> to vector<1x32xf32>
    %73 = arith.mulf %70, %70 : vector<4x32xf32>
    %cst_85 = arith.constant dense<0.000000e+00> : vector<32xf32>
    %74 = vector.multi_reduction <add>, %73, %cst_85 [0] : vector<4x32xf32> to vector<32xf32>
    %75 = vector.shape_cast %74 : vector<32xf32> to vector<1x32xf32>
    %76 = arith.maximumf %48, %70 : vector<4x32xf32>
    %77 = arith.minimumf %49, %70 : vector<4x32xf32>
    %78 = arith.addf %50, %72 : vector<1x32xf32>
    %79 = arith.addf %51, %75 : vector<1x32xf32>
    %cst_86 = arith.constant 0.000000e+00 : f32
    %80 = vector.broadcast %cst_86 : f32 to vector<4x32xf32>
    %c0_87 = arith.constant 0 : index
    %c1_88 = arith.constant 1 : index
    %c0_89 = arith.constant 0 : index
    %c0_90 = arith.constant 0 : index
    %81 = vector.load %arg1[%c0_87, %c1_88, %c0_89, %c0_90] : memref<1x2x6x128xbf16, #tpu.memory_space<vmem>>, vector<1x1x4x128xbf16>
    %82 = vector.shape_cast %81 : vector<1x1x4x128xbf16> to vector<4x128xbf16>
    %c1_91 = arith.constant 1 : index
    %c0_92 = arith.constant 0 : index
    %c0_93 = arith.constant 0 : index
    %c0_94 = arith.constant 0 : index
    %83 = vector.load %arg2[%c1_91, %c0_92, %c0_93, %c0_94] : memref<2x3x128x32xbf16, #tpu.memory_space<vmem>>, vector<1x1x128x32xbf16>
    %84 = vector.shape_cast %83 : vector<1x1x128x32xbf16> to vector<128x32xbf16>
    %cst_95 = arith.constant dense<0.000000e+00> : vector<4x32xf32>
    %85 = tpu.matmul %82, %84, %cst_95 {dimension_numbers = #tpu.dot_dimension_numbers<[1], [0], [0], [1], [0, 0, 1, 1], [], []>} : vector<4x128xbf16>, vector<128x32xbf16>, vector<4x32xf32> -> vector<4x32xf32>
    %86 = arith.addf %80, %85 : vector<4x32xf32>
    %c0_96 = arith.constant 0 : index
    %c0_97 = arith.constant 0 : index
    %c2_98 = arith.constant 2 : index
    %c0_99 = arith.constant 0 : index
    %87 = vector.load %arg1[%c0_96, %c0_97, %c2_98, %c0_99] : memref<1x2x6x128xbf16, #tpu.memory_space<vmem>>, vector<1x1x4x128xbf16>
    %88 = vector.shape_cast %87 : vector<1x1x4x128xbf16> to vector<4x128xbf16>
    %c1_100 = arith.constant 1 : index
    %c1_101 = arith.constant 1 : index
    %c0_102 = arith.constant 0 : index
    %c0_103 = arith.constant 0 : index
    %89 = vector.load %arg2[%c1_100, %c1_101, %c0_102, %c0_103] : memref<2x3x128x32xbf16, #tpu.memory_space<vmem>>, vector<1x1x128x32xbf16>
    %90 = vector.shape_cast %89 : vector<1x1x128x32xbf16> to vector<128x32xbf16>
    %cst_104 = arith.constant dense<0.000000e+00> : vector<4x32xf32>
    %91 = tpu.matmul %88, %90, %cst_104 {dimension_numbers = #tpu.dot_dimension_numbers<[1], [0], [0], [1], [0, 0, 1, 1], [], []>} : vector<4x128xbf16>, vector<128x32xbf16>, vector<4x32xf32> -> vector<4x32xf32>
    %92 = arith.addf %86, %91 : vector<4x32xf32>
    %c0_105 = arith.constant 0 : index
    %c1_106 = arith.constant 1 : index
    %c2_107 = arith.constant 2 : index
    %c0_108 = arith.constant 0 : index
    %93 = vector.load %arg1[%c0_105, %c1_106, %c2_107, %c0_108] : memref<1x2x6x128xbf16, #tpu.memory_space<vmem>>, vector<1x1x4x128xbf16>
    %94 = vector.shape_cast %93 : vector<1x1x4x128xbf16> to vector<4x128xbf16>
    %c1_109 = arith.constant 1 : index
    %c2_110 = arith.constant 2 : index
    %c0_111 = arith.constant 0 : index
    %c0_112 = arith.constant 0 : index
    %95 = vector.load %arg2[%c1_109, %c2_110, %c0_111, %c0_112] : memref<2x3x128x32xbf16, #tpu.memory_space<vmem>>, vector<1x1x128x32xbf16>
    %96 = vector.shape_cast %95 : vector<1x1x128x32xbf16> to vector<128x32xbf16>
    %cst_113 = arith.constant dense<0.000000e+00> : vector<4x32xf32>
    %97 = tpu.matmul %94, %96, %cst_113 {dimension_numbers = #tpu.dot_dimension_numbers<[1], [0], [0], [1], [0, 0, 1, 1], [], []>} : vector<4x128xbf16>, vector<128x32xbf16>, vector<4x32xf32> -> vector<4x32xf32>
    %98 = arith.addf %92, %97 : vector<4x32xf32>
    %cst_114 = arith.constant dense<0.000000e+00> : vector<32xf32>
    %99 = vector.multi_reduction <add>, %98, %cst_114 [0] : vector<4x32xf32> to vector<32xf32>
    %100 = vector.shape_cast %99 : vector<32xf32> to vector<1x32xf32>
    %101 = arith.mulf %98, %98 : vector<4x32xf32>
    %cst_115 = arith.constant dense<0.000000e+00> : vector<32xf32>
    %102 = vector.multi_reduction <add>, %101, %cst_115 [0] : vector<4x32xf32> to vector<32xf32>
    %103 = vector.shape_cast %102 : vector<32xf32> to vector<1x32xf32>
    %104 = arith.maximumf %76, %98 : vector<4x32xf32>
    %105 = arith.minimumf %77, %98 : vector<4x32xf32>
    %106 = arith.addf %78, %100 : vector<1x32xf32>
    %107 = arith.addf %79, %103 : vector<1x32xf32>
    %108 = tpu.concatenate %104, %105 in 1 : vector<4x32xf32>, vector<4x32xf32> -> vector<4x64xf32>
    %109 = arith.truncf %108 : vector<4x64xf32> to vector<4x64xbf16>
    %c0_116 = arith.constant 0 : index
    %c0_117 = arith.constant 0 : index
    %c0_118 = arith.constant 0 : index
    %110 = vector.load %arg3[%c0_116, %c0_117, %c0_118] : memref<1x4x64xbf16, #tpu.memory_space<vmem>>, vector<1x4x64xbf16>
    %111 = vector.shape_cast %110 : vector<1x4x64xbf16> to vector<4x64xbf16>
    %112 = vector.shape_cast %109 : vector<4x64xbf16> to vector<1x4x64xbf16>
    tpu.vector_store %arg3[%c0_116, %c0_117, %c0_118], %112 {strides = array<i32>} : memref<1x4x64xbf16, #tpu.memory_space<vmem>>, vector<1x4x64xbf16>,
    %cst_119 = arith.constant 0.000000e+00 : f32
    %113 = vector.broadcast %cst_119 : f32 to vector<6x32xf32>
    %114 = tpu.concatenate %106, %107, %113 in 0 : vector<1x32xf32>, vector<1x32xf32>, vector<6x32xf32> -> vector<8x32xf32>
    %c0_120 = arith.constant 0 : index
    %c0_121 = arith.constant 0 : index
    %c0_122 = arith.constant 0 : index
    %115 = vector.load %arg4[%c0_120, %c0_121, %c0_122] : memref<1x8x32xf32, #tpu.memory_space<vmem>>, vector<1x8x32xf32>
    %116 = vector.shape_cast %115 : vector<1x8x32xf32> to vector<8x32xf32>
    %117 = vector.shape_cast %114 : vector<8x32xf32> to vector<1x8x32xf32>
    tpu.vector_store %arg4[%c0_120, %c0_121, %c0_122], %117 {strides = array<i32>} : memref<1x8x32xf32, #tpu.memory_space<vmem>>, vector<1x8x32xf32>,
    return
  }
  func.func @transform_0(%arg0: i32) -> (i32, i32, i32, i32) {
    %c0_i32 = arith.constant 0 : i32
    %c0_i32_0 = arith.constant 0 : i32
    %c0_i32_1 = arith.constant 0 : i32
    %c0_i32_2 = arith.constant 0 : i32
    return %arg0, %c0_i32, %c0_i32_0, %c0_i32_1 : i32, i32, i32, i32
  }
  func.func @transform_1(%arg0: i32) -> (i32, i32, i32, i32) {
    %c0_i32 = arith.constant 0 : i32
    %c0_i32_0 = arith.constant 0 : i32
    %c0_i32_1 = arith.constant 0 : i32
    %c0_i32_2 = arith.constant 0 : i32
    %c0_i32_3 = arith.constant 0 : i32
    return %c0_i32, %c0_i32_0, %c0_i32_1, %c0_i32_2 : i32, i32, i32, i32
  }
  func.func @transform_2(%arg0: i32) -> (i32, i32, i32) {
    %c0_i32 = arith.constant 0 : i32
    %c0_i32_0 = arith.constant 0 : i32
    %c0_i32_1 = arith.constant 0 : i32
    return %arg0, %c0_i32, %c0_i32_0 : i32, i32, i32
  }
  func.func @transform_3(%arg0: i32) -> (i32, i32, i32) {
    %c0_i32 = arith.constant 0 : i32
    %c0_i32_0 = arith.constant 0 : i32
    %c0_i32_1 = arith.constant 0 : i32
    return %arg0, %c0_i32, %c0_i32_0 : i32, i32, i32
  }
}

module attributes {stable_mosaic.version = 11 : i64} {
  func.func @bn_relu_kernel(%arg0: i32, %arg1: memref<1x4x64xbf16, #tpu.memory_space<vmem>>, %arg2: memref<1x32xf32, #tpu.memory_space<vmem>>, %arg3: memref<1x32xf32, #tpu.memory_space<vmem>>, %arg4: memref<1x4x32xbf16, #tpu.memory_space<vmem>>) attributes {dimension_semantics = [#tpu.dimension_semantics<parallel>], iteration_bounds = array<i64: 2>, scalar_prefetch = 0 : i64, scratch_operands = 0 : i64, tpu.core_type = #tpu.core_type<tc>, window_params = [{transform_indices = @transform_0, window_bounds = array<i64: 1, 4, 64>}, {pipeline_mode = #tpu.pipeline_mode<synchronous>, transform_indices = @transform_1, window_bounds = array<i64: 1, 32>}, {pipeline_mode = #tpu.pipeline_mode<synchronous>, transform_indices = @transform_2, window_bounds = array<i64: 1, 32>}, {transform_indices = @transform_3, window_bounds = array<i64: 1, 4, 32>}]} {
    %c0 = arith.constant 0 : index
    %c0_0 = arith.constant 0 : index
    %c0_1 = arith.constant 0 : index
    %0 = vector.load %arg1[%c0, %c0_0, %c0_1] : memref<1x4x64xbf16, #tpu.memory_space<vmem>>, vector<1x4x64xbf16>
    %1 = vector.shape_cast %0 : vector<1x4x64xbf16> to vector<4x64xbf16>
    %2 = arith.extf %1 : vector<4x64xbf16> to vector<4x64xf32>
    %3 = vector.extract_strided_slice %2 {offsets = [0, 0], sizes = [4, 32], strides = [1, 1]} : vector<4x64xf32> to vector<4x32xf32>
    %4 = vector.extract_strided_slice %2 {offsets = [0, 32], sizes = [4, 32], strides = [1, 1]} : vector<4x64xf32> to vector<4x32xf32>
    %c0_2 = arith.constant 0 : index
    %c0_3 = arith.constant 0 : index
    %5 = vector.load %arg2[%c0_2, %c0_3] : memref<1x32xf32, #tpu.memory_space<vmem>>, vector<1x32xf32>
    %c0_4 = arith.constant 0 : index
    %c0_5 = arith.constant 0 : index
    %6 = vector.load %arg3[%c0_4, %c0_5] : memref<1x32xf32, #tpu.memory_space<vmem>>, vector<1x32xf32>
    %cst = arith.constant 0.000000e+00 : f32
    %7 = vector.broadcast %cst : f32 to vector<1x32xf32>
    %8 = arith.cmpf oge, %5, %7 : vector<1x32xf32>
    %9 = vector.shape_cast %8 : vector<1x32xi1> to vector<1x32xi1>
    %10 = vector.broadcast %9 : vector<1x32xi1> to vector<4x32xi1>
    %11 = arith.select %10, %3, %4 : vector<4x32xi1>, vector<4x32xf32>
    %12 = vector.broadcast %5 : vector<1x32xf32> to vector<4x32xf32>
    %13 = arith.mulf %11, %12 : vector<4x32xf32>
    %14 = vector.broadcast %6 : vector<1x32xf32> to vector<4x32xf32>
    %15 = arith.addf %13, %14 : vector<4x32xf32>
    %cst_6 = arith.constant 0.000000e+00 : f32
    %16 = vector.broadcast %cst_6 : f32 to vector<4x32xf32>
    %17 = arith.maximumf %15, %16 : vector<4x32xf32>
    %18 = arith.truncf %17 : vector<4x32xf32> to vector<4x32xbf16>
    %c0_7 = arith.constant 0 : index
    %c0_8 = arith.constant 0 : index
    %c0_9 = arith.constant 0 : index
    %19 = vector.load %arg4[%c0_7, %c0_8, %c0_9] : memref<1x4x32xbf16, #tpu.memory_space<vmem>>, vector<1x4x32xbf16>
    %20 = vector.shape_cast %19 : vector<1x4x32xbf16> to vector<4x32xbf16>
    %21 = vector.shape_cast %18 : vector<4x32xbf16> to vector<1x4x32xbf16>
    tpu.vector_store %arg4[%c0_7, %c0_8, %c0_9], %21 {strides = array<i32>} : memref<1x4x32xbf16, #tpu.memory_space<vmem>>, vector<1x4x32xbf16>,
    return
  }
  func.func @transform_0(%arg0: i32) -> (i32, i32, i32) {
    %c0_i32 = arith.constant 0 : i32
    %c0_i32_0 = arith.constant 0 : i32
    %c0_i32_1 = arith.constant 0 : i32
    return %arg0, %c0_i32, %c0_i32_0 : i32, i32, i32
  }
  func.func @transform_1(%arg0: i32) -> (i32, i32) {
    %c0_i32 = arith.constant 0 : i32
    %c0_i32_0 = arith.constant 0 : i32
    %c0_i32_1 = arith.constant 0 : i32
    return %c0_i32, %c0_i32_0 : i32, i32
  }
  func.func @transform_2(%arg0: i32) -> (i32, i32) {
    %c0_i32 = arith.constant 0 : i32
    %c0_i32_0 = arith.constant 0 : i32
    %c0_i32_1 = arith.constant 0 : i32
    return %c0_i32, %c0_i32_0 : i32, i32
  }
  func.func @transform_3(%arg0: i32) -> (i32, i32, i32) {
    %c0_i32 = arith.constant 0 : i32
    %c0_i32_0 = arith.constant 0 : i32
    %c0_i32_1 = arith.constant 0 : i32
    return %arg0, %c0_i32, %c0_i32_0 : i32, i32, i32
  }
}

module attributes {stable_mosaic.version = 11 : i64} {
  func.func @conv_pool_stats_kernel(%arg0: i32, %arg1: memref<1x2x2x128xbf16, #tpu.memory_space<vmem>>, %arg2: memref<2x3x128x32xbf16, #tpu.memory_space<vmem>>, %arg3: memref<1x1x64xbf16, #tpu.memory_space<vmem>>, %arg4: memref<1x8x32xf32, #tpu.memory_space<vmem>>) attributes {dimension_semantics = [#tpu.dimension_semantics<parallel>], iteration_bounds = array<i64: 2>, scalar_prefetch = 0 : i64, scratch_operands = 0 : i64, tpu.core_type = #tpu.core_type<tc>, window_params = [{transform_indices = @transform_0, window_bounds = array<i64: 1, 2, 2, 128>}, {pipeline_mode = #tpu.pipeline_mode<synchronous>, transform_indices = @transform_1, window_bounds = array<i64: 2, 3, 128, 32>}, {transform_indices = @transform_2, window_bounds = array<i64: 1, 1, 64>}, {transform_indices = @transform_3, window_bounds = array<i64: 1, 8, 32>}]} {
    %cst = arith.constant 0.000000e+00 : f32
    %0 = vector.broadcast %cst : f32 to vector<1x32xf32>
    %c0 = arith.constant 0 : index
    %c0_0 = arith.constant 0 : index
    %c0_1 = arith.constant 0 : index
    %c0_2 = arith.constant 0 : index
    %1 = vector.load %arg1[%c0, %c0_0, %c0_1, %c0_2] : memref<1x2x2x128xbf16, #tpu.memory_space<vmem>>, vector<1x1x1x128xbf16>
    %2 = vector.shape_cast %1 : vector<1x1x1x128xbf16> to vector<1x128xbf16>
    %c0_3 = arith.constant 0 : index
    %c0_4 = arith.constant 0 : index
    %c0_5 = arith.constant 0 : index
    %c0_6 = arith.constant 0 : index
    %3 = vector.load %arg2[%c0_3, %c0_4, %c0_5, %c0_6] : memref<2x3x128x32xbf16, #tpu.memory_space<vmem>>, vector<1x1x128x32xbf16>
    %4 = vector.shape_cast %3 : vector<1x1x128x32xbf16> to vector<128x32xbf16>
    %cst_7 = arith.constant dense<0.000000e+00> : vector<1x32xf32>
    %5 = tpu.matmul %2, %4, %cst_7 {dimension_numbers = #tpu.dot_dimension_numbers<[1], [0], [0], [1], [0, 0, 1, 1], [], []>} : vector<1x128xbf16>, vector<128x32xbf16>, vector<1x32xf32> -> vector<1x32xf32>
    %6 = arith.addf %0, %5 : vector<1x32xf32>
    %c0_8 = arith.constant 0 : index
    %c1 = arith.constant 1 : index
    %c0_9 = arith.constant 0 : index
    %c0_10 = arith.constant 0 : index
    %7 = vector.load %arg1[%c0_8, %c1, %c0_9, %c0_10] : memref<1x2x2x128xbf16, #tpu.memory_space<vmem>>, vector<1x1x1x128xbf16>
    %8 = vector.shape_cast %7 : vector<1x1x1x128xbf16> to vector<1x128xbf16>
    %c0_11 = arith.constant 0 : index
    %c1_12 = arith.constant 1 : index
    %c0_13 = arith.constant 0 : index
    %c0_14 = arith.constant 0 : index
    %9 = vector.load %arg2[%c0_11, %c1_12, %c0_13, %c0_14] : memref<2x3x128x32xbf16, #tpu.memory_space<vmem>>, vector<1x1x128x32xbf16>
    %10 = vector.shape_cast %9 : vector<1x1x128x32xbf16> to vector<128x32xbf16>
    %cst_15 = arith.constant dense<0.000000e+00> : vector<1x32xf32>
    %11 = tpu.matmul %8, %10, %cst_15 {dimension_numbers = #tpu.dot_dimension_numbers<[1], [0], [0], [1], [0, 0, 1, 1], [], []>} : vector<1x128xbf16>, vector<128x32xbf16>, vector<1x32xf32> -> vector<1x32xf32>
    %12 = arith.addf %6, %11 : vector<1x32xf32>
    %c0_16 = arith.constant 0 : index
    %c0_17 = arith.constant 0 : index
    %c1_18 = arith.constant 1 : index
    %c0_19 = arith.constant 0 : index
    %13 = vector.load %arg1[%c0_16, %c0_17, %c1_18, %c0_19] : memref<1x2x2x128xbf16, #tpu.memory_space<vmem>>, vector<1x1x1x128xbf16>
    %14 = vector.shape_cast %13 : vector<1x1x1x128xbf16> to vector<1x128xbf16>
    %c0_20 = arith.constant 0 : index
    %c2 = arith.constant 2 : index
    %c0_21 = arith.constant 0 : index
    %c0_22 = arith.constant 0 : index
    %15 = vector.load %arg2[%c0_20, %c2, %c0_21, %c0_22] : memref<2x3x128x32xbf16, #tpu.memory_space<vmem>>, vector<1x1x128x32xbf16>
    %16 = vector.shape_cast %15 : vector<1x1x128x32xbf16> to vector<128x32xbf16>
    %cst_23 = arith.constant dense<0.000000e+00> : vector<1x32xf32>
    %17 = tpu.matmul %14, %16, %cst_23 {dimension_numbers = #tpu.dot_dimension_numbers<[1], [0], [0], [1], [0, 0, 1, 1], [], []>} : vector<1x128xbf16>, vector<128x32xbf16>, vector<1x32xf32> -> vector<1x32xf32>
    %18 = arith.addf %12, %17 : vector<1x32xf32>
    %cst_24 = arith.constant dense<0.000000e+00> : vector<32xf32>
    %19 = vector.multi_reduction <add>, %18, %cst_24 [0] : vector<1x32xf32> to vector<32xf32>
    %20 = vector.shape_cast %19 : vector<32xf32> to vector<1x32xf32>
    %21 = arith.mulf %18, %18 : vector<1x32xf32>
    %cst_25 = arith.constant dense<0.000000e+00> : vector<32xf32>
    %22 = vector.multi_reduction <add>, %21, %cst_25 [0] : vector<1x32xf32> to vector<32xf32>
    %23 = vector.shape_cast %22 : vector<32xf32> to vector<1x32xf32>
    %cst_26 = arith.constant 0.000000e+00 : f32
    %24 = vector.broadcast %cst_26 : f32 to vector<1x32xf32>
    %c0_27 = arith.constant 0 : index
    %c0_28 = arith.constant 0 : index
    %c0_29 = arith.constant 0 : index
    %c0_30 = arith.constant 0 : index
    %25 = vector.load %arg1[%c0_27, %c0_28, %c0_29, %c0_30] : memref<1x2x2x128xbf16, #tpu.memory_space<vmem>>, vector<1x1x1x128xbf16>
    %26 = vector.shape_cast %25 : vector<1x1x1x128xbf16> to vector<1x128xbf16>
    %c1_31 = arith.constant 1 : index
    %c0_32 = arith.constant 0 : index
    %c0_33 = arith.constant 0 : index
    %c0_34 = arith.constant 0 : index
    %27 = vector.load %arg2[%c1_31, %c0_32, %c0_33, %c0_34] : memref<2x3x128x32xbf16, #tpu.memory_space<vmem>>, vector<1x1x128x32xbf16>
    %28 = vector.shape_cast %27 : vector<1x1x128x32xbf16> to vector<128x32xbf16>
    %cst_35 = arith.constant dense<0.000000e+00> : vector<1x32xf32>
    %29 = tpu.matmul %26, %28, %cst_35 {dimension_numbers = #tpu.dot_dimension_numbers<[1], [0], [0], [1], [0, 0, 1, 1], [], []>} : vector<1x128xbf16>, vector<128x32xbf16>, vector<1x32xf32> -> vector<1x32xf32>
    %30 = arith.addf %24, %29 : vector<1x32xf32>
    %c0_36 = arith.constant 0 : index
    %c1_37 = arith.constant 1 : index
    %c0_38 = arith.constant 0 : index
    %c0_39 = arith.constant 0 : index
    %31 = vector.load %arg1[%c0_36, %c1_37, %c0_38, %c0_39] : memref<1x2x2x128xbf16, #tpu.memory_space<vmem>>, vector<1x1x1x128xbf16>
    %32 = vector.shape_cast %31 : vector<1x1x1x128xbf16> to vector<1x128xbf16>
    %c1_40 = arith.constant 1 : index
    %c1_41 = arith.constant 1 : index
    %c0_42 = arith.constant 0 : index
    %c0_43 = arith.constant 0 : index
    %33 = vector.load %arg2[%c1_40, %c1_41, %c0_42, %c0_43] : memref<2x3x128x32xbf16, #tpu.memory_space<vmem>>, vector<1x1x128x32xbf16>
    %34 = vector.shape_cast %33 : vector<1x1x128x32xbf16> to vector<128x32xbf16>
    %cst_44 = arith.constant dense<0.000000e+00> : vector<1x32xf32>
    %35 = tpu.matmul %32, %34, %cst_44 {dimension_numbers = #tpu.dot_dimension_numbers<[1], [0], [0], [1], [0, 0, 1, 1], [], []>} : vector<1x128xbf16>, vector<128x32xbf16>, vector<1x32xf32> -> vector<1x32xf32>
    %36 = arith.addf %30, %35 : vector<1x32xf32>
    %c0_45 = arith.constant 0 : index
    %c0_46 = arith.constant 0 : index
    %c1_47 = arith.constant 1 : index
    %c0_48 = arith.constant 0 : index
    %37 = vector.load %arg1[%c0_45, %c0_46, %c1_47, %c0_48] : memref<1x2x2x128xbf16, #tpu.memory_space<vmem>>, vector<1x1x1x128xbf16>
    %38 = vector.shape_cast %37 : vector<1x1x1x128xbf16> to vector<1x128xbf16>
    %c1_49 = arith.constant 1 : index
    %c2_50 = arith.constant 2 : index
    %c0_51 = arith.constant 0 : index
    %c0_52 = arith.constant 0 : index
    %39 = vector.load %arg2[%c1_49, %c2_50, %c0_51, %c0_52] : memref<2x3x128x32xbf16, #tpu.memory_space<vmem>>, vector<1x1x128x32xbf16>
    %40 = vector.shape_cast %39 : vector<1x1x128x32xbf16> to vector<128x32xbf16>
    %cst_53 = arith.constant dense<0.000000e+00> : vector<1x32xf32>
    %41 = tpu.matmul %38, %40, %cst_53 {dimension_numbers = #tpu.dot_dimension_numbers<[1], [0], [0], [1], [0, 0, 1, 1], [], []>} : vector<1x128xbf16>, vector<128x32xbf16>, vector<1x32xf32> -> vector<1x32xf32>
    %42 = arith.addf %36, %41 : vector<1x32xf32>
    %cst_54 = arith.constant dense<0.000000e+00> : vector<32xf32>
    %43 = vector.multi_reduction <add>, %42, %cst_54 [0] : vector<1x32xf32> to vector<32xf32>
    %44 = vector.shape_cast %43 : vector<32xf32> to vector<1x32xf32>
    %45 = arith.mulf %42, %42 : vector<1x32xf32>
    %cst_55 = arith.constant dense<0.000000e+00> : vector<32xf32>
    %46 = vector.multi_reduction <add>, %45, %cst_55 [0] : vector<1x32xf32> to vector<32xf32>
    %47 = vector.shape_cast %46 : vector<32xf32> to vector<1x32xf32>
    %48 = arith.maximumf %18, %42 : vector<1x32xf32>
    %49 = arith.minimumf %18, %42 : vector<1x32xf32>
    %50 = arith.addf %20, %44 : vector<1x32xf32>
    %51 = arith.addf %23, %47 : vector<1x32xf32>
    %cst_56 = arith.constant 0.000000e+00 : f32
    %52 = vector.broadcast %cst_56 : f32 to vector<1x32xf32>
    %c0_57 = arith.constant 0 : index
    %c1_58 = arith.constant 1 : index
    %c0_59 = arith.constant 0 : index
    %c0_60 = arith.constant 0 : index
    %53 = vector.load %arg1[%c0_57, %c1_58, %c0_59, %c0_60] : memref<1x2x2x128xbf16, #tpu.memory_space<vmem>>, vector<1x1x1x128xbf16>
    %54 = vector.shape_cast %53 : vector<1x1x1x128xbf16> to vector<1x128xbf16>
    %c0_61 = arith.constant 0 : index
    %c0_62 = arith.constant 0 : index
    %c0_63 = arith.constant 0 : index
    %c0_64 = arith.constant 0 : index
    %55 = vector.load %arg2[%c0_61, %c0_62, %c0_63, %c0_64] : memref<2x3x128x32xbf16, #tpu.memory_space<vmem>>, vector<1x1x128x32xbf16>
    %56 = vector.shape_cast %55 : vector<1x1x128x32xbf16> to vector<128x32xbf16>
    %cst_65 = arith.constant dense<0.000000e+00> : vector<1x32xf32>
    %57 = tpu.matmul %54, %56, %cst_65 {dimension_numbers = #tpu.dot_dimension_numbers<[1], [0], [0], [1], [0, 0, 1, 1], [], []>} : vector<1x128xbf16>, vector<128x32xbf16>, vector<1x32xf32> -> vector<1x32xf32>
    %58 = arith.addf %52, %57 : vector<1x32xf32>
    %c0_66 = arith.constant 0 : index
    %c0_67 = arith.constant 0 : index
    %c1_68 = arith.constant 1 : index
    %c0_69 = arith.constant 0 : index
    %59 = vector.load %arg1[%c0_66, %c0_67, %c1_68, %c0_69] : memref<1x2x2x128xbf16, #tpu.memory_space<vmem>>, vector<1x1x1x128xbf16>
    %60 = vector.shape_cast %59 : vector<1x1x1x128xbf16> to vector<1x128xbf16>
    %c0_70 = arith.constant 0 : index
    %c1_71 = arith.constant 1 : index
    %c0_72 = arith.constant 0 : index
    %c0_73 = arith.constant 0 : index
    %61 = vector.load %arg2[%c0_70, %c1_71, %c0_72, %c0_73] : memref<2x3x128x32xbf16, #tpu.memory_space<vmem>>, vector<1x1x128x32xbf16>
    %62 = vector.shape_cast %61 : vector<1x1x128x32xbf16> to vector<128x32xbf16>
    %cst_74 = arith.constant dense<0.000000e+00> : vector<1x32xf32>
    %63 = tpu.matmul %60, %62, %cst_74 {dimension_numbers = #tpu.dot_dimension_numbers<[1], [0], [0], [1], [0, 0, 1, 1], [], []>} : vector<1x128xbf16>, vector<128x32xbf16>, vector<1x32xf32> -> vector<1x32xf32>
    %64 = arith.addf %58, %63 : vector<1x32xf32>
    %c0_75 = arith.constant 0 : index
    %c1_76 = arith.constant 1 : index
    %c1_77 = arith.constant 1 : index
    %c0_78 = arith.constant 0 : index
    %65 = vector.load %arg1[%c0_75, %c1_76, %c1_77, %c0_78] : memref<1x2x2x128xbf16, #tpu.memory_space<vmem>>, vector<1x1x1x128xbf16>
    %66 = vector.shape_cast %65 : vector<1x1x1x128xbf16> to vector<1x128xbf16>
    %c0_79 = arith.constant 0 : index
    %c2_80 = arith.constant 2 : index
    %c0_81 = arith.constant 0 : index
    %c0_82 = arith.constant 0 : index
    %67 = vector.load %arg2[%c0_79, %c2_80, %c0_81, %c0_82] : memref<2x3x128x32xbf16, #tpu.memory_space<vmem>>, vector<1x1x128x32xbf16>
    %68 = vector.shape_cast %67 : vector<1x1x128x32xbf16> to vector<128x32xbf16>
    %cst_83 = arith.constant dense<0.000000e+00> : vector<1x32xf32>
    %69 = tpu.matmul %66, %68, %cst_83 {dimension_numbers = #tpu.dot_dimension_numbers<[1], [0], [0], [1], [0, 0, 1, 1], [], []>} : vector<1x128xbf16>, vector<128x32xbf16>, vector<1x32xf32> -> vector<1x32xf32>
    %70 = arith.addf %64, %69 : vector<1x32xf32>
    %cst_84 = arith.constant dense<0.000000e+00> : vector<32xf32>
    %71 = vector.multi_reduction <add>, %70, %cst_84 [0] : vector<1x32xf32> to vector<32xf32>
    %72 = vector.shape_cast %71 : vector<32xf32> to vector<1x32xf32>
    %73 = arith.mulf %70, %70 : vector<1x32xf32>
    %cst_85 = arith.constant dense<0.000000e+00> : vector<32xf32>
    %74 = vector.multi_reduction <add>, %73, %cst_85 [0] : vector<1x32xf32> to vector<32xf32>
    %75 = vector.shape_cast %74 : vector<32xf32> to vector<1x32xf32>
    %76 = arith.maximumf %48, %70 : vector<1x32xf32>
    %77 = arith.minimumf %49, %70 : vector<1x32xf32>
    %78 = arith.addf %50, %72 : vector<1x32xf32>
    %79 = arith.addf %51, %75 : vector<1x32xf32>
    %cst_86 = arith.constant 0.000000e+00 : f32
    %80 = vector.broadcast %cst_86 : f32 to vector<1x32xf32>
    %c0_87 = arith.constant 0 : index
    %c1_88 = arith.constant 1 : index
    %c0_89 = arith.constant 0 : index
    %c0_90 = arith.constant 0 : index
    %81 = vector.load %arg1[%c0_87, %c1_88, %c0_89, %c0_90] : memref<1x2x2x128xbf16, #tpu.memory_space<vmem>>, vector<1x1x1x128xbf16>
    %82 = vector.shape_cast %81 : vector<1x1x1x128xbf16> to vector<1x128xbf16>
    %c1_91 = arith.constant 1 : index
    %c0_92 = arith.constant 0 : index
    %c0_93 = arith.constant 0 : index
    %c0_94 = arith.constant 0 : index
    %83 = vector.load %arg2[%c1_91, %c0_92, %c0_93, %c0_94] : memref<2x3x128x32xbf16, #tpu.memory_space<vmem>>, vector<1x1x128x32xbf16>
    %84 = vector.shape_cast %83 : vector<1x1x128x32xbf16> to vector<128x32xbf16>
    %cst_95 = arith.constant dense<0.000000e+00> : vector<1x32xf32>
    %85 = tpu.matmul %82, %84, %cst_95 {dimension_numbers = #tpu.dot_dimension_numbers<[1], [0], [0], [1], [0, 0, 1, 1], [], []>} : vector<1x128xbf16>, vector<128x32xbf16>, vector<1x32xf32> -> vector<1x32xf32>
    %86 = arith.addf %80, %85 : vector<1x32xf32>
    %c0_96 = arith.constant 0 : index
    %c0_97 = arith.constant 0 : index
    %c1_98 = arith.constant 1 : index
    %c0_99 = arith.constant 0 : index
    %87 = vector.load %arg1[%c0_96, %c0_97, %c1_98, %c0_99] : memref<1x2x2x128xbf16, #tpu.memory_space<vmem>>, vector<1x1x1x128xbf16>
    %88 = vector.shape_cast %87 : vector<1x1x1x128xbf16> to vector<1x128xbf16>
    %c1_100 = arith.constant 1 : index
    %c1_101 = arith.constant 1 : index
    %c0_102 = arith.constant 0 : index
    %c0_103 = arith.constant 0 : index
    %89 = vector.load %arg2[%c1_100, %c1_101, %c0_102, %c0_103] : memref<2x3x128x32xbf16, #tpu.memory_space<vmem>>, vector<1x1x128x32xbf16>
    %90 = vector.shape_cast %89 : vector<1x1x128x32xbf16> to vector<128x32xbf16>
    %cst_104 = arith.constant dense<0.000000e+00> : vector<1x32xf32>
    %91 = tpu.matmul %88, %90, %cst_104 {dimension_numbers = #tpu.dot_dimension_numbers<[1], [0], [0], [1], [0, 0, 1, 1], [], []>} : vector<1x128xbf16>, vector<128x32xbf16>, vector<1x32xf32> -> vector<1x32xf32>
    %92 = arith.addf %86, %91 : vector<1x32xf32>
    %c0_105 = arith.constant 0 : index
    %c1_106 = arith.constant 1 : index
    %c1_107 = arith.constant 1 : index
    %c0_108 = arith.constant 0 : index
    %93 = vector.load %arg1[%c0_105, %c1_106, %c1_107, %c0_108] : memref<1x2x2x128xbf16, #tpu.memory_space<vmem>>, vector<1x1x1x128xbf16>
    %94 = vector.shape_cast %93 : vector<1x1x1x128xbf16> to vector<1x128xbf16>
    %c1_109 = arith.constant 1 : index
    %c2_110 = arith.constant 2 : index
    %c0_111 = arith.constant 0 : index
    %c0_112 = arith.constant 0 : index
    %95 = vector.load %arg2[%c1_109, %c2_110, %c0_111, %c0_112] : memref<2x3x128x32xbf16, #tpu.memory_space<vmem>>, vector<1x1x128x32xbf16>
    %96 = vector.shape_cast %95 : vector<1x1x128x32xbf16> to vector<128x32xbf16>
    %cst_113 = arith.constant dense<0.000000e+00> : vector<1x32xf32>
    %97 = tpu.matmul %94, %96, %cst_113 {dimension_numbers = #tpu.dot_dimension_numbers<[1], [0], [0], [1], [0, 0, 1, 1], [], []>} : vector<1x128xbf16>, vector<128x32xbf16>, vector<1x32xf32> -> vector<1x32xf32>
    %98 = arith.addf %92, %97 : vector<1x32xf32>
    %cst_114 = arith.constant dense<0.000000e+00> : vector<32xf32>
    %99 = vector.multi_reduction <add>, %98, %cst_114 [0] : vector<1x32xf32> to vector<32xf32>
    %100 = vector.shape_cast %99 : vector<32xf32> to vector<1x32xf32>
    %101 = arith.mulf %98, %98 : vector<1x32xf32>
    %cst_115 = arith.constant dense<0.000000e+00> : vector<32xf32>
    %102 = vector.multi_reduction <add>, %101, %cst_115 [0] : vector<1x32xf32> to vector<32xf32>
    %103 = vector.shape_cast %102 : vector<32xf32> to vector<1x32xf32>
    %104 = arith.maximumf %76, %98 : vector<1x32xf32>
    %105 = arith.minimumf %77, %98 : vector<1x32xf32>
    %106 = arith.addf %78, %100 : vector<1x32xf32>
    %107 = arith.addf %79, %103 : vector<1x32xf32>
    %108 = tpu.concatenate %104, %105 in 1 : vector<1x32xf32>, vector<1x32xf32> -> vector<1x64xf32>
    %109 = arith.truncf %108 : vector<1x64xf32> to vector<1x64xbf16>
    %c0_116 = arith.constant 0 : index
    %c0_117 = arith.constant 0 : index
    %c0_118 = arith.constant 0 : index
    %110 = vector.load %arg3[%c0_116, %c0_117, %c0_118] : memref<1x1x64xbf16, #tpu.memory_space<vmem>>, vector<1x1x64xbf16>
    %111 = vector.shape_cast %110 : vector<1x1x64xbf16> to vector<1x64xbf16>
    %112 = vector.shape_cast %109 : vector<1x64xbf16> to vector<1x1x64xbf16>
    tpu.vector_store %arg3[%c0_116, %c0_117, %c0_118], %112 {strides = array<i32>} : memref<1x1x64xbf16, #tpu.memory_space<vmem>>, vector<1x1x64xbf16>,
    %cst_119 = arith.constant 0.000000e+00 : f32
    %113 = vector.broadcast %cst_119 : f32 to vector<6x32xf32>
    %114 = tpu.concatenate %106, %107, %113 in 0 : vector<1x32xf32>, vector<1x32xf32>, vector<6x32xf32> -> vector<8x32xf32>
    %c0_120 = arith.constant 0 : index
    %c0_121 = arith.constant 0 : index
    %c0_122 = arith.constant 0 : index
    %115 = vector.load %arg4[%c0_120, %c0_121, %c0_122] : memref<1x8x32xf32, #tpu.memory_space<vmem>>, vector<1x8x32xf32>
    %116 = vector.shape_cast %115 : vector<1x8x32xf32> to vector<8x32xf32>
    %117 = vector.shape_cast %114 : vector<8x32xf32> to vector<1x8x32xf32>
    tpu.vector_store %arg4[%c0_120, %c0_121, %c0_122], %117 {strides = array<i32>} : memref<1x8x32xf32, #tpu.memory_space<vmem>>, vector<1x8x32xf32>,
    return
  }
  func.func @transform_0(%arg0: i32) -> (i32, i32, i32, i32) {
    %c0_i32 = arith.constant 0 : i32
    %c0_i32_0 = arith.constant 0 : i32
    %c0_i32_1 = arith.constant 0 : i32
    %c0_i32_2 = arith.constant 0 : i32
    return %arg0, %c0_i32, %c0_i32_0, %c0_i32_1 : i32, i32, i32, i32
  }
  func.func @transform_1(%arg0: i32) -> (i32, i32, i32, i32) {
    %c0_i32 = arith.constant 0 : i32
    %c0_i32_0 = arith.constant 0 : i32
    %c0_i32_1 = arith.constant 0 : i32
    %c0_i32_2 = arith.constant 0 : i32
    %c0_i32_3 = arith.constant 0 : i32
    return %c0_i32, %c0_i32_0, %c0_i32_1, %c0_i32_2 : i32, i32, i32, i32
  }
  func.func @transform_2(%arg0: i32) -> (i32, i32, i32) {
    %c0_i32 = arith.constant 0 : i32
    %c0_i32_0 = arith.constant 0 : i32
    %c0_i32_1 = arith.constant 0 : i32
    return %arg0, %c0_i32, %c0_i32_0 : i32, i32, i32
  }
  func.func @transform_3(%arg0: i32) -> (i32, i32, i32) {
    %c0_i32 = arith.constant 0 : i32
    %c0_i32_0 = arith.constant 0 : i32
    %c0_i32_1 = arith.constant 0 : i32
    return %arg0, %c0_i32, %c0_i32_0 : i32, i32, i32
  }
}

module attributes {stable_mosaic.version = 11 : i64} {
  func.func @bn1d_kernel(%arg0: memref<2x32xbf16, #tpu.memory_space<vmem>>, %arg1: memref<1x32xf32, #tpu.memory_space<vmem>>, %arg2: memref<1x32xf32, #tpu.memory_space<vmem>>, %arg3: memref<2x32xf32, #tpu.memory_space<vmem>>) attributes {dimension_semantics = [], scalar_prefetch = 0 : i64, scratch_operands = 0 : i64, tpu.core_type = #tpu.core_type<tc>} {
    %c0 = arith.constant 0 : index
    %c0_0 = arith.constant 0 : index
    %0 = vector.load %arg0[%c0, %c0_0] : memref<2x32xbf16, #tpu.memory_space<vmem>>, vector<2x32xbf16>
    %1 = arith.extf %0 : vector<2x32xbf16> to vector<2x32xf32>
    %cst = arith.constant dense<0.000000e+00> : vector<32xf32>
    %2 = vector.multi_reduction <add>, %1, %cst [0] : vector<2x32xf32> to vector<32xf32>
    %3 = vector.shape_cast %2 : vector<32xf32> to vector<1x32xf32>
    %cst_1 = arith.constant 2.000000e+00 : f32
    %4 = vector.broadcast %cst_1 : f32 to vector<1x32xf32>
    %5 = arith.divf %3, %4 : vector<1x32xf32>
    %6 = vector.broadcast %5 : vector<1x32xf32> to vector<2x32xf32>
    %7 = arith.subf %1, %6 : vector<2x32xf32>
    %8 = arith.mulf %7, %7 : vector<2x32xf32>
    %cst_2 = arith.constant dense<0.000000e+00> : vector<32xf32>
    %9 = vector.multi_reduction <add>, %8, %cst_2 [0] : vector<2x32xf32> to vector<32xf32>
    %10 = vector.shape_cast %9 : vector<32xf32> to vector<1x32xf32>
    %cst_3 = arith.constant 2.000000e+00 : f32
    %11 = vector.broadcast %cst_3 : f32 to vector<1x32xf32>
    %12 = arith.divf %10, %11 : vector<1x32xf32>
    %cst_4 = arith.constant 9.99999974E-6 : f32
    %13 = vector.broadcast %cst_4 : f32 to vector<1x32xf32>
    %14 = arith.addf %12, %13 : vector<1x32xf32>
    %15 = math.rsqrt %14 : vector<1x32xf32>
    %16 = vector.broadcast %15 : vector<1x32xf32> to vector<2x32xf32>
    %17 = arith.mulf %7, %16 : vector<2x32xf32>
    %c0_5 = arith.constant 0 : index
    %c0_6 = arith.constant 0 : index
    %18 = vector.load %arg1[%c0_5, %c0_6] : memref<1x32xf32, #tpu.memory_space<vmem>>, vector<1x32xf32>
    %19 = vector.broadcast %18 : vector<1x32xf32> to vector<2x32xf32>
    %20 = arith.mulf %17, %19 : vector<2x32xf32>
    %c0_7 = arith.constant 0 : index
    %c0_8 = arith.constant 0 : index
    %21 = vector.load %arg2[%c0_7, %c0_8] : memref<1x32xf32, #tpu.memory_space<vmem>>, vector<1x32xf32>
    %22 = vector.broadcast %21 : vector<1x32xf32> to vector<2x32xf32>
    %23 = arith.addf %20, %22 : vector<2x32xf32>
    %c0_9 = arith.constant 0 : index
    %c0_10 = arith.constant 0 : index
    %24 = vector.load %arg3[%c0_9, %c0_10] : memref<2x32xf32, #tpu.memory_space<vmem>>, vector<2x32xf32>
    tpu.vector_store %arg3[%c0_9, %c0_10], %23 {strides = array<i32>} : memref<2x32xf32, #tpu.memory_space<vmem>>, vector<2x32xf32>,
    return
  }
}

module attributes {stable_mosaic.version = 11 : i64} {
  func.func @bn_relu_kernel(%arg0: i32, %arg1: memref<1x1x64xbf16, #tpu.memory_space<vmem>>, %arg2: memref<1x32xf32, #tpu.memory_space<vmem>>, %arg3: memref<1x32xf32, #tpu.memory_space<vmem>>, %arg4: memref<1x1x32xbf16, #tpu.memory_space<vmem>>) attributes {dimension_semantics = [#tpu.dimension_semantics<parallel>], iteration_bounds = array<i64: 2>, scalar_prefetch = 0 : i64, scratch_operands = 0 : i64, tpu.core_type = #tpu.core_type<tc>, window_params = [{transform_indices = @transform_0, window_bounds = array<i64: 1, 1, 64>}, {pipeline_mode = #tpu.pipeline_mode<synchronous>, transform_indices = @transform_1, window_bounds = array<i64: 1, 32>}, {pipeline_mode = #tpu.pipeline_mode<synchronous>, transform_indices = @transform_2, window_bounds = array<i64: 1, 32>}, {transform_indices = @transform_3, window_bounds = array<i64: 1, 1, 32>}]} {
    %c0 = arith.constant 0 : index
    %c0_0 = arith.constant 0 : index
    %c0_1 = arith.constant 0 : index
    %0 = vector.load %arg1[%c0, %c0_0, %c0_1] : memref<1x1x64xbf16, #tpu.memory_space<vmem>>, vector<1x1x64xbf16>
    %1 = vector.shape_cast %0 : vector<1x1x64xbf16> to vector<1x64xbf16>
    %2 = arith.extf %1 : vector<1x64xbf16> to vector<1x64xf32>
    %3 = vector.extract_strided_slice %2 {offsets = [0, 0], sizes = [1, 32], strides = [1, 1]} : vector<1x64xf32> to vector<1x32xf32>
    %4 = vector.extract_strided_slice %2 {offsets = [0, 32], sizes = [1, 32], strides = [1, 1]} : vector<1x64xf32> to vector<1x32xf32>
    %c0_2 = arith.constant 0 : index
    %c0_3 = arith.constant 0 : index
    %5 = vector.load %arg2[%c0_2, %c0_3] : memref<1x32xf32, #tpu.memory_space<vmem>>, vector<1x32xf32>
    %c0_4 = arith.constant 0 : index
    %c0_5 = arith.constant 0 : index
    %6 = vector.load %arg3[%c0_4, %c0_5] : memref<1x32xf32, #tpu.memory_space<vmem>>, vector<1x32xf32>
    %cst = arith.constant 0.000000e+00 : f32
    %7 = vector.broadcast %cst : f32 to vector<1x32xf32>
    %8 = arith.cmpf oge, %5, %7 : vector<1x32xf32>
    %9 = arith.select %8, %3, %4 : vector<1x32xi1>, vector<1x32xf32>
    %10 = arith.mulf %9, %5 : vector<1x32xf32>
    %11 = arith.addf %10, %6 : vector<1x32xf32>
    %cst_6 = arith.constant 0.000000e+00 : f32
    %12 = vector.broadcast %cst_6 : f32 to vector<1x32xf32>
    %13 = arith.maximumf %11, %12 : vector<1x32xf32>
    %14 = arith.truncf %13 : vector<1x32xf32> to vector<1x32xbf16>
    %c0_7 = arith.constant 0 : index
    %c0_8 = arith.constant 0 : index
    %c0_9 = arith.constant 0 : index
    %15 = vector.load %arg4[%c0_7, %c0_8, %c0_9] : memref<1x1x32xbf16, #tpu.memory_space<vmem>>, vector<1x1x32xbf16>
    %16 = vector.shape_cast %15 : vector<1x1x32xbf16> to vector<1x32xbf16>
    %17 = vector.shape_cast %14 : vector<1x32xbf16> to vector<1x1x32xbf16>
    tpu.vector_store %arg4[%c0_7, %c0_8, %c0_9], %17 {strides = array<i32>} : memref<1x1x32xbf16, #tpu.memory_space<vmem>>, vector<1x1x32xbf16>,
    return
  }
  func.func @transform_0(%arg0: i32) -> (i32, i32, i32) {
    %c0_i32 = arith.constant 0 : i32
    %c0_i32_0 = arith.constant 0 : i32
    %c0_i32_1 = arith.constant 0 : i32
    return %arg0, %c0_i32, %c0_i32_0 : i32, i32, i32
  }
  func.func @transform_1(%arg0: i32) -> (i32, i32) {
    %c0_i32 = arith.constant 0 : i32
    %c0_i32_0 = arith.constant 0 : i32
    %c0_i32_1 = arith.constant 0 : i32
    return %c0_i32, %c0_i32_0 : i32, i32
  }
  func.func @transform_2(%arg0: i32) -> (i32, i32) {
    %c0_i32 = arith.constant 0 : i32
    %c0_i32_0 = arith.constant 0 : i32
    %c0_i32_1 = arith.constant 0 : i32
    return %c0_i32, %c0_i32_0 : i32, i32
  }
  func.func @transform_3(%arg0: i32) -> (i32, i32, i32) {
    %c0_i32 = arith.constant 0 : i32
    %c0_i32_0 = arith.constant 0 : i32
    %c0_i32_1 = arith.constant 0 : i32
    return %arg0, %c0_i32, %c0_i32_0 : i32, i32, i32
  }
}

</mosaic_0001>

<llo_original>
// kernel: cnn4_dsvdd_forward.10
$region0: #{cnn4_dsvdd_forward.10}
  #allocation0 [shape = 'u32[]', space=smem, size = 0x4, offset = 0x4, fixed_abs, tag = 'smem constant byte address 0x4 - core index']
  #allocation1 [shape = 'u32[144,128]{1,0:T(1,128)}', space=vmem, size = 0x12000, scoped, tag = 'internal scratch']
  %s0 = inlined_call_operand.vmem [shape: bf16[2,64,64], index: 0, kind: input, shape index: {}]
  %s1 = inlined_call_operand.vmem [shape: f32[1,32], index: 1, kind: input, shape index: {}]
  %s2 = inlined_call_operand.vmem [shape: f32[1,32], index: 2, kind: input, shape index: {}]
  %s3 = inlined_call_operand.vmem [shape: bf16[2,64,32], index: 3, kind: output, shape index: {}]
  %s4 = sld [smem:[#allocation0]]
  $region45: #{cnn4_dsvdd_forward.10} parent=0
    _
  %s6 = ssub.s32 1, %s4
  %s7 = scalar_select 0, %s6, %s4
  loop: start=0, step=1, limit=4
  $region2: #{cnn4_dsvdd_forward.10} parent=0 // loop_pre_header
    _
  $region3: #{cnn4_dsvdd_forward.10} parent=0 // loop_header
    %s9 = sphi 0, %s13
    %p10 = scmp.ge.s32.totalorder %s9, 4
    %s19 = sphi 0, %s21
    %s22 = sphi 0, %s19
    %s23 = sphi 0, %s22
    %s39 = sphi 0, %s23
    %s43 = sphi 0, %s43
    %s45 = sphi 0, %s43
    %s46 = sphi 0, %s45
    %s60 = sphi 0, %s46
    %s64 = sphi 0, %s64
    %s66 = sphi 0, %s64
    %s67 = sphi 0, %s66
    %s81 = sphi 0, %s67
    %s87 = sphi 0, %s89
    %s90 = sphi 0, %s87
    %s91 = sphi 0, %s90
    %s107 = sphi 0, %s91
  $region4: #{cnn4_dsvdd_forward.10} parent=0 // loop_header_branch
    %12 = sbr.rel (%p10) target = $region8
  $region5: #{cnn4_dsvdd_forward.10} parent=0 // loop_body
    %s14 = ssub.s32 %s9, 1
    %s15 = ssub.s32 %s9, 2
    %s16 = sadd.s32 %s9, 1
    %s17 = ssub.s32 %s9, %s16
    %p18 = scmp.eq.s32.totalorder %s17, 0
    %s20 = sadd.s32 %s19, 1
    %s21 = scalar_select %p18, %s19, %s20
    %p24 = pneg %p18
    %p25 = scmp.eq.s32.totalorder %s9, 1
    %p26 = por %p24, %p25
    %p27 = scmp.ne.s32.totalorder %s19, %s22
    %p28 = scmp.eq.s32.totalorder %s9, 0
    %p29 = por %p27, %p28
    %p30 = scmp.ne.s32.totalorder %s19, %s22
    %p31 = scmp.eq.s32.totalorder %s14, 1
    %p32 = por %p30, %p31
    %p33 = scmp.ne.s32.totalorder %s22, %s23
    %p34 = scmp.eq.s32.totalorder %s14, 0
    %p35 = por %p33, %p34
    %p36 = scmp.ne.s32.totalorder %s22, %s23
    %p37 = scmp.eq.s32.totalorder %s15, 1
    %p38 = por %p36, %p37
    %p40 = scmp.ne.s32.totalorder %s23, %s39
    %p41 = scmp.eq.s32.totalorder %s15, 0
    %p42 = por %p40, %p41
    %s44 = sadd.s32 %s43, 1
    %p47 = scmp.eq.s32.totalorder %s9, 1
    %p48 = scmp.ne.s32.totalorder %s43, %s45
    %p49 = scmp.eq.s32.totalorder %s9, 0
    %p50 = por %p48, %p49
    %p51 = scmp.ne.s32.totalorder %s43, %s45
    %p52 = scmp.eq.s32.totalorder %s14, 1
    %p53 = por %p51, %p52
    %p54 = scmp.ne.s32.totalorder %s45, %s46
    %p55 = scmp.eq.s32.totalorder %s14, 0
    %p56 = por %p54, %p55
    %p57 = scmp.ne.s32.totalorder %s45, %s46
    %p58 = scmp.eq.s32.totalorder %s15, 1
    %p59 = por %p57, %p58
    %p61 = scmp.ne.s32.totalorder %s46, %s60
    %p62 = scmp.eq.s32.totalorder %s15, 0
    %p63 = por %p61, %p62
    %s65 = sadd.s32 %s64, 1
    %p68 = scmp.eq.s32.totalorder %s9, 1
    %p69 = scmp.ne.s32.totalorder %s64, %s66
    %p70 = scmp.eq.s32.totalorder %s9, 0
    %p71 = por %p69, %p70
    %p72 = scmp.ne.s32.totalorder %s64, %s66
    %p73 = scmp.eq.s32.totalorder %s14, 1
    %p74 = por %p72, %p73
    %p75 = scmp.ne.s32.totalorder %s66, %s67
    %p76 = scmp.eq.s32.totalorder %s14, 0
    %p77 = por %p75, %p76
    %p78 = scmp.ne.s32.totalorder %s66, %s67
    %p79 = scmp.eq.s32.totalorder %s15, 1
    %p80 = por %p78, %p79
    %p82 = scmp.ne.s32.totalorder %s67, %s81
    %p83 = scmp.eq.s32.totalorder %s15, 0
    %p84 = por %p82, %p83
    %s85 = ssub.s32 %s9, %s16
    %p86 = scmp.eq.s32.totalorder %s85, 0
    %s88 = sadd.s32 %s87, 1
    %s89 = scalar_select %p86, %s87, %s88
    %p92 = pneg %p86
    %p93 = scmp.eq.s32.totalorder %s9, 1
    %p94 = por %p92, %p93
    %p95 = scmp.ne.s32.totalorder %s87, %s90
    %p96 = scmp.eq.s32.totalorder %s9, 0
    %p97 = por %p95, %p96
    %p98 = scmp.ne.s32.totalorder %s87, %s90
    %p99 = scmp.eq.s32.totalorder %s14, 1
    %p100 = por %p98, %p99
    %p101 = scmp.ne.s32.totalorder %s90, %s91
    %p102 = scmp.eq.s32.totalorder %s14, 0
    %p103 = por %p101, %p102
    %p104 = scmp.ne.s32.totalorder %s90, %s91
    %p105 = scmp.eq.s32.totalorder %s15, 1
    %p106 = por %p104, %p105
    %p108 = scmp.ne.s32.totalorder %s91, %s107
    %p109 = scmp.eq.s32.totalorder %s15, 0
    %p110 = por %p108, %p109
    %p111 = scmp.le.s32.totalorder 1, %s9
    %p112 = scmp.lt.s32.totalorder %s9, 3
    %p113 = pnand %p111, %p112
    %p114 = pneg %p113
    // Predicated region
    $region9: #{cnn4_dsvdd_forward.10} parent=5 // pred_check
      _
    $region10: #{cnn4_dsvdd_forward.10} parent=5 // pred_check_branch
      %116 = sbr.rel (%p113) target = $region12
    $region11: #{cnn4_dsvdd_forward.10} parent=5 // pred_region
      %s117 = ssub.s32 %s9, 1
      // Predicated region
      $region13: #{cnn4_dsvdd_forward.10} parent=11 // pred_check
        %p118 = pneg %p56
      $region14: #{cnn4_dsvdd_forward.10} parent=11 // pred_check_branch
        %120 = sbr.rel (%p118) target = $region16
      $region15: #{cnn4_dsvdd_forward.10} parent=11 // pred_region
        _
      $region16: #{cnn4_dsvdd_forward.10} parent=11 // pred_fallthru
        _
      // Predicated region
      $region17: #{cnn4_dsvdd_forward.10} parent=11 // pred_check
        %p121 = pneg %p77
      $region18: #{cnn4_dsvdd_forward.10} parent=11 // pred_check_branch
        %123 = sbr.rel (%p121) target = $region20
      $region19: #{cnn4_dsvdd_forward.10} parent=11 // pred_region
        _
      $region20: #{cnn4_dsvdd_forward.10} parent=11 // pred_fallthru
        _
    $region12: #{cnn4_dsvdd_forward.10} parent=5 // pred_fallthru
      _
    %p124 = scmp.lt.s32.totalorder %s9, 2
    // Predicated region
    $region21: #{cnn4_dsvdd_forward.10} parent=5 // pred_check
      %p125 = pneg %p124
    $region22: #{cnn4_dsvdd_forward.10} parent=5 // pred_check_branch
      %127 = sbr.rel (%p125) target = $region24
    $region23: #{cnn4_dsvdd_forward.10} parent=5 // pred_region
      // Predicated region
      $region25: #{cnn4_dsvdd_forward.10} parent=23 // pred_check
        %p128 = pneg %p29
      $region26: #{cnn4_dsvdd_forward.10} parent=23 // pred_check_branch
        %130 = sbr.rel (%p128) target = $region28
      $region27: #{cnn4_dsvdd_forward.10} parent=23 // pred_region
        %p131 = scmp.lt.s32.totalorder %s9, 1
        %s132 = scalar_select %p131, %s9, 1
        %s133 = smul.addr %s132, 8
        %s134 = smul.addr %s133, 4
        %s135 = scalar_lea.vmem %s0, %s134
      $region28: #{cnn4_dsvdd_forward.10} parent=23 // pred_fallthru
        _
    $region24: #{cnn4_dsvdd_forward.10} parent=5 // pred_fallthru
      _
    %p136 = scmp.le.s32.totalorder 1, %s9
    %p137 = scmp.lt.s32.totalorder %s9, 3
    %p138 = pnand %p136, %p137
    %p139 = pneg %p138
    // Predicated region
    $region29: #{cnn4_dsvdd_forward.10} parent=5 // pred_check
      _
    $region30: #{cnn4_dsvdd_forward.10} parent=5 // pred_check_branch
      %141 = sbr.rel (%p138) target = $region32
    $region31: #{cnn4_dsvdd_forward.10} parent=5 // pred_region
      %s142 = ssub.s32 %s9, 1
      %p143 = scmp.lt.s32.totalorder %s14, 1
      %s144 = scalar_select %p143, %s14, 1
      %s145 = smul.addr %s144, 8
      %s146 = smul.addr %s145, 4
      %s147 = scalar_lea.vmem %s0, %s146
      %p148 = pneg %p35
      %p149 = pneg %p32
      %p150 = pneg %p56
      %p151 = pneg %p53
      %p152 = pneg %p77
      %p153 = pneg %p74
      %p154 = pneg %p103
      %p155 = pneg %p100
      %p156 = scmp.lt.s32.totalorder %s14, 1
      %s157 = scalar_select %p156, %s14, 1
      %s158 = smul.addr %s157, 8
      %s159 = smul.addr %s158, 4
      %s160 = scalar_lea.vmem %s3, %s159
      %p161 = scmp.lt.s32.totalorder %s14, 1
      %s162 = scalar_select %p161, %s14, 1
      %s163 = smul.addr %s162, 8
      %s164 = smul.addr %s163, 4
      %s165 = scalar_lea.vmem %s0, %s164
      %p166 = scmp.lt.s32.totalorder %s14, 1
      %s167 = scalar_select %p166, %s14, 1
      %s168 = smul.addr %s167, 8
      %s169 = smul.addr %s168, 4
      %s170 = scalar_lea.vmem %s3, %s169
      %v171 = vld [vmem:[%s165] sm:$0xf]
      %v172 = vld [vmem:[%s165 + $0x4] sm:$0xf]
      %v173 = vld [vmem:[%s165 + $0x8] sm:$0xf]
      %v174 = vld [vmem:[%s165 + $0xc] sm:$0xf]
      %v175 = vld [vmem:[%s165 + $0x10] sm:$0xf]
      %v176 = vld [vmem:[%s165 + $0x14] sm:$0xf]
      %v177 = vld [vmem:[%s165 + $0x18] sm:$0xf]
      %v178 = vld [vmem:[%s165 + $0x1c] sm:$0xf]
      %v179 = vunpack.c.l.bf16 %v171
      %v180 = vunpack.c.l.bf16 %v172
      %v181 = vunpack.c.l.bf16 %v173
      %v182 = vunpack.c.l.bf16 %v174
      %v183 = vunpack.c.l.bf16 %v175
      %v184 = vunpack.c.l.bf16 %v176
      %v185 = vunpack.c.l.bf16 %v177
      %v186 = vunpack.c.l.bf16 %v178
      %v187 = vld [vmem:[%s1] sm:$0x1]
      %v188 = vld [vmem:[%s2] sm:$0x1]
      %vm189 = vcmp.ge.f32.partialorder %v187, 0.0
      %v190 = vsel %vm189, 1, 0
      %v191 = vlaneseq
      %v192 = vshrl.u32 %v191, 7
      %v193 = vsub.s32 0, %v192
      %v194 = vrot.slane %v190, %v193
      %vm195 = vcmp.eq.s32.totalorder %v194, 1
      %204 = vrot.lane.b32.xlu0 %v179, 96
      %v205 = vpop.permute.xlu0 %204
      %206 = vrot.lane.b32.xlu0 %v180, 96
      %v207 = vpop.permute.xlu0 %206
      %208 = vrot.lane.b32.xlu0 %v181, 96
      %v209 = vpop.permute.xlu0 %208
      %210 = vrot.lane.b32.xlu0 %v182, 96
      %v211 = vpop.permute.xlu0 %210
      %212 = vrot.lane.b32.xlu0 %v183, 96
      %v213 = vpop.permute.xlu0 %212
      %214 = vrot.lane.b32.xlu0 %v184, 96
      %v215 = vpop.permute.xlu0 %214
      %216 = vrot.lane.b32.xlu0 %v185, 96
      %v217 = vpop.permute.xlu0 %216
      %218 = vrot.lane.b32.xlu0 %v186, 96
      %v219 = vpop.permute.xlu0 %218
      %v228 = vsel %vm195, %v179, %v205
      %v229 = vsel %vm195, %v180, %v207
      %v230 = vsel %vm195, %v181, %v209
      %v231 = vsel %vm195, %v182, %v211
      %v232 = vsel %vm195, %v183, %v213
      %v233 = vsel %vm195, %v184, %v215
      %v234 = vsel %vm195, %v185, %v217
      %v235 = vsel %vm195, %v186, %v219
      %v237 = vlaneseq
      %v238 = vshrl.u32 %v237, 7
      %v239 = vsub.s32 0, %v238
      %v240 = vrot.slane %v187, %v239
      %v242 = vmul.f32 %v228, %v240
      %v243 = vmul.f32 %v229, %v240
      %v244 = vmul.f32 %v230, %v240
      %v245 = vmul.f32 %v231, %v240
      %v246 = vmul.f32 %v232, %v240
      %v247 = vmul.f32 %v233, %v240
      %v248 = vmul.f32 %v234, %v240
      %v249 = vmul.f32 %v235, %v240
      %v251 = vlaneseq
      %v252 = vshrl.u32 %v251, 7
      %v253 = vsub.s32 0, %v252
      %v254 = vrot.slane %v188, %v253
      %v256 = vadd.f32 %v242, %v254
      %v257 = vadd.f32 %v243, %v254
      %v258 = vadd.f32 %v244, %v254
      %v259 = vadd.f32 %v245, %v254
      %v260 = vadd.f32 %v246, %v254
      %v261 = vadd.f32 %v247, %v254
      %v262 = vadd.f32 %v248, %v254
      %v263 = vadd.f32 %v249, %v254
      %v264 = vmax.f32 %v256, 0.0
      %v265 = vmax.f32 %v257, 0.0
      %v266 = vmax.f32 %v258, 0.0
      %v267 = vmax.f32 %v259, 0.0
      %v268 = vmax.f32 %v260, 0.0
      %v269 = vmax.f32 %v261, 0.0
      %v270 = vmax.f32 %v262, 0.0
      %v271 = vmax.f32 %v263, 0.0
      %v272 = vpack.c.bf16 %v265, %v264
      %v273 = vpack.c.bf16 %v267, %v266
      %v274 = vpack.c.bf16 %v269, %v268
      %v275 = vpack.c.bf16 %v271, %v270
      %v280 = vunpack.c.l.b16 %v272
      %v281 = vunpack.c.h.b16 %v272
      %v282 = vunpack.c.l.b16 %v273
      %v283 = vunpack.c.h.b16 %v273
      %v284 = vunpack.c.l.b16 %v274
      %v285 = vunpack.c.h.b16 %v274
      %v286 = vunpack.c.l.b16 %v275
      %v287 = vunpack.c.h.b16 %v275
      %v288 = vpack.c.b16 %v280, %v280
      %v289 = vpack.c.b16 %v281, %v281
      %v290 = vpack.c.b16 %v282, %v282
      %v291 = vpack.c.b16 %v283, %v283
      %v292 = vpack.c.b16 %v284, %v284
      %v293 = vpack.c.b16 %v285, %v285
      %v294 = vpack.c.b16 %v286, %v286
      %v295 = vpack.c.b16 %v287, %v287
      %vm304 = vcmask 257024
      %305 = vst.msk [vmem:[%s170] sm:$0xf] %vm304, %v288
      %306 = vst.msk [vmem:[%s170 + $0x4] sm:$0xf] %vm304, %v289
      %307 = vst.msk [vmem:[%s170 + $0x8] sm:$0xf] %vm304, %v290
      %308 = vst.msk [vmem:[%s170 + $0xc] sm:$0xf] %vm304, %v291
      %309 = vst.msk [vmem:[%s170 + $0x10] sm:$0xf] %vm304, %v292
      %310 = vst.msk [vmem:[%s170 + $0x14] sm:$0xf] %vm304, %v293
      %311 = vst.msk [vmem:[%s170 + $0x18] sm:$0xf] %vm304, %v294
      %312 = vst.msk [vmem:[%s170 + $0x1c] sm:$0xf] %vm304, %v295
      %p313 = scmp.lt.s32.totalorder %s14, 1
      %s314 = scalar_select %p313, %s14, 1
      %s315 = smul.addr %s314, 8
      %s316 = smul.addr %s315, 4
      %s317 = scalar_lea.vmem %s3, %s316
      // Predicated region
      $region33: #{cnn4_dsvdd_forward.10} parent=31 // pred_check
        %p318 = pneg %p100
      $region34: #{cnn4_dsvdd_forward.10} parent=31 // pred_check_branch
        %320 = sbr.rel (%p318) target = $region36
      $region35: #{cnn4_dsvdd_forward.10} parent=31 // pred_region
        _
      $region36: #{cnn4_dsvdd_forward.10} parent=31 // pred_fallthru
        _
    $region32: #{cnn4_dsvdd_forward.10} parent=5 // pred_fallthru
      _
    %p321 = scmp.le.s32.totalorder 2, %s9
    // Predicated region
    $region37: #{cnn4_dsvdd_forward.10} parent=5 // pred_check
      %p322 = pneg %p321
    $region38: #{cnn4_dsvdd_forward.10} parent=5 // pred_check_branch
      %324 = sbr.rel (%p322) target = $region40
    $region39: #{cnn4_dsvdd_forward.10} parent=5 // pred_region
      %s325 = ssub.s32 %s9, 2
      // Predicated region
      $region41: #{cnn4_dsvdd_forward.10} parent=39 // pred_check
        %p326 = pneg %p106
      $region42: #{cnn4_dsvdd_forward.10} parent=39 // pred_check_branch
        %328 = sbr.rel (%p326) target = $region44
      $region43: #{cnn4_dsvdd_forward.10} parent=39 // pred_region
        %p329 = scmp.lt.s32.totalorder %s15, 1
        %s330 = scalar_select %p329, %s15, 1
        %s331 = smul.addr %s330, 8
        %s332 = smul.addr %s331, 4
        %s333 = scalar_lea.vmem %s3, %s332
      $region44: #{cnn4_dsvdd_forward.10} parent=39 // pred_fallthru
        _
    $region40: #{cnn4_dsvdd_forward.10} parent=5 // pred_fallthru
      _
  $region6: #{cnn4_dsvdd_forward.10} parent=0 // loop_footer
    %s13 = sadd.s32 1, %s9
  $region7: #{cnn4_dsvdd_forward.10} parent=0 // loop_footer_branch
    %8 = sbr.rel target = $region3
  $region8: #{cnn4_dsvdd_forward.10} parent=0 // loop_exit
    _

// kernel: cnn4_dsvdd_forward.9
$region0: #{cnn4_dsvdd_forward.9}
  #allocation0 [shape = 'u32[]', space=smem, size = 0x4, offset = 0x4, fixed_abs, tag = 'smem constant byte address 0x4 - core index']
  #allocation1 [shape = 'u32[144,128]{1,0:T(1,128)}', space=vmem, size = 0x12000, scoped, tag = 'internal scratch']
  %s0 = inlined_call_operand.vmem [shape: bf16[2,2,72,32], index: 0, kind: input, shape index: {}]
  %s1 = inlined_call_operand.vmem [shape: bf16[2,3,32,32], index: 1, kind: input, shape index: {}]
  %s2 = inlined_call_operand.vmem [shape: bf16[2,64,64], index: 2, kind: output, shape index: {0}]
  %s3 = inlined_call_operand.vmem [shape: f32[2,8,32], index: 3, kind: output, shape index: {1}]
  %4 = xla_tuple %s2, %s3
  %s5 = sld [smem:[#allocation0]]
  $region49: #{cnn4_dsvdd_forward.9} parent=0
    _
  %s7 = ssub.s32 1, %s5
  %s8 = scalar_select 0, %s7, %s5
  loop: start=0, step=1, limit=4
  $region2: #{cnn4_dsvdd_forward.9} parent=0 // loop_pre_header
    _
  $region3: #{cnn4_dsvdd_forward.9} parent=0 // loop_header
    %s10 = sphi 0, %s14
    %p11 = scmp.ge.s32.totalorder %s10, 4
    %s20 = sphi 0, %s22
    %s23 = sphi 0, %s20
    %s24 = sphi 0, %s23
    %s40 = sphi 0, %s24
    %s44 = sphi 0, %s44
    %s46 = sphi 0, %s44
    %s47 = sphi 0, %s46
    %s61 = sphi 0, %s47
    %s67 = sphi 0, %s69
    %s70 = sphi 0, %s67
    %s71 = sphi 0, %s70
    %s87 = sphi 0, %s71
    %s93 = sphi 0, %s95
    %s96 = sphi 0, %s93
    %s97 = sphi 0, %s96
    %s113 = sphi 0, %s97
  $region4: #{cnn4_dsvdd_forward.9} parent=0 // loop_header_branch
    %13 = sbr.rel (%p11) target = $region8
  $region5: #{cnn4_dsvdd_forward.9} parent=0 // loop_body
    %s15 = ssub.s32 %s10, 1
    %s16 = ssub.s32 %s10, 2
    %s17 = sadd.s32 %s10, 1
    %s18 = ssub.s32 %s10, %s17
    %p19 = scmp.eq.s32.totalorder %s18, 0
    %s21 = sadd.s32 %s20, 1
    %s22 = scalar_select %p19, %s20, %s21
    %p25 = pneg %p19
    %p26 = scmp.eq.s32.totalorder %s10, 1
    %p27 = por %p25, %p26
    %p28 = scmp.ne.s32.totalorder %s20, %s23
    %p29 = scmp.eq.s32.totalorder %s10, 0
    %p30 = por %p28, %p29
    %p31 = scmp.ne.s32.totalorder %s20, %s23
    %p32 = scmp.eq.s32.totalorder %s15, 1
    %p33 = por %p31, %p32
    %p34 = scmp.ne.s32.totalorder %s23, %s24
    %p35 = scmp.eq.s32.totalorder %s15, 0
    %p36 = por %p34, %p35
    %p37 = scmp.ne.s32.totalorder %s23, %s24
    %p38 = scmp.eq.s32.totalorder %s16, 1
    %p39 = por %p37, %p38
    %p41 = scmp.ne.s32.totalorder %s24, %s40
    %p42 = scmp.eq.s32.totalorder %s16, 0
    %p43 = por %p41, %p42
    %s45 = sadd.s32 %s44, 1
    %p48 = scmp.eq.s32.totalorder %s10, 1
    %p49 = scmp.ne.s32.totalorder %s44, %s46
    %p50 = scmp.eq.s32.totalorder %s10, 0
    %p51 = por %p49, %p50
    %p52 = scmp.ne.s32.totalorder %s44, %s46
    %p53 = scmp.eq.s32.totalorder %s15, 1
    %p54 = por %p52, %p53
    %p55 = scmp.ne.s32.totalorder %s46, %s47
    %p56 = scmp.eq.s32.totalorder %s15, 0
    %p57 = por %p55, %p56
    %p58 = scmp.ne.s32.totalorder %s46, %s47
    %p59 = scmp.eq.s32.totalorder %s16, 1
    %p60 = por %p58, %p59
    %p62 = scmp.ne.s32.totalorder %s47, %s61
    %p63 = scmp.eq.s32.totalorder %s16, 0
    %p64 = por %p62, %p63
    %s65 = ssub.s32 %s10, %s17
    %p66 = scmp.eq.s32.totalorder %s65, 0
    %s68 = sadd.s32 %s67, 1
    %s69 = scalar_select %p66, %s67, %s68
    %p72 = pneg %p66
    %p73 = scmp.eq.s32.totalorder %s10, 1
    %p74 = por %p72, %p73
    %p75 = scmp.ne.s32.totalorder %s67, %s70
    %p76 = scmp.eq.s32.totalorder %s10, 0
    %p77 = por %p75, %p76
    %p78 = scmp.ne.s32.totalorder %s67, %s70
    %p79 = scmp.eq.s32.totalorder %s15, 1
    %p80 = por %p78, %p79
    %p81 = scmp.ne.s32.totalorder %s70, %s71
    %p82 = scmp.eq.s32.totalorder %s15, 0
    %p83 = por %p81, %p82
    %p84 = scmp.ne.s32.totalorder %s70, %s71
    %p85 = scmp.eq.s32.totalorder %s16, 1
    %p86 = por %p84, %p85
    %p88 = scmp.ne.s32.totalorder %s71, %s87
    %p89 = scmp.eq.s32.totalorder %s16, 0
    %p90 = por %p88, %p89
    %s91 = ssub.s32 %s10, %s17
    %p92 = scmp.eq.s32.totalorder %s91, 0
    %s94 = sadd.s32 %s93, 1
    %s95 = scalar_select %p92, %s93, %s94
    %p98 = pneg %p92
    %p99 = scmp.eq.s32.totalorder %s10, 1
    %p100 = por %p98, %p99
    %p101 = scmp.ne.s32.totalorder %s93, %s96
    %p102 = scmp.eq.s32.totalorder %s10, 0
    %p103 = por %p101, %p102
    %p104 = scmp.ne.s32.totalorder %s93, %s96
    %p105 = scmp.eq.s32.totalorder %s15, 1
    %p106 = por %p104, %p105
    %p107 = scmp.ne.s32.totalorder %s96, %s97
    %p108 = scmp.eq.s32.totalorder %s15, 0
    %p109 = por %p107, %p108
    %p110 = scmp.ne.s32.totalorder %s96, %s97
    %p111 = scmp.eq.s32.totalorder %s16, 1
    %p112 = por %p110, %p111
    %p114 = scmp.ne.s32.totalorder %s97, %s113
    %p115 = scmp.eq.s32.totalorder %s16, 0
    %p116 = por %p114, %p115
    %p117 = scmp.le.s32.totalorder 1, %s10
    %p118 = scmp.lt.s32.totalorder %s10, 3
    %p119 = pnand %p117, %p118
    %p120 = pneg %p119
    // Predicated region
    $region9: #{cnn4_dsvdd_forward.9} parent=5 // pred_check
      _
    $region10: #{cnn4_dsvdd_forward.9} parent=5 // pred_check_branch
      %122 = sbr.rel (%p119) target = $region12
    $region11: #{cnn4_dsvdd_forward.9} parent=5 // pred_region
      %s123 = ssub.s32 %s10, 1
      // Predicated region
      $region13: #{cnn4_dsvdd_forward.9} parent=11 // pred_check
        %p124 = pneg %p57
      $region14: #{cnn4_dsvdd_forward.9} parent=11 // pred_check_branch
        %126 = sbr.rel (%p124) target = $region16
      $region15: #{cnn4_dsvdd_forward.9} parent=11 // pred_region
        _
      $region16: #{cnn4_dsvdd_forward.9} parent=11 // pred_fallthru
        _
    $region12: #{cnn4_dsvdd_forward.9} parent=5 // pred_fallthru
      _
    %p127 = scmp.lt.s32.totalorder %s10, 2
    // Predicated region
    $region17: #{cnn4_dsvdd_forward.9} parent=5 // pred_check
      %p128 = pneg %p127
    $region18: #{cnn4_dsvdd_forward.9} parent=5 // pred_check_branch
      %130 = sbr.rel (%p128) target = $region20
    $region19: #{cnn4_dsvdd_forward.9} parent=5 // pred_region
      // Predicated region
      $region21: #{cnn4_dsvdd_forward.9} parent=19 // pred_check
        %p131 = pneg %p30
      $region22: #{cnn4_dsvdd_forward.9} parent=19 // pred_check_branch
        %133 = sbr.rel (%p131) target = $region24
      $region23: #{cnn4_dsvdd_forward.9} parent=19 // pred_region
        %p134 = scmp.lt.s32.totalorder %s10, 1
        %s135 = scalar_select %p134, %s10, 1
        %s136 = smul.addr %s135, 18
        %s137 = smul.addr %s136, 4
        %s138 = scalar_lea.vmem %s0, %s137
      $region24: #{cnn4_dsvdd_forward.9} parent=19 // pred_fallthru
        _
    $region20: #{cnn4_dsvdd_forward.9} parent=5 // pred_fallthru
      _
    %p139 = scmp.le.s32.totalorder 1, %s10
    %p140 = scmp.lt.s32.totalorder %s10, 3
    %p141 = pnand %p139, %p140
    %p142 = pneg %p141
    // Predicated region
    $region25: #{cnn4_dsvdd_forward.9} parent=5 // pred_check
      _
    $region26: #{cnn4_dsvdd_forward.9} parent=5 // pred_check_branch
      %144 = sbr.rel (%p141) target = $region28
    $region27: #{cnn4_dsvdd_forward.9} parent=5 // pred_region
      %s145 = ssub.s32 %s10, 1
      %p146 = scmp.lt.s32.totalorder %s15, 1
      %s147 = scalar_select %p146, %s15, 1
      %s148 = smul.addr %s147, 18
      %s149 = smul.addr %s148, 4
      %s150 = scalar_lea.vmem %s0, %s149
      %p151 = pneg %p36
      %p152 = pneg %p33
      %p153 = pneg %p57
      %p154 = pneg %p54
      %p155 = pneg %p83
      %p156 = pneg %p80
      %p157 = scmp.lt.s32.totalorder %s15, 1
      %s158 = scalar_select %p157, %s15, 1
      %s159 = smul.addr %s158, 8
      %s160 = smul.addr %s159, 4
      %s161 = scalar_lea.vmem %s2, %s160
      %p162 = pneg %p109
      %p163 = pneg %p106
      %p164 = scmp.lt.s32.totalorder %s15, 1
      %s165 = scalar_select %p164, %s15, 1
      %s166 = smul.addr %s165, 8
      %s167 = scalar_lea.vmem %s3, %s166
      %p168 = scmp.lt.s32.totalorder %s15, 1
      %s169 = scalar_select %p168, %s15, 1
      %s170 = smul.addr %s169, 18
      %s171 = smul.addr %s170, 4
      %s172 = scalar_lea.vmem %s0, %s171
      %p173 = scmp.lt.s32.totalorder %s15, 1
      %s174 = scalar_select %p173, %s15, 1
      %s175 = smul.addr %s174, 8
      %s176 = smul.addr %s175, 4
      %s177 = scalar_lea.vmem %s2, %s176
      %p178 = scmp.lt.s32.totalorder %s15, 1
      %s179 = scalar_select %p178, %s15, 1
      %s180 = smul.addr %s179, 8
      %s181 = scalar_lea.vmem %s3, %s180
      %v183 = vld [vmem:[%s172] sm:$0xf]
      %v184 = vld [vmem:[%s172 + $0x4] sm:$0xf]
      %v185 = vld [vmem:[%s172 + $0x8] sm:$0xf]
      %v186 = vld [vmem:[%s172 + $0xc] sm:$0xf]
      %v187 = vld [vmem:[%s172 + $0x10] sm:$0xf]
      %v188 = vld [vmem:[%s172 + $0x14] sm:$0xf]
      %v189 = vld [vmem:[%s172 + $0x18] sm:$0xf]
      %v190 = vld [vmem:[%s172 + $0x1c] sm:$0xf]
      %v191 = vld [vmem:[%s1] sm:$0xf]
      %v192 = vld [vmem:[%s1 + $0x4] sm:$0xf]
      %v193 = vld [vmem:[%s1 + $0x8] sm:$0xf]
      %v194 = vld [vmem:[%s1 + $0xc] sm:$0xf]
      %s195 = scalar_lea.vmem %s172, 36
      %v196 = vld [vmem:[%s195] sm:$0xf]
      %v197 = vld [vmem:[%s195 + $0x4] sm:$0xf]
      %v198 = vld [vmem:[%s195 + $0x8] sm:$0xf]
      %v199 = vld [vmem:[%s195 + $0xc] sm:$0xf]
      %v200 = vld [vmem:[%s195 + $0x10] sm:$0xf]
      %v201 = vld [vmem:[%s195 + $0x14] sm:$0xf]
      %v202 = vld [vmem:[%s195 + $0x18] sm:$0xf]
      %v203 = vld [vmem:[%s195 + $0x1c] sm:$0xf]
      %s204 = scalar_lea.vmem %s1, 16
      %v205 = vld [vmem:[%s204] sm:$0xf]
      %v206 = vld [vmem:[%s204 + $0x4] sm:$0xf]
      %v207 = vld [vmem:[%s204 + $0x8] sm:$0xf]
      %v208 = vld [vmem:[%s204 + $0xc] sm:$0xf]
      %v217 = vunpack.c.l.b16 %v196
      %v218 = vunpack.c.l.b16 %v197
      %v219 = vunpack.c.l.b16 %v198
      %v220 = vunpack.c.l.b16 %v199
      %v221 = vunpack.c.l.b16 %v200
      %v222 = vunpack.c.l.b16 %v201
      %v223 = vunpack.c.l.b16 %v202
      %v224 = vunpack.c.l.b16 %v203
      %v225 = vpack.c.b16 %v218, %v217
      %v226 = vpack.c.b16 %v220, %v219
      %v227 = vpack.c.b16 %v222, %v221
      %v228 = vpack.c.b16 %v224, %v223
      %v233 = vunpack.c.l.b16 %v205
      %v234 = vunpack.c.l.b16 %v206
      %v235 = vunpack.c.l.b16 %v207
      %v236 = vunpack.c.l.b16 %v208
      %v237 = vpack.c.b16 %v234, %v233
      %v238 = vpack.c.b16 %v236, %v235
      %vm241 = vcmask 261120
      %v243 = vsel %vm241, %v225, 0
      %v246 = vsel %vm241, %v226, 0
      %v249 = vsel %vm241, %v227, 0
      %v252 = vsel %vm241, %v228, 0
      %254 = vmatprep.subr.bf16.mxu0 0
      %255 = vmatpush1.bf16.msra.mxu0 0
      %256 = vmatprep.subr.bf16.mxu0 0
      %257 = vmatpush1.bf16.msra.mxu0 0
      %258 = vmatprep.subr.bf16.mxu0 0
      %259 = vmatpush1.bf16.msra.mxu0 0
      %260 = vmatprep.subr.bf16.mxu0 0
      %261 = vmatpush1.bf16.msra.mxu0 0
      %262 = vmatprep.subr.bf16.mxu0 0
      %263 = vmatpush1.bf16.msra.mxu0 0
      %264 = vmatprep.subr.bf16.mxu0 0
      %265 = vmatpush1.bf16.msra.mxu0 0
      %266 = vmatprep.subr.bf16.mxu0 0
      %267 = vmatpush1.bf16.msra.mxu0 %v238
      %268 = vmatprep.subr.bf16.mxu0 0
      %269 = vmatpush1.bf16.msra.mxu0 %v237
      %270 = vmatprep.subr.bf16.mxu0 0
      %271 = vmatpush2.bf16.msra.mxu0 0
      %272 = vmatprep.subr.bf16.mxu0 0
      %273 = vmatpush2.bf16.msra.mxu0 0
      %274 = vmatprep.subr.bf16.mxu0 0
      %275 = vmatpush2.bf16.msra.mxu0 0
      %276 = vmatprep.subr.bf16.mxu0 0
      %277 = vmatpush2.bf16.msra.mxu0 0
      %278 = vmatprep.subr.bf16.mxu0 0
      %279 = vmatpush2.bf16.msra.mxu0 0
      %280 = vmatprep.subr.bf16.mxu0 0
      %281 = vmatpush2.bf16.msra.mxu0 0
      %282 = vmatprep.subr.bf16.mxu0 0
      %283 = vmatpush2.bf16.msra.mxu0 0
      %284 = vmatprep.subr.bf16.mxu0 0
      %285 = vmatpush2.bf16.msra.mxu0 0
      %286 = vmatprep.mubr.bf16.mxu0 0
      %287 = vmatmul.mubr.bf16.gmra.mxu0 %v243
      %v288 = vpop.f32.mrf.mxu0
      %v289 = vadd.f32 0.0, %v288
      %v290 = vpop.f32.mrf.mxu0
      %v291 = vpop.f32.mrf.mxu0
      %v292 = vadd.f32 0.0, %v291
      %v293 = vpop.f32.mrf.mxu0
      %294 = vmatprep.mubr.bf16.mxu0 0
      %295 = vmatmul.mubr.bf16.gmra.mxu0 %v246
      %v296 = vpop.f32.mrf.mxu0
      %v297 = vadd.f32 0.0, %v296
      %v298 = vpop.f32.mrf.mxu0
      %v299 = vpop.f32.mrf.mxu0
      %v300 = vadd.f32 0.0, %v299
      %v301 = vpop.f32.mrf.mxu0
      %302 = vmatprep.mubr.bf16.mxu0 0
      %303 = vmatmul.mubr.bf16.gmra.mxu0 %v249
      %v304 = vpop.f32.mrf.mxu0
      %v305 = vadd.f32 0.0, %v304
      %v306 = vpop.f32.mrf.mxu0
      %v307 = vpop.f32.mrf.mxu0
      %v308 = vadd.f32 0.0, %v307
      %v309 = vpop.f32.mrf.mxu0
      %310 = vmatprep.mubr.bf16.mxu0 0
      %311 = vmatmul.mubr.bf16.gmra.mxu0 %v252
      %v312 = vpop.f32.mrf.mxu0
      %v313 = vadd.f32 0.0, %v312
      %v314 = vpop.f32.mrf.mxu0
      %v315 = vpop.f32.mrf.mxu0
      %v316 = vadd.f32 0.0, %v315
      %v317 = vpop.f32.mrf.mxu0
      %318 = vdwg.mxu0
      %v327 = vunpack.c.l.b16 %v183
      %v328 = vunpack.c.l.b16 %v184
      %v329 = vunpack.c.l.b16 %v185
      %v330 = vunpack.c.l.b16 %v186
      %v331 = vunpack.c.l.b16 %v187
      %v332 = vunpack.c.l.b16 %v188
      %v333 = vunpack.c.l.b16 %v189
      %v334 = vunpack.c.l.b16 %v190
      %v335 = vpack.c.b16 %v328, %v327
      %v336 = vpack.c.b16 %v330, %v329
      %v337 = vpack.c.b16 %v332, %v331
      %v338 = vpack.c.b16 %v334, %v333
      %v343 = vunpack.c.l.b16 %v191
      %v344 = vunpack.c.l.b16 %v192
      %v345 = vunpack.c.l.b16 %v193
      %v346 = vunpack.c.l.b16 %v194
      %v347 = vpack.c.b16 %v344, %v343
      %v348 = vpack.c.b16 %v346, %v345
      %v352 = vsel %vm241, %v335, 0
      %v355 = vsel %vm241, %v336, 0
      %v358 = vsel %vm241, %v337, 0
      %v361 = vsel %vm241, %v338, 0
      %363 = vmatprep.subr.bf16.mxu0 0
      %364 = vmatpush1.bf16.msra.mxu0 0
      %365 = vmatprep.subr.bf16.mxu0 0
      %366 = vmatpush1.bf16.msra.mxu0 0
      %367 = vmatprep.subr.bf16.mxu0 0
      %368 = vmatpush1.bf16.msra.mxu0 0
      %369 = vmatprep.subr.bf16.mxu0 0
      %370 = vmatpush1.bf16.msra.mxu0 0
      %371 = vmatprep.subr.bf16.mxu0 0
      %372 = vmatpush1.bf16.msra.mxu0 0
      %373 = vmatprep.subr.bf16.mxu0 0
      %374 = vmatpush1.bf16.msra.mxu0 0
      %375 = vmatprep.subr.bf16.mxu0 0
      %376 = vmatpush1.bf16.msra.mxu0 %v348
      %377 = vmatprep.subr.bf16.mxu0 0
      %378 = vmatpush1.bf16.msra.mxu0 %v347
      %379 = vmatprep.subr.bf16.mxu0 0
      %380 = vmatpush2.bf16.msra.mxu0 0
      %381 = vmatprep.subr.bf16.mxu0 0
      %382 = vmatpush2.bf16.msra.mxu0 0
      %383 = vmatprep.subr.bf16.mxu0 0
      %384 = vmatpush2.bf16.msra.mxu0 0
      %385 = vmatprep.subr.bf16.mxu0 0
      %386 = vmatpush2.bf16.msra.mxu0 0
      %387 = vmatprep.subr.bf16.mxu0 0
      %388 = vmatpush2.bf16.msra.mxu0 0
      %389 = vmatprep.subr.bf16.mxu0 0
      %390 = vmatpush2.bf16.msra.mxu0 0
      %391 = vmatprep.subr.bf16.mxu0 0
      %392 = vmatpush2.bf16.msra.mxu0 0
      %393 = vmatprep.subr.bf16.mxu0 0
      %394 = vmatpush2.bf16.msra.mxu0 0
      %395 = vmatprep.mubr.bf16.mxu0 0
      %396 = vmatmul.mubr.bf16.gmra.mxu0 %v352
      %v397 = vpop.f32.mrf.mxu0
      %v398 = vadd.f32 %v289, %v397
      %v399 = vpop.f32.mrf.mxu0
      %v400 = vpop.f32.mrf.mxu0
      %v401 = vadd.f32 %v292, %v400
      %v402 = vpop.f32.mrf.mxu0
      %403 = vmatprep.mubr.bf16.mxu0 0
      %404 = vmatmul.mubr.bf16.gmra.mxu0 %v355
      %v405 = vpop.f32.mrf.mxu0
      %v406 = vadd.f32 %v297, %v405
      %v407 = vpop.f32.mrf.mxu0
      %v408 = vpop.f32.mrf.mxu0
      %v409 = vadd.f32 %v300, %v408
      %v410 = vpop.f32.mrf.mxu0
      %411 = vmatprep.mubr.bf16.mxu0 0
      %412 = vmatmul.mubr.bf16.gmra.mxu0 %v358
      %v413 = vpop.f32.mrf.mxu0
      %v414 = vadd.f32 %v305, %v413
      %v415 = vpop.f32.mrf.mxu0
      %v416 = vpop.f32.mrf.mxu0
      %v417 = vadd.f32 %v308, %v416
      %v418 = vpop.f32.mrf.mxu0
      %419 = vmatprep.mubr.bf16.mxu0 0
      %420 = vmatmul.mubr.bf16.gmra.mxu0 %v361
      %v421 = vpop.f32.mrf.mxu0
      %v422 = vadd.f32 %v313, %v421
      %v423 = vpop.f32.mrf.mxu0
      %v424 = vpop.f32.mrf.mxu0
      %v425 = vadd.f32 %v316, %v424
      %v426 = vpop.f32.mrf.mxu0
      %427 = vdwg.mxu0
      %v428 = vld [vmem:[%s172 + $0x4] sm:$0xf]
      %v429 = vld [vmem:[%s172 + $0x8] sm:$0xf]
      %v430 = vld [vmem:[%s172 + $0xc] sm:$0xf]
      %v431 = vld [vmem:[%s172 + $0x10] sm:$0xf]
      %v432 = vld [vmem:[%s172 + $0x14] sm:$0xf]
      %v433 = vld [vmem:[%s172 + $0x18] sm:$0xf]
      %v434 = vld [vmem:[%s172 + $0x1c] sm:$0xf]
      %v435 = vld [vmem:[%s172 + $0x20] sm:$0xf]
      %s436 = scalar_lea.vmem %s1, 32
      %v437 = vld [vmem:[%s436] sm:$0xf]
      %v438 = vld [vmem:[%s436 + $0x4] sm:$0xf]
      %v439 = vld [vmem:[%s436 + $0x8] sm:$0xf]
      %v440 = vld [vmem:[%s436 + $0xc] sm:$0xf]
      %v449 = vunpack.c.l.b16 %v428
      %v450 = vunpack.c.l.b16 %v429
      %v451 = vunpack.c.l.b16 %v430
      %v452 = vunpack.c.l.b16 %v431
      %v453 = vunpack.c.l.b16 %v432
      %v454 = vunpack.c.l.b16 %v433
      %v455 = vunpack.c.l.b16 %v434
      %v456 = vunpack.c.l.b16 %v435
      %v457 = vpack.c.b16 %v450, %v449
      %v458 = vpack.c.b16 %v452, %v451
      %v459 = vpack.c.b16 %v454, %v453
      %v460 = vpack.c.b16 %v456, %v455
      %v465 = vunpack.c.l.b16 %v437
      %v466 = vunpack.c.l.b16 %v438
      %v467 = vunpack.c.l.b16 %v439
      %v468 = vunpack.c.l.b16 %v440
      %v469 = vpack.c.b16 %v466, %v465
      %v470 = vpack.c.b16 %v468, %v467
      %v474 = vsel %vm241, %v457, 0
      %v477 = vsel %vm241, %v458, 0
      %v480 = vsel %vm241, %v459, 0
      %v483 = vsel %vm241, %v460, 0
      %485 = vmatprep.subr.bf16.mxu0 0
      %486 = vmatpush1.bf16.msra.mxu0 0
      %487 = vmatprep.subr.bf16.mxu0 0
      %488 = vmatpush1.bf16.msra.mxu0 0
      %489 = vmatprep.subr.bf16.mxu0 0
      %490 = vmatpush1.bf16.msra.mxu0 0
      %491 = vmatprep.subr.bf16.mxu0 0
      %492 = vmatpush1.bf16.msra.mxu0 0
      %493 = vmatprep.subr.bf16.mxu0 0
      %494 = vmatpush1.bf16.msra.mxu0 0
      %495 = vmatprep.subr.bf16.mxu0 0
      %496 = vmatpush1.bf16.msra.mxu0 0
      %497 = vmatprep.subr.bf16.mxu0 0
      %498 = vmatpush1.bf16.msra.mxu0 %v470
      %499 = vmatprep.subr.bf16.mxu0 0
      %500 = vmatpush1.bf16.msra.mxu0 %v469
      %501 = vmatprep.subr.bf16.mxu0 0
      %502 = vmatpush2.bf16.msra.mxu0 0
      %503 = vmatprep.subr.bf16.mxu0 0
      %504 = vmatpush2.bf16.msra.mxu0 0
      %505 = vmatprep.subr.bf16.mxu0 0
      %506 = vmatpush2.bf16.msra.mxu0 0
      %507 = vmatprep.subr.bf16.mxu0 0
      %508 = vmatpush2.bf16.msra.mxu0 0
      %509 = vmatprep.subr.bf16.mxu0 0
      %510 = vmatpush2.bf16.msra.mxu0 0
      %511 = vmatprep.subr.bf16.mxu0 0
      %512 = vmatpush2.bf16.msra.mxu0 0
      %513 = vmatprep.subr.bf16.mxu0 0
      %514 = vmatpush2.bf16.msra.mxu0 0
      %515 = vmatprep.subr.bf16.mxu0 0
      %516 = vmatpush2.bf16.msra.mxu0 0
      %517 = vmatprep.mubr.bf16.mxu0 0
      %518 = vmatmul.mubr.bf16.gmra.mxu0 %v474
      %v519 = vpop.f32.mrf.mxu0
      %v520 = vadd.f32 0.0, %v519
      %v521 = vpop.f32.mrf.mxu0
      %v522 = vpop.f32.mrf.mxu0
      %v523 = vadd.f32 0.0, %v522
      %v524 = vpop.f32.mrf.mxu0
      %525 = vmatprep.mubr.bf16.mxu0 0
      %526 = vmatmul.mubr.bf16.gmra.mxu0 %v477
      %v527 = vpop.f32.mrf.mxu0
      %v528 = vadd.f32 0.0, %v527
      %v529 = vpop.f32.mrf.mxu0
      %v530 = vpop.f32.mrf.mxu0
      %v531 = vadd.f32 0.0, %v530
      %v532 = vpop.f32.mrf.mxu0
      %533 = vmatprep.mubr.bf16.mxu0 0
      %534 = vmatmul.mubr.bf16.gmra.mxu0 %v480
      %v535 = vpop.f32.mrf.mxu0
      %v536 = vadd.f32 0.0, %v535
      %v537 = vpop.f32.mrf.mxu0
      %v538 = vpop.f32.mrf.mxu0
      %v539 = vadd.f32 0.0, %v538
      %v540 = vpop.f32.mrf.mxu0
      %541 = vmatprep.mubr.bf16.mxu0 0
      %542 = vmatmul.mubr.bf16.gmra.mxu0 %v483
      %v543 = vpop.f32.mrf.mxu0
      %v544 = vadd.f32 0.0, %v543
      %v545 = vpop.f32.mrf.mxu0
      %v546 = vpop.f32.mrf.mxu0
      %v547 = vadd.f32 0.0, %v546
      %v548 = vpop.f32.mrf.mxu0
      %549 = vdwg.mxu0
      %v550 = vadd.f32 %v398, %v520
      %v551 = vadd.f32 %v401, %v523
      %v552 = vadd.f32 %v406, %v528
      %v553 = vadd.f32 %v409, %v531
      %v554 = vadd.f32 %v414, %v536
      %v555 = vadd.f32 %v417, %v539
      %v556 = vadd.f32 %v422, %v544
      %v557 = vadd.f32 %v425, %v547
      %v558 = vsel %vm241, %v550, 0.0
      %v559 = vsel %vm241, %v551, 0.0
      %v560 = vadd.f32 %v558, %v559
      %v561 = vsel %vm241, %v552, 0.0
      %v562 = vadd.f32 %v560, %v561
      %v563 = vsel %vm241, %v553, 0.0
      %v564 = vadd.f32 %v562, %v563
      %v565 = vsel %vm241, %v554, 0.0
      %v566 = vadd.f32 %v564, %v565
      %v567 = vsel %vm241, %v555, 0.0
      %v568 = vadd.f32 %v566, %v567
      %v569 = vsel %vm241, %v556, 0.0
      %v570 = vadd.f32 %v568, %v569
      %v571 = vsel %vm241, %v557, 0.0
      %v572 = vadd.f32 %v570, %v571
      %v573 = vrot.slane %v572, 4
      %v574 = vadd.f32 %v572, %v573
      %v575 = vrot.slane %v574, 2
      %v576 = vadd.f32 %v574, %v575
      %v577 = vrot.slane %v576, 1
      %v578 = vadd.f32 %v576, %v577
      %v579 = vmul.f32 %v550, %v550
      %v580 = vmul.f32 %v551, %v551
      %v581 = vmul.f32 %v552, %v552
      %v582 = vmul.f32 %v553, %v553
      %v583 = vmul.f32 %v554, %v554
      %v584 = vmul.f32 %v555, %v555
      %v585 = vmul.f32 %v556, %v556
      %v586 = vmul.f32 %v557, %v557
      %v587 = vsel %vm241, %v579, 0.0
      %v588 = vsel %vm241, %v580, 0.0
      %v589 = vadd.f32 %v587, %v588
      %v590 = vsel %vm241, %v581, 0.0
      %v591 = vadd.f32 %v589, %v590
      %v592 = vsel %vm241, %v582, 0.0
      %v593 = vadd.f32 %v591, %v592
      %v594 = vsel %vm241, %v583, 0.0
      %v595 = vadd.f32 %v593, %v594
      %v596 = vsel %vm241, %v584, 0.0
      %v597 = vadd.f32 %v595, %v596
      %v598 = vsel %vm241, %v585, 0.0
      %v599 = vadd.f32 %v597, %v598
      %v600 = vsel %vm241, %v586, 0.0
      %v601 = vadd.f32 %v599, %v600
      %v602 = vrot.slane %v601, 4
      %v603 = vadd.f32 %v601, %v602
      %v604 = vrot.slane %v603, 2
      %v605 = vadd.f32 %v603, %v604
      %v606 = vrot.slane %v605, 1
      %v607 = vadd.f32 %v605, %v606
      %s608 = scalar_lea.vmem %s1, 48
      %v609 = vld [vmem:[%s608] sm:$0xf]
      %v610 = vld [vmem:[%s608 + $0x4] sm:$0xf]
      %v611 = vld [vmem:[%s608 + $0x8] sm:$0xf]
      %v612 = vld [vmem:[%s608 + $0xc] sm:$0xf]
      %s613 = scalar_lea.vmem %s1, 64
      %v614 = vld [vmem:[%s613] sm:$0xf]
      %v615 = vld [vmem:[%s613 + $0x4] sm:$0xf]
      %v616 = vld [vmem:[%s613 + $0x8] sm:$0xf]
      %v617 = vld [vmem:[%s613 + $0xc] sm:$0xf]
      %v622 = vunpack.c.l.b16 %v614
      %v623 = vunpack.c.l.b16 %v615
      %v624 = vunpack.c.l.b16 %v616
      %v625 = vunpack.c.l.b16 %v617
      %v626 = vpack.c.b16 %v623, %v622
      %v627 = vpack.c.b16 %v625, %v624
      %630 = vmatprep.subr.bf16.mxu0 0
      %631 = vmatpush1.bf16.msra.mxu0 0
      %632 = vmatprep.subr.bf16.mxu0 0
      %633 = vmatpush1.bf16.msra.mxu0 0
      %634 = vmatprep.subr.bf16.mxu0 0
      %635 = vmatpush1.bf16.msra.mxu0 0
      %636 = vmatprep.subr.bf16.mxu0 0
      %637 = vmatpush1.bf16.msra.mxu0 0
      %638 = vmatprep.subr.bf16.mxu0 0
      %639 = vmatpush1.bf16.msra.mxu0 0
      %640 = vmatprep.subr.bf16.mxu0 0
      %641 = vmatpush1.bf16.msra.mxu0 0
      %642 = vmatprep.subr.bf16.mxu0 0
      %643 = vmatpush1.bf16.msra.mxu0 %v627
      %644 = vmatprep.subr.bf16.mxu0 0
      %645 = vmatpush1.bf16.msra.mxu0 %v626
      %646 = vmatprep.subr.bf16.mxu0 0
      %647 = vmatpush2.bf16.msra.mxu0 0
      %648 = vmatprep.subr.bf16.mxu0 0
      %649 = vmatpush2.bf16.msra.mxu0 0
      %650 = vmatprep.subr.bf16.mxu0 0
      %651 = vmatpush2.bf16.msra.mxu0 0
      %652 = vmatprep.subr.bf16.mxu0 0
      %653 = vmatpush2.bf16.msra.mxu0 0
      %654 = vmatprep.subr.bf16.mxu0 0
      %655 = vmatpush2.bf16.msra.mxu0 0
      %656 = vmatprep.subr.bf16.mxu0 0
      %657 = vmatpush2.bf16.msra.mxu0 0
      %658 = vmatprep.subr.bf16.mxu0 0
      %659 = vmatpush2.bf16.msra.mxu0 0
      %660 = vmatprep.subr.bf16.mxu0 0
      %661 = vmatpush2.bf16.msra.mxu0 0
      %662 = vmatprep.mubr.bf16.mxu0 0
      %663 = vmatmul.mubr.bf16.gmra.mxu0 %v243
      %v664 = vpop.f32.mrf.mxu0
      %v665 = vadd.f32 0.0, %v664
      %v666 = vpop.f32.mrf.mxu0
      %v667 = vpop.f32.mrf.mxu0
      %v668 = vadd.f32 0.0, %v667
      %v669 = vpop.f32.mrf.mxu0
      %670 = vmatprep.mubr.bf16.mxu0 0
      %671 = vmatmul.mubr.bf16.gmra.mxu0 %v246
      %v672 = vpop.f32.mrf.mxu0
      %v673 = vadd.f32 0.0, %v672
      %v674 = vpop.f32.mrf.mxu0
      %v675 = vpop.f32.mrf.mxu0
      %v676 = vadd.f32 0.0, %v675
      %v677 = vpop.f32.mrf.mxu0
      %678 = vmatprep.mubr.bf16.mxu0 0
      %679 = vmatmul.mubr.bf16.gmra.mxu0 %v249
      %v680 = vpop.f32.mrf.mxu0
      %v681 = vadd.f32 0.0, %v680
      %v682 = vpop.f32.mrf.mxu0
      %v683 = vpop.f32.mrf.mxu0
      %v684 = vadd.f32 0.0, %v683
      %v685 = vpop.f32.mrf.mxu0
      %686 = vmatprep.mubr.bf16.mxu0 0
      %687 = vmatmul.mubr.bf16.gmra.mxu0 %v252
      %v688 = vpop.f32.mrf.mxu0
      %v689 = vadd.f32 0.0, %v688
      %v690 = vpop.f32.mrf.mxu0
      %v691 = vpop.f32.mrf.mxu0
      %v692 = vadd.f32 0.0, %v691
      %v693 = vpop.f32.mrf.mxu0
      %694 = vdwg.mxu0
      %v699 = vunpack.c.l.b16 %v609
      %v700 = vunpack.c.l.b16 %v610
      %v701 = vunpack.c.l.b16 %v611
      %v702 = vunpack.c.l.b16 %v612
      %v703 = vpack.c.b16 %v700, %v699
      %v704 = vpack.c.b16 %v702, %v701
      %707 = vmatprep.subr.bf16.mxu0 0
      %708 = vmatpush1.bf16.msra.mxu0 0
      %709 = vmatprep.subr.bf16.mxu0 0
      %710 = vmatpush1.bf16.msra.mxu0 0
      %711 = vmatprep.subr.bf16.mxu0 0
      %712 = vmatpush1.bf16.msra.mxu0 0
      %713 = vmatprep.subr.bf16.mxu0 0
      %714 = vmatpush1.bf16.msra.mxu0 0
      %715 = vmatprep.subr.bf16.mxu0 0
      %716 = vmatpush1.bf16.msra.mxu0 0
      %717 = vmatprep.subr.bf16.mxu0 0
      %718 = vmatpush1.bf16.msra.mxu0 0
      %719 = vmatprep.subr.bf16.mxu0 0
      %720 = vmatpush1.bf16.msra.mxu0 %v704
      %721 = vmatprep.subr.bf16.mxu0 0
      %722 = vmatpush1.bf16.msra.mxu0 %v703
      %723 = vmatprep.subr.bf16.mxu0 0
      %724 = vmatpush2.bf16.msra.mxu0 0
      %725 = vmatprep.subr.bf16.mxu0 0
      %726 = vmatpush2.bf16.msra.mxu0 0
      %727 = vmatprep.subr.bf16.mxu0 0
      %728 = vmatpush2.bf16.msra.mxu0 0
      %729 = vmatprep.subr.bf16.mxu0 0
      %730 = vmatpush2.bf16.msra.mxu0 0
      %731 = vmatprep.subr.bf16.mxu0 0
      %732 = vmatpush2.bf16.msra.mxu0 0
      %733 = vmatprep.subr.bf16.mxu0 0
      %734 = vmatpush2.bf16.msra.mxu0 0
      %735 = vmatprep.subr.bf16.mxu0 0
      %736 = vmatpush2.bf16.msra.mxu0 0
      %737 = vmatprep.subr.bf16.mxu0 0
      %738 = vmatpush2.bf16.msra.mxu0 0
      %739 = vmatprep.mubr.bf16.mxu0 0
      %740 = vmatmul.mubr.bf16.gmra.mxu0 %v352
      %v741 = vpop.f32.mrf.mxu0
      %v742 = vadd.f32 %v665, %v741
      %v743 = vpop.f32.mrf.mxu0
      %v744 = vpop.f32.mrf.mxu0
      %v745 = vadd.f32 %v668, %v744
      %v746 = vpop.f32.mrf.mxu0
      %747 = vmatprep.mubr.bf16.mxu0 0
      %748 = vmatmul.mubr.bf16.gmra.mxu0 %v355
      %v749 = vpop.f32.mrf.mxu0
      %v750 = vadd.f32 %v673, %v749
      %v751 = vpop.f32.mrf.mxu0
      %v752 = vpop.f32.mrf.mxu0
      %v753 = vadd.f32 %v676, %v752
      %v754 = vpop.f32.mrf.mxu0
      %755 = vmatprep.mubr.bf16.mxu0 0
      %756 = vmatmul.mubr.bf16.gmra.mxu0 %v358
      %v757 = vpop.f32.mrf.mxu0
      %v758 = vadd.f32 %v681, %v757
      %v759 = vpop.f32.mrf.mxu0
      %v760 = vpop.f32.mrf.mxu0
      %v761 = vadd.f32 %v684, %v760
      %v762 = vpop.f32.mrf.mxu0
      %763 = vmatprep.mubr.bf16.mxu0 0
      %764 = vmatmul.mubr.bf16.gmra.mxu0 %v361
      %v765 = vpop.f32.mrf.mxu0
      %v766 = vadd.f32 %v689, %v765
      %v767 = vpop.f32.mrf.mxu0
      %v768 = vpop.f32.mrf.mxu0
      %v769 = vadd.f32 %v692, %v768
      %v770 = vpop.f32.mrf.mxu0
      %771 = vdwg.mxu0
      %s772 = scalar_lea.vmem %s1, 80
      %v773 = vld [vmem:[%s772] sm:$0xf]
      %v774 = vld [vmem:[%s772 + $0x4] sm:$0xf]
      %v775 = vld [vmem:[%s772 + $0x8] sm:$0xf]
      %v776 = vld [vmem:[%s772 + $0xc] sm:$0xf]
      %v781 = vunpack.c.l.b16 %v773
      %v782 = vunpack.c.l.b16 %v774
      %v783 = vunpack.c.l.b16 %v775
      %v784 = vunpack.c.l.b16 %v776
      %v785 = vpack.c.b16 %v782, %v781
      %v786 = vpack.c.b16 %v784, %v783
      %789 = vmatprep.subr.bf16.mxu0 0
      %790 = vmatpush1.bf16.msra.mxu0 0
      %791 = vmatprep.subr.bf16.mxu0 0
      %792 = vmatpush1.bf16.msra.mxu0 0
      %793 = vmatprep.subr.bf16.mxu0 0
      %794 = vmatpush1.bf16.msra.mxu0 0
      %795 = vmatprep.subr.bf16.mxu0 0
      %796 = vmatpush1.bf16.msra.mxu0 0
      %797 = vmatprep.subr.bf16.mxu0 0
      %798 = vmatpush1.bf16.msra.mxu0 0
      %799 = vmatprep.subr.bf16.mxu0 0
      %800 = vmatpush1.bf16.msra.mxu0 0
      %801 = vmatprep.subr.bf16.mxu0 0
      %802 = vmatpush1.bf16.msra.mxu0 %v786
      %803 = vmatprep.subr.bf16.mxu0 0
      %804 = vmatpush1.bf16.msra.mxu0 %v785
      %805 = vmatprep.subr.bf16.mxu0 0
      %806 = vmatpush2.bf16.msra.mxu0 0
      %807 = vmatprep.subr.bf16.mxu0 0
      %808 = vmatpush2.bf16.msra.mxu0 0
      %809 = vmatprep.subr.bf16.mxu0 0
      %810 = vmatpush2.bf16.msra.mxu0 0
      %811 = vmatprep.subr.bf16.mxu0 0
      %812 = vmatpush2.bf16.msra.mxu0 0
      %813 = vmatprep.subr.bf16.mxu0 0
      %814 = vmatpush2.bf16.msra.mxu0 0
      %815 = vmatprep.subr.bf16.mxu0 0
      %816 = vmatpush2.bf16.msra.mxu0 0
      %817 = vmatprep.subr.bf16.mxu0 0
      %818 = vmatpush2.bf16.msra.mxu0 0
      %819 = vmatprep.subr.bf16.mxu0 0
      %820 = vmatpush2.bf16.msra.mxu0 0
      %821 = vmatprep.mubr.bf16.mxu0 0
      %822 = vmatmul.mubr.bf16.gmra.mxu0 %v474
      %v823 = vpop.f32.mrf.mxu0
      %v824 = vadd.f32 0.0, %v823
      %v825 = vpop.f32.mrf.mxu0
      %v826 = vpop.f32.mrf.mxu0
      %v827 = vadd.f32 0.0, %v826
      %v828 = vpop.f32.mrf.mxu0
      %829 = vmatprep.mubr.bf16.mxu0 0
      %830 = vmatmul.mubr.bf16.gmra.mxu0 %v477
      %v831 = vpop.f32.mrf.mxu0
      %v832 = vadd.f32 0.0, %v831
      %v833 = vpop.f32.mrf.mxu0
      %v834 = vpop.f32.mrf.mxu0
      %v835 = vadd.f32 0.0, %v834
      %v836 = vpop.f32.mrf.mxu0
      %837 = vmatprep.mubr.bf16.mxu0 0
      %838 = vmatmul.mubr.bf16.gmra.mxu0 %v480
      %v839 = vpop.f32.mrf.mxu0
      %v840 = vadd.f32 0.0, %v839
      %v841 = vpop.f32.mrf.mxu0
      %v842 = vpop.f32.mrf.mxu0
      %v843 = vadd.f32 0.0, %v842
      %v844 = vpop.f32.mrf.mxu0
      %845 = vmatprep.mubr.bf16.mxu0 0
      %846 = vmatmul.mubr.bf16.gmra.mxu0 %v483
      %v847 = vpop.f32.mrf.mxu0
      %v848 = vadd.f32 0.0, %v847
      %v849 = vpop.f32.mrf.mxu0
      %v850 = vpop.f32.mrf.mxu0
      %v851 = vadd.f32 0.0, %v850
      %v852 = vpop.f32.mrf.mxu0
      %853 = vdwg.mxu0
      %v854 = vadd.f32 %v742, %v824
      %v855 = vadd.f32 %v745, %v827
      %v856 = vadd.f32 %v750, %v832
      %v857 = vadd.f32 %v753, %v835
      %v858 = vadd.f32 %v758, %v840
      %v859 = vadd.f32 %v761, %v843
      %v860 = vadd.f32 %v766, %v848
      %v861 = vadd.f32 %v769, %v851
      %v862 = vsel %vm241, %v854, 0.0
      %v863 = vsel %vm241, %v855, 0.0
      %v864 = vadd.f32 %v862, %v863
      %v865 = vsel %vm241, %v856, 0.0
      %v866 = vadd.f32 %v864, %v865
      %v867 = vsel %vm241, %v857, 0.0
      %v868 = vadd.f32 %v866, %v867
      %v869 = vsel %vm241, %v858, 0.0
      %v870 = vadd.f32 %v868, %v869
      %v871 = vsel %vm241, %v859, 0.0
      %v872 = vadd.f32 %v870, %v871
      %v873 = vsel %vm241, %v860, 0.0
      %v874 = vadd.f32 %v872, %v873
      %v875 = vsel %vm241, %v861, 0.0
      %v876 = vadd.f32 %v874, %v875
      %v877 = vrot.slane %v876, 4
      %v878 = vadd.f32 %v876, %v877
      %v879 = vrot.slane %v878, 2
      %v880 = vadd.f32 %v878, %v879
      %v881 = vrot.slane %v880, 1
      %v882 = vadd.f32 %v880, %v881
      %v883 = vmul.f32 %v854, %v854
      %v884 = vmul.f32 %v855, %v855
      %v885 = vmul.f32 %v856, %v856
      %v886 = vmul.f32 %v857, %v857
      %v887 = vmul.f32 %v858, %v858
      %v888 = vmul.f32 %v859, %v859
      %v889 = vmul.f32 %v860, %v860
      %v890 = vmul.f32 %v861, %v861
      %v891 = vsel %vm241, %v883, 0.0
      %v892 = vsel %vm241, %v884, 0.0
      %v893 = vadd.f32 %v891, %v892
      %v894 = vsel %vm241, %v885, 0.0
      %v895 = vadd.f32 %v893, %v894
      %v896 = vsel %vm241, %v886, 0.0
      %v897 = vadd.f32 %v895, %v896
      %v898 = vsel %vm241, %v887, 0.0
      %v899 = vadd.f32 %v897, %v898
      %v900 = vsel %vm241, %v888, 0.0
      %v901 = vadd.f32 %v899, %v900
      %v902 = vsel %vm241, %v889, 0.0
      %v903 = vadd.f32 %v901, %v902
      %v904 = vsel %vm241, %v890, 0.0
      %v905 = vadd.f32 %v903, %v904
      %v906 = vrot.slane %v905, 4
      %v907 = vadd.f32 %v905, %v906
      %v908 = vrot.slane %v907, 2
      %v909 = vadd.f32 %v907, %v908
      %v910 = vrot.slane %v909, 1
      %v911 = vadd.f32 %v909, %v910
      %v912 = vmax.f32 %v550, %v854
      %v913 = vmax.f32 %v551, %v855
      %v914 = vmax.f32 %v552, %v856
      %v915 = vmax.f32 %v553, %v857
      %v916 = vmax.f32 %v554, %v858
      %v917 = vmax.f32 %v555, %v859
      %v918 = vmax.f32 %v556, %v860
      %v919 = vmax.f32 %v557, %v861
      %v920 = vmin.f32 %v550, %v854
      %v921 = vmin.f32 %v551, %v855
      %v922 = vmin.f32 %v552, %v856
      %v923 = vmin.f32 %v553, %v857
      %v924 = vmin.f32 %v554, %v858
      %v925 = vmin.f32 %v555, %v859
      %v926 = vmin.f32 %v556, %v860
      %v927 = vmin.f32 %v557, %v861
      %v928 = vadd.f32 %v578, %v882
      %v929 = vadd.f32 %v607, %v911
      %930 = vmatprep.subr.bf16.mxu0 0
      %931 = vmatpush1.bf16.msra.mxu0 0
      %932 = vmatprep.subr.bf16.mxu0 0
      %933 = vmatpush1.bf16.msra.mxu0 0
      %934 = vmatprep.subr.bf16.mxu0 0
      %935 = vmatpush1.bf16.msra.mxu0 0
      %936 = vmatprep.subr.bf16.mxu0 0
      %937 = vmatpush1.bf16.msra.mxu0 0
      %938 = vmatprep.subr.bf16.mxu0 0
      %939 = vmatpush1.bf16.msra.mxu0 0
      %940 = vmatprep.subr.bf16.mxu0 0
      %941 = vmatpush1.bf16.msra.mxu0 0
      %942 = vmatprep.subr.bf16.mxu0 0
      %943 = vmatpush1.bf16.msra.mxu0 %v238
      %944 = vmatprep.subr.bf16.mxu0 0
      %945 = vmatpush1.bf16.msra.mxu0 %v237
      %946 = vmatprep.subr.bf16.mxu0 0
      %947 = vmatpush2.bf16.msra.mxu0 0
      %948 = vmatprep.subr.bf16.mxu0 0
      %949 = vmatpush2.bf16.msra.mxu0 0
      %950 = vmatprep.subr.bf16.mxu0 0
      %951 = vmatpush2.bf16.msra.mxu0 0
      %952 = vmatprep.subr.bf16.mxu0 0
      %953 = vmatpush2.bf16.msra.mxu0 0
      %954 = vmatprep.subr.bf16.mxu0 0
      %955 = vmatpush2.bf16.msra.mxu0 0
      %956 = vmatprep.subr.bf16.mxu0 0
      %957 = vmatpush2.bf16.msra.mxu0 0
      %958 = vmatprep.subr.bf16.mxu0 0
      %959 = vmatpush2.bf16.msra.mxu0 0
      %960 = vmatprep.subr.bf16.mxu0 0
      %961 = vmatpush2.bf16.msra.mxu0 0
      %962 = vmatprep.mubr.bf16.mxu0 0
      %963 = vmatmul.mubr.bf16.gmra.mxu0 %v474
      %v964 = vpop.f32.mrf.mxu0
      %v965 = vadd.f32 0.0, %v964
      %v966 = vpop.f32.mrf.mxu0
      %v967 = vpop.f32.mrf.mxu0
      %v968 = vadd.f32 0.0, %v967
      %v969 = vpop.f32.mrf.mxu0
      %970 = vmatprep.mubr.bf16.mxu0 0
      %971 = vmatmul.mubr.bf16.gmra.mxu0 %v477
      %v972 = vpop.f32.mrf.mxu0
      %v973 = vadd.f32 0.0, %v972
      %v974 = vpop.f32.mrf.mxu0
      %v975 = vpop.f32.mrf.mxu0
      %v976 = vadd.f32 0.0, %v975
      %v977 = vpop.f32.mrf.mxu0
      %978 = vmatprep.mubr.bf16.mxu0 0
      %979 = vmatmul.mubr.bf16.gmra.mxu0 %v480
      %v980 = vpop.f32.mrf.mxu0
      %v981 = vadd.f32 0.0, %v980
      %v982 = vpop.f32.mrf.mxu0
      %v983 = vpop.f32.mrf.mxu0
      %v984 = vadd.f32 0.0, %v983
      %v985 = vpop.f32.mrf.mxu0
      %986 = vmatprep.mubr.bf16.mxu0 0
      %987 = vmatmul.mubr.bf16.gmra.mxu0 %v483
      %v988 = vpop.f32.mrf.mxu0
      %v989 = vadd.f32 0.0, %v988
      %v990 = vpop.f32.mrf.mxu0
      %v991 = vpop.f32.mrf.mxu0
      %v992 = vadd.f32 0.0, %v991
      %v993 = vpop.f32.mrf.mxu0
      %994 = vdwg.mxu0
      %995 = vmatprep.subr.bf16.mxu0 0
      %996 = vmatpush1.bf16.msra.mxu0 0
      %997 = vmatprep.subr.bf16.mxu0 0
      %998 = vmatpush1.bf16.msra.mxu0 0
      %999 = vmatprep.subr.bf16.mxu0 0
      %1000 = vmatpush1.bf16.msra.mxu0 0
      %1001 = vmatprep.subr.bf16.mxu0 0
      %1002 = vmatpush1.bf16.msra.mxu0 0
      %1003 = vmatprep.subr.bf16.mxu0 0
      %1004 = vmatpush1.bf16.msra.mxu0 0
      %1005 = vmatprep.subr.bf16.mxu0 0
      %1006 = vmatpush1.bf16.msra.mxu0 0
      %1007 = vmatprep.subr.bf16.mxu0 0
      %1008 = vmatpush1.bf16.msra.mxu0 %v348
      %1009 = vmatprep.subr.bf16.mxu0 0
      %1010 = vmatpush1.bf16.msra.mxu0 %v347
      %1011 = vmatprep.subr.bf16.mxu0 0
      %1012 = vmatpush2.bf16.msra.mxu0 0
      %1013 = vmatprep.subr.bf16.mxu0 0
      %1014 = vmatpush2.bf16.msra.mxu0 0
      %1015 = vmatprep.subr.bf16.mxu0 0
      %1016 = vmatpush2.bf16.msra.mxu0 0
      %1017 = vmatprep.subr.bf16.mxu0 0
      %1018 = vmatpush2.bf16.msra.mxu0 0
      %1019 = vmatprep.subr.bf16.mxu0 0
      %1020 = vmatpush2.bf16.msra.mxu0 0
      %1021 = vmatprep.subr.bf16.mxu0 0
      %1022 = vmatpush2.bf16.msra.mxu0 0
      %1023 = vmatprep.subr.bf16.mxu0 0
      %1024 = vmatpush2.bf16.msra.mxu0 0
      %1025 = vmatprep.subr.bf16.mxu0 0
      %1026 = vmatpush2.bf16.msra.mxu0 0
      %1027 = vmatprep.mubr.bf16.mxu0 0
      %1028 = vmatmul.mubr.bf16.gmra.mxu0 %v243
      %v1029 = vpop.f32.mrf.mxu0
      %v1030 = vadd.f32 %v965, %v1029
      %v1031 = vpop.f32.mrf.mxu0
      %v1032 = vpop.f32.mrf.mxu0
      %v1033 = vadd.f32 %v968, %v1032
      %v1034 = vpop.f32.mrf.mxu0
      %1035 = vmatprep.mubr.bf16.mxu0 0
      %1036 = vmatmul.mubr.bf16.gmra.mxu0 %v246
      %v1037 = vpop.f32.mrf.mxu0
      %v1038 = vadd.f32 %v973, %v1037
      %v1039 = vpop.f32.mrf.mxu0
      %v1040 = vpop.f32.mrf.mxu0
      %v1041 = vadd.f32 %v976, %v1040
      %v1042 = vpop.f32.mrf.mxu0
      %1043 = vmatprep.mubr.bf16.mxu0 0
      %1044 = vmatmul.mubr.bf16.gmra.mxu0 %v249
      %v1045 = vpop.f32.mrf.mxu0
      %v1046 = vadd.f32 %v981, %v1045
      %v1047 = vpop.f32.mrf.mxu0
      %v1048 = vpop.f32.mrf.mxu0
      %v1049 = vadd.f32 %v984, %v1048
      %v1050 = vpop.f32.mrf.mxu0
      %1051 = vmatprep.mubr.bf16.mxu0 0
      %1052 = vmatmul.mubr.bf16.gmra.mxu0 %v252
      %v1053 = vpop.f32.mrf.mxu0
      %v1054 = vadd.f32 %v989, %v1053
      %v1055 = vpop.f32.mrf.mxu0
      %v1056 = vpop.f32.mrf.mxu0
      %v1057 = vadd.f32 %v992, %v1056
      %v1058 = vpop.f32.mrf.mxu0
      %1059 = vdwg.mxu0
      %v1060 = vld [vmem:[%s195 + $0x4] sm:$0xf]
      %v1061 = vld [vmem:[%s195 + $0x8] sm:$0xf]
      %v1062 = vld [vmem:[%s195 + $0xc] sm:$0xf]
      %v1063 = vld [vmem:[%s195 + $0x10] sm:$0xf]
      %v1064 = vld [vmem:[%s195 + $0x14] sm:$0xf]
      %v1065 = vld [vmem:[%s195 + $0x18] sm:$0xf]
      %v1066 = vld [vmem:[%s195 + $0x1c] sm:$0xf]
      %v1067 = vld [vmem:[%s195 + $0x20] sm:$0xf]
      %v1076 = vunpack.c.l.b16 %v1060
      %v1077 = vunpack.c.l.b16 %v1061
      %v1078 = vunpack.c.l.b16 %v1062
      %v1079 = vunpack.c.l.b16 %v1063
      %v1080 = vunpack.c.l.b16 %v1064
      %v1081 = vunpack.c.l.b16 %v1065
      %v1082 = vunpack.c.l.b16 %v1066
      %v1083 = vunpack.c.l.b16 %v1067
      %v1084 = vpack.c.b16 %v1077, %v1076
      %v1085 = vpack.c.b16 %v1079, %v1078
      %v1086 = vpack.c.b16 %v1081, %v1080
      %v1087 = vpack.c.b16 %v1083, %v1082
      %v1089 = vsel %vm241, %v1084, 0
      %v1092 = vsel %vm241, %v1085, 0
      %v1095 = vsel %vm241, %v1086, 0
      %v1098 = vsel %vm241, %v1087, 0
      %1100 = vmatprep.subr.bf16.mxu0 0
      %1101 = vmatpush1.bf16.msra.mxu0 0
      %1102 = vmatprep.subr.bf16.mxu0 0
      %1103 = vmatpush1.bf16.msra.mxu0 0
      %1104 = vmatprep.subr.bf16.mxu0 0
      %1105 = vmatpush1.bf16.msra.mxu0 0
      %1106 = vmatprep.subr.bf16.mxu0 0
      %1107 = vmatpush1.bf16.msra.mxu0 0
      %1108 = vmatprep.subr.bf16.mxu0 0
      %1109 = vmatpush1.bf16.msra.mxu0 0
      %1110 = vmatprep.subr.bf16.mxu0 0
      %1111 = vmatpush1.bf16.msra.mxu0 0
      %1112 = vmatprep.subr.bf16.mxu0 0
      %1113 = vmatpush1.bf16.msra.mxu0 %v470
      %1114 = vmatprep.subr.bf16.mxu0 0
      %1115 = vmatpush1.bf16.msra.mxu0 %v469
      %1116 = vmatprep.subr.bf16.mxu0 0
      %1117 = vmatpush2.bf16.msra.mxu0 0
      %1118 = vmatprep.subr.bf16.mxu0 0
      %1119 = vmatpush2.bf16.msra.mxu0 0
      %1120 = vmatprep.subr.bf16.mxu0 0
      %1121 = vmatpush2.bf16.msra.mxu0 0
      %1122 = vmatprep.subr.bf16.mxu0 0
      %1123 = vmatpush2.bf16.msra.mxu0 0
      %1124 = vmatprep.subr.bf16.mxu0 0
      %1125 = vmatpush2.bf16.msra.mxu0 0
      %1126 = vmatprep.subr.bf16.mxu0 0
      %1127 = vmatpush2.bf16.msra.mxu0 0
      %1128 = vmatprep.subr.bf16.mxu0 0
      %1129 = vmatpush2.bf16.msra.mxu0 0
      %1130 = vmatprep.subr.bf16.mxu0 0
      %1131 = vmatpush2.bf16.msra.mxu0 0
      %1132 = vmatprep.mubr.bf16.mxu0 0
      %1133 = vmatmul.mubr.bf16.gmra.mxu0 %v1089
      %v1134 = vpop.f32.mrf.mxu0
      %v1135 = vadd.f32 0.0, %v1134
      %v1136 = vpop.f32.mrf.mxu0
      %v1137 = vpop.f32.mrf.mxu0
      %v1138 = vadd.f32 0.0, %v1137
      %v1139 = vpop.f32.mrf.mxu0
      %1140 = vmatprep.mubr.bf16.mxu0 0
      %1141 = vmatmul.mubr.bf16.gmra.mxu0 %v1092
      %v1142 = vpop.f32.mrf.mxu0
      %v1143 = vadd.f32 0.0, %v1142
      %v1144 = vpop.f32.mrf.mxu0
      %v1145 = vpop.f32.mrf.mxu0
      %v1146 = vadd.f32 0.0, %v1145
      %v1147 = vpop.f32.mrf.mxu0
      %1148 = vmatprep.mubr.bf16.mxu0 0
      %1149 = vmatmul.mubr.bf16.gmra.mxu0 %v1095
      %v1150 = vpop.f32.mrf.mxu0
      %v1151 = vadd.f32 0.0, %v1150
      %v1152 = vpop.f32.mrf.mxu0
      %v1153 = vpop.f32.mrf.mxu0
      %v1154 = vadd.f32 0.0, %v1153
      %v1155 = vpop.f32.mrf.mxu0
      %1156 = vmatprep.mubr.bf16.mxu0 0
      %1157 = vmatmul.mubr.bf16.gmra.mxu0 %v1098
      %v1158 = vpop.f32.mrf.mxu0
      %v1159 = vadd.f32 0.0, %v1158
      %v1160 = vpop.f32.mrf.mxu0
      %v1161 = vpop.f32.mrf.mxu0
      %v1162 = vadd.f32 0.0, %v1161
      %v1163 = vpop.f32.mrf.mxu0
      %1164 = vdwg.mxu0
      %v1165 = vadd.f32 %v1030, %v1135
      %v1166 = vadd.f32 %v1033, %v1138
      %v1167 = vadd.f32 %v1038, %v1143
      %v1168 = vadd.f32 %v1041, %v1146
      %v1169 = vadd.f32 %v1046, %v1151
      %v1170 = vadd.f32 %v1049, %v1154
      %v1171 = vadd.f32 %v1054, %v1159
      %v1172 = vadd.f32 %v1057, %v1162
      %v1173 = vsel %vm241, %v1165, 0.0
      %v1174 = vsel %vm241, %v1166, 0.0
      %v1175 = vadd.f32 %v1173, %v1174
      %v1176 = vsel %vm241, %v1167, 0.0
      %v1177 = vadd.f32 %v1175, %v1176
      %v1178 = vsel %vm241, %v1168, 0.0
      %v1179 = vadd.f32 %v1177, %v1178
      %v1180 = vsel %vm241, %v1169, 0.0
      %v1181 = vadd.f32 %v1179, %v1180
      %v1182 = vsel %vm241, %v1170, 0.0
      %v1183 = vadd.f32 %v1181, %v1182
      %v1184 = vsel %vm241, %v1171, 0.0
      %v1185 = vadd.f32 %v1183, %v1184
      %v1186 = vsel %vm241, %v1172, 0.0
      %v1187 = vadd.f32 %v1185, %v1186
      %v1188 = vrot.slane %v1187, 4
      %v1189 = vadd.f32 %v1187, %v1188
      %v1190 = vrot.slane %v1189, 2
      %v1191 = vadd.f32 %v1189, %v1190
      %v1192 = vrot.slane %v1191, 1
      %v1193 = vadd.f32 %v1191, %v1192
      %v1194 = vmul.f32 %v1165, %v1165
      %v1195 = vmul.f32 %v1166, %v1166
      %v1196 = vmul.f32 %v1167, %v1167
      %v1197 = vmul.f32 %v1168, %v1168
      %v1198 = vmul.f32 %v1169, %v1169
      %v1199 = vmul.f32 %v1170, %v1170
      %v1200 = vmul.f32 %v1171, %v1171
      %v1201 = vmul.f32 %v1172, %v1172
      %v1202 = vsel %vm241, %v1194, 0.0
      %v1203 = vsel %vm241, %v1195, 0.0
      %v1204 = vadd.f32 %v1202, %v1203
      %v1205 = vsel %vm241, %v1196, 0.0
      %v1206 = vadd.f32 %v1204, %v1205
      %v1207 = vsel %vm241, %v1197, 0.0
      %v1208 = vadd.f32 %v1206, %v1207
      %v1209 = vsel %vm241, %v1198, 0.0
      %v1210 = vadd.f32 %v1208, %v1209
      %v1211 = vsel %vm241, %v1199, 0.0
      %v1212 = vadd.f32 %v1210, %v1211
      %v1213 = vsel %vm241, %v1200, 0.0
      %v1214 = vadd.f32 %v1212, %v1213
      %v1215 = vsel %vm241, %v1201, 0.0
      %v1216 = vadd.f32 %v1214, %v1215
      %v1217 = vrot.slane %v1216, 4
      %v1218 = vadd.f32 %v1216, %v1217
      %v1219 = vrot.slane %v1218, 2
      %v1220 = vadd.f32 %v1218, %v1219
      %v1221 = vrot.slane %v1220, 1
      %v1222 = vadd.f32 %v1220, %v1221
      %v1223 = vmax.f32 %v912, %v1165
      %v1224 = vmax.f32 %v913, %v1166
      %v1225 = vmax.f32 %v914, %v1167
      %v1226 = vmax.f32 %v915, %v1168
      %v1227 = vmax.f32 %v916, %v1169
      %v1228 = vmax.f32 %v917, %v1170
      %v1229 = vmax.f32 %v918, %v1171
      %v1230 = vmax.f32 %v919, %v1172
      %v1231 = vmin.f32 %v920, %v1165
      %v1232 = vmin.f32 %v921, %v1166
      %v1233 = vmin.f32 %v922, %v1167
      %v1234 = vmin.f32 %v923, %v1168
      %v1235 = vmin.f32 %v924, %v1169
      %v1236 = vmin.f32 %v925, %v1170
      %v1237 = vmin.f32 %v926, %v1171
      %v1238 = vmin.f32 %v927, %v1172
      %v1239 = vadd.f32 %v928, %v1193
      %v1240 = vadd.f32 %v929, %v1222
      %1241 = vmatprep.subr.bf16.mxu0 0
      %1242 = vmatpush1.bf16.msra.mxu0 0
      %1243 = vmatprep.subr.bf16.mxu0 0
      %1244 = vmatpush1.bf16.msra.mxu0 0
      %1245 = vmatprep.subr.bf16.mxu0 0
      %1246 = vmatpush1.bf16.msra.mxu0 0
      %1247 = vmatprep.subr.bf16.mxu0 0
      %1248 = vmatpush1.bf16.msra.mxu0 0
      %1249 = vmatprep.subr.bf16.mxu0 0
      %1250 = vmatpush1.bf16.msra.mxu0 0
      %1251 = vmatprep.subr.bf16.mxu0 0
      %1252 = vmatpush1.bf16.msra.mxu0 0
      %1253 = vmatprep.subr.bf16.mxu0 0
      %1254 = vmatpush1.bf16.msra.mxu0 %v627
      %1255 = vmatprep.subr.bf16.mxu0 0
      %1256 = vmatpush1.bf16.msra.mxu0 %v626
      %1257 = vmatprep.subr.bf16.mxu0 0
      %1258 = vmatpush2.bf16.msra.mxu0 0
      %1259 = vmatprep.subr.bf16.mxu0 0
      %1260 = vmatpush2.bf16.msra.mxu0 0
      %1261 = vmatprep.subr.bf16.mxu0 0
      %1262 = vmatpush2.bf16.msra.mxu0 0
      %1263 = vmatprep.subr.bf16.mxu0 0
      %1264 = vmatpush2.bf16.msra.mxu0 0
      %1265 = vmatprep.subr.bf16.mxu0 0
      %1266 = vmatpush2.bf16.msra.mxu0 0
      %1267 = vmatprep.subr.bf16.mxu0 0
      %1268 = vmatpush2.bf16.msra.mxu0 0
      %1269 = vmatprep.subr.bf16.mxu0 0
      %1270 = vmatpush2.bf16.msra.mxu0 0
      %1271 = vmatprep.subr.bf16.mxu0 0
      %1272 = vmatpush2.bf16.msra.mxu0 0
      %1273 = vmatprep.mubr.bf16.mxu0 0
      %1274 = vmatmul.mubr.bf16.gmra.mxu0 %v474
      %v1275 = vpop.f32.mrf.mxu0
      %v1276 = vadd.f32 0.0, %v1275
      %v1277 = vpop.f32.mrf.mxu0
      %v1278 = vpop.f32.mrf.mxu0
      %v1279 = vadd.f32 0.0, %v1278
      %v1280 = vpop.f32.mrf.mxu0
      %1281 = vmatprep.mubr.bf16.mxu0 0
      %1282 = vmatmul.mubr.bf16.gmra.mxu0 %v477
      %v1283 = vpop.f32.mrf.mxu0
      %v1284 = vadd.f32 0.0, %v1283
      %v1285 = vpop.f32.mrf.mxu0
      %v1286 = vpop.f32.mrf.mxu0
      %v1287 = vadd.f32 0.0, %v1286
      %v1288 = vpop.f32.mrf.mxu0
      %1289 = vmatprep.mubr.bf16.mxu0 0
      %1290 = vmatmul.mubr.bf16.gmra.mxu0 %v480
      %v1291 = vpop.f32.mrf.mxu0
      %v1292 = vadd.f32 0.0, %v1291
      %v1293 = vpop.f32.mrf.mxu0
      %v1294 = vpop.f32.mrf.mxu0
      %v1295 = vadd.f32 0.0, %v1294
      %v1296 = vpop.f32.mrf.mxu0
      %1297 = vmatprep.mubr.bf16.mxu0 0
      %1298 = vmatmul.mubr.bf16.gmra.mxu0 %v483
      %v1299 = vpop.f32.mrf.mxu0
      %v1300 = vadd.f32 0.0, %v1299
      %v1301 = vpop.f32.mrf.mxu0
      %v1302 = vpop.f32.mrf.mxu0
      %v1303 = vadd.f32 0.0, %v1302
      %v1304 = vpop.f32.mrf.mxu0
      %1305 = vdwg.mxu0
      %1306 = vmatprep.subr.bf16.mxu0 0
      %1307 = vmatpush1.bf16.msra.mxu0 0
      %1308 = vmatprep.subr.bf16.mxu0 0
      %1309 = vmatpush1.bf16.msra.mxu0 0
      %1310 = vmatprep.subr.bf16.mxu0 0
      %1311 = vmatpush1.bf16.msra.mxu0 0
      %1312 = vmatprep.subr.bf16.mxu0 0
      %1313 = vmatpush1.bf16.msra.mxu0 0
      %1314 = vmatprep.subr.bf16.mxu0 0
      %1315 = vmatpush1.bf16.msra.mxu0 0
      %1316 = vmatprep.subr.bf16.mxu0 0
      %1317 = vmatpush1.bf16.msra.mxu0 0
      %1318 = vmatprep.subr.bf16.mxu0 0
      %1319 = vmatpush1.bf16.msra.mxu0 %v704
      %1320 = vmatprep.subr.bf16.mxu0 0
      %1321 = vmatpush1.bf16.msra.mxu0 %v703
      %1322 = vmatprep.subr.bf16.mxu0 0
      %1323 = vmatpush2.bf16.msra.mxu0 0
      %1324 = vmatprep.subr.bf16.mxu0 0
      %1325 = vmatpush2.bf16.msra.mxu0 0
      %1326 = vmatprep.subr.bf16.mxu0 0
      %1327 = vmatpush2.bf16.msra.mxu0 0
      %1328 = vmatprep.subr.bf16.mxu0 0
      %1329 = vmatpush2.bf16.msra.mxu0 0
      %1330 = vmatprep.subr.bf16.mxu0 0
      %1331 = vmatpush2.bf16.msra.mxu0 0
      %1332 = vmatprep.subr.bf16.mxu0 0
      %1333 = vmatpush2.bf16.msra.mxu0 0
      %1334 = vmatprep.subr.bf16.mxu0 0
      %1335 = vmatpush2.bf16.msra.mxu0 0
      %1336 = vmatprep.subr.bf16.mxu0 0
      %1337 = vmatpush2.bf16.msra.mxu0 0
      %1338 = vmatprep.mubr.bf16.mxu0 0
      %1339 = vmatmul.mubr.bf16.gmra.mxu0 %v243
      %v1340 = vpop.f32.mrf.mxu0
      %v1341 = vadd.f32 %v1276, %v1340
      %v1342 = vpop.f32.mrf.mxu0
      %v1343 = vpop.f32.mrf.mxu0
      %v1344 = vadd.f32 %v1279, %v1343
      %v1345 = vpop.f32.mrf.mxu0
      %1346 = vmatprep.mubr.bf16.mxu0 0
      %1347 = vmatmul.mubr.bf16.gmra.mxu0 %v246
      %v1348 = vpop.f32.mrf.mxu0
      %v1349 = vadd.f32 %v1284, %v1348
      %v1350 = vpop.f32.mrf.mxu0
      %v1351 = vpop.f32.mrf.mxu0
      %v1352 = vadd.f32 %v1287, %v1351
      %v1353 = vpop.f32.mrf.mxu0
      %1354 = vmatprep.mubr.bf16.mxu0 0
      %1355 = vmatmul.mubr.bf16.gmra.mxu0 %v249
      %v1356 = vpop.f32.mrf.mxu0
      %v1357 = vadd.f32 %v1292, %v1356
      %v1358 = vpop.f32.mrf.mxu0
      %v1359 = vpop.f32.mrf.mxu0
      %v1360 = vadd.f32 %v1295, %v1359
      %v1361 = vpop.f32.mrf.mxu0
      %1362 = vmatprep.mubr.bf16.mxu0 0
      %1363 = vmatmul.mubr.bf16.gmra.mxu0 %v252
      %v1364 = vpop.f32.mrf.mxu0
      %v1365 = vadd.f32 %v1300, %v1364
      %v1366 = vpop.f32.mrf.mxu0
      %v1367 = vpop.f32.mrf.mxu0
      %v1368 = vadd.f32 %v1303, %v1367
      %v1369 = vpop.f32.mrf.mxu0
      %1370 = vdwg.mxu0
      %1371 = vmatprep.subr.bf16.mxu0 0
      %1372 = vmatpush1.bf16.msra.mxu0 0
      %1373 = vmatprep.subr.bf16.mxu0 0
      %1374 = vmatpush1.bf16.msra.mxu0 0
      %1375 = vmatprep.subr.bf16.mxu0 0
      %1376 = vmatpush1.bf16.msra.mxu0 0
      %1377 = vmatprep.subr.bf16.mxu0 0
      %1378 = vmatpush1.bf16.msra.mxu0 0
      %1379 = vmatprep.subr.bf16.mxu0 0
      %1380 = vmatpush1.bf16.msra.mxu0 0
      %1381 = vmatprep.subr.bf16.mxu0 0
      %1382 = vmatpush1.bf16.msra.mxu0 0
      %1383 = vmatprep.subr.bf16.mxu0 0
      %1384 = vmatpush1.bf16.msra.mxu0 %v786
      %1385 = vmatprep.subr.bf16.mxu0 0
      %1386 = vmatpush1.bf16.msra.mxu0 %v785
      %1387 = vmatprep.subr.bf16.mxu0 0
      %1388 = vmatpush2.bf16.msra.mxu0 0
      %1389 = vmatprep.subr.bf16.mxu0 0
      %1390 = vmatpush2.bf16.msra.mxu0 0
      %1391 = vmatprep.subr.bf16.mxu0 0
      %1392 = vmatpush2.bf16.msra.mxu0 0
      %1393 = vmatprep.subr.bf16.mxu0 0
      %1394 = vmatpush2.bf16.msra.mxu0 0
      %1395 = vmatprep.subr.bf16.mxu0 0
      %1396 = vmatpush2.bf16.msra.mxu0 0
      %1397 = vmatprep.subr.bf16.mxu0 0
      %1398 = vmatpush2.bf16.msra.mxu0 0
      %1399 = vmatprep.subr.bf16.mxu0 0
      %1400 = vmatpush2.bf16.msra.mxu0 0
      %1401 = vmatprep.subr.bf16.mxu0 0
      %1402 = vmatpush2.bf16.msra.mxu0 0
      %1403 = vmatprep.mubr.bf16.mxu0 0
      %1404 = vmatmul.mubr.bf16.gmra.mxu0 %v1089
      %v1405 = vpop.f32.mrf.mxu0
      %v1406 = vadd.f32 0.0, %v1405
      %v1407 = vpop.f32.mrf.mxu0
      %v1408 = vpop.f32.mrf.mxu0
      %v1409 = vadd.f32 0.0, %v1408
      %v1410 = vpop.f32.mrf.mxu0
      %1411 = vmatprep.mubr.bf16.mxu0 0
      %1412 = vmatmul.mubr.bf16.gmra.mxu0 %v1092
      %v1413 = vpop.f32.mrf.mxu0
      %v1414 = vadd.f32 0.0, %v1413
      %v1415 = vpop.f32.mrf.mxu0
      %v1416 = vpop.f32.mrf.mxu0
      %v1417 = vadd.f32 0.0, %v1416
      %v1418 = vpop.f32.mrf.mxu0
      %1419 = vmatprep.mubr.bf16.mxu0 0
      %1420 = vmatmul.mubr.bf16.gmra.mxu0 %v1095
      %v1421 = vpop.f32.mrf.mxu0
      %v1422 = vadd.f32 0.0, %v1421
      %v1423 = vpop.f32.mrf.mxu0
      %v1424 = vpop.f32.mrf.mxu0
      %v1425 = vadd.f32 0.0, %v1424
      %v1426 = vpop.f32.mrf.mxu0
      %1427 = vmatprep.mubr.bf16.mxu0 0
      %1428 = vmatmul.mubr.bf16.gmra.mxu0 %v1098
      %v1429 = vpop.f32.mrf.mxu0
      %v1430 = vadd.f32 0.0, %v1429
      %v1431 = vpop.f32.mrf.mxu0
      %v1432 = vpop.f32.mrf.mxu0
      %v1433 = vadd.f32 0.0, %v1432
      %v1434 = vpop.f32.mrf.mxu0
      %1435 = vdwg.mxu0
      %v1436 = vadd.f32 %v1341, %v1406
      %v1437 = vadd.f32 %v1344, %v1409
      %v1438 = vadd.f32 %v1349, %v1414
      %v1439 = vadd.f32 %v1352, %v1417
      %v1440 = vadd.f32 %v1357, %v1422
      %v1441 = vadd.f32 %v1360, %v1425
      %v1442 = vadd.f32 %v1365, %v1430
      %v1443 = vadd.f32 %v1368, %v1433
      %v1444 = vsel %vm241, %v1436, 0.0
      %v1445 = vsel %vm241, %v1437, 0.0
      %v1446 = vadd.f32 %v1444, %v1445
      %v1447 = vsel %vm241, %v1438, 0.0
      %v1448 = vadd.f32 %v1446, %v1447
      %v1449 = vsel %vm241, %v1439, 0.0
      %v1450 = vadd.f32 %v1448, %v1449
      %v1451 = vsel %vm241, %v1440, 0.0
      %v1452 = vadd.f32 %v1450, %v1451
      %v1453 = vsel %vm241, %v1441, 0.0
      %v1454 = vadd.f32 %v1452, %v1453
      %v1455 = vsel %vm241, %v1442, 0.0
      %v1456 = vadd.f32 %v1454, %v1455
      %v1457 = vsel %vm241, %v1443, 0.0
      %v1458 = vadd.f32 %v1456, %v1457
      %v1459 = vrot.slane %v1458, 4
      %v1460 = vadd.f32 %v1458, %v1459
      %v1461 = vrot.slane %v1460, 2
      %v1462 = vadd.f32 %v1460, %v1461
      %v1463 = vrot.slane %v1462, 1
      %v1464 = vadd.f32 %v1462, %v1463
      %v1465 = vmul.f32 %v1436, %v1436
      %v1466 = vmul.f32 %v1437, %v1437
      %v1467 = vmul.f32 %v1438, %v1438
      %v1468 = vmul.f32 %v1439, %v1439
      %v1469 = vmul.f32 %v1440, %v1440
      %v1470 = vmul.f32 %v1441, %v1441
      %v1471 = vmul.f32 %v1442, %v1442
      %v1472 = vmul.f32 %v1443, %v1443
      %v1473 = vsel %vm241, %v1465, 0.0
      %v1474 = vsel %vm241, %v1466, 0.0
      %v1475 = vadd.f32 %v1473, %v1474
      %v1476 = vsel %vm241, %v1467, 0.0
      %v1477 = vadd.f32 %v1475, %v1476
      %v1478 = vsel %vm241, %v1468, 0.0
      %v1479 = vadd.f32 %v1477, %v1478
      %v1480 = vsel %vm241, %v1469, 0.0
      %v1481 = vadd.f32 %v1479, %v1480
      %v1482 = vsel %vm241, %v1470, 0.0
      %v1483 = vadd.f32 %v1481, %v1482
      %v1484 = vsel %vm241, %v1471, 0.0
      %v1485 = vadd.f32 %v1483, %v1484
      %v1486 = vsel %vm241, %v1472, 0.0
      %v1487 = vadd.f32 %v1485, %v1486
      %v1488 = vrot.slane %v1487, 4
      %v1489 = vadd.f32 %v1487, %v1488
      %v1490 = vrot.slane %v1489, 2
      %v1491 = vadd.f32 %v1489, %v1490
      %v1492 = vrot.slane %v1491, 1
      %v1493 = vadd.f32 %v1491, %v1492
      %v1494 = vmax.f32 %v1223, %v1436
      %v1495 = vmax.f32 %v1224, %v1437
      %v1496 = vmax.f32 %v1225, %v1438
      %v1497 = vmax.f32 %v1226, %v1439
      %v1498 = vmax.f32 %v1227, %v1440
      %v1499 = vmax.f32 %v1228, %v1441
      %v1500 = vmax.f32 %v1229, %v1442
      %v1501 = vmax.f32 %v1230, %v1443
      %v1502 = vmin.f32 %v1231, %v1436
      %v1503 = vmin.f32 %v1232, %v1437
      %v1504 = vmin.f32 %v1233, %v1438
      %v1505 = vmin.f32 %v1234, %v1439
      %v1506 = vmin.f32 %v1235, %v1440
      %v1507 = vmin.f32 %v1236, %v1441
      %v1508 = vmin.f32 %v1237, %v1442
      %v1509 = vmin.f32 %v1238, %v1443
      %v1510 = vadd.f32 %v1239, %v1464
      %v1511 = vadd.f32 %v1240, %v1493
      %1520 = vrot.lane.b32.xlu0 %v1502, 32
      %v1521 = vpop.permute.xlu0 %1520
      %1522 = vrot.lane.b32.xlu0 %v1503, 32
      %v1523 = vpop.permute.xlu0 %1522
      %1524 = vrot.lane.b32.xlu0 %v1504, 32
      %v1525 = vpop.permute.xlu0 %1524
      %1526 = vrot.lane.b32.xlu0 %v1505, 32
      %v1527 = vpop.permute.xlu0 %1526
      %1528 = vrot.lane.b32.xlu0 %v1506, 32
      %v1529 = vpop.permute.xlu0 %1528
      %1530 = vrot.lane.b32.xlu0 %v1507, 32
      %v1531 = vpop.permute.xlu0 %1530
      %1532 = vrot.lane.b32.xlu0 %v1508, 32
      %v1533 = vpop.permute.xlu0 %1532
      %1534 = vrot.lane.b32.xlu0 %v1509, 32
      %v1535 = vpop.permute.xlu0 %1534
      %v1544 = vsel %vm241, %v1494, %v1521
      %v1545 = vsel %vm241, %v1495, %v1523
      %v1546 = vsel %vm241, %v1496, %v1525
      %v1547 = vsel %vm241, %v1497, %v1527
      %v1548 = vsel %vm241, %v1498, %v1529
      %v1549 = vsel %vm241, %v1499, %v1531
      %v1550 = vsel %vm241, %v1500, %v1533
      %v1551 = vsel %vm241, %v1501, %v1535
      %v1552 = vpack.c.bf16 %v1545, %v1544
      %v1553 = vpack.c.bf16 %v1547, %v1546
      %v1554 = vpack.c.bf16 %v1549, %v1548
      %v1555 = vpack.c.bf16 %v1551, %v1550
      %v1560 = vunpack.c.l.b16 %v1552
      %v1561 = vunpack.c.h.b16 %v1552
      %v1562 = vunpack.c.l.b16 %v1553
      %v1563 = vunpack.c.h.b16 %v1553
      %v1564 = vunpack.c.l.b16 %v1554
      %v1565 = vunpack.c.h.b16 %v1554
      %v1566 = vunpack.c.l.b16 %v1555
      %v1567 = vunpack.c.h.b16 %v1555
      %v1568 = vpack.c.b16 %v1560, %v1560
      %v1569 = vpack.c.b16 %v1561, %v1561
      %v1570 = vpack.c.b16 %v1562, %v1562
      %v1571 = vpack.c.b16 %v1563, %v1563
      %v1572 = vpack.c.b16 %v1564, %v1564
      %v1573 = vpack.c.b16 %v1565, %v1565
      %v1574 = vpack.c.b16 %v1566, %v1566
      %v1575 = vpack.c.b16 %v1567, %v1567
      %vm1584 = vcmask 519168
      %1585 = vst.msk [vmem:[%s177] sm:$0xf] %vm1584, %v1568
      %1586 = vst.msk [vmem:[%s177 + $0x4] sm:$0xf] %vm1584, %v1569
      %1587 = vst.msk [vmem:[%s177 + $0x8] sm:$0xf] %vm1584, %v1570
      %1588 = vst.msk [vmem:[%s177 + $0xc] sm:$0xf] %vm1584, %v1571
      %1589 = vst.msk [vmem:[%s177 + $0x10] sm:$0xf] %vm1584, %v1572
      %1590 = vst.msk [vmem:[%s177 + $0x14] sm:$0xf] %vm1584, %v1573
      %1591 = vst.msk [vmem:[%s177 + $0x18] sm:$0xf] %vm1584, %v1574
      %1592 = vst.msk [vmem:[%s177 + $0x1c] sm:$0xf] %vm1584, %v1575
      %vm1593 = vcmask 1040384
      %v1594 = vsel %vm1593, %v1510, %v1511
      %vm1595 = vcmask 1041408
      %v1596 = vsel %vm1595, %v1594, 0.0
      %1597 = vst.msk [vmem:[%s181] sm:$0xff] %vm241, %v1596
      %p1598 = scmp.lt.s32.totalorder %s15, 1
      %s1599 = scalar_select %p1598, %s15, 1
      %s1600 = smul.addr %s1599, 8
      %s1601 = smul.addr %s1600, 4
      %s1602 = scalar_lea.vmem %s2, %s1601
      %p1603 = scmp.lt.s32.totalorder %s15, 1
      %s1604 = scalar_select %p1603, %s15, 1
      %s1605 = smul.addr %s1604, 8
      %s1606 = scalar_lea.vmem %s3, %s1605
      // Predicated region
      $region29: #{cnn4_dsvdd_forward.9} parent=27 // pred_check
        %p1607 = pneg %p80
      $region30: #{cnn4_dsvdd_forward.9} parent=27 // pred_check_branch
        %1609 = sbr.rel (%p1607) target = $region32
      $region31: #{cnn4_dsvdd_forward.9} parent=27 // pred_region
        _
      $region32: #{cnn4_dsvdd_forward.9} parent=27 // pred_fallthru
        _
      // Predicated region
      $region33: #{cnn4_dsvdd_forward.9} parent=27 // pred_check
        %p1610 = pneg %p106
      $region34: #{cnn4_dsvdd_forward.9} parent=27 // pred_check_branch
        %1612 = sbr.rel (%p1610) target = $region36
      $region35: #{cnn4_dsvdd_forward.9} parent=27 // pred_region
        _
      $region36: #{cnn4_dsvdd_forward.9} parent=27 // pred_fallthru
        _
    $region28: #{cnn4_dsvdd_forward.9} parent=5 // pred_fallthru
      _
    %p1613 = scmp.le.s32.totalorder 2, %s10
    // Predicated region
    $region37: #{cnn4_dsvdd_forward.9} parent=5 // pred_check
      %p1614 = pneg %p1613
    $region38: #{cnn4_dsvdd_forward.9} parent=5 // pred_check_branch
      %1616 = sbr.rel (%p1614) target = $region40
    $region39: #{cnn4_dsvdd_forward.9} parent=5 // pred_region
      %s1617 = ssub.s32 %s10, 2
      // Predicated region
      $region41: #{cnn4_dsvdd_forward.9} parent=39 // pred_check
        %p1618 = pneg %p86
      $region42: #{cnn4_dsvdd_forward.9} parent=39 // pred_check_branch
        %1620 = sbr.rel (%p1618) target = $region44
      $region43: #{cnn4_dsvdd_forward.9} parent=39 // pred_region
        %p1621 = scmp.lt.s32.totalorder %s16, 1
        %s1622 = scalar_select %p1621, %s16, 1
        %s1623 = smul.addr %s1622, 8
        %s1624 = smul.addr %s1623, 4
        %s1625 = scalar_lea.vmem %s2, %s1624
      $region44: #{cnn4_dsvdd_forward.9} parent=39 // pred_fallthru
        _
      // Predicated region
      $region45: #{cnn4_dsvdd_forward.9} parent=39 // pred_check
        %p1626 = pneg %p112
      $region46: #{cnn4_dsvdd_forward.9} parent=39 // pred_check_branch
        %1628 = sbr.rel (%p1626) target = $region48
      $region47: #{cnn4_dsvdd_forward.9} parent=39 // pred_region
        %p1629 = scmp.lt.s32.totalorder %s16, 1
        %s1630 = scalar_select %p1629, %s16, 1
        %s1631 = smul.addr %s1630, 8
        %s1632 = scalar_lea.vmem %s3, %s1631
      $region48: #{cnn4_dsvdd_forward.9} parent=39 // pred_fallthru
        _
    $region40: #{cnn4_dsvdd_forward.9} parent=5 // pred_fallthru
      _
  $region6: #{cnn4_dsvdd_forward.9} parent=0 // loop_footer
    %s14 = sadd.s32 1, %s10
  $region7: #{cnn4_dsvdd_forward.9} parent=0 // loop_footer_branch
    %9 = sbr.rel target = $region3
  $region8: #{cnn4_dsvdd_forward.9} parent=0 // loop_exit
    _

// kernel: cnn4_dsvdd_forward.12
$region0: #{cnn4_dsvdd_forward.12}
  #allocation0 [shape = 'u32[]', space=smem, size = 0x4, offset = 0x4, fixed_abs, tag = 'smem constant byte address 0x4 - core index']
  #allocation1 [shape = 'u32[144,128]{1,0:T(1,128)}', space=vmem, size = 0x12000, scoped, tag = 'internal scratch']
  %s0 = inlined_call_operand.vmem [shape: bf16[2,16,64], index: 0, kind: input, shape index: {}]
  %s1 = inlined_call_operand.vmem [shape: f32[1,32], index: 1, kind: input, shape index: {}]
  %s2 = inlined_call_operand.vmem [shape: f32[1,32], index: 2, kind: input, shape index: {}]
  %s3 = inlined_call_operand.vmem [shape: bf16[2,16,32], index: 3, kind: output, shape index: {}]
  %s4 = sld [smem:[#allocation0]]
  $region45: #{cnn4_dsvdd_forward.12} parent=0
    _
  %s6 = ssub.s32 1, %s4
  %s7 = scalar_select 0, %s6, %s4
  loop: start=0, step=1, limit=4
  $region2: #{cnn4_dsvdd_forward.12} parent=0 // loop_pre_header
    _
  $region3: #{cnn4_dsvdd_forward.12} parent=0 // loop_header
    %s9 = sphi 0, %s13
    %p10 = scmp.ge.s32.totalorder %s9, 4
    %s19 = sphi 0, %s21
    %s22 = sphi 0, %s19
    %s23 = sphi 0, %s22
    %s39 = sphi 0, %s23
    %s43 = sphi 0, %s43
    %s45 = sphi 0, %s43
    %s46 = sphi 0, %s45
    %s60 = sphi 0, %s46
    %s64 = sphi 0, %s64
    %s66 = sphi 0, %s64
    %s67 = sphi 0, %s66
    %s81 = sphi 0, %s67
    %s87 = sphi 0, %s89
    %s90 = sphi 0, %s87
    %s91 = sphi 0, %s90
    %s107 = sphi 0, %s91
  $region4: #{cnn4_dsvdd_forward.12} parent=0 // loop_header_branch
    %12 = sbr.rel (%p10) target = $region8
  $region5: #{cnn4_dsvdd_forward.12} parent=0 // loop_body
    %s14 = ssub.s32 %s9, 1
    %s15 = ssub.s32 %s9, 2
    %s16 = sadd.s32 %s9, 1
    %s17 = ssub.s32 %s9, %s16
    %p18 = scmp.eq.s32.totalorder %s17, 0
    %s20 = sadd.s32 %s19, 1
    %s21 = scalar_select %p18, %s19, %s20
    %p24 = pneg %p18
    %p25 = scmp.eq.s32.totalorder %s9, 1
    %p26 = por %p24, %p25
    %p27 = scmp.ne.s32.totalorder %s19, %s22
    %p28 = scmp.eq.s32.totalorder %s9, 0
    %p29 = por %p27, %p28
    %p30 = scmp.ne.s32.totalorder %s19, %s22
    %p31 = scmp.eq.s32.totalorder %s14, 1
    %p32 = por %p30, %p31
    %p33 = scmp.ne.s32.totalorder %s22, %s23
    %p34 = scmp.eq.s32.totalorder %s14, 0
    %p35 = por %p33, %p34
    %p36 = scmp.ne.s32.totalorder %s22, %s23
    %p37 = scmp.eq.s32.totalorder %s15, 1
    %p38 = por %p36, %p37
    %p40 = scmp.ne.s32.totalorder %s23, %s39
    %p41 = scmp.eq.s32.totalorder %s15, 0
    %p42 = por %p40, %p41
    %s44 = sadd.s32 %s43, 1
    %p47 = scmp.eq.s32.totalorder %s9, 1
    %p48 = scmp.ne.s32.totalorder %s43, %s45
    %p49 = scmp.eq.s32.totalorder %s9, 0
    %p50 = por %p48, %p49
    %p51 = scmp.ne.s32.totalorder %s43, %s45
    %p52 = scmp.eq.s32.totalorder %s14, 1
    %p53 = por %p51, %p52
    %p54 = scmp.ne.s32.totalorder %s45, %s46
    %p55 = scmp.eq.s32.totalorder %s14, 0
    %p56 = por %p54, %p55
    %p57 = scmp.ne.s32.totalorder %s45, %s46
    %p58 = scmp.eq.s32.totalorder %s15, 1
    %p59 = por %p57, %p58
    %p61 = scmp.ne.s32.totalorder %s46, %s60
    %p62 = scmp.eq.s32.totalorder %s15, 0
    %p63 = por %p61, %p62
    %s65 = sadd.s32 %s64, 1
    %p68 = scmp.eq.s32.totalorder %s9, 1
    %p69 = scmp.ne.s32.totalorder %s64, %s66
    %p70 = scmp.eq.s32.totalorder %s9, 0
    %p71 = por %p69, %p70
    %p72 = scmp.ne.s32.totalorder %s64, %s66
    %p73 = scmp.eq.s32.totalorder %s14, 1
    %p74 = por %p72, %p73
    %p75 = scmp.ne.s32.totalorder %s66, %s67
    %p76 = scmp.eq.s32.totalorder %s14, 0
    %p77 = por %p75, %p76
    %p78 = scmp.ne.s32.totalorder %s66, %s67
    %p79 = scmp.eq.s32.totalorder %s15, 1
    %p80 = por %p78, %p79
    %p82 = scmp.ne.s32.totalorder %s67, %s81
    %p83 = scmp.eq.s32.totalorder %s15, 0
    %p84 = por %p82, %p83
    %s85 = ssub.s32 %s9, %s16
    %p86 = scmp.eq.s32.totalorder %s85, 0
    %s88 = sadd.s32 %s87, 1
    %s89 = scalar_select %p86, %s87, %s88
    %p92 = pneg %p86
    %p93 = scmp.eq.s32.totalorder %s9, 1
    %p94 = por %p92, %p93
    %p95 = scmp.ne.s32.totalorder %s87, %s90
    %p96 = scmp.eq.s32.totalorder %s9, 0
    %p97 = por %p95, %p96
    %p98 = scmp.ne.s32.totalorder %s87, %s90
    %p99 = scmp.eq.s32.totalorder %s14, 1
    %p100 = por %p98, %p99
    %p101 = scmp.ne.s32.totalorder %s90, %s91
    %p102 = scmp.eq.s32.totalorder %s14, 0
    %p103 = por %p101, %p102
    %p104 = scmp.ne.s32.totalorder %s90, %s91
    %p105 = scmp.eq.s32.totalorder %s15, 1
    %p106 = por %p104, %p105
    %p108 = scmp.ne.s32.totalorder %s91, %s107
    %p109 = scmp.eq.s32.totalorder %s15, 0
    %p110 = por %p108, %p109
    %p111 = scmp.le.s32.totalorder 1, %s9
    %p112 = scmp.lt.s32.totalorder %s9, 3
    %p113 = pnand %p111, %p112
    %p114 = pneg %p113
    // Predicated region
    $region9: #{cnn4_dsvdd_forward.12} parent=5 // pred_check
      _
    $region10: #{cnn4_dsvdd_forward.12} parent=5 // pred_check_branch
      %116 = sbr.rel (%p113) target = $region12
    $region11: #{cnn4_dsvdd_forward.12} parent=5 // pred_region
      %s117 = ssub.s32 %s9, 1
      // Predicated region
      $region13: #{cnn4_dsvdd_forward.12} parent=11 // pred_check
        %p118 = pneg %p56
      $region14: #{cnn4_dsvdd_forward.12} parent=11 // pred_check_branch
        %120 = sbr.rel (%p118) target = $region16
      $region15: #{cnn4_dsvdd_forward.12} parent=11 // pred_region
        _
      $region16: #{cnn4_dsvdd_forward.12} parent=11 // pred_fallthru
        _
      // Predicated region
      $region17: #{cnn4_dsvdd_forward.12} parent=11 // pred_check
        %p121 = pneg %p77
      $region18: #{cnn4_dsvdd_forward.12} parent=11 // pred_check_branch
        %123 = sbr.rel (%p121) target = $region20
      $region19: #{cnn4_dsvdd_forward.12} parent=11 // pred_region
        _
      $region20: #{cnn4_dsvdd_forward.12} parent=11 // pred_fallthru
        _
    $region12: #{cnn4_dsvdd_forward.12} parent=5 // pred_fallthru
      _
    %p124 = scmp.lt.s32.totalorder %s9, 2
    // Predicated region
    $region21: #{cnn4_dsvdd_forward.12} parent=5 // pred_check
      %p125 = pneg %p124
    $region22: #{cnn4_dsvdd_forward.12} parent=5 // pred_check_branch
      %127 = sbr.rel (%p125) target = $region24
    $region23: #{cnn4_dsvdd_forward.12} parent=5 // pred_region
      // Predicated region
      $region25: #{cnn4_dsvdd_forward.12} parent=23 // pred_check
        %p128 = pneg %p29
      $region26: #{cnn4_dsvdd_forward.12} parent=23 // pred_check_branch
        %130 = sbr.rel (%p128) target = $region28
      $region27: #{cnn4_dsvdd_forward.12} parent=23 // pred_region
        %p131 = scmp.lt.s32.totalorder %s9, 1
        %s132 = scalar_select %p131, %s9, 1
        %s133 = smul.addr %s132, 2
        %s134 = smul.addr %s133, 4
        %s135 = scalar_lea.vmem %s0, %s134
      $region28: #{cnn4_dsvdd_forward.12} parent=23 // pred_fallthru
        _
    $region24: #{cnn4_dsvdd_forward.12} parent=5 // pred_fallthru
      _
    %p136 = scmp.le.s32.totalorder 1, %s9
    %p137 = scmp.lt.s32.totalorder %s9, 3
    %p138 = pnand %p136, %p137
    %p139 = pneg %p138
    // Predicated region
    $region29: #{cnn4_dsvdd_forward.12} parent=5 // pred_check
      _
    $region30: #{cnn4_dsvdd_forward.12} parent=5 // pred_check_branch
      %141 = sbr.rel (%p138) target = $region32
    $region31: #{cnn4_dsvdd_forward.12} parent=5 // pred_region
      %s142 = ssub.s32 %s9, 1
      %p143 = scmp.lt.s32.totalorder %s14, 1
      %s144 = scalar_select %p143, %s14, 1
      %s145 = smul.addr %s144, 2
      %s146 = smul.addr %s145, 4
      %s147 = scalar_lea.vmem %s0, %s146
      %p148 = pneg %p35
      %p149 = pneg %p32
      %p150 = pneg %p56
      %p151 = pneg %p53
      %p152 = pneg %p77
      %p153 = pneg %p74
      %p154 = pneg %p103
      %p155 = pneg %p100
      %p156 = scmp.lt.s32.totalorder %s14, 1
      %s157 = scalar_select %p156, %s14, 1
      %s158 = smul.addr %s157, 2
      %s159 = smul.addr %s158, 4
      %s160 = scalar_lea.vmem %s3, %s159
      %p161 = scmp.lt.s32.totalorder %s14, 1
      %s162 = scalar_select %p161, %s14, 1
      %s163 = smul.addr %s162, 2
      %s164 = smul.addr %s163, 4
      %s165 = scalar_lea.vmem %s0, %s164
      %p166 = scmp.lt.s32.totalorder %s14, 1
      %s167 = scalar_select %p166, %s14, 1
      %s168 = smul.addr %s167, 2
      %s169 = smul.addr %s168, 4
      %s170 = scalar_lea.vmem %s3, %s169
      %v171 = vld [vmem:[%s165] sm:$0xf]
      %v172 = vld [vmem:[%s165 + $0x4] sm:$0xf]
      %v173 = vunpack.c.l.bf16 %v171
      %v174 = vunpack.c.l.bf16 %v172
      %v175 = vld [vmem:[%s1] sm:$0x1]
      %v176 = vld [vmem:[%s2] sm:$0x1]
      %vm177 = vcmp.ge.f32.partialorder %v175, 0.0
      %v178 = vsel %vm177, 1, 0
      %v179 = vlaneseq
      %v180 = vshrl.u32 %v179, 7
      %v181 = vsub.s32 0, %v180
      %v182 = vrot.slane %v178, %v181
      %vm183 = vcmp.eq.s32.totalorder %v182, 1
      %186 = vrot.lane.b32.xlu0 %v173, 96
      %v187 = vpop.permute.xlu0 %186
      %188 = vrot.lane.b32.xlu0 %v174, 96
      %v189 = vpop.permute.xlu0 %188
      %v192 = vsel %vm183, %v173, %v187
      %v193 = vsel %vm183, %v174, %v189
      %v195 = vlaneseq
      %v196 = vshrl.u32 %v195, 7
      %v197 = vsub.s32 0, %v196
      %v198 = vrot.slane %v175, %v197
      %v200 = vmul.f32 %v192, %v198
      %v201 = vmul.f32 %v193, %v198
      %v203 = vlaneseq
      %v204 = vshrl.u32 %v203, 7
      %v205 = vsub.s32 0, %v204
      %v206 = vrot.slane %v176, %v205
      %v208 = vadd.f32 %v200, %v206
      %v209 = vadd.f32 %v201, %v206
      %v210 = vmax.f32 %v208, 0.0
      %v211 = vmax.f32 %v209, 0.0
      %v212 = vpack.c.bf16 %v211, %v210
      %v214 = vunpack.c.l.b16 %v212
      %v215 = vunpack.c.h.b16 %v212
      %v216 = vpack.c.b16 %v214, %v214
      %v217 = vpack.c.b16 %v215, %v215
      %vm220 = vcmask 257024
      %221 = vst.msk [vmem:[%s170] sm:$0xf] %vm220, %v216
      %222 = vst.msk [vmem:[%s170 + $0x4] sm:$0xf] %vm220, %v217
      %p223 = scmp.lt.s32.totalorder %s14, 1
      %s224 = scalar_select %p223, %s14, 1
      %s225 = smul.addr %s224, 2
      %s226 = smul.addr %s225, 4
      %s227 = scalar_lea.vmem %s3, %s226
      // Predicated region
      $region33: #{cnn4_dsvdd_forward.12} parent=31 // pred_check
        %p228 = pneg %p100
      $region34: #{cnn4_dsvdd_forward.12} parent=31 // pred_check_branch
        %230 = sbr.rel (%p228) target = $region36
      $region35: #{cnn4_dsvdd_forward.12} parent=31 // pred_region
        _
      $region36: #{cnn4_dsvdd_forward.12} parent=31 // pred_fallthru
        _
    $region32: #{cnn4_dsvdd_forward.12} parent=5 // pred_fallthru
      _
    %p231 = scmp.le.s32.totalorder 2, %s9
    // Predicated region
    $region37: #{cnn4_dsvdd_forward.12} parent=5 // pred_check
      %p232 = pneg %p231
    $region38: #{cnn4_dsvdd_forward.12} parent=5 // pred_check_branch
      %234 = sbr.rel (%p232) target = $region40
    $region39: #{cnn4_dsvdd_forward.12} parent=5 // pred_region
      %s235 = ssub.s32 %s9, 2
      // Predicated region
      $region41: #{cnn4_dsvdd_forward.12} parent=39 // pred_check
        %p236 = pneg %p106
      $region42: #{cnn4_dsvdd_forward.12} parent=39 // pred_check_branch
        %238 = sbr.rel (%p236) target = $region44
      $region43: #{cnn4_dsvdd_forward.12} parent=39 // pred_region
        %p239 = scmp.lt.s32.totalorder %s15, 1
        %s240 = scalar_select %p239, %s15, 1
        %s241 = smul.addr %s240, 2
        %s242 = smul.addr %s241, 4
        %s243 = scalar_lea.vmem %s3, %s242
      $region44: #{cnn4_dsvdd_forward.12} parent=39 // pred_fallthru
        _
    $region40: #{cnn4_dsvdd_forward.12} parent=5 // pred_fallthru
      _
  $region6: #{cnn4_dsvdd_forward.12} parent=0 // loop_footer
    %s13 = sadd.s32 1, %s9
  $region7: #{cnn4_dsvdd_forward.12} parent=0 // loop_footer_branch
    %8 = sbr.rel target = $region3
  $region8: #{cnn4_dsvdd_forward.12} parent=0 // loop_exit
    _

// kernel: cnn4_dsvdd_forward.11
$region0: #{cnn4_dsvdd_forward.11}
  #allocation0 [shape = 'u32[]', space=smem, size = 0x4, offset = 0x4, fixed_abs, tag = 'smem constant byte address 0x4 - core index']
  #allocation1 [shape = 'u32[144,128]{1,0:T(1,128)}', space=vmem, size = 0x12000, scoped, tag = 'internal scratch']
  %s0 = inlined_call_operand.vmem [shape: bf16[2,2,20,128], index: 0, kind: input, shape index: {}]
  %s1 = inlined_call_operand.vmem [shape: bf16[2,3,128,32], index: 1, kind: input, shape index: {}]
  %s2 = inlined_call_operand.vmem [shape: bf16[2,16,64], index: 2, kind: output, shape index: {0}]
  %s3 = inlined_call_operand.vmem [shape: f32[2,8,32], index: 3, kind: output, shape index: {1}]
  %4 = xla_tuple %s2, %s3
  %s5 = sld [smem:[#allocation0]]
  $region49: #{cnn4_dsvdd_forward.11} parent=0
    _
  %s7 = ssub.s32 1, %s5
  %s8 = scalar_select 0, %s7, %s5
  loop: start=0, step=1, limit=4
  $region2: #{cnn4_dsvdd_forward.11} parent=0 // loop_pre_header
    _
  $region3: #{cnn4_dsvdd_forward.11} parent=0 // loop_header
    %s10 = sphi 0, %s14
    %p11 = scmp.ge.s32.totalorder %s10, 4
    %s20 = sphi 0, %s22
    %s23 = sphi 0, %s20
    %s24 = sphi 0, %s23
    %s40 = sphi 0, %s24
    %s44 = sphi 0, %s44
    %s46 = sphi 0, %s44
    %s47 = sphi 0, %s46
    %s61 = sphi 0, %s47
    %s67 = sphi 0, %s69
    %s70 = sphi 0, %s67
    %s71 = sphi 0, %s70
    %s87 = sphi 0, %s71
    %s93 = sphi 0, %s95
    %s96 = sphi 0, %s93
    %s97 = sphi 0, %s96
    %s113 = sphi 0, %s97
  $region4: #{cnn4_dsvdd_forward.11} parent=0 // loop_header_branch
    %13 = sbr.rel (%p11) target = $region8
  $region5: #{cnn4_dsvdd_forward.11} parent=0 // loop_body
    %s15 = ssub.s32 %s10, 1
    %s16 = ssub.s32 %s10, 2
    %s17 = sadd.s32 %s10, 1
    %s18 = ssub.s32 %s10, %s17
    %p19 = scmp.eq.s32.totalorder %s18, 0
    %s21 = sadd.s32 %s20, 1
    %s22 = scalar_select %p19, %s20, %s21
    %p25 = pneg %p19
    %p26 = scmp.eq.s32.totalorder %s10, 1
    %p27 = por %p25, %p26
    %p28 = scmp.ne.s32.totalorder %s20, %s23
    %p29 = scmp.eq.s32.totalorder %s10, 0
    %p30 = por %p28, %p29
    %p31 = scmp.ne.s32.totalorder %s20, %s23
    %p32 = scmp.eq.s32.totalorder %s15, 1
    %p33 = por %p31, %p32
    %p34 = scmp.ne.s32.totalorder %s23, %s24
    %p35 = scmp.eq.s32.totalorder %s15, 0
    %p36 = por %p34, %p35
    %p37 = scmp.ne.s32.totalorder %s23, %s24
    %p38 = scmp.eq.s32.totalorder %s16, 1
    %p39 = por %p37, %p38
    %p41 = scmp.ne.s32.totalorder %s24, %s40
    %p42 = scmp.eq.s32.totalorder %s16, 0
    %p43 = por %p41, %p42
    %s45 = sadd.s32 %s44, 1
    %p48 = scmp.eq.s32.totalorder %s10, 1
    %p49 = scmp.ne.s32.totalorder %s44, %s46
    %p50 = scmp.eq.s32.totalorder %s10, 0
    %p51 = por %p49, %p50
    %p52 = scmp.ne.s32.totalorder %s44, %s46
    %p53 = scmp.eq.s32.totalorder %s15, 1
    %p54 = por %p52, %p53
    %p55 = scmp.ne.s32.totalorder %s46, %s47
    %p56 = scmp.eq.s32.totalorder %s15, 0
    %p57 = por %p55, %p56
    %p58 = scmp.ne.s32.totalorder %s46, %s47
    %p59 = scmp.eq.s32.totalorder %s16, 1
    %p60 = por %p58, %p59
    %p62 = scmp.ne.s32.totalorder %s47, %s61
    %p63 = scmp.eq.s32.totalorder %s16, 0
    %p64 = por %p62, %p63
    %s65 = ssub.s32 %s10, %s17
    %p66 = scmp.eq.s32.totalorder %s65, 0
    %s68 = sadd.s32 %s67, 1
    %s69 = scalar_select %p66, %s67, %s68
    %p72 = pneg %p66
    %p73 = scmp.eq.s32.totalorder %s10, 1
    %p74 = por %p72, %p73
    %p75 = scmp.ne.s32.totalorder %s67, %s70
    %p76 = scmp.eq.s32.totalorder %s10, 0
    %p77 = por %p75, %p76
    %p78 = scmp.ne.s32.totalorder %s67, %s70
    %p79 = scmp.eq.s32.totalorder %s15, 1
    %p80 = por %p78, %p79
    %p81 = scmp.ne.s32.totalorder %s70, %s71
    %p82 = scmp.eq.s32.totalorder %s15, 0
    %p83 = por %p81, %p82
    %p84 = scmp.ne.s32.totalorder %s70, %s71
    %p85 = scmp.eq.s32.totalorder %s16, 1
    %p86 = por %p84, %p85
    %p88 = scmp.ne.s32.totalorder %s71, %s87
    %p89 = scmp.eq.s32.totalorder %s16, 0
    %p90 = por %p88, %p89
    %s91 = ssub.s32 %s10, %s17
    %p92 = scmp.eq.s32.totalorder %s91, 0
    %s94 = sadd.s32 %s93, 1
    %s95 = scalar_select %p92, %s93, %s94
    %p98 = pneg %p92
    %p99 = scmp.eq.s32.totalorder %s10, 1
    %p100 = por %p98, %p99
    %p101 = scmp.ne.s32.totalorder %s93, %s96
    %p102 = scmp.eq.s32.totalorder %s10, 0
    %p103 = por %p101, %p102
    %p104 = scmp.ne.s32.totalorder %s93, %s96
    %p105 = scmp.eq.s32.totalorder %s15, 1
    %p106 = por %p104, %p105
    %p107 = scmp.ne.s32.totalorder %s96, %s97
    %p108 = scmp.eq.s32.totalorder %s15, 0
    %p109 = por %p107, %p108
    %p110 = scmp.ne.s32.totalorder %s96, %s97
    %p111 = scmp.eq.s32.totalorder %s16, 1
    %p112 = por %p110, %p111
    %p114 = scmp.ne.s32.totalorder %s97, %s113
    %p115 = scmp.eq.s32.totalorder %s16, 0
    %p116 = por %p114, %p115
    %p117 = scmp.le.s32.totalorder 1, %s10
    %p118 = scmp.lt.s32.totalorder %s10, 3
    %p119 = pnand %p117, %p118
    %p120 = pneg %p119
    // Predicated region
    $region9: #{cnn4_dsvdd_forward.11} parent=5 // pred_check
      _
    $region10: #{cnn4_dsvdd_forward.11} parent=5 // pred_check_branch
      %122 = sbr.rel (%p119) target = $region12
    $region11: #{cnn4_dsvdd_forward.11} parent=5 // pred_region
      %s123 = ssub.s32 %s10, 1
      // Predicated region
      $region13: #{cnn4_dsvdd_forward.11} parent=11 // pred_check
        %p124 = pneg %p57
      $region14: #{cnn4_dsvdd_forward.11} parent=11 // pred_check_branch
        %126 = sbr.rel (%p124) target = $region16
      $region15: #{cnn4_dsvdd_forward.11} parent=11 // pred_region
        _
      $region16: #{cnn4_dsvdd_forward.11} parent=11 // pred_fallthru
        _
    $region12: #{cnn4_dsvdd_forward.11} parent=5 // pred_fallthru
      _
    %p127 = scmp.lt.s32.totalorder %s10, 2
    // Predicated region
    $region17: #{cnn4_dsvdd_forward.11} parent=5 // pred_check
      %p128 = pneg %p127
    $region18: #{cnn4_dsvdd_forward.11} parent=5 // pred_check_branch
      %130 = sbr.rel (%p128) target = $region20
    $region19: #{cnn4_dsvdd_forward.11} parent=5 // pred_region
      // Predicated region
      $region21: #{cnn4_dsvdd_forward.11} parent=19 // pred_check
        %p131 = pneg %p30
      $region22: #{cnn4_dsvdd_forward.11} parent=19 // pred_check_branch
        %133 = sbr.rel (%p131) target = $region24
      $region23: #{cnn4_dsvdd_forward.11} parent=19 // pred_region
        %p134 = scmp.lt.s32.totalorder %s10, 1
        %s135 = scalar_select %p134, %s10, 1
        %s136 = smul.addr %s135, 6
        %s137 = smul.addr %s136, 4
        %s138 = scalar_lea.vmem %s0, %s137
      $region24: #{cnn4_dsvdd_forward.11} parent=19 // pred_fallthru
        _
    $region20: #{cnn4_dsvdd_forward.11} parent=5 // pred_fallthru
      _
    %p139 = scmp.le.s32.totalorder 1, %s10
    %p140 = scmp.lt.s32.totalorder %s10, 3
    %p141 = pnand %p139, %p140
    %p142 = pneg %p141
    // Predicated region
    $region25: #{cnn4_dsvdd_forward.11} parent=5 // pred_check
      _
    $region26: #{cnn4_dsvdd_forward.11} parent=5 // pred_check_branch
      %144 = sbr.rel (%p141) target = $region28
    $region27: #{cnn4_dsvdd_forward.11} parent=5 // pred_region
      %s145 = ssub.s32 %s10, 1
      %p146 = scmp.lt.s32.totalorder %s15, 1
      %s147 = scalar_select %p146, %s15, 1
      %s148 = smul.addr %s147, 6
      %s149 = smul.addr %s148, 4
      %s150 = scalar_lea.vmem %s0, %s149
      %p151 = pneg %p36
      %p152 = pneg %p33
      %p153 = pneg %p57
      %p154 = pneg %p54
      %p155 = pneg %p83
      %p156 = pneg %p80
      %p157 = scmp.lt.s32.totalorder %s15, 1
      %s158 = scalar_select %p157, %s15, 1
      %s159 = smul.addr %s158, 2
      %s160 = smul.addr %s159, 4
      %s161 = scalar_lea.vmem %s2, %s160
      %p162 = pneg %p109
      %p163 = pneg %p106
      %p164 = scmp.lt.s32.totalorder %s15, 1
      %s165 = scalar_select %p164, %s15, 1
      %s166 = smul.addr %s165, 8
      %s167 = scalar_lea.vmem %s3, %s166
      %p168 = scmp.lt.s32.totalorder %s15, 1
      %s169 = scalar_select %p168, %s15, 1
      %s170 = smul.addr %s169, 6
      %s171 = smul.addr %s170, 4
      %s172 = scalar_lea.vmem %s0, %s171
      %p173 = scmp.lt.s32.totalorder %s15, 1
      %s174 = scalar_select %p173, %s15, 1
      %s175 = smul.addr %s174, 2
      %s176 = smul.addr %s175, 4
      %s177 = scalar_lea.vmem %s2, %s176
      %p178 = scmp.lt.s32.totalorder %s15, 1
      %s179 = scalar_select %p178, %s15, 1
      %s180 = smul.addr %s179, 8
      %s181 = scalar_lea.vmem %s3, %s180
      %v183 = vld [vmem:[%s172] sm:$0xf]
      %v184 = vld [vmem:[%s172 + $0x4] sm:$0xf]
      %v185 = vld [vmem:[%s1] sm:$0xf]
      %v186 = vld [vmem:[%s1 + $0x4] sm:$0xf]
      %v187 = vld [vmem:[%s1 + $0x8] sm:$0xf]
      %v188 = vld [vmem:[%s1 + $0xc] sm:$0xf]
      %v189 = vld [vmem:[%s1 + $0x10] sm:$0xf]
      %v190 = vld [vmem:[%s1 + $0x14] sm:$0xf]
      %v191 = vld [vmem:[%s1 + $0x18] sm:$0xf]
      %v192 = vld [vmem:[%s1 + $0x1c] sm:$0xf]
      %v193 = vld [vmem:[%s1 + $0x20] sm:$0xf]
      %v194 = vld [vmem:[%s1 + $0x24] sm:$0xf]
      %v195 = vld [vmem:[%s1 + $0x28] sm:$0xf]
      %v196 = vld [vmem:[%s1 + $0x2c] sm:$0xf]
      %v197 = vld [vmem:[%s1 + $0x30] sm:$0xf]
      %v198 = vld [vmem:[%s1 + $0x34] sm:$0xf]
      %v199 = vld [vmem:[%s1 + $0x38] sm:$0xf]
      %v200 = vld [vmem:[%s1 + $0x3c] sm:$0xf]
      %s201 = scalar_lea.vmem %s172, 12
      %v202 = vld [vmem:[%s201] sm:$0xf]
      %v203 = vld [vmem:[%s201 + $0x4] sm:$0xf]
      %s204 = scalar_lea.vmem %s1, 64
      %v205 = vld [vmem:[%s204] sm:$0xf]
      %v206 = vld [vmem:[%s204 + $0x4] sm:$0xf]
      %v207 = vld [vmem:[%s204 + $0x8] sm:$0xf]
      %v208 = vld [vmem:[%s204 + $0xc] sm:$0xf]
      %v209 = vld [vmem:[%s204 + $0x10] sm:$0xf]
      %v210 = vld [vmem:[%s204 + $0x14] sm:$0xf]
      %v211 = vld [vmem:[%s204 + $0x18] sm:$0xf]
      %v212 = vld [vmem:[%s204 + $0x1c] sm:$0xf]
      %v213 = vld [vmem:[%s204 + $0x20] sm:$0xf]
      %v214 = vld [vmem:[%s204 + $0x24] sm:$0xf]
      %v215 = vld [vmem:[%s204 + $0x28] sm:$0xf]
      %v216 = vld [vmem:[%s204 + $0x2c] sm:$0xf]
      %v217 = vld [vmem:[%s204 + $0x30] sm:$0xf]
      %v218 = vld [vmem:[%s204 + $0x34] sm:$0xf]
      %v219 = vld [vmem:[%s204 + $0x38] sm:$0xf]
      %v220 = vld [vmem:[%s204 + $0x3c] sm:$0xf]
      %v223 = vunpack.c.l.b16 %v202
      %v224 = vunpack.c.l.b16 %v203
      %v225 = vpack.c.b16 %v224, %v223
      %v243 = vunpack.c.l.b16 %v205
      %v244 = vunpack.c.l.b16 %v206
      %v245 = vunpack.c.l.b16 %v207
      %v246 = vunpack.c.l.b16 %v208
      %v247 = vunpack.c.l.b16 %v209
      %v248 = vunpack.c.l.b16 %v210
      %v249 = vunpack.c.l.b16 %v211
      %v250 = vunpack.c.l.b16 %v212
      %v251 = vunpack.c.l.b16 %v213
      %v252 = vunpack.c.l.b16 %v214
      %v253 = vunpack.c.l.b16 %v215
      %v254 = vunpack.c.l.b16 %v216
      %v255 = vunpack.c.l.b16 %v217
      %v256 = vunpack.c.l.b16 %v218
      %v257 = vunpack.c.l.b16 %v219
      %v258 = vunpack.c.l.b16 %v220
      %v259 = vpack.c.b16 %v244, %v243
      %v260 = vpack.c.b16 %v246, %v245
      %v261 = vpack.c.b16 %v248, %v247
      %v262 = vpack.c.b16 %v250, %v249
      %v263 = vpack.c.b16 %v252, %v251
      %v264 = vpack.c.b16 %v254, %v253
      %v265 = vpack.c.b16 %v256, %v255
      %v266 = vpack.c.b16 %v258, %v257
      %275 = vmatprep.subr.bf16.mxu0 0
      %276 = vmatpush1.bf16.msra.mxu0 %v266
      %277 = vmatprep.subr.bf16.mxu0 0
      %278 = vmatpush1.bf16.msra.mxu0 %v265
      %279 = vmatprep.subr.bf16.mxu0 0
      %280 = vmatpush1.bf16.msra.mxu0 %v264
      %281 = vmatprep.subr.bf16.mxu0 0
      %282 = vmatpush1.bf16.msra.mxu0 %v263
      %283 = vmatprep.subr.bf16.mxu0 0
      %284 = vmatpush1.bf16.msra.mxu0 %v262
      %285 = vmatprep.subr.bf16.mxu0 0
      %286 = vmatpush1.bf16.msra.mxu0 %v261
      %287 = vmatprep.subr.bf16.mxu0 0
      %288 = vmatpush1.bf16.msra.mxu0 %v260
      %289 = vmatprep.subr.bf16.mxu0 0
      %290 = vmatpush1.bf16.msra.mxu0 %v259
      %291 = vmatprep.subr.bf16.mxu0 0
      %292 = vmatpush2.bf16.msra.mxu0 0
      %293 = vmatprep.subr.bf16.mxu0 0
      %294 = vmatpush2.bf16.msra.mxu0 0
      %295 = vmatprep.subr.bf16.mxu0 0
      %296 = vmatpush2.bf16.msra.mxu0 0
      %297 = vmatprep.subr.bf16.mxu0 0
      %298 = vmatpush2.bf16.msra.mxu0 0
      %299 = vmatprep.subr.bf16.mxu0 0
      %300 = vmatpush2.bf16.msra.mxu0 0
      %301 = vmatprep.subr.bf16.mxu0 0
      %302 = vmatpush2.bf16.msra.mxu0 0
      %303 = vmatprep.subr.bf16.mxu0 0
      %304 = vmatpush2.bf16.msra.mxu0 0
      %305 = vmatprep.subr.bf16.mxu0 0
      %306 = vmatpush2.bf16.msra.mxu0 0
      %307 = vmatprep.mubr.bf16.mxu0 0
      %308 = vmatmul.mubr.bf16.gmra.mxu0 %v225
      %v309 = vpop.f32.mrf.mxu0
      %v310 = vadd.f32 0.0, %v309
      %v311 = vpop.f32.mrf.mxu0
      %v312 = vpop.f32.mrf.mxu0
      %v313 = vadd.f32 0.0, %v312
      %v314 = vpop.f32.mrf.mxu0
      %315 = vdwg.mxu0
      %v318 = vunpack.c.l.b16 %v183
      %v319 = vunpack.c.l.b16 %v184
      %v320 = vpack.c.b16 %v319, %v318
      %v338 = vunpack.c.l.b16 %v185
      %v339 = vunpack.c.l.b16 %v186
      %v340 = vunpack.c.l.b16 %v187
      %v341 = vunpack.c.l.b16 %v188
      %v342 = vunpack.c.l.b16 %v189
      %v343 = vunpack.c.l.b16 %v190
      %v344 = vunpack.c.l.b16 %v191
      %v345 = vunpack.c.l.b16 %v192
      %v346 = vunpack.c.l.b16 %v193
      %v347 = vunpack.c.l.b16 %v194
      %v348 = vunpack.c.l.b16 %v195
      %v349 = vunpack.c.l.b16 %v196
      %v350 = vunpack.c.l.b16 %v197
      %v351 = vunpack.c.l.b16 %v198
      %v352 = vunpack.c.l.b16 %v199
      %v353 = vunpack.c.l.b16 %v200
      %v354 = vpack.c.b16 %v339, %v338
      %v355 = vpack.c.b16 %v341, %v340
      %v356 = vpack.c.b16 %v343, %v342
      %v357 = vpack.c.b16 %v345, %v344
      %v358 = vpack.c.b16 %v347, %v346
      %v359 = vpack.c.b16 %v349, %v348
      %v360 = vpack.c.b16 %v351, %v350
      %v361 = vpack.c.b16 %v353, %v352
      %370 = vmatprep.subr.bf16.mxu0 0
      %371 = vmatpush1.bf16.msra.mxu0 %v361
      %372 = vmatprep.subr.bf16.mxu0 0
      %373 = vmatpush1.bf16.msra.mxu0 %v360
      %374 = vmatprep.subr.bf16.mxu0 0
      %375 = vmatpush1.bf16.msra.mxu0 %v359
      %376 = vmatprep.subr.bf16.mxu0 0
      %377 = vmatpush1.bf16.msra.mxu0 %v358
      %378 = vmatprep.subr.bf16.mxu0 0
      %379 = vmatpush1.bf16.msra.mxu0 %v357
      %380 = vmatprep.subr.bf16.mxu0 0
      %381 = vmatpush1.bf16.msra.mxu0 %v356
      %382 = vmatprep.subr.bf16.mxu0 0
      %383 = vmatpush1.bf16.msra.mxu0 %v355
      %384 = vmatprep.subr.bf16.mxu0 0
      %385 = vmatpush1.bf16.msra.mxu0 %v354
      %386 = vmatprep.subr.bf16.mxu0 0
      %387 = vmatpush2.bf16.msra.mxu0 0
      %388 = vmatprep.subr.bf16.mxu0 0
      %389 = vmatpush2.bf16.msra.mxu0 0
      %390 = vmatprep.subr.bf16.mxu0 0
      %391 = vmatpush2.bf16.msra.mxu0 0
      %392 = vmatprep.subr.bf16.mxu0 0
      %393 = vmatpush2.bf16.msra.mxu0 0
      %394 = vmatprep.subr.bf16.mxu0 0
      %395 = vmatpush2.bf16.msra.mxu0 0
      %396 = vmatprep.subr.bf16.mxu0 0
      %397 = vmatpush2.bf16.msra.mxu0 0
      %398 = vmatprep.subr.bf16.mxu0 0
      %399 = vmatpush2.bf16.msra.mxu0 0
      %400 = vmatprep.subr.bf16.mxu0 0
      %401 = vmatpush2.bf16.msra.mxu0 0
      %402 = vmatprep.mubr.bf16.mxu0 0
      %403 = vmatmul.mubr.bf16.gmra.mxu0 %v320
      %v404 = vpop.f32.mrf.mxu0
      %v405 = vadd.f32 %v310, %v404
      %v406 = vpop.f32.mrf.mxu0
      %v407 = vpop.f32.mrf.mxu0
      %v408 = vadd.f32 %v313, %v407
      %v409 = vpop.f32.mrf.mxu0
      %410 = vdwg.mxu0
      %v411 = vld [vmem:[%s172] sm:$0xc]
      %v412 = vld [vmem:[%s172 + $0x4] sm:$0xf]
      %v413 = vld [vmem:[%s172 + $0x8] sm:$0x3]
      %s414 = scalar_lea.vmem %s1, 128
      %v415 = vld [vmem:[%s414] sm:$0xf]
      %v416 = vld [vmem:[%s414 + $0x4] sm:$0xf]
      %v417 = vld [vmem:[%s414 + $0x8] sm:$0xf]
      %v418 = vld [vmem:[%s414 + $0xc] sm:$0xf]
      %v419 = vld [vmem:[%s414 + $0x10] sm:$0xf]
      %v420 = vld [vmem:[%s414 + $0x14] sm:$0xf]
      %v421 = vld [vmem:[%s414 + $0x18] sm:$0xf]
      %v422 = vld [vmem:[%s414 + $0x1c] sm:$0xf]
      %v423 = vld [vmem:[%s414 + $0x20] sm:$0xf]
      %v424 = vld [vmem:[%s414 + $0x24] sm:$0xf]
      %v425 = vld [vmem:[%s414 + $0x28] sm:$0xf]
      %v426 = vld [vmem:[%s414 + $0x2c] sm:$0xf]
      %v427 = vld [vmem:[%s414 + $0x30] sm:$0xf]
      %v428 = vld [vmem:[%s414 + $0x34] sm:$0xf]
      %v429 = vld [vmem:[%s414 + $0x38] sm:$0xf]
      %v430 = vld [vmem:[%s414 + $0x3c] sm:$0xf]
      %v434 = vunpack.c.l.b16 %v411
      %v435 = vunpack.c.l.b16 %v412
      %v436 = vunpack.c.l.b16 %v413
      %v437 = vpack.c.b16 %v435, %v434
      %v438 = vpack.c.b16 %v436, %v436
      %vm439 = vcmask 1045504
      %v440 = vrot.slane %v437, 2
      %v441 = vrot.slane %v438, 2
      %v442 = vsel %vm439, %v440, %v441
      %v460 = vunpack.c.l.b16 %v415
      %v461 = vunpack.c.l.b16 %v416
      %v462 = vunpack.c.l.b16 %v417
      %v463 = vunpack.c.l.b16 %v418
      %v464 = vunpack.c.l.b16 %v419
      %v465 = vunpack.c.l.b16 %v420
      %v466 = vunpack.c.l.b16 %v421
      %v467 = vunpack.c.l.b16 %v422
      %v468 = vunpack.c.l.b16 %v423
      %v469 = vunpack.c.l.b16 %v424
      %v470 = vunpack.c.l.b16 %v425
      %v471 = vunpack.c.l.b16 %v426
      %v472 = vunpack.c.l.b16 %v427
      %v473 = vunpack.c.l.b16 %v428
      %v474 = vunpack.c.l.b16 %v429
      %v475 = vunpack.c.l.b16 %v430
      %v476 = vpack.c.b16 %v461, %v460
      %v477 = vpack.c.b16 %v463, %v462
      %v478 = vpack.c.b16 %v465, %v464
      %v479 = vpack.c.b16 %v467, %v466
      %v480 = vpack.c.b16 %v469, %v468
      %v481 = vpack.c.b16 %v471, %v470
      %v482 = vpack.c.b16 %v473, %v472
      %v483 = vpack.c.b16 %v475, %v474
      %492 = vmatprep.subr.bf16.mxu0 0
      %493 = vmatpush1.bf16.msra.mxu0 %v483
      %494 = vmatprep.subr.bf16.mxu0 0
      %495 = vmatpush1.bf16.msra.mxu0 %v482
      %496 = vmatprep.subr.bf16.mxu0 0
      %497 = vmatpush1.bf16.msra.mxu0 %v481
      %498 = vmatprep.subr.bf16.mxu0 0
      %499 = vmatpush1.bf16.msra.mxu0 %v480
      %500 = vmatprep.subr.bf16.mxu0 0
      %501 = vmatpush1.bf16.msra.mxu0 %v479
      %502 = vmatprep.subr.bf16.mxu0 0
      %503 = vmatpush1.bf16.msra.mxu0 %v478
      %504 = vmatprep.subr.bf16.mxu0 0
      %505 = vmatpush1.bf16.msra.mxu0 %v477
      %506 = vmatprep.subr.bf16.mxu0 0
      %507 = vmatpush1.bf16.msra.mxu0 %v476
      %508 = vmatprep.subr.bf16.mxu0 0
      %509 = vmatpush2.bf16.msra.mxu0 0
      %510 = vmatprep.subr.bf16.mxu0 0
      %511 = vmatpush2.bf16.msra.mxu0 0
      %512 = vmatprep.subr.bf16.mxu0 0
      %513 = vmatpush2.bf16.msra.mxu0 0
      %514 = vmatprep.subr.bf16.mxu0 0
      %515 = vmatpush2.bf16.msra.mxu0 0
      %516 = vmatprep.subr.bf16.mxu0 0
      %517 = vmatpush2.bf16.msra.mxu0 0
      %518 = vmatprep.subr.bf16.mxu0 0
      %519 = vmatpush2.bf16.msra.mxu0 0
      %520 = vmatprep.subr.bf16.mxu0 0
      %521 = vmatpush2.bf16.msra.mxu0 0
      %522 = vmatprep.subr.bf16.mxu0 0
      %523 = vmatpush2.bf16.msra.mxu0 0
      %524 = vmatprep.mubr.bf16.mxu0 0
      %525 = vmatmul.mubr.bf16.gmra.mxu0 %v442
      %v526 = vpop.f32.mrf.mxu0
      %v527 = vadd.f32 0.0, %v526
      %v528 = vpop.f32.mrf.mxu0
      %v529 = vpop.f32.mrf.mxu0
      %v530 = vadd.f32 0.0, %v529
      %v531 = vpop.f32.mrf.mxu0
      %532 = vdwg.mxu0
      %v533 = vadd.f32 %v405, %v527
      %v534 = vadd.f32 %v408, %v530
      %vm535 = vcmask 261120
      %v536 = vsel %vm535, %v533, 0.0
      %v537 = vsel %vm535, %v534, 0.0
      %v538 = vadd.f32 %v536, %v537
      %v539 = vrot.slane %v538, 4
      %v540 = vadd.f32 %v538, %v539
      %v541 = vrot.slane %v540, 2
      %v542 = vadd.f32 %v540, %v541
      %v543 = vrot.slane %v542, 1
      %v544 = vadd.f32 %v542, %v543
      %v545 = vmul.f32 %v533, %v533
      %v546 = vmul.f32 %v534, %v534
      %v547 = vsel %vm535, %v545, 0.0
      %v548 = vsel %vm535, %v546, 0.0
      %v549 = vadd.f32 %v547, %v548
      %v550 = vrot.slane %v549, 4
      %v551 = vadd.f32 %v549, %v550
      %v552 = vrot.slane %v551, 2
      %v553 = vadd.f32 %v551, %v552
      %v554 = vrot.slane %v553, 1
      %v555 = vadd.f32 %v553, %v554
      %s556 = scalar_lea.vmem %s1, 192
      %v557 = vld [vmem:[%s556] sm:$0xf]
      %v558 = vld [vmem:[%s556 + $0x4] sm:$0xf]
      %v559 = vld [vmem:[%s556 + $0x8] sm:$0xf]
      %v560 = vld [vmem:[%s556 + $0xc] sm:$0xf]
      %v561 = vld [vmem:[%s556 + $0x10] sm:$0xf]
      %v562 = vld [vmem:[%s556 + $0x14] sm:$0xf]
      %v563 = vld [vmem:[%s556 + $0x18] sm:$0xf]
      %v564 = vld [vmem:[%s556 + $0x1c] sm:$0xf]
      %v565 = vld [vmem:[%s556 + $0x20] sm:$0xf]
      %v566 = vld [vmem:[%s556 + $0x24] sm:$0xf]
      %v567 = vld [vmem:[%s556 + $0x28] sm:$0xf]
      %v568 = vld [vmem:[%s556 + $0x2c] sm:$0xf]
      %v569 = vld [vmem:[%s556 + $0x30] sm:$0xf]
      %v570 = vld [vmem:[%s556 + $0x34] sm:$0xf]
      %v571 = vld [vmem:[%s556 + $0x38] sm:$0xf]
      %v572 = vld [vmem:[%s556 + $0x3c] sm:$0xf]
      %s573 = scalar_lea.vmem %s1, 256
      %v574 = vld [vmem:[%s573] sm:$0xf]
      %v575 = vld [vmem:[%s573 + $0x4] sm:$0xf]
      %v576 = vld [vmem:[%s573 + $0x8] sm:$0xf]
      %v577 = vld [vmem:[%s573 + $0xc] sm:$0xf]
      %v578 = vld [vmem:[%s573 + $0x10] sm:$0xf]
      %v579 = vld [vmem:[%s573 + $0x14] sm:$0xf]
      %v580 = vld [vmem:[%s573 + $0x18] sm:$0xf]
      %v581 = vld [vmem:[%s573 + $0x1c] sm:$0xf]
      %v582 = vld [vmem:[%s573 + $0x20] sm:$0xf]
      %v583 = vld [vmem:[%s573 + $0x24] sm:$0xf]
      %v584 = vld [vmem:[%s573 + $0x28] sm:$0xf]
      %v585 = vld [vmem:[%s573 + $0x2c] sm:$0xf]
      %v586 = vld [vmem:[%s573 + $0x30] sm:$0xf]
      %v587 = vld [vmem:[%s573 + $0x34] sm:$0xf]
      %v588 = vld [vmem:[%s573 + $0x38] sm:$0xf]
      %v589 = vld [vmem:[%s573 + $0x3c] sm:$0xf]
      %v606 = vunpack.c.l.b16 %v574
      %v607 = vunpack.c.l.b16 %v575
      %v608 = vunpack.c.l.b16 %v576
      %v609 = vunpack.c.l.b16 %v577
      %v610 = vunpack.c.l.b16 %v578
      %v611 = vunpack.c.l.b16 %v579
      %v612 = vunpack.c.l.b16 %v580
      %v613 = vunpack.c.l.b16 %v581
      %v614 = vunpack.c.l.b16 %v582
      %v615 = vunpack.c.l.b16 %v583
      %v616 = vunpack.c.l.b16 %v584
      %v617 = vunpack.c.l.b16 %v585
      %v618 = vunpack.c.l.b16 %v586
      %v619 = vunpack.c.l.b16 %v587
      %v620 = vunpack.c.l.b16 %v588
      %v621 = vunpack.c.l.b16 %v589
      %v622 = vpack.c.b16 %v607, %v606
      %v623 = vpack.c.b16 %v609, %v608
      %v624 = vpack.c.b16 %v611, %v610
      %v625 = vpack.c.b16 %v613, %v612
      %v626 = vpack.c.b16 %v615, %v614
      %v627 = vpack.c.b16 %v617, %v616
      %v628 = vpack.c.b16 %v619, %v618
      %v629 = vpack.c.b16 %v621, %v620
      %638 = vmatprep.subr.bf16.mxu0 0
      %639 = vmatpush1.bf16.msra.mxu0 %v629
      %640 = vmatprep.subr.bf16.mxu0 0
      %641 = vmatpush1.bf16.msra.mxu0 %v628
      %642 = vmatprep.subr.bf16.mxu0 0
      %643 = vmatpush1.bf16.msra.mxu0 %v627
      %644 = vmatprep.subr.bf16.mxu0 0
      %645 = vmatpush1.bf16.msra.mxu0 %v626
      %646 = vmatprep.subr.bf16.mxu0 0
      %647 = vmatpush1.bf16.msra.mxu0 %v625
      %648 = vmatprep.subr.bf16.mxu0 0
      %649 = vmatpush1.bf16.msra.mxu0 %v624
      %650 = vmatprep.subr.bf16.mxu0 0
      %651 = vmatpush1.bf16.msra.mxu0 %v623
      %652 = vmatprep.subr.bf16.mxu0 0
      %653 = vmatpush1.bf16.msra.mxu0 %v622
      %654 = vmatprep.subr.bf16.mxu0 0
      %655 = vmatpush2.bf16.msra.mxu0 0
      %656 = vmatprep.subr.bf16.mxu0 0
      %657 = vmatpush2.bf16.msra.mxu0 0
      %658 = vmatprep.subr.bf16.mxu0 0
      %659 = vmatpush2.bf16.msra.mxu0 0
      %660 = vmatprep.subr.bf16.mxu0 0
      %661 = vmatpush2.bf16.msra.mxu0 0
      %662 = vmatprep.subr.bf16.mxu0 0
      %663 = vmatpush2.bf16.msra.mxu0 0
      %664 = vmatprep.subr.bf16.mxu0 0
      %665 = vmatpush2.bf16.msra.mxu0 0
      %666 = vmatprep.subr.bf16.mxu0 0
      %667 = vmatpush2.bf16.msra.mxu0 0
      %668 = vmatprep.subr.bf16.mxu0 0
      %669 = vmatpush2.bf16.msra.mxu0 0
      %670 = vmatprep.mubr.bf16.mxu0 0
      %671 = vmatmul.mubr.bf16.gmra.mxu0 %v225
      %v672 = vpop.f32.mrf.mxu0
      %v673 = vadd.f32 0.0, %v672
      %v674 = vpop.f32.mrf.mxu0
      %v675 = vpop.f32.mrf.mxu0
      %v676 = vadd.f32 0.0, %v675
      %v677 = vpop.f32.mrf.mxu0
      %678 = vdwg.mxu0
      %v695 = vunpack.c.l.b16 %v557
      %v696 = vunpack.c.l.b16 %v558
      %v697 = vunpack.c.l.b16 %v559
      %v698 = vunpack.c.l.b16 %v560
      %v699 = vunpack.c.l.b16 %v561
      %v700 = vunpack.c.l.b16 %v562
      %v701 = vunpack.c.l.b16 %v563
      %v702 = vunpack.c.l.b16 %v564
      %v703 = vunpack.c.l.b16 %v565
      %v704 = vunpack.c.l.b16 %v566
      %v705 = vunpack.c.l.b16 %v567
      %v706 = vunpack.c.l.b16 %v568
      %v707 = vunpack.c.l.b16 %v569
      %v708 = vunpack.c.l.b16 %v570
      %v709 = vunpack.c.l.b16 %v571
      %v710 = vunpack.c.l.b16 %v572
      %v711 = vpack.c.b16 %v696, %v695
      %v712 = vpack.c.b16 %v698, %v697
      %v713 = vpack.c.b16 %v700, %v699
      %v714 = vpack.c.b16 %v702, %v701
      %v715 = vpack.c.b16 %v704, %v703
      %v716 = vpack.c.b16 %v706, %v705
      %v717 = vpack.c.b16 %v708, %v707
      %v718 = vpack.c.b16 %v710, %v709
      %727 = vmatprep.subr.bf16.mxu0 0
      %728 = vmatpush1.bf16.msra.mxu0 %v718
      %729 = vmatprep.subr.bf16.mxu0 0
      %730 = vmatpush1.bf16.msra.mxu0 %v717
      %731 = vmatprep.subr.bf16.mxu0 0
      %732 = vmatpush1.bf16.msra.mxu0 %v716
      %733 = vmatprep.subr.bf16.mxu0 0
      %734 = vmatpush1.bf16.msra.mxu0 %v715
      %735 = vmatprep.subr.bf16.mxu0 0
      %736 = vmatpush1.bf16.msra.mxu0 %v714
      %737 = vmatprep.subr.bf16.mxu0 0
      %738 = vmatpush1.bf16.msra.mxu0 %v713
      %739 = vmatprep.subr.bf16.mxu0 0
      %740 = vmatpush1.bf16.msra.mxu0 %v712
      %741 = vmatprep.subr.bf16.mxu0 0
      %742 = vmatpush1.bf16.msra.mxu0 %v711
      %743 = vmatprep.subr.bf16.mxu0 0
      %744 = vmatpush2.bf16.msra.mxu0 0
      %745 = vmatprep.subr.bf16.mxu0 0
      %746 = vmatpush2.bf16.msra.mxu0 0
      %747 = vmatprep.subr.bf16.mxu0 0
      %748 = vmatpush2.bf16.msra.mxu0 0
      %749 = vmatprep.subr.bf16.mxu0 0
      %750 = vmatpush2.bf16.msra.mxu0 0
      %751 = vmatprep.subr.bf16.mxu0 0
      %752 = vmatpush2.bf16.msra.mxu0 0
      %753 = vmatprep.subr.bf16.mxu0 0
      %754 = vmatpush2.bf16.msra.mxu0 0
      %755 = vmatprep.subr.bf16.mxu0 0
      %756 = vmatpush2.bf16.msra.mxu0 0
      %757 = vmatprep.subr.bf16.mxu0 0
      %758 = vmatpush2.bf16.msra.mxu0 0
      %759 = vmatprep.mubr.bf16.mxu0 0
      %760 = vmatmul.mubr.bf16.gmra.mxu0 %v320
      %v761 = vpop.f32.mrf.mxu0
      %v762 = vadd.f32 %v673, %v761
      %v763 = vpop.f32.mrf.mxu0
      %v764 = vpop.f32.mrf.mxu0
      %v765 = vadd.f32 %v676, %v764
      %v766 = vpop.f32.mrf.mxu0
      %767 = vdwg.mxu0
      %s768 = scalar_lea.vmem %s1, 320
      %v769 = vld [vmem:[%s768] sm:$0xf]
      %v770 = vld [vmem:[%s768 + $0x4] sm:$0xf]
      %v771 = vld [vmem:[%s768 + $0x8] sm:$0xf]
      %v772 = vld [vmem:[%s768 + $0xc] sm:$0xf]
      %v773 = vld [vmem:[%s768 + $0x10] sm:$0xf]
      %v774 = vld [vmem:[%s768 + $0x14] sm:$0xf]
      %v775 = vld [vmem:[%s768 + $0x18] sm:$0xf]
      %v776 = vld [vmem:[%s768 + $0x1c] sm:$0xf]
      %v777 = vld [vmem:[%s768 + $0x20] sm:$0xf]
      %v778 = vld [vmem:[%s768 + $0x24] sm:$0xf]
      %v779 = vld [vmem:[%s768 + $0x28] sm:$0xf]
      %v780 = vld [vmem:[%s768 + $0x2c] sm:$0xf]
      %v781 = vld [vmem:[%s768 + $0x30] sm:$0xf]
      %v782 = vld [vmem:[%s768 + $0x34] sm:$0xf]
      %v783 = vld [vmem:[%s768 + $0x38] sm:$0xf]
      %v784 = vld [vmem:[%s768 + $0x3c] sm:$0xf]
      %v801 = vunpack.c.l.b16 %v769
      %v802 = vunpack.c.l.b16 %v770
      %v803 = vunpack.c.l.b16 %v771
      %v804 = vunpack.c.l.b16 %v772
      %v805 = vunpack.c.l.b16 %v773
      %v806 = vunpack.c.l.b16 %v774
      %v807 = vunpack.c.l.b16 %v775
      %v808 = vunpack.c.l.b16 %v776
      %v809 = vunpack.c.l.b16 %v777
      %v810 = vunpack.c.l.b16 %v778
      %v811 = vunpack.c.l.b16 %v779
      %v812 = vunpack.c.l.b16 %v780
      %v813 = vunpack.c.l.b16 %v781
      %v814 = vunpack.c.l.b16 %v782
      %v815 = vunpack.c.l.b16 %v783
      %v816 = vunpack.c.l.b16 %v784
      %v817 = vpack.c.b16 %v802, %v801
      %v818 = vpack.c.b16 %v804, %v803
      %v819 = vpack.c.b16 %v806, %v805
      %v820 = vpack.c.b16 %v808, %v807
      %v821 = vpack.c.b16 %v810, %v809
      %v822 = vpack.c.b16 %v812, %v811
      %v823 = vpack.c.b16 %v814, %v813
      %v824 = vpack.c.b16 %v816, %v815
      %833 = vmatprep.subr.bf16.mxu0 0
      %834 = vmatpush1.bf16.msra.mxu0 %v824
      %835 = vmatprep.subr.bf16.mxu0 0
      %836 = vmatpush1.bf16.msra.mxu0 %v823
      %837 = vmatprep.subr.bf16.mxu0 0
      %838 = vmatpush1.bf16.msra.mxu0 %v822
      %839 = vmatprep.subr.bf16.mxu0 0
      %840 = vmatpush1.bf16.msra.mxu0 %v821
      %841 = vmatprep.subr.bf16.mxu0 0
      %842 = vmatpush1.bf16.msra.mxu0 %v820
      %843 = vmatprep.subr.bf16.mxu0 0
      %844 = vmatpush1.bf16.msra.mxu0 %v819
      %845 = vmatprep.subr.bf16.mxu0 0
      %846 = vmatpush1.bf16.msra.mxu0 %v818
      %847 = vmatprep.subr.bf16.mxu0 0
      %848 = vmatpush1.bf16.msra.mxu0 %v817
      %849 = vmatprep.subr.bf16.mxu0 0
      %850 = vmatpush2.bf16.msra.mxu0 0
      %851 = vmatprep.subr.bf16.mxu0 0
      %852 = vmatpush2.bf16.msra.mxu0 0
      %853 = vmatprep.subr.bf16.mxu0 0
      %854 = vmatpush2.bf16.msra.mxu0 0
      %855 = vmatprep.subr.bf16.mxu0 0
      %856 = vmatpush2.bf16.msra.mxu0 0
      %857 = vmatprep.subr.bf16.mxu0 0
      %858 = vmatpush2.bf16.msra.mxu0 0
      %859 = vmatprep.subr.bf16.mxu0 0
      %860 = vmatpush2.bf16.msra.mxu0 0
      %861 = vmatprep.subr.bf16.mxu0 0
      %862 = vmatpush2.bf16.msra.mxu0 0
      %863 = vmatprep.subr.bf16.mxu0 0
      %864 = vmatpush2.bf16.msra.mxu0 0
      %865 = vmatprep.mubr.bf16.mxu0 0
      %866 = vmatmul.mubr.bf16.gmra.mxu0 %v442
      %v867 = vpop.f32.mrf.mxu0
      %v868 = vadd.f32 0.0, %v867
      %v869 = vpop.f32.mrf.mxu0
      %v870 = vpop.f32.mrf.mxu0
      %v871 = vadd.f32 0.0, %v870
      %v872 = vpop.f32.mrf.mxu0
      %873 = vdwg.mxu0
      %v874 = vadd.f32 %v762, %v868
      %v875 = vadd.f32 %v765, %v871
      %v876 = vsel %vm535, %v874, 0.0
      %v877 = vsel %vm535, %v875, 0.0
      %v878 = vadd.f32 %v876, %v877
      %v879 = vrot.slane %v878, 4
      %v880 = vadd.f32 %v878, %v879
      %v881 = vrot.slane %v880, 2
      %v882 = vadd.f32 %v880, %v881
      %v883 = vrot.slane %v882, 1
      %v884 = vadd.f32 %v882, %v883
      %v885 = vmul.f32 %v874, %v874
      %v886 = vmul.f32 %v875, %v875
      %v887 = vsel %vm535, %v885, 0.0
      %v888 = vsel %vm535, %v886, 0.0
      %v889 = vadd.f32 %v887, %v888
      %v890 = vrot.slane %v889, 4
      %v891 = vadd.f32 %v889, %v890
      %v892 = vrot.slane %v891, 2
      %v893 = vadd.f32 %v891, %v892
      %v894 = vrot.slane %v893, 1
      %v895 = vadd.f32 %v893, %v894
      %v896 = vmax.f32 %v533, %v874
      %v897 = vmax.f32 %v534, %v875
      %v898 = vmin.f32 %v533, %v874
      %v899 = vmin.f32 %v534, %v875
      %v900 = vadd.f32 %v544, %v884
      %v901 = vadd.f32 %v555, %v895
      %902 = vmatprep.subr.bf16.mxu0 0
      %903 = vmatpush1.bf16.msra.mxu0 %v266
      %904 = vmatprep.subr.bf16.mxu0 0
      %905 = vmatpush1.bf16.msra.mxu0 %v265
      %906 = vmatprep.subr.bf16.mxu0 0
      %907 = vmatpush1.bf16.msra.mxu0 %v264
      %908 = vmatprep.subr.bf16.mxu0 0
      %909 = vmatpush1.bf16.msra.mxu0 %v263
      %910 = vmatprep.subr.bf16.mxu0 0
      %911 = vmatpush1.bf16.msra.mxu0 %v262
      %912 = vmatprep.subr.bf16.mxu0 0
      %913 = vmatpush1.bf16.msra.mxu0 %v261
      %914 = vmatprep.subr.bf16.mxu0 0
      %915 = vmatpush1.bf16.msra.mxu0 %v260
      %916 = vmatprep.subr.bf16.mxu0 0
      %917 = vmatpush1.bf16.msra.mxu0 %v259
      %918 = vmatprep.subr.bf16.mxu0 0
      %919 = vmatpush2.bf16.msra.mxu0 0
      %920 = vmatprep.subr.bf16.mxu0 0
      %921 = vmatpush2.bf16.msra.mxu0 0
      %922 = vmatprep.subr.bf16.mxu0 0
      %923 = vmatpush2.bf16.msra.mxu0 0
      %924 = vmatprep.subr.bf16.mxu0 0
      %925 = vmatpush2.bf16.msra.mxu0 0
      %926 = vmatprep.subr.bf16.mxu0 0
      %927 = vmatpush2.bf16.msra.mxu0 0
      %928 = vmatprep.subr.bf16.mxu0 0
      %929 = vmatpush2.bf16.msra.mxu0 0
      %930 = vmatprep.subr.bf16.mxu0 0
      %931 = vmatpush2.bf16.msra.mxu0 0
      %932 = vmatprep.subr.bf16.mxu0 0
      %933 = vmatpush2.bf16.msra.mxu0 0
      %934 = vmatprep.mubr.bf16.mxu0 0
      %935 = vmatmul.mubr.bf16.gmra.mxu0 %v442
      %v936 = vpop.f32.mrf.mxu0
      %v937 = vadd.f32 0.0, %v936
      %v938 = vpop.f32.mrf.mxu0
      %v939 = vpop.f32.mrf.mxu0
      %v940 = vadd.f32 0.0, %v939
      %v941 = vpop.f32.mrf.mxu0
      %942 = vdwg.mxu0
      %943 = vmatprep.subr.bf16.mxu0 0
      %944 = vmatpush1.bf16.msra.mxu0 %v361
      %945 = vmatprep.subr.bf16.mxu0 0
      %946 = vmatpush1.bf16.msra.mxu0 %v360
      %947 = vmatprep.subr.bf16.mxu0 0
      %948 = vmatpush1.bf16.msra.mxu0 %v359
      %949 = vmatprep.subr.bf16.mxu0 0
      %950 = vmatpush1.bf16.msra.mxu0 %v358
      %951 = vmatprep.subr.bf16.mxu0 0
      %952 = vmatpush1.bf16.msra.mxu0 %v357
      %953 = vmatprep.subr.bf16.mxu0 0
      %954 = vmatpush1.bf16.msra.mxu0 %v356
      %955 = vmatprep.subr.bf16.mxu0 0
      %956 = vmatpush1.bf16.msra.mxu0 %v355
      %957 = vmatprep.subr.bf16.mxu0 0
      %958 = vmatpush1.bf16.msra.mxu0 %v354
      %959 = vmatprep.subr.bf16.mxu0 0
      %960 = vmatpush2.bf16.msra.mxu0 0
      %961 = vmatprep.subr.bf16.mxu0 0
      %962 = vmatpush2.bf16.msra.mxu0 0
      %963 = vmatprep.subr.bf16.mxu0 0
      %964 = vmatpush2.bf16.msra.mxu0 0
      %965 = vmatprep.subr.bf16.mxu0 0
      %966 = vmatpush2.bf16.msra.mxu0 0
      %967 = vmatprep.subr.bf16.mxu0 0
      %968 = vmatpush2.bf16.msra.mxu0 0
      %969 = vmatprep.subr.bf16.mxu0 0
      %970 = vmatpush2.bf16.msra.mxu0 0
      %971 = vmatprep.subr.bf16.mxu0 0
      %972 = vmatpush2.bf16.msra.mxu0 0
      %973 = vmatprep.subr.bf16.mxu0 0
      %974 = vmatpush2.bf16.msra.mxu0 0
      %975 = vmatprep.mubr.bf16.mxu0 0
      %976 = vmatmul.mubr.bf16.gmra.mxu0 %v225
      %v977 = vpop.f32.mrf.mxu0
      %v978 = vadd.f32 %v937, %v977
      %v979 = vpop.f32.mrf.mxu0
      %v980 = vpop.f32.mrf.mxu0
      %v981 = vadd.f32 %v940, %v980
      %v982 = vpop.f32.mrf.mxu0
      %983 = vdwg.mxu0
      %v984 = vld [vmem:[%s201] sm:$0xc]
      %v985 = vld [vmem:[%s201 + $0x4] sm:$0xf]
      %v986 = vld [vmem:[%s201 + $0x8] sm:$0x3]
      %v990 = vunpack.c.l.b16 %v984
      %v991 = vunpack.c.l.b16 %v985
      %v992 = vunpack.c.l.b16 %v986
      %v993 = vpack.c.b16 %v991, %v990
      %v994 = vpack.c.b16 %v992, %v992
      %v995 = vrot.slane %v993, 2
      %v996 = vrot.slane %v994, 2
      %v997 = vsel %vm439, %v995, %v996
      %999 = vmatprep.subr.bf16.mxu0 0
      %1000 = vmatpush1.bf16.msra.mxu0 %v483
      %1001 = vmatprep.subr.bf16.mxu0 0
      %1002 = vmatpush1.bf16.msra.mxu0 %v482
      %1003 = vmatprep.subr.bf16.mxu0 0
      %1004 = vmatpush1.bf16.msra.mxu0 %v481
      %1005 = vmatprep.subr.bf16.mxu0 0
      %1006 = vmatpush1.bf16.msra.mxu0 %v480
      %1007 = vmatprep.subr.bf16.mxu0 0
      %1008 = vmatpush1.bf16.msra.mxu0 %v479
      %1009 = vmatprep.subr.bf16.mxu0 0
      %1010 = vmatpush1.bf16.msra.mxu0 %v478
      %1011 = vmatprep.subr.bf16.mxu0 0
      %1012 = vmatpush1.bf16.msra.mxu0 %v477
      %1013 = vmatprep.subr.bf16.mxu0 0
      %1014 = vmatpush1.bf16.msra.mxu0 %v476
      %1015 = vmatprep.subr.bf16.mxu0 0
      %1016 = vmatpush2.bf16.msra.mxu0 0
      %1017 = vmatprep.subr.bf16.mxu0 0
      %1018 = vmatpush2.bf16.msra.mxu0 0
      %1019 = vmatprep.subr.bf16.mxu0 0
      %1020 = vmatpush2.bf16.msra.mxu0 0
      %1021 = vmatprep.subr.bf16.mxu0 0
      %1022 = vmatpush2.bf16.msra.mxu0 0
      %1023 = vmatprep.subr.bf16.mxu0 0
      %1024 = vmatpush2.bf16.msra.mxu0 0
      %1025 = vmatprep.subr.bf16.mxu0 0
      %1026 = vmatpush2.bf16.msra.mxu0 0
      %1027 = vmatprep.subr.bf16.mxu0 0
      %1028 = vmatpush2.bf16.msra.mxu0 0
      %1029 = vmatprep.subr.bf16.mxu0 0
      %1030 = vmatpush2.bf16.msra.mxu0 0
      %1031 = vmatprep.mubr.bf16.mxu0 0
      %1032 = vmatmul.mubr.bf16.gmra.mxu0 %v997
      %v1033 = vpop.f32.mrf.mxu0
      %v1034 = vadd.f32 0.0, %v1033
      %v1035 = vpop.f32.mrf.mxu0
      %v1036 = vpop.f32.mrf.mxu0
      %v1037 = vadd.f32 0.0, %v1036
      %v1038 = vpop.f32.mrf.mxu0
      %1039 = vdwg.mxu0
      %v1040 = vadd.f32 %v978, %v1034
      %v1041 = vadd.f32 %v981, %v1037
      %v1042 = vsel %vm535, %v1040, 0.0
      %v1043 = vsel %vm535, %v1041, 0.0
      %v1044 = vadd.f32 %v1042, %v1043
      %v1045 = vrot.slane %v1044, 4
      %v1046 = vadd.f32 %v1044, %v1045
      %v1047 = vrot.slane %v1046, 2
      %v1048 = vadd.f32 %v1046, %v1047
      %v1049 = vrot.slane %v1048, 1
      %v1050 = vadd.f32 %v1048, %v1049
      %v1051 = vmul.f32 %v1040, %v1040
      %v1052 = vmul.f32 %v1041, %v1041
      %v1053 = vsel %vm535, %v1051, 0.0
      %v1054 = vsel %vm535, %v1052, 0.0
      %v1055 = vadd.f32 %v1053, %v1054
      %v1056 = vrot.slane %v1055, 4
      %v1057 = vadd.f32 %v1055, %v1056
      %v1058 = vrot.slane %v1057, 2
      %v1059 = vadd.f32 %v1057, %v1058
      %v1060 = vrot.slane %v1059, 1
      %v1061 = vadd.f32 %v1059, %v1060
      %v1062 = vmax.f32 %v896, %v1040
      %v1063 = vmax.f32 %v897, %v1041
      %v1064 = vmin.f32 %v898, %v1040
      %v1065 = vmin.f32 %v899, %v1041
      %v1066 = vadd.f32 %v900, %v1050
      %v1067 = vadd.f32 %v901, %v1061
      %1068 = vmatprep.subr.bf16.mxu0 0
      %1069 = vmatpush1.bf16.msra.mxu0 %v629
      %1070 = vmatprep.subr.bf16.mxu0 0
      %1071 = vmatpush1.bf16.msra.mxu0 %v628
      %1072 = vmatprep.subr.bf16.mxu0 0
      %1073 = vmatpush1.bf16.msra.mxu0 %v627
      %1074 = vmatprep.subr.bf16.mxu0 0
      %1075 = vmatpush1.bf16.msra.mxu0 %v626
      %1076 = vmatprep.subr.bf16.mxu0 0
      %1077 = vmatpush1.bf16.msra.mxu0 %v625
      %1078 = vmatprep.subr.bf16.mxu0 0
      %1079 = vmatpush1.bf16.msra.mxu0 %v624
      %1080 = vmatprep.subr.bf16.mxu0 0
      %1081 = vmatpush1.bf16.msra.mxu0 %v623
      %1082 = vmatprep.subr.bf16.mxu0 0
      %1083 = vmatpush1.bf16.msra.mxu0 %v622
      %1084 = vmatprep.subr.bf16.mxu0 0
      %1085 = vmatpush2.bf16.msra.mxu0 0
      %1086 = vmatprep.subr.bf16.mxu0 0
      %1087 = vmatpush2.bf16.msra.mxu0 0
      %1088 = vmatprep.subr.bf16.mxu0 0
      %1089 = vmatpush2.bf16.msra.mxu0 0
      %1090 = vmatprep.subr.bf16.mxu0 0
      %1091 = vmatpush2.bf16.msra.mxu0 0
      %1092 = vmatprep.subr.bf16.mxu0 0
      %1093 = vmatpush2.bf16.msra.mxu0 0
      %1094 = vmatprep.subr.bf16.mxu0 0
      %1095 = vmatpush2.bf16.msra.mxu0 0
      %1096 = vmatprep.subr.bf16.mxu0 0
      %1097 = vmatpush2.bf16.msra.mxu0 0
      %1098 = vmatprep.subr.bf16.mxu0 0
      %1099 = vmatpush2.bf16.msra.mxu0 0
      %1100 = vmatprep.mubr.bf16.mxu0 0
      %1101 = vmatmul.mubr.bf16.gmra.mxu0 %v442
      %v1102 = vpop.f32.mrf.mxu0
      %v1103 = vadd.f32 0.0, %v1102
      %v1104 = vpop.f32.mrf.mxu0
      %v1105 = vpop.f32.mrf.mxu0
      %v1106 = vadd.f32 0.0, %v1105
      %v1107 = vpop.f32.mrf.mxu0
      %1108 = vdwg.mxu0
      %1109 = vmatprep.subr.bf16.mxu0 0
      %1110 = vmatpush1.bf16.msra.mxu0 %v718
      %1111 = vmatprep.subr.bf16.mxu0 0
      %1112 = vmatpush1.bf16.msra.mxu0 %v717
      %1113 = vmatprep.subr.bf16.mxu0 0
      %1114 = vmatpush1.bf16.msra.mxu0 %v716
      %1115 = vmatprep.subr.bf16.mxu0 0
      %1116 = vmatpush1.bf16.msra.mxu0 %v715
      %1117 = vmatprep.subr.bf16.mxu0 0
      %1118 = vmatpush1.bf16.msra.mxu0 %v714
      %1119 = vmatprep.subr.bf16.mxu0 0
      %1120 = vmatpush1.bf16.msra.mxu0 %v713
      %1121 = vmatprep.subr.bf16.mxu0 0
      %1122 = vmatpush1.bf16.msra.mxu0 %v712
      %1123 = vmatprep.subr.bf16.mxu0 0
      %1124 = vmatpush1.bf16.msra.mxu0 %v711
      %1125 = vmatprep.subr.bf16.mxu0 0
      %1126 = vmatpush2.bf16.msra.mxu0 0
      %1127 = vmatprep.subr.bf16.mxu0 0
      %1128 = vmatpush2.bf16.msra.mxu0 0
      %1129 = vmatprep.subr.bf16.mxu0 0
      %1130 = vmatpush2.bf16.msra.mxu0 0
      %1131 = vmatprep.subr.bf16.mxu0 0
      %1132 = vmatpush2.bf16.msra.mxu0 0
      %1133 = vmatprep.subr.bf16.mxu0 0
      %1134 = vmatpush2.bf16.msra.mxu0 0
      %1135 = vmatprep.subr.bf16.mxu0 0
      %1136 = vmatpush2.bf16.msra.mxu0 0
      %1137 = vmatprep.subr.bf16.mxu0 0
      %1138 = vmatpush2.bf16.msra.mxu0 0
      %1139 = vmatprep.subr.bf16.mxu0 0
      %1140 = vmatpush2.bf16.msra.mxu0 0
      %1141 = vmatprep.mubr.bf16.mxu0 0
      %1142 = vmatmul.mubr.bf16.gmra.mxu0 %v225
      %v1143 = vpop.f32.mrf.mxu0
      %v1144 = vadd.f32 %v1103, %v1143
      %v1145 = vpop.f32.mrf.mxu0
      %v1146 = vpop.f32.mrf.mxu0
      %v1147 = vadd.f32 %v1106, %v1146
      %v1148 = vpop.f32.mrf.mxu0
      %1149 = vdwg.mxu0
      %1150 = vmatprep.subr.bf16.mxu0 0
      %1151 = vmatpush1.bf16.msra.mxu0 %v824
      %1152 = vmatprep.subr.bf16.mxu0 0
      %1153 = vmatpush1.bf16.msra.mxu0 %v823
      %1154 = vmatprep.subr.bf16.mxu0 0
      %1155 = vmatpush1.bf16.msra.mxu0 %v822
      %1156 = vmatprep.subr.bf16.mxu0 0
      %1157 = vmatpush1.bf16.msra.mxu0 %v821
      %1158 = vmatprep.subr.bf16.mxu0 0
      %1159 = vmatpush1.bf16.msra.mxu0 %v820
      %1160 = vmatprep.subr.bf16.mxu0 0
      %1161 = vmatpush1.bf16.msra.mxu0 %v819
      %1162 = vmatprep.subr.bf16.mxu0 0
      %1163 = vmatpush1.bf16.msra.mxu0 %v818
      %1164 = vmatprep.subr.bf16.mxu0 0
      %1165 = vmatpush1.bf16.msra.mxu0 %v817
      %1166 = vmatprep.subr.bf16.mxu0 0
      %1167 = vmatpush2.bf16.msra.mxu0 0
      %1168 = vmatprep.subr.bf16.mxu0 0
      %1169 = vmatpush2.bf16.msra.mxu0 0
      %1170 = vmatprep.subr.bf16.mxu0 0
      %1171 = vmatpush2.bf16.msra.mxu0 0
      %1172 = vmatprep.subr.bf16.mxu0 0
      %1173 = vmatpush2.bf16.msra.mxu0 0
      %1174 = vmatprep.subr.bf16.mxu0 0
      %1175 = vmatpush2.bf16.msra.mxu0 0
      %1176 = vmatprep.subr.bf16.mxu0 0
      %1177 = vmatpush2.bf16.msra.mxu0 0
      %1178 = vmatprep.subr.bf16.mxu0 0
      %1179 = vmatpush2.bf16.msra.mxu0 0
      %1180 = vmatprep.subr.bf16.mxu0 0
      %1181 = vmatpush2.bf16.msra.mxu0 0
      %1182 = vmatprep.mubr.bf16.mxu0 0
      %1183 = vmatmul.mubr.bf16.gmra.mxu0 %v997
      %v1184 = vpop.f32.mrf.mxu0
      %v1185 = vadd.f32 0.0, %v1184
      %v1186 = vpop.f32.mrf.mxu0
      %v1187 = vpop.f32.mrf.mxu0
      %v1188 = vadd.f32 0.0, %v1187
      %v1189 = vpop.f32.mrf.mxu0
      %1190 = vdwg.mxu0
      %v1191 = vadd.f32 %v1144, %v1185
      %v1192 = vadd.f32 %v1147, %v1188
      %v1193 = vsel %vm535, %v1191, 0.0
      %v1194 = vsel %vm535, %v1192, 0.0
      %v1195 = vadd.f32 %v1193, %v1194
      %v1196 = vrot.slane %v1195, 4
      %v1197 = vadd.f32 %v1195, %v1196
      %v1198 = vrot.slane %v1197, 2
      %v1199 = vadd.f32 %v1197, %v1198
      %v1200 = vrot.slane %v1199, 1
      %v1201 = vadd.f32 %v1199, %v1200
      %v1202 = vmul.f32 %v1191, %v1191
      %v1203 = vmul.f32 %v1192, %v1192
      %v1204 = vsel %vm535, %v1202, 0.0
      %v1205 = vsel %vm535, %v1203, 0.0
      %v1206 = vadd.f32 %v1204, %v1205
      %v1207 = vrot.slane %v1206, 4
      %v1208 = vadd.f32 %v1206, %v1207
      %v1209 = vrot.slane %v1208, 2
      %v1210 = vadd.f32 %v1208, %v1209
      %v1211 = vrot.slane %v1210, 1
      %v1212 = vadd.f32 %v1210, %v1211
      %v1213 = vmax.f32 %v1062, %v1191
      %v1214 = vmax.f32 %v1063, %v1192
      %v1215 = vmin.f32 %v1064, %v1191
      %v1216 = vmin.f32 %v1065, %v1192
      %v1217 = vadd.f32 %v1066, %v1201
      %v1218 = vadd.f32 %v1067, %v1212
      %1221 = vrot.lane.b32.xlu0 %v1215, 32
      %v1222 = vpop.permute.xlu0 %1221
      %1223 = vrot.lane.b32.xlu0 %v1216, 32
      %v1224 = vpop.permute.xlu0 %1223
      %v1227 = vsel %vm535, %v1213, %v1222
      %v1228 = vsel %vm535, %v1214, %v1224
      %v1229 = vpack.c.bf16 %v1228, %v1227
      %v1231 = vunpack.c.l.b16 %v1229
      %v1232 = vunpack.c.h.b16 %v1229
      %v1233 = vpack.c.b16 %v1231, %v1231
      %v1234 = vpack.c.b16 %v1232, %v1232
      %vm1237 = vcmask 519168
      %1238 = vst.msk [vmem:[%s177] sm:$0xf] %vm1237, %v1233
      %1239 = vst.msk [vmem:[%s177 + $0x4] sm:$0xf] %vm1237, %v1234
      %vm1240 = vcmask 1040384
      %v1241 = vsel %vm1240, %v1217, %v1218
      %vm1242 = vcmask 1041408
      %v1243 = vsel %vm1242, %v1241, 0.0
      %1244 = vst.msk [vmem:[%s181] sm:$0xff] %vm535, %v1243
      %p1245 = scmp.lt.s32.totalorder %s15, 1
      %s1246 = scalar_select %p1245, %s15, 1
      %s1247 = smul.addr %s1246, 2
      %s1248 = smul.addr %s1247, 4
      %s1249 = scalar_lea.vmem %s2, %s1248
      %p1250 = scmp.lt.s32.totalorder %s15, 1
      %s1251 = scalar_select %p1250, %s15, 1
      %s1252 = smul.addr %s1251, 8
      %s1253 = scalar_lea.vmem %s3, %s1252
      // Predicated region
      $region29: #{cnn4_dsvdd_forward.11} parent=27 // pred_check
        %p1254 = pneg %p80
      $region30: #{cnn4_dsvdd_forward.11} parent=27 // pred_check_branch
        %1256 = sbr.rel (%p1254) target = $region32
      $region31: #{cnn4_dsvdd_forward.11} parent=27 // pred_region
        _
      $region32: #{cnn4_dsvdd_forward.11} parent=27 // pred_fallthru
        _
      // Predicated region
      $region33: #{cnn4_dsvdd_forward.11} parent=27 // pred_check
        %p1257 = pneg %p106
      $region34: #{cnn4_dsvdd_forward.11} parent=27 // pred_check_branch
        %1259 = sbr.rel (%p1257) target = $region36
      $region35: #{cnn4_dsvdd_forward.11} parent=27 // pred_region
        _
      $region36: #{cnn4_dsvdd_forward.11} parent=27 // pred_fallthru
        _
    $region28: #{cnn4_dsvdd_forward.11} parent=5 // pred_fallthru
      _
    %p1260 = scmp.le.s32.totalorder 2, %s10
    // Predicated region
    $region37: #{cnn4_dsvdd_forward.11} parent=5 // pred_check
      %p1261 = pneg %p1260
    $region38: #{cnn4_dsvdd_forward.11} parent=5 // pred_check_branch
      %1263 = sbr.rel (%p1261) target = $region40
    $region39: #{cnn4_dsvdd_forward.11} parent=5 // pred_region
      %s1264 = ssub.s32 %s10, 2
      // Predicated region
      $region41: #{cnn4_dsvdd_forward.11} parent=39 // pred_check
        %p1265 = pneg %p86
      $region42: #{cnn4_dsvdd_forward.11} parent=39 // pred_check_branch
        %1267 = sbr.rel (%p1265) target = $region44
      $region43: #{cnn4_dsvdd_forward.11} parent=39 // pred_region
        %p1268 = scmp.lt.s32.totalorder %s16, 1
        %s1269 = scalar_select %p1268, %s16, 1
        %s1270 = smul.addr %s1269, 2
        %s1271 = smul.addr %s1270, 4
        %s1272 = scalar_lea.vmem %s2, %s1271
      $region44: #{cnn4_dsvdd_forward.11} parent=39 // pred_fallthru
        _
      // Predicated region
      $region45: #{cnn4_dsvdd_forward.11} parent=39 // pred_check
        %p1273 = pneg %p112
      $region46: #{cnn4_dsvdd_forward.11} parent=39 // pred_check_branch
        %1275 = sbr.rel (%p1273) target = $region48
      $region47: #{cnn4_dsvdd_forward.11} parent=39 // pred_region
        %p1276 = scmp.lt.s32.totalorder %s16, 1
        %s1277 = scalar_select %p1276, %s16, 1
        %s1278 = smul.addr %s1277, 8
        %s1279 = scalar_lea.vmem %s3, %s1278
      $region48: #{cnn4_dsvdd_forward.11} parent=39 // pred_fallthru
        _
    $region40: #{cnn4_dsvdd_forward.11} parent=5 // pred_fallthru
      _
  $region6: #{cnn4_dsvdd_forward.11} parent=0 // loop_footer
    %s14 = sadd.s32 1, %s10
  $region7: #{cnn4_dsvdd_forward.11} parent=0 // loop_footer_branch
    %9 = sbr.rel target = $region3
  $region8: #{cnn4_dsvdd_forward.11} parent=0 // loop_exit
    _

// kernel: cnn4_dsvdd_forward.14
$region0: #{cnn4_dsvdd_forward.14}
  #allocation0 [shape = 'u32[]', space=smem, size = 0x4, offset = 0x4, fixed_abs, tag = 'smem constant byte address 0x4 - core index']
  #allocation1 [shape = 'u32[144,128]{1,0:T(1,128)}', space=vmem, size = 0x12000, scoped, tag = 'internal scratch']
  %s0 = inlined_call_operand.vmem [shape: bf16[2,4,64], index: 0, kind: input, shape index: {}]
  %s1 = inlined_call_operand.vmem [shape: f32[1,32], index: 1, kind: input, shape index: {}]
  %s2 = inlined_call_operand.vmem [shape: f32[1,32], index: 2, kind: input, shape index: {}]
  %s3 = inlined_call_operand.vmem [shape: bf16[2,4,32], index: 3, kind: output, shape index: {}]
  %s4 = sld [smem:[#allocation0]]
  $region45: #{cnn4_dsvdd_forward.14} parent=0
    _
  %s6 = ssub.s32 1, %s4
  %s7 = scalar_select 0, %s6, %s4
  loop: start=0, step=1, limit=4
  $region2: #{cnn4_dsvdd_forward.14} parent=0 // loop_pre_header
    _
  $region3: #{cnn4_dsvdd_forward.14} parent=0 // loop_header
    %s9 = sphi 0, %s13
    %p10 = scmp.ge.s32.totalorder %s9, 4
    %s19 = sphi 0, %s21
    %s22 = sphi 0, %s19
    %s23 = sphi 0, %s22
    %s39 = sphi 0, %s23
    %s43 = sphi 0, %s43
    %s45 = sphi 0, %s43
    %s46 = sphi 0, %s45
    %s60 = sphi 0, %s46
    %s64 = sphi 0, %s64
    %s66 = sphi 0, %s64
    %s67 = sphi 0, %s66
    %s81 = sphi 0, %s67
    %s87 = sphi 0, %s89
    %s90 = sphi 0, %s87
    %s91 = sphi 0, %s90
    %s107 = sphi 0, %s91
  $region4: #{cnn4_dsvdd_forward.14} parent=0 // loop_header_branch
    %12 = sbr.rel (%p10) target = $region8
  $region5: #{cnn4_dsvdd_forward.14} parent=0 // loop_body
    %s14 = ssub.s32 %s9, 1
    %s15 = ssub.s32 %s9, 2
    %s16 = sadd.s32 %s9, 1
    %s17 = ssub.s32 %s9, %s16
    %p18 = scmp.eq.s32.totalorder %s17, 0
    %s20 = sadd.s32 %s19, 1
    %s21 = scalar_select %p18, %s19, %s20
    %p24 = pneg %p18
    %p25 = scmp.eq.s32.totalorder %s9, 1
    %p26 = por %p24, %p25
    %p27 = scmp.ne.s32.totalorder %s19, %s22
    %p28 = scmp.eq.s32.totalorder %s9, 0
    %p29 = por %p27, %p28
    %p30 = scmp.ne.s32.totalorder %s19, %s22
    %p31 = scmp.eq.s32.totalorder %s14, 1
    %p32 = por %p30, %p31
    %p33 = scmp.ne.s32.totalorder %s22, %s23
    %p34 = scmp.eq.s32.totalorder %s14, 0
    %p35 = por %p33, %p34
    %p36 = scmp.ne.s32.totalorder %s22, %s23
    %p37 = scmp.eq.s32.totalorder %s15, 1
    %p38 = por %p36, %p37
    %p40 = scmp.ne.s32.totalorder %s23, %s39
    %p41 = scmp.eq.s32.totalorder %s15, 0
    %p42 = por %p40, %p41
    %s44 = sadd.s32 %s43, 1
    %p47 = scmp.eq.s32.totalorder %s9, 1
    %p48 = scmp.ne.s32.totalorder %s43, %s45
    %p49 = scmp.eq.s32.totalorder %s9, 0
    %p50 = por %p48, %p49
    %p51 = scmp.ne.s32.totalorder %s43, %s45
    %p52 = scmp.eq.s32.totalorder %s14, 1
    %p53 = por %p51, %p52
    %p54 = scmp.ne.s32.totalorder %s45, %s46
    %p55 = scmp.eq.s32.totalorder %s14, 0
    %p56 = por %p54, %p55
    %p57 = scmp.ne.s32.totalorder %s45, %s46
    %p58 = scmp.eq.s32.totalorder %s15, 1
    %p59 = por %p57, %p58
    %p61 = scmp.ne.s32.totalorder %s46, %s60
    %p62 = scmp.eq.s32.totalorder %s15, 0
    %p63 = por %p61, %p62
    %s65 = sadd.s32 %s64, 1
    %p68 = scmp.eq.s32.totalorder %s9, 1
    %p69 = scmp.ne.s32.totalorder %s64, %s66
    %p70 = scmp.eq.s32.totalorder %s9, 0
    %p71 = por %p69, %p70
    %p72 = scmp.ne.s32.totalorder %s64, %s66
    %p73 = scmp.eq.s32.totalorder %s14, 1
    %p74 = por %p72, %p73
    %p75 = scmp.ne.s32.totalorder %s66, %s67
    %p76 = scmp.eq.s32.totalorder %s14, 0
    %p77 = por %p75, %p76
    %p78 = scmp.ne.s32.totalorder %s66, %s67
    %p79 = scmp.eq.s32.totalorder %s15, 1
    %p80 = por %p78, %p79
    %p82 = scmp.ne.s32.totalorder %s67, %s81
    %p83 = scmp.eq.s32.totalorder %s15, 0
    %p84 = por %p82, %p83
    %s85 = ssub.s32 %s9, %s16
    %p86 = scmp.eq.s32.totalorder %s85, 0
    %s88 = sadd.s32 %s87, 1
    %s89 = scalar_select %p86, %s87, %s88
    %p92 = pneg %p86
    %p93 = scmp.eq.s32.totalorder %s9, 1
    %p94 = por %p92, %p93
    %p95 = scmp.ne.s32.totalorder %s87, %s90
    %p96 = scmp.eq.s32.totalorder %s9, 0
    %p97 = por %p95, %p96
    %p98 = scmp.ne.s32.totalorder %s87, %s90
    %p99 = scmp.eq.s32.totalorder %s14, 1
    %p100 = por %p98, %p99
    %p101 = scmp.ne.s32.totalorder %s90, %s91
    %p102 = scmp.eq.s32.totalorder %s14, 0
    %p103 = por %p101, %p102
    %p104 = scmp.ne.s32.totalorder %s90, %s91
    %p105 = scmp.eq.s32.totalorder %s15, 1
    %p106 = por %p104, %p105
    %p108 = scmp.ne.s32.totalorder %s91, %s107
    %p109 = scmp.eq.s32.totalorder %s15, 0
    %p110 = por %p108, %p109
    %p111 = scmp.le.s32.totalorder 1, %s9
    %p112 = scmp.lt.s32.totalorder %s9, 3
    %p113 = pnand %p111, %p112
    %p114 = pneg %p113
    // Predicated region
    $region9: #{cnn4_dsvdd_forward.14} parent=5 // pred_check
      _
    $region10: #{cnn4_dsvdd_forward.14} parent=5 // pred_check_branch
      %116 = sbr.rel (%p113) target = $region12
    $region11: #{cnn4_dsvdd_forward.14} parent=5 // pred_region
      %s117 = ssub.s32 %s9, 1
      // Predicated region
      $region13: #{cnn4_dsvdd_forward.14} parent=11 // pred_check
        %p118 = pneg %p56
      $region14: #{cnn4_dsvdd_forward.14} parent=11 // pred_check_branch
        %120 = sbr.rel (%p118) target = $region16
      $region15: #{cnn4_dsvdd_forward.14} parent=11 // pred_region
        _
      $region16: #{cnn4_dsvdd_forward.14} parent=11 // pred_fallthru
        _
      // Predicated region
      $region17: #{cnn4_dsvdd_forward.14} parent=11 // pred_check
        %p121 = pneg %p77
      $region18: #{cnn4_dsvdd_forward.14} parent=11 // pred_check_branch
        %123 = sbr.rel (%p121) target = $region20
      $region19: #{cnn4_dsvdd_forward.14} parent=11 // pred_region
        _
      $region20: #{cnn4_dsvdd_forward.14} parent=11 // pred_fallthru
        _
    $region12: #{cnn4_dsvdd_forward.14} parent=5 // pred_fallthru
      _
    %p124 = scmp.lt.s32.totalorder %s9, 2
    // Predicated region
    $region21: #{cnn4_dsvdd_forward.14} parent=5 // pred_check
      %p125 = pneg %p124
    $region22: #{cnn4_dsvdd_forward.14} parent=5 // pred_check_branch
      %127 = sbr.rel (%p125) target = $region24
    $region23: #{cnn4_dsvdd_forward.14} parent=5 // pred_region
      // Predicated region
      $region25: #{cnn4_dsvdd_forward.14} parent=23 // pred_check
        %p128 = pneg %p29
      $region26: #{cnn4_dsvdd_forward.14} parent=23 // pred_check_branch
        %130 = sbr.rel (%p128) target = $region28
      $region27: #{cnn4_dsvdd_forward.14} parent=23 // pred_region
        %p131 = scmp.lt.s32.totalorder %s9, 1
        %s132 = scalar_select %p131, %s9, 1
        %s133 = smul.addr %s132, 2
        %s134 = scalar_lea.vmem %s0, %s133
      $region28: #{cnn4_dsvdd_forward.14} parent=23 // pred_fallthru
        _
    $region24: #{cnn4_dsvdd_forward.14} parent=5 // pred_fallthru
      _
    %p135 = scmp.le.s32.totalorder 1, %s9
    %p136 = scmp.lt.s32.totalorder %s9, 3
    %p137 = pnand %p135, %p136
    %p138 = pneg %p137
    // Predicated region
    $region29: #{cnn4_dsvdd_forward.14} parent=5 // pred_check
      _
    $region30: #{cnn4_dsvdd_forward.14} parent=5 // pred_check_branch
      %140 = sbr.rel (%p137) target = $region32
    $region31: #{cnn4_dsvdd_forward.14} parent=5 // pred_region
      %s141 = ssub.s32 %s9, 1
      %p142 = scmp.lt.s32.totalorder %s14, 1
      %s143 = scalar_select %p142, %s14, 1
      %s144 = smul.addr %s143, 2
      %s145 = scalar_lea.vmem %s0, %s144
      %p146 = pneg %p35
      %p147 = pneg %p32
      %p148 = pneg %p56
      %p149 = pneg %p53
      %p150 = pneg %p77
      %p151 = pneg %p74
      %p152 = pneg %p103
      %p153 = pneg %p100
      %p154 = scmp.lt.s32.totalorder %s14, 1
      %s155 = scalar_select %p154, %s14, 1
      %s156 = smul.addr %s155, 2
      %s157 = scalar_lea.vmem %s3, %s156
      %p158 = scmp.lt.s32.totalorder %s14, 1
      %s159 = scalar_select %p158, %s14, 1
      %s160 = smul.addr %s159, 2
      %s161 = scalar_lea.vmem %s0, %s160
      %p162 = scmp.lt.s32.totalorder %s14, 1
      %s163 = scalar_select %p162, %s14, 1
      %s164 = smul.addr %s163, 2
      %s165 = scalar_lea.vmem %s3, %s164
      %v166 = vld [vmem:[%s161] sm:$0x3]
      %v167 = vunpack.c.l.bf16 %v166
      %v168 = vld [vmem:[%s1] sm:$0x1]
      %v169 = vld [vmem:[%s2] sm:$0x1]
      %vm170 = vcmp.ge.f32.partialorder %v168, 0.0
      %v171 = vsel %vm170, 1, 0
      %v172 = vlaneseq
      %v173 = vshrl.u32 %v172, 7
      %v174 = vsub.s32 0, %v173
      %v175 = vrot.slane %v171, %v174
      %vm176 = vcmp.eq.s32.totalorder %v175, 1
      %178 = vrot.lane.b32.xlu0 %v167, 96
      %v179 = vpop.permute.xlu0 %178
      %v181 = vsel %vm176, %v167, %v179
      %v183 = vlaneseq
      %v184 = vshrl.u32 %v183, 7
      %v185 = vsub.s32 0, %v184
      %v186 = vrot.slane %v168, %v185
      %v188 = vmul.f32 %v181, %v186
      %v190 = vlaneseq
      %v191 = vshrl.u32 %v190, 7
      %v192 = vsub.s32 0, %v191
      %v193 = vrot.slane %v169, %v192
      %v195 = vadd.f32 %v188, %v193
      %v196 = vmax.f32 %v195, 0.0
      %v197 = vpack.c.bf16 %v196, %v196
      %vm198 = vcmask 254976
      %199 = vst.msk [vmem:[%s165] sm:$0x3] %vm198, %v197
      %p200 = scmp.lt.s32.totalorder %s14, 1
      %s201 = scalar_select %p200, %s14, 1
      %s202 = smul.addr %s201, 2
      %s203 = scalar_lea.vmem %s3, %s202
      // Predicated region
      $region33: #{cnn4_dsvdd_forward.14} parent=31 // pred_check
        %p204 = pneg %p100
      $region34: #{cnn4_dsvdd_forward.14} parent=31 // pred_check_branch
        %206 = sbr.rel (%p204) target = $region36
      $region35: #{cnn4_dsvdd_forward.14} parent=31 // pred_region
        _
      $region36: #{cnn4_dsvdd_forward.14} parent=31 // pred_fallthru
        _
    $region32: #{cnn4_dsvdd_forward.14} parent=5 // pred_fallthru
      _
    %p207 = scmp.le.s32.totalorder 2, %s9
    // Predicated region
    $region37: #{cnn4_dsvdd_forward.14} parent=5 // pred_check
      %p208 = pneg %p207
    $region38: #{cnn4_dsvdd_forward.14} parent=5 // pred_check_branch
      %210 = sbr.rel (%p208) target = $region40
    $region39: #{cnn4_dsvdd_forward.14} parent=5 // pred_region
      %s211 = ssub.s32 %s9, 2
      // Predicated region
      $region41: #{cnn4_dsvdd_forward.14} parent=39 // pred_check
        %p212 = pneg %p106
      $region42: #{cnn4_dsvdd_forward.14} parent=39 // pred_check_branch
        %214 = sbr.rel (%p212) target = $region44
      $region43: #{cnn4_dsvdd_forward.14} parent=39 // pred_region
        %p215 = scmp.lt.s32.totalorder %s15, 1
        %s216 = scalar_select %p215, %s15, 1
        %s217 = smul.addr %s216, 2
        %s218 = scalar_lea.vmem %s3, %s217
      $region44: #{cnn4_dsvdd_forward.14} parent=39 // pred_fallthru
        _
    $region40: #{cnn4_dsvdd_forward.14} parent=5 // pred_fallthru
      _
  $region6: #{cnn4_dsvdd_forward.14} parent=0 // loop_footer
    %s13 = sadd.s32 1, %s9
  $region7: #{cnn4_dsvdd_forward.14} parent=0 // loop_footer_branch
    %8 = sbr.rel target = $region3
  $region8: #{cnn4_dsvdd_forward.14} parent=0 // loop_exit
    _

// kernel: cnn4_dsvdd_forward.13
$region0: #{cnn4_dsvdd_forward.13}
  #allocation0 [shape = 'u32[]', space=smem, size = 0x4, offset = 0x4, fixed_abs, tag = 'smem constant byte address 0x4 - core index']
  #allocation1 [shape = 'u32[144,128]{1,0:T(1,128)}', space=vmem, size = 0x12000, scoped, tag = 'internal scratch']
  %s0 = inlined_call_operand.vmem [shape: bf16[2,2,6,128], index: 0, kind: input, shape index: {}]
  %s1 = inlined_call_operand.vmem [shape: bf16[2,3,128,32], index: 1, kind: input, shape index: {}]
  %s2 = inlined_call_operand.vmem [shape: bf16[2,4,64], index: 2, kind: output, shape index: {0}]
  %s3 = inlined_call_operand.vmem [shape: f32[2,8,32], index: 3, kind: output, shape index: {1}]
  %4 = xla_tuple %s2, %s3
  %s5 = sld [smem:[#allocation0]]
  $region49: #{cnn4_dsvdd_forward.13} parent=0
    _
  %s7 = ssub.s32 1, %s5
  %s8 = scalar_select 0, %s7, %s5
  loop: start=0, step=1, limit=4
  $region2: #{cnn4_dsvdd_forward.13} parent=0 // loop_pre_header
    _
  $region3: #{cnn4_dsvdd_forward.13} parent=0 // loop_header
    %s10 = sphi 0, %s14
    %p11 = scmp.ge.s32.totalorder %s10, 4
    %s20 = sphi 0, %s22
    %s23 = sphi 0, %s20
    %s24 = sphi 0, %s23
    %s40 = sphi 0, %s24
    %s44 = sphi 0, %s44
    %s46 = sphi 0, %s44
    %s47 = sphi 0, %s46
    %s61 = sphi 0, %s47
    %s67 = sphi 0, %s69
    %s70 = sphi 0, %s67
    %s71 = sphi 0, %s70
    %s87 = sphi 0, %s71
    %s93 = sphi 0, %s95
    %s96 = sphi 0, %s93
    %s97 = sphi 0, %s96
    %s113 = sphi 0, %s97
  $region4: #{cnn4_dsvdd_forward.13} parent=0 // loop_header_branch
    %13 = sbr.rel (%p11) target = $region8
  $region5: #{cnn4_dsvdd_forward.13} parent=0 // loop_body
    %s15 = ssub.s32 %s10, 1
    %s16 = ssub.s32 %s10, 2
    %s17 = sadd.s32 %s10, 1
    %s18 = ssub.s32 %s10, %s17
    %p19 = scmp.eq.s32.totalorder %s18, 0
    %s21 = sadd.s32 %s20, 1
    %s22 = scalar_select %p19, %s20, %s21
    %p25 = pneg %p19
    %p26 = scmp.eq.s32.totalorder %s10, 1
    %p27 = por %p25, %p26
    %p28 = scmp.ne.s32.totalorder %s20, %s23
    %p29 = scmp.eq.s32.totalorder %s10, 0
    %p30 = por %p28, %p29
    %p31 = scmp.ne.s32.totalorder %s20, %s23
    %p32 = scmp.eq.s32.totalorder %s15, 1
    %p33 = por %p31, %p32
    %p34 = scmp.ne.s32.totalorder %s23, %s24
    %p35 = scmp.eq.s32.totalorder %s15, 0
    %p36 = por %p34, %p35
    %p37 = scmp.ne.s32.totalorder %s23, %s24
    %p38 = scmp.eq.s32.totalorder %s16, 1
    %p39 = por %p37, %p38
    %p41 = scmp.ne.s32.totalorder %s24, %s40
    %p42 = scmp.eq.s32.totalorder %s16, 0
    %p43 = por %p41, %p42
    %s45 = sadd.s32 %s44, 1
    %p48 = scmp.eq.s32.totalorder %s10, 1
    %p49 = scmp.ne.s32.totalorder %s44, %s46
    %p50 = scmp.eq.s32.totalorder %s10, 0
    %p51 = por %p49, %p50
    %p52 = scmp.ne.s32.totalorder %s44, %s46
    %p53 = scmp.eq.s32.totalorder %s15, 1
    %p54 = por %p52, %p53
    %p55 = scmp.ne.s32.totalorder %s46, %s47
    %p56 = scmp.eq.s32.totalorder %s15, 0
    %p57 = por %p55, %p56
    %p58 = scmp.ne.s32.totalorder %s46, %s47
    %p59 = scmp.eq.s32.totalorder %s16, 1
    %p60 = por %p58, %p59
    %p62 = scmp.ne.s32.totalorder %s47, %s61
    %p63 = scmp.eq.s32.totalorder %s16, 0
    %p64 = por %p62, %p63
    %s65 = ssub.s32 %s10, %s17
    %p66 = scmp.eq.s32.totalorder %s65, 0
    %s68 = sadd.s32 %s67, 1
    %s69 = scalar_select %p66, %s67, %s68
    %p72 = pneg %p66
    %p73 = scmp.eq.s32.totalorder %s10, 1
    %p74 = por %p72, %p73
    %p75 = scmp.ne.s32.totalorder %s67, %s70
    %p76 = scmp.eq.s32.totalorder %s10, 0
    %p77 = por %p75, %p76
    %p78 = scmp.ne.s32.totalorder %s67, %s70
    %p79 = scmp.eq.s32.totalorder %s15, 1
    %p80 = por %p78, %p79
    %p81 = scmp.ne.s32.totalorder %s70, %s71
    %p82 = scmp.eq.s32.totalorder %s15, 0
    %p83 = por %p81, %p82
    %p84 = scmp.ne.s32.totalorder %s70, %s71
    %p85 = scmp.eq.s32.totalorder %s16, 1
    %p86 = por %p84, %p85
    %p88 = scmp.ne.s32.totalorder %s71, %s87
    %p89 = scmp.eq.s32.totalorder %s16, 0
    %p90 = por %p88, %p89
    %s91 = ssub.s32 %s10, %s17
    %p92 = scmp.eq.s32.totalorder %s91, 0
    %s94 = sadd.s32 %s93, 1
    %s95 = scalar_select %p92, %s93, %s94
    %p98 = pneg %p92
    %p99 = scmp.eq.s32.totalorder %s10, 1
    %p100 = por %p98, %p99
    %p101 = scmp.ne.s32.totalorder %s93, %s96
    %p102 = scmp.eq.s32.totalorder %s10, 0
    %p103 = por %p101, %p102
    %p104 = scmp.ne.s32.totalorder %s93, %s96
    %p105 = scmp.eq.s32.totalorder %s15, 1
    %p106 = por %p104, %p105
    %p107 = scmp.ne.s32.totalorder %s96, %s97
    %p108 = scmp.eq.s32.totalorder %s15, 0
    %p109 = por %p107, %p108
    %p110 = scmp.ne.s32.totalorder %s96, %s97
    %p111 = scmp.eq.s32.totalorder %s16, 1
    %p112 = por %p110, %p111
    %p114 = scmp.ne.s32.totalorder %s97, %s113
    %p115 = scmp.eq.s32.totalorder %s16, 0
    %p116 = por %p114, %p115
    %p117 = scmp.le.s32.totalorder 1, %s10
    %p118 = scmp.lt.s32.totalorder %s10, 3
    %p119 = pnand %p117, %p118
    %p120 = pneg %p119
    // Predicated region
    $region9: #{cnn4_dsvdd_forward.13} parent=5 // pred_check
      _
    $region10: #{cnn4_dsvdd_forward.13} parent=5 // pred_check_branch
      %122 = sbr.rel (%p119) target = $region12
    $region11: #{cnn4_dsvdd_forward.13} parent=5 // pred_region
      %s123 = ssub.s32 %s10, 1
      // Predicated region
      $region13: #{cnn4_dsvdd_forward.13} parent=11 // pred_check
        %p124 = pneg %p57
      $region14: #{cnn4_dsvdd_forward.13} parent=11 // pred_check_branch
        %126 = sbr.rel (%p124) target = $region16
      $region15: #{cnn4_dsvdd_forward.13} parent=11 // pred_region
        _
      $region16: #{cnn4_dsvdd_forward.13} parent=11 // pred_fallthru
        _
    $region12: #{cnn4_dsvdd_forward.13} parent=5 // pred_fallthru
      _
    %p127 = scmp.lt.s32.totalorder %s10, 2
    // Predicated region
    $region17: #{cnn4_dsvdd_forward.13} parent=5 // pred_check
      %p128 = pneg %p127
    $region18: #{cnn4_dsvdd_forward.13} parent=5 // pred_check_branch
      %130 = sbr.rel (%p128) target = $region20
    $region19: #{cnn4_dsvdd_forward.13} parent=5 // pred_region
      // Predicated region
      $region21: #{cnn4_dsvdd_forward.13} parent=19 // pred_check
        %p131 = pneg %p30
      $region22: #{cnn4_dsvdd_forward.13} parent=19 // pred_check_branch
        %133 = sbr.rel (%p131) target = $region24
      $region23: #{cnn4_dsvdd_forward.13} parent=19 // pred_region
        %p134 = scmp.lt.s32.totalorder %s10, 1
        %s135 = scalar_select %p134, %s10, 1
        %s136 = smul.addr %s135, 2
        %s137 = smul.addr %s136, 4
        %s138 = scalar_lea.vmem %s0, %s137
      $region24: #{cnn4_dsvdd_forward.13} parent=19 // pred_fallthru
        _
    $region20: #{cnn4_dsvdd_forward.13} parent=5 // pred_fallthru
      _
    %p139 = scmp.le.s32.totalorder 1, %s10
    %p140 = scmp.lt.s32.totalorder %s10, 3
    %p141 = pnand %p139, %p140
    %p142 = pneg %p141
    // Predicated region
    $region25: #{cnn4_dsvdd_forward.13} parent=5 // pred_check
      _
    $region26: #{cnn4_dsvdd_forward.13} parent=5 // pred_check_branch
      %144 = sbr.rel (%p141) target = $region28
    $region27: #{cnn4_dsvdd_forward.13} parent=5 // pred_region
      %s145 = ssub.s32 %s10, 1
      %p146 = scmp.lt.s32.totalorder %s15, 1
      %s147 = scalar_select %p146, %s15, 1
      %s148 = smul.addr %s147, 2
      %s149 = smul.addr %s148, 4
      %s150 = scalar_lea.vmem %s0, %s149
      %p151 = pneg %p36
      %p152 = pneg %p33
      %p153 = pneg %p57
      %p154 = pneg %p54
      %p155 = pneg %p83
      %p156 = pneg %p80
      %p157 = scmp.lt.s32.totalorder %s15, 1
      %s158 = scalar_select %p157, %s15, 1
      %s159 = smul.addr %s158, 2
      %s160 = scalar_lea.vmem %s2, %s159
      %p161 = pneg %p109
      %p162 = pneg %p106
      %p163 = scmp.lt.s32.totalorder %s15, 1
      %s164 = scalar_select %p163, %s15, 1
      %s165 = smul.addr %s164, 8
      %s166 = scalar_lea.vmem %s3, %s165
      %p167 = scmp.lt.s32.totalorder %s15, 1
      %s168 = scalar_select %p167, %s15, 1
      %s169 = smul.addr %s168, 2
      %s170 = smul.addr %s169, 4
      %s171 = scalar_lea.vmem %s0, %s170
      %p172 = scmp.lt.s32.totalorder %s15, 1
      %s173 = scalar_select %p172, %s15, 1
      %s174 = smul.addr %s173, 2
      %s175 = scalar_lea.vmem %s2, %s174
      %p176 = scmp.lt.s32.totalorder %s15, 1
      %s177 = scalar_select %p176, %s15, 1
      %s178 = smul.addr %s177, 8
      %s179 = scalar_lea.vmem %s3, %s178
      %v181 = vld [vmem:[%s171] sm:$0x3]
      %v182 = vld [vmem:[%s1] sm:$0xf]
      %v183 = vld [vmem:[%s1 + $0x4] sm:$0xf]
      %v184 = vld [vmem:[%s1 + $0x8] sm:$0xf]
      %v185 = vld [vmem:[%s1 + $0xc] sm:$0xf]
      %v186 = vld [vmem:[%s1 + $0x10] sm:$0xf]
      %v187 = vld [vmem:[%s1 + $0x14] sm:$0xf]
      %v188 = vld [vmem:[%s1 + $0x18] sm:$0xf]
      %v189 = vld [vmem:[%s1 + $0x1c] sm:$0xf]
      %v190 = vld [vmem:[%s1 + $0x20] sm:$0xf]
      %v191 = vld [vmem:[%s1 + $0x24] sm:$0xf]
      %v192 = vld [vmem:[%s1 + $0x28] sm:$0xf]
      %v193 = vld [vmem:[%s1 + $0x2c] sm:$0xf]
      %v194 = vld [vmem:[%s1 + $0x30] sm:$0xf]
      %v195 = vld [vmem:[%s1 + $0x34] sm:$0xf]
      %v196 = vld [vmem:[%s1 + $0x38] sm:$0xf]
      %v197 = vld [vmem:[%s1 + $0x3c] sm:$0xf]
      %s198 = scalar_lea.vmem %s171, 4
      %v199 = vld [vmem:[%s198] sm:$0x3]
      %s200 = scalar_lea.vmem %s1, 64
      %v201 = vld [vmem:[%s200] sm:$0xf]
      %v202 = vld [vmem:[%s200 + $0x4] sm:$0xf]
      %v203 = vld [vmem:[%s200 + $0x8] sm:$0xf]
      %v204 = vld [vmem:[%s200 + $0xc] sm:$0xf]
      %v205 = vld [vmem:[%s200 + $0x10] sm:$0xf]
      %v206 = vld [vmem:[%s200 + $0x14] sm:$0xf]
      %v207 = vld [vmem:[%s200 + $0x18] sm:$0xf]
      %v208 = vld [vmem:[%s200 + $0x1c] sm:$0xf]
      %v209 = vld [vmem:[%s200 + $0x20] sm:$0xf]
      %v210 = vld [vmem:[%s200 + $0x24] sm:$0xf]
      %v211 = vld [vmem:[%s200 + $0x28] sm:$0xf]
      %v212 = vld [vmem:[%s200 + $0x2c] sm:$0xf]
      %v213 = vld [vmem:[%s200 + $0x30] sm:$0xf]
      %v214 = vld [vmem:[%s200 + $0x34] sm:$0xf]
      %v215 = vld [vmem:[%s200 + $0x38] sm:$0xf]
      %v216 = vld [vmem:[%s200 + $0x3c] sm:$0xf]
      %v233 = vunpack.c.l.b16 %v201
      %v234 = vunpack.c.l.b16 %v202
      %v235 = vunpack.c.l.b16 %v203
      %v236 = vunpack.c.l.b16 %v204
      %v237 = vunpack.c.l.b16 %v205
      %v238 = vunpack.c.l.b16 %v206
      %v239 = vunpack.c.l.b16 %v207
      %v240 = vunpack.c.l.b16 %v208
      %v241 = vunpack.c.l.b16 %v209
      %v242 = vunpack.c.l.b16 %v210
      %v243 = vunpack.c.l.b16 %v211
      %v244 = vunpack.c.l.b16 %v212
      %v245 = vunpack.c.l.b16 %v213
      %v246 = vunpack.c.l.b16 %v214
      %v247 = vunpack.c.l.b16 %v215
      %v248 = vunpack.c.l.b16 %v216
      %v249 = vpack.c.b16 %v234, %v233
      %v250 = vpack.c.b16 %v236, %v235
      %v251 = vpack.c.b16 %v238, %v237
      %v252 = vpack.c.b16 %v240, %v239
      %v253 = vpack.c.b16 %v242, %v241
      %v254 = vpack.c.b16 %v244, %v243
      %v255 = vpack.c.b16 %v246, %v245
      %v256 = vpack.c.b16 %v248, %v247
      %265 = vmatprep.subr.bf16.mxu0 0
      %266 = vmatpush1.bf16.msra.mxu0 %v256
      %267 = vmatprep.subr.bf16.mxu0 0
      %268 = vmatpush1.bf16.msra.mxu0 %v255
      %269 = vmatprep.subr.bf16.mxu0 0
      %270 = vmatpush1.bf16.msra.mxu0 %v254
      %271 = vmatprep.subr.bf16.mxu0 0
      %272 = vmatpush1.bf16.msra.mxu0 %v253
      %273 = vmatprep.subr.bf16.mxu0 0
      %274 = vmatpush1.bf16.msra.mxu0 %v252
      %275 = vmatprep.subr.bf16.mxu0 0
      %276 = vmatpush1.bf16.msra.mxu0 %v251
      %277 = vmatprep.subr.bf16.mxu0 0
      %278 = vmatpush1.bf16.msra.mxu0 %v250
      %279 = vmatprep.subr.bf16.mxu0 0
      %280 = vmatpush1.bf16.msra.mxu0 %v249
      %281 = vmatprep.subr.bf16.mxu0 0
      %282 = vmatpush2.bf16.msra.mxu0 0
      %283 = vmatprep.subr.bf16.mxu0 0
      %284 = vmatpush2.bf16.msra.mxu0 0
      %285 = vmatprep.subr.bf16.mxu0 0
      %286 = vmatpush2.bf16.msra.mxu0 0
      %287 = vmatprep.subr.bf16.mxu0 0
      %288 = vmatpush2.bf16.msra.mxu0 0
      %289 = vmatprep.subr.bf16.mxu0 0
      %290 = vmatpush2.bf16.msra.mxu0 0
      %291 = vmatprep.subr.bf16.mxu0 0
      %292 = vmatpush2.bf16.msra.mxu0 0
      %293 = vmatprep.subr.bf16.mxu0 0
      %294 = vmatpush2.bf16.msra.mxu0 0
      %295 = vmatprep.subr.bf16.mxu0 0
      %296 = vmatpush2.bf16.msra.mxu0 0
      %297 = vmatprep.mubr.bf16.mxu0 0
      %298 = vmatmul.mubr.bf16.gmra.mxu0 %v199
      %v299 = vpop.f32.mrf.mxu0
      %v300 = vadd.f32 0.0, %v299
      %v301 = vpop.f32.mrf.mxu0
      %v302 = vpop.f32.mrf.mxu0
      %v303 = vpop.f32.mrf.mxu0
      %304 = vdwg.mxu0
      %v321 = vunpack.c.l.b16 %v182
      %v322 = vunpack.c.l.b16 %v183
      %v323 = vunpack.c.l.b16 %v184
      %v324 = vunpack.c.l.b16 %v185
      %v325 = vunpack.c.l.b16 %v186
      %v326 = vunpack.c.l.b16 %v187
      %v327 = vunpack.c.l.b16 %v188
      %v328 = vunpack.c.l.b16 %v189
      %v329 = vunpack.c.l.b16 %v190
      %v330 = vunpack.c.l.b16 %v191
      %v331 = vunpack.c.l.b16 %v192
      %v332 = vunpack.c.l.b16 %v193
      %v333 = vunpack.c.l.b16 %v194
      %v334 = vunpack.c.l.b16 %v195
      %v335 = vunpack.c.l.b16 %v196
      %v336 = vunpack.c.l.b16 %v197
      %v337 = vpack.c.b16 %v322, %v321
      %v338 = vpack.c.b16 %v324, %v323
      %v339 = vpack.c.b16 %v326, %v325
      %v340 = vpack.c.b16 %v328, %v327
      %v341 = vpack.c.b16 %v330, %v329
      %v342 = vpack.c.b16 %v332, %v331
      %v343 = vpack.c.b16 %v334, %v333
      %v344 = vpack.c.b16 %v336, %v335
      %353 = vmatprep.subr.bf16.mxu0 0
      %354 = vmatpush1.bf16.msra.mxu0 %v344
      %355 = vmatprep.subr.bf16.mxu0 0
      %356 = vmatpush1.bf16.msra.mxu0 %v343
      %357 = vmatprep.subr.bf16.mxu0 0
      %358 = vmatpush1.bf16.msra.mxu0 %v342
      %359 = vmatprep.subr.bf16.mxu0 0
      %360 = vmatpush1.bf16.msra.mxu0 %v341
      %361 = vmatprep.subr.bf16.mxu0 0
      %362 = vmatpush1.bf16.msra.mxu0 %v340
      %363 = vmatprep.subr.bf16.mxu0 0
      %364 = vmatpush1.bf16.msra.mxu0 %v339
      %365 = vmatprep.subr.bf16.mxu0 0
      %366 = vmatpush1.bf16.msra.mxu0 %v338
      %367 = vmatprep.subr.bf16.mxu0 0
      %368 = vmatpush1.bf16.msra.mxu0 %v337
      %369 = vmatprep.subr.bf16.mxu0 0
      %370 = vmatpush2.bf16.msra.mxu0 0
      %371 = vmatprep.subr.bf16.mxu0 0
      %372 = vmatpush2.bf16.msra.mxu0 0
      %373 = vmatprep.subr.bf16.mxu0 0
      %374 = vmatpush2.bf16.msra.mxu0 0
      %375 = vmatprep.subr.bf16.mxu0 0
      %376 = vmatpush2.bf16.msra.mxu0 0
      %377 = vmatprep.subr.bf16.mxu0 0
      %378 = vmatpush2.bf16.msra.mxu0 0
      %379 = vmatprep.subr.bf16.mxu0 0
      %380 = vmatpush2.bf16.msra.mxu0 0
      %381 = vmatprep.subr.bf16.mxu0 0
      %382 = vmatpush2.bf16.msra.mxu0 0
      %383 = vmatprep.subr.bf16.mxu0 0
      %384 = vmatpush2.bf16.msra.mxu0 0
      %385 = vmatprep.mubr.bf16.mxu0 0
      %386 = vmatmul.mubr.bf16.gmra.mxu0 %v181
      %v387 = vpop.f32.mrf.mxu0
      %v388 = vadd.f32 %v300, %v387
      %v389 = vpop.f32.mrf.mxu0
      %v390 = vpop.f32.mrf.mxu0
      %v391 = vpop.f32.mrf.mxu0
      %392 = vdwg.mxu0
      %v393 = vld [vmem:[%s171] sm:$0x6]
      %s394 = scalar_lea.vmem %s1, 128
      %v395 = vld [vmem:[%s394] sm:$0xf]
      %v396 = vld [vmem:[%s394 + $0x4] sm:$0xf]
      %v397 = vld [vmem:[%s394 + $0x8] sm:$0xf]
      %v398 = vld [vmem:[%s394 + $0xc] sm:$0xf]
      %v399 = vld [vmem:[%s394 + $0x10] sm:$0xf]
      %v400 = vld [vmem:[%s394 + $0x14] sm:$0xf]
      %v401 = vld [vmem:[%s394 + $0x18] sm:$0xf]
      %v402 = vld [vmem:[%s394 + $0x1c] sm:$0xf]
      %v403 = vld [vmem:[%s394 + $0x20] sm:$0xf]
      %v404 = vld [vmem:[%s394 + $0x24] sm:$0xf]
      %v405 = vld [vmem:[%s394 + $0x28] sm:$0xf]
      %v406 = vld [vmem:[%s394 + $0x2c] sm:$0xf]
      %v407 = vld [vmem:[%s394 + $0x30] sm:$0xf]
      %v408 = vld [vmem:[%s394 + $0x34] sm:$0xf]
      %v409 = vld [vmem:[%s394 + $0x38] sm:$0xf]
      %v410 = vld [vmem:[%s394 + $0x3c] sm:$0xf]
      %v412 = vunpack.c.l.b16 %v393
      %v413 = vpack.c.b16 %v412, %v412
      %v414 = vrot.slane %v413, 1
      %v432 = vunpack.c.l.b16 %v395
      %v433 = vunpack.c.l.b16 %v396
      %v434 = vunpack.c.l.b16 %v397
      %v435 = vunpack.c.l.b16 %v398
      %v436 = vunpack.c.l.b16 %v399
      %v437 = vunpack.c.l.b16 %v400
      %v438 = vunpack.c.l.b16 %v401
      %v439 = vunpack.c.l.b16 %v402
      %v440 = vunpack.c.l.b16 %v403
      %v441 = vunpack.c.l.b16 %v404
      %v442 = vunpack.c.l.b16 %v405
      %v443 = vunpack.c.l.b16 %v406
      %v444 = vunpack.c.l.b16 %v407
      %v445 = vunpack.c.l.b16 %v408
      %v446 = vunpack.c.l.b16 %v409
      %v447 = vunpack.c.l.b16 %v410
      %v448 = vpack.c.b16 %v433, %v432
      %v449 = vpack.c.b16 %v435, %v434
      %v450 = vpack.c.b16 %v437, %v436
      %v451 = vpack.c.b16 %v439, %v438
      %v452 = vpack.c.b16 %v441, %v440
      %v453 = vpack.c.b16 %v443, %v442
      %v454 = vpack.c.b16 %v445, %v444
      %v455 = vpack.c.b16 %v447, %v446
      %464 = vmatprep.subr.bf16.mxu0 0
      %465 = vmatpush1.bf16.msra.mxu0 %v455
      %466 = vmatprep.subr.bf16.mxu0 0
      %467 = vmatpush1.bf16.msra.mxu0 %v454
      %468 = vmatprep.subr.bf16.mxu0 0
      %469 = vmatpush1.bf16.msra.mxu0 %v453
      %470 = vmatprep.subr.bf16.mxu0 0
      %471 = vmatpush1.bf16.msra.mxu0 %v452
      %472 = vmatprep.subr.bf16.mxu0 0
      %473 = vmatpush1.bf16.msra.mxu0 %v451
      %474 = vmatprep.subr.bf16.mxu0 0
      %475 = vmatpush1.bf16.msra.mxu0 %v450
      %476 = vmatprep.subr.bf16.mxu0 0
      %477 = vmatpush1.bf16.msra.mxu0 %v449
      %478 = vmatprep.subr.bf16.mxu0 0
      %479 = vmatpush1.bf16.msra.mxu0 %v448
      %480 = vmatprep.subr.bf16.mxu0 0
      %481 = vmatpush2.bf16.msra.mxu0 0
      %482 = vmatprep.subr.bf16.mxu0 0
      %483 = vmatpush2.bf16.msra.mxu0 0
      %484 = vmatprep.subr.bf16.mxu0 0
      %485 = vmatpush2.bf16.msra.mxu0 0
      %486 = vmatprep.subr.bf16.mxu0 0
      %487 = vmatpush2.bf16.msra.mxu0 0
      %488 = vmatprep.subr.bf16.mxu0 0
      %489 = vmatpush2.bf16.msra.mxu0 0
      %490 = vmatprep.subr.bf16.mxu0 0
      %491 = vmatpush2.bf16.msra.mxu0 0
      %492 = vmatprep.subr.bf16.mxu0 0
      %493 = vmatpush2.bf16.msra.mxu0 0
      %494 = vmatprep.subr.bf16.mxu0 0
      %495 = vmatpush2.bf16.msra.mxu0 0
      %496 = vmatprep.mubr.bf16.mxu0 0
      %497 = vmatmul.mubr.bf16.gmra.mxu0 %v414
      %v498 = vpop.f32.mrf.mxu0
      %v499 = vadd.f32 0.0, %v498
      %v500 = vpop.f32.mrf.mxu0
      %v501 = vpop.f32.mrf.mxu0
      %v502 = vpop.f32.mrf.mxu0
      %503 = vdwg.mxu0
      %v504 = vadd.f32 %v388, %v499
      %vm505 = vcmask 257024
      %v506 = vsel %vm505, %v504, 0.0
      %v507 = vrot.slane %v506, 4
      %v508 = vadd.f32 %v506, %v507
      %v509 = vrot.slane %v508, 2
      %v510 = vadd.f32 %v508, %v509
      %v511 = vrot.slane %v510, 1
      %v512 = vadd.f32 %v510, %v511
      %v513 = vmul.f32 %v504, %v504
      %v514 = vsel %vm505, %v513, 0.0
      %v515 = vrot.slane %v514, 4
      %v516 = vadd.f32 %v514, %v515
      %v517 = vrot.slane %v516, 2
      %v518 = vadd.f32 %v516, %v517
      %v519 = vrot.slane %v518, 1
      %v520 = vadd.f32 %v518, %v519
      %s521 = scalar_lea.vmem %s1, 192
      %v522 = vld [vmem:[%s521] sm:$0xf]
      %v523 = vld [vmem:[%s521 + $0x4] sm:$0xf]
      %v524 = vld [vmem:[%s521 + $0x8] sm:$0xf]
      %v525 = vld [vmem:[%s521 + $0xc] sm:$0xf]
      %v526 = vld [vmem:[%s521 + $0x10] sm:$0xf]
      %v527 = vld [vmem:[%s521 + $0x14] sm:$0xf]
      %v528 = vld [vmem:[%s521 + $0x18] sm:$0xf]
      %v529 = vld [vmem:[%s521 + $0x1c] sm:$0xf]
      %v530 = vld [vmem:[%s521 + $0x20] sm:$0xf]
      %v531 = vld [vmem:[%s521 + $0x24] sm:$0xf]
      %v532 = vld [vmem:[%s521 + $0x28] sm:$0xf]
      %v533 = vld [vmem:[%s521 + $0x2c] sm:$0xf]
      %v534 = vld [vmem:[%s521 + $0x30] sm:$0xf]
      %v535 = vld [vmem:[%s521 + $0x34] sm:$0xf]
      %v536 = vld [vmem:[%s521 + $0x38] sm:$0xf]
      %v537 = vld [vmem:[%s521 + $0x3c] sm:$0xf]
      %s538 = scalar_lea.vmem %s1, 256
      %v539 = vld [vmem:[%s538] sm:$0xf]
      %v540 = vld [vmem:[%s538 + $0x4] sm:$0xf]
      %v541 = vld [vmem:[%s538 + $0x8] sm:$0xf]
      %v542 = vld [vmem:[%s538 + $0xc] sm:$0xf]
      %v543 = vld [vmem:[%s538 + $0x10] sm:$0xf]
      %v544 = vld [vmem:[%s538 + $0x14] sm:$0xf]
      %v545 = vld [vmem:[%s538 + $0x18] sm:$0xf]
      %v546 = vld [vmem:[%s538 + $0x1c] sm:$0xf]
      %v547 = vld [vmem:[%s538 + $0x20] sm:$0xf]
      %v548 = vld [vmem:[%s538 + $0x24] sm:$0xf]
      %v549 = vld [vmem:[%s538 + $0x28] sm:$0xf]
      %v550 = vld [vmem:[%s538 + $0x2c] sm:$0xf]
      %v551 = vld [vmem:[%s538 + $0x30] sm:$0xf]
      %v552 = vld [vmem:[%s538 + $0x34] sm:$0xf]
      %v553 = vld [vmem:[%s538 + $0x38] sm:$0xf]
      %v554 = vld [vmem:[%s538 + $0x3c] sm:$0xf]
      %v571 = vunpack.c.l.b16 %v539
      %v572 = vunpack.c.l.b16 %v540
      %v573 = vunpack.c.l.b16 %v541
      %v574 = vunpack.c.l.b16 %v542
      %v575 = vunpack.c.l.b16 %v543
      %v576 = vunpack.c.l.b16 %v544
      %v577 = vunpack.c.l.b16 %v545
      %v578 = vunpack.c.l.b16 %v546
      %v579 = vunpack.c.l.b16 %v547
      %v580 = vunpack.c.l.b16 %v548
      %v581 = vunpack.c.l.b16 %v549
      %v582 = vunpack.c.l.b16 %v550
      %v583 = vunpack.c.l.b16 %v551
      %v584 = vunpack.c.l.b16 %v552
      %v585 = vunpack.c.l.b16 %v553
      %v586 = vunpack.c.l.b16 %v554
      %v587 = vpack.c.b16 %v572, %v571
      %v588 = vpack.c.b16 %v574, %v573
      %v589 = vpack.c.b16 %v576, %v575
      %v590 = vpack.c.b16 %v578, %v577
      %v591 = vpack.c.b16 %v580, %v579
      %v592 = vpack.c.b16 %v582, %v581
      %v593 = vpack.c.b16 %v584, %v583
      %v594 = vpack.c.b16 %v586, %v585
      %603 = vmatprep.subr.bf16.mxu0 0
      %604 = vmatpush1.bf16.msra.mxu0 %v594
      %605 = vmatprep.subr.bf16.mxu0 0
      %606 = vmatpush1.bf16.msra.mxu0 %v593
      %607 = vmatprep.subr.bf16.mxu0 0
      %608 = vmatpush1.bf16.msra.mxu0 %v592
      %609 = vmatprep.subr.bf16.mxu0 0
      %610 = vmatpush1.bf16.msra.mxu0 %v591
      %611 = vmatprep.subr.bf16.mxu0 0
      %612 = vmatpush1.bf16.msra.mxu0 %v590
      %613 = vmatprep.subr.bf16.mxu0 0
      %614 = vmatpush1.bf16.msra.mxu0 %v589
      %615 = vmatprep.subr.bf16.mxu0 0
      %616 = vmatpush1.bf16.msra.mxu0 %v588
      %617 = vmatprep.subr.bf16.mxu0 0
      %618 = vmatpush1.bf16.msra.mxu0 %v587
      %619 = vmatprep.subr.bf16.mxu0 0
      %620 = vmatpush2.bf16.msra.mxu0 0
      %621 = vmatprep.subr.bf16.mxu0 0
      %622 = vmatpush2.bf16.msra.mxu0 0
      %623 = vmatprep.subr.bf16.mxu0 0
      %624 = vmatpush2.bf16.msra.mxu0 0
      %625 = vmatprep.subr.bf16.mxu0 0
      %626 = vmatpush2.bf16.msra.mxu0 0
      %627 = vmatprep.subr.bf16.mxu0 0
      %628 = vmatpush2.bf16.msra.mxu0 0
      %629 = vmatprep.subr.bf16.mxu0 0
      %630 = vmatpush2.bf16.msra.mxu0 0
      %631 = vmatprep.subr.bf16.mxu0 0
      %632 = vmatpush2.bf16.msra.mxu0 0
      %633 = vmatprep.subr.bf16.mxu0 0
      %634 = vmatpush2.bf16.msra.mxu0 0
      %635 = vmatprep.mubr.bf16.mxu0 0
      %636 = vmatmul.mubr.bf16.gmra.mxu0 %v199
      %v637 = vpop.f32.mrf.mxu0
      %v638 = vadd.f32 0.0, %v637
      %v639 = vpop.f32.mrf.mxu0
      %v640 = vpop.f32.mrf.mxu0
      %v641 = vpop.f32.mrf.mxu0
      %642 = vdwg.mxu0
      %v659 = vunpack.c.l.b16 %v522
      %v660 = vunpack.c.l.b16 %v523
      %v661 = vunpack.c.l.b16 %v524
      %v662 = vunpack.c.l.b16 %v525
      %v663 = vunpack.c.l.b16 %v526
      %v664 = vunpack.c.l.b16 %v527
      %v665 = vunpack.c.l.b16 %v528
      %v666 = vunpack.c.l.b16 %v529
      %v667 = vunpack.c.l.b16 %v530
      %v668 = vunpack.c.l.b16 %v531
      %v669 = vunpack.c.l.b16 %v532
      %v670 = vunpack.c.l.b16 %v533
      %v671 = vunpack.c.l.b16 %v534
      %v672 = vunpack.c.l.b16 %v535
      %v673 = vunpack.c.l.b16 %v536
      %v674 = vunpack.c.l.b16 %v537
      %v675 = vpack.c.b16 %v660, %v659
      %v676 = vpack.c.b16 %v662, %v661
      %v677 = vpack.c.b16 %v664, %v663
      %v678 = vpack.c.b16 %v666, %v665
      %v679 = vpack.c.b16 %v668, %v667
      %v680 = vpack.c.b16 %v670, %v669
      %v681 = vpack.c.b16 %v672, %v671
      %v682 = vpack.c.b16 %v674, %v673
      %691 = vmatprep.subr.bf16.mxu0 0
      %692 = vmatpush1.bf16.msra.mxu0 %v682
      %693 = vmatprep.subr.bf16.mxu0 0
      %694 = vmatpush1.bf16.msra.mxu0 %v681
      %695 = vmatprep.subr.bf16.mxu0 0
      %696 = vmatpush1.bf16.msra.mxu0 %v680
      %697 = vmatprep.subr.bf16.mxu0 0
      %698 = vmatpush1.bf16.msra.mxu0 %v679
      %699 = vmatprep.subr.bf16.mxu0 0
      %700 = vmatpush1.bf16.msra.mxu0 %v678
      %701 = vmatprep.subr.bf16.mxu0 0
      %702 = vmatpush1.bf16.msra.mxu0 %v677
      %703 = vmatprep.subr.bf16.mxu0 0
      %704 = vmatpush1.bf16.msra.mxu0 %v676
      %705 = vmatprep.subr.bf16.mxu0 0
      %706 = vmatpush1.bf16.msra.mxu0 %v675
      %707 = vmatprep.subr.bf16.mxu0 0
      %708 = vmatpush2.bf16.msra.mxu0 0
      %709 = vmatprep.subr.bf16.mxu0 0
      %710 = vmatpush2.bf16.msra.mxu0 0
      %711 = vmatprep.subr.bf16.mxu0 0
      %712 = vmatpush2.bf16.msra.mxu0 0
      %713 = vmatprep.subr.bf16.mxu0 0
      %714 = vmatpush2.bf16.msra.mxu0 0
      %715 = vmatprep.subr.bf16.mxu0 0
      %716 = vmatpush2.bf16.msra.mxu0 0
      %717 = vmatprep.subr.bf16.mxu0 0
      %718 = vmatpush2.bf16.msra.mxu0 0
      %719 = vmatprep.subr.bf16.mxu0 0
      %720 = vmatpush2.bf16.msra.mxu0 0
      %721 = vmatprep.subr.bf16.mxu0 0
      %722 = vmatpush2.bf16.msra.mxu0 0
      %723 = vmatprep.mubr.bf16.mxu0 0
      %724 = vmatmul.mubr.bf16.gmra.mxu0 %v181
      %v725 = vpop.f32.mrf.mxu0
      %v726 = vadd.f32 %v638, %v725
      %v727 = vpop.f32.mrf.mxu0
      %v728 = vpop.f32.mrf.mxu0
      %v729 = vpop.f32.mrf.mxu0
      %730 = vdwg.mxu0
      %s731 = scalar_lea.vmem %s1, 320
      %v732 = vld [vmem:[%s731] sm:$0xf]
      %v733 = vld [vmem:[%s731 + $0x4] sm:$0xf]
      %v734 = vld [vmem:[%s731 + $0x8] sm:$0xf]
      %v735 = vld [vmem:[%s731 + $0xc] sm:$0xf]
      %v736 = vld [vmem:[%s731 + $0x10] sm:$0xf]
      %v737 = vld [vmem:[%s731 + $0x14] sm:$0xf]
      %v738 = vld [vmem:[%s731 + $0x18] sm:$0xf]
      %v739 = vld [vmem:[%s731 + $0x1c] sm:$0xf]
      %v740 = vld [vmem:[%s731 + $0x20] sm:$0xf]
      %v741 = vld [vmem:[%s731 + $0x24] sm:$0xf]
      %v742 = vld [vmem:[%s731 + $0x28] sm:$0xf]
      %v743 = vld [vmem:[%s731 + $0x2c] sm:$0xf]
      %v744 = vld [vmem:[%s731 + $0x30] sm:$0xf]
      %v745 = vld [vmem:[%s731 + $0x34] sm:$0xf]
      %v746 = vld [vmem:[%s731 + $0x38] sm:$0xf]
      %v747 = vld [vmem:[%s731 + $0x3c] sm:$0xf]
      %v764 = vunpack.c.l.b16 %v732
      %v765 = vunpack.c.l.b16 %v733
      %v766 = vunpack.c.l.b16 %v734
      %v767 = vunpack.c.l.b16 %v735
      %v768 = vunpack.c.l.b16 %v736
      %v769 = vunpack.c.l.b16 %v737
      %v770 = vunpack.c.l.b16 %v738
      %v771 = vunpack.c.l.b16 %v739
      %v772 = vunpack.c.l.b16 %v740
      %v773 = vunpack.c.l.b16 %v741
      %v774 = vunpack.c.l.b16 %v742
      %v775 = vunpack.c.l.b16 %v743
      %v776 = vunpack.c.l.b16 %v744
      %v777 = vunpack.c.l.b16 %v745
      %v778 = vunpack.c.l.b16 %v746
      %v779 = vunpack.c.l.b16 %v747
      %v780 = vpack.c.b16 %v765, %v764
      %v781 = vpack.c.b16 %v767, %v766
      %v782 = vpack.c.b16 %v769, %v768
      %v783 = vpack.c.b16 %v771, %v770
      %v784 = vpack.c.b16 %v773, %v772
      %v785 = vpack.c.b16 %v775, %v774
      %v786 = vpack.c.b16 %v777, %v776
      %v787 = vpack.c.b16 %v779, %v778
      %796 = vmatprep.subr.bf16.mxu0 0
      %797 = vmatpush1.bf16.msra.mxu0 %v787
      %798 = vmatprep.subr.bf16.mxu0 0
      %799 = vmatpush1.bf16.msra.mxu0 %v786
      %800 = vmatprep.subr.bf16.mxu0 0
      %801 = vmatpush1.bf16.msra.mxu0 %v785
      %802 = vmatprep.subr.bf16.mxu0 0
      %803 = vmatpush1.bf16.msra.mxu0 %v784
      %804 = vmatprep.subr.bf16.mxu0 0
      %805 = vmatpush1.bf16.msra.mxu0 %v783
      %806 = vmatprep.subr.bf16.mxu0 0
      %807 = vmatpush1.bf16.msra.mxu0 %v782
      %808 = vmatprep.subr.bf16.mxu0 0
      %809 = vmatpush1.bf16.msra.mxu0 %v781
      %810 = vmatprep.subr.bf16.mxu0 0
      %811 = vmatpush1.bf16.msra.mxu0 %v780
      %812 = vmatprep.subr.bf16.mxu0 0
      %813 = vmatpush2.bf16.msra.mxu0 0
      %814 = vmatprep.subr.bf16.mxu0 0
      %815 = vmatpush2.bf16.msra.mxu0 0
      %816 = vmatprep.subr.bf16.mxu0 0
      %817 = vmatpush2.bf16.msra.mxu0 0
      %818 = vmatprep.subr.bf16.mxu0 0
      %819 = vmatpush2.bf16.msra.mxu0 0
      %820 = vmatprep.subr.bf16.mxu0 0
      %821 = vmatpush2.bf16.msra.mxu0 0
      %822 = vmatprep.subr.bf16.mxu0 0
      %823 = vmatpush2.bf16.msra.mxu0 0
      %824 = vmatprep.subr.bf16.mxu0 0
      %825 = vmatpush2.bf16.msra.mxu0 0
      %826 = vmatprep.subr.bf16.mxu0 0
      %827 = vmatpush2.bf16.msra.mxu0 0
      %828 = vmatprep.mubr.bf16.mxu0 0
      %829 = vmatmul.mubr.bf16.gmra.mxu0 %v414
      %v830 = vpop.f32.mrf.mxu0
      %v831 = vadd.f32 0.0, %v830
      %v832 = vpop.f32.mrf.mxu0
      %v833 = vpop.f32.mrf.mxu0
      %v834 = vpop.f32.mrf.mxu0
      %835 = vdwg.mxu0
      %v836 = vadd.f32 %v726, %v831
      %v837 = vsel %vm505, %v836, 0.0
      %v838 = vrot.slane %v837, 4
      %v839 = vadd.f32 %v837, %v838
      %v840 = vrot.slane %v839, 2
      %v841 = vadd.f32 %v839, %v840
      %v842 = vrot.slane %v841, 1
      %v843 = vadd.f32 %v841, %v842
      %v844 = vmul.f32 %v836, %v836
      %v845 = vsel %vm505, %v844, 0.0
      %v846 = vrot.slane %v845, 4
      %v847 = vadd.f32 %v845, %v846
      %v848 = vrot.slane %v847, 2
      %v849 = vadd.f32 %v847, %v848
      %v850 = vrot.slane %v849, 1
      %v851 = vadd.f32 %v849, %v850
      %v852 = vmax.f32 %v504, %v836
      %v853 = vmin.f32 %v504, %v836
      %v854 = vadd.f32 %v512, %v843
      %v855 = vadd.f32 %v520, %v851
      %856 = vmatprep.subr.bf16.mxu0 0
      %857 = vmatpush1.bf16.msra.mxu0 %v256
      %858 = vmatprep.subr.bf16.mxu0 0
      %859 = vmatpush1.bf16.msra.mxu0 %v255
      %860 = vmatprep.subr.bf16.mxu0 0
      %861 = vmatpush1.bf16.msra.mxu0 %v254
      %862 = vmatprep.subr.bf16.mxu0 0
      %863 = vmatpush1.bf16.msra.mxu0 %v253
      %864 = vmatprep.subr.bf16.mxu0 0
      %865 = vmatpush1.bf16.msra.mxu0 %v252
      %866 = vmatprep.subr.bf16.mxu0 0
      %867 = vmatpush1.bf16.msra.mxu0 %v251
      %868 = vmatprep.subr.bf16.mxu0 0
      %869 = vmatpush1.bf16.msra.mxu0 %v250
      %870 = vmatprep.subr.bf16.mxu0 0
      %871 = vmatpush1.bf16.msra.mxu0 %v249
      %872 = vmatprep.subr.bf16.mxu0 0
      %873 = vmatpush2.bf16.msra.mxu0 0
      %874 = vmatprep.subr.bf16.mxu0 0
      %875 = vmatpush2.bf16.msra.mxu0 0
      %876 = vmatprep.subr.bf16.mxu0 0
      %877 = vmatpush2.bf16.msra.mxu0 0
      %878 = vmatprep.subr.bf16.mxu0 0
      %879 = vmatpush2.bf16.msra.mxu0 0
      %880 = vmatprep.subr.bf16.mxu0 0
      %881 = vmatpush2.bf16.msra.mxu0 0
      %882 = vmatprep.subr.bf16.mxu0 0
      %883 = vmatpush2.bf16.msra.mxu0 0
      %884 = vmatprep.subr.bf16.mxu0 0
      %885 = vmatpush2.bf16.msra.mxu0 0
      %886 = vmatprep.subr.bf16.mxu0 0
      %887 = vmatpush2.bf16.msra.mxu0 0
      %888 = vmatprep.mubr.bf16.mxu0 0
      %889 = vmatmul.mubr.bf16.gmra.mxu0 %v414
      %v890 = vpop.f32.mrf.mxu0
      %v891 = vadd.f32 0.0, %v890
      %v892 = vpop.f32.mrf.mxu0
      %v893 = vpop.f32.mrf.mxu0
      %v894 = vpop.f32.mrf.mxu0
      %895 = vdwg.mxu0
      %896 = vmatprep.subr.bf16.mxu0 0
      %897 = vmatpush1.bf16.msra.mxu0 %v344
      %898 = vmatprep.subr.bf16.mxu0 0
      %899 = vmatpush1.bf16.msra.mxu0 %v343
      %900 = vmatprep.subr.bf16.mxu0 0
      %901 = vmatpush1.bf16.msra.mxu0 %v342
      %902 = vmatprep.subr.bf16.mxu0 0
      %903 = vmatpush1.bf16.msra.mxu0 %v341
      %904 = vmatprep.subr.bf16.mxu0 0
      %905 = vmatpush1.bf16.msra.mxu0 %v340
      %906 = vmatprep.subr.bf16.mxu0 0
      %907 = vmatpush1.bf16.msra.mxu0 %v339
      %908 = vmatprep.subr.bf16.mxu0 0
      %909 = vmatpush1.bf16.msra.mxu0 %v338
      %910 = vmatprep.subr.bf16.mxu0 0
      %911 = vmatpush1.bf16.msra.mxu0 %v337
      %912 = vmatprep.subr.bf16.mxu0 0
      %913 = vmatpush2.bf16.msra.mxu0 0
      %914 = vmatprep.subr.bf16.mxu0 0
      %915 = vmatpush2.bf16.msra.mxu0 0
      %916 = vmatprep.subr.bf16.mxu0 0
      %917 = vmatpush2.bf16.msra.mxu0 0
      %918 = vmatprep.subr.bf16.mxu0 0
      %919 = vmatpush2.bf16.msra.mxu0 0
      %920 = vmatprep.subr.bf16.mxu0 0
      %921 = vmatpush2.bf16.msra.mxu0 0
      %922 = vmatprep.subr.bf16.mxu0 0
      %923 = vmatpush2.bf16.msra.mxu0 0
      %924 = vmatprep.subr.bf16.mxu0 0
      %925 = vmatpush2.bf16.msra.mxu0 0
      %926 = vmatprep.subr.bf16.mxu0 0
      %927 = vmatpush2.bf16.msra.mxu0 0
      %928 = vmatprep.mubr.bf16.mxu0 0
      %929 = vmatmul.mubr.bf16.gmra.mxu0 %v199
      %v930 = vpop.f32.mrf.mxu0
      %v931 = vadd.f32 %v891, %v930
      %v932 = vpop.f32.mrf.mxu0
      %v933 = vpop.f32.mrf.mxu0
      %v934 = vpop.f32.mrf.mxu0
      %935 = vdwg.mxu0
      %v936 = vld [vmem:[%s198] sm:$0x6]
      %v938 = vunpack.c.l.b16 %v936
      %v939 = vpack.c.b16 %v938, %v938
      %v940 = vrot.slane %v939, 1
      %942 = vmatprep.subr.bf16.mxu0 0
      %943 = vmatpush1.bf16.msra.mxu0 %v455
      %944 = vmatprep.subr.bf16.mxu0 0
      %945 = vmatpush1.bf16.msra.mxu0 %v454
      %946 = vmatprep.subr.bf16.mxu0 0
      %947 = vmatpush1.bf16.msra.mxu0 %v453
      %948 = vmatprep.subr.bf16.mxu0 0
      %949 = vmatpush1.bf16.msra.mxu0 %v452
      %950 = vmatprep.subr.bf16.mxu0 0
      %951 = vmatpush1.bf16.msra.mxu0 %v451
      %952 = vmatprep.subr.bf16.mxu0 0
      %953 = vmatpush1.bf16.msra.mxu0 %v450
      %954 = vmatprep.subr.bf16.mxu0 0
      %955 = vmatpush1.bf16.msra.mxu0 %v449
      %956 = vmatprep.subr.bf16.mxu0 0
      %957 = vmatpush1.bf16.msra.mxu0 %v448
      %958 = vmatprep.subr.bf16.mxu0 0
      %959 = vmatpush2.bf16.msra.mxu0 0
      %960 = vmatprep.subr.bf16.mxu0 0
      %961 = vmatpush2.bf16.msra.mxu0 0
      %962 = vmatprep.subr.bf16.mxu0 0
      %963 = vmatpush2.bf16.msra.mxu0 0
      %964 = vmatprep.subr.bf16.mxu0 0
      %965 = vmatpush2.bf16.msra.mxu0 0
      %966 = vmatprep.subr.bf16.mxu0 0
      %967 = vmatpush2.bf16.msra.mxu0 0
      %968 = vmatprep.subr.bf16.mxu0 0
      %969 = vmatpush2.bf16.msra.mxu0 0
      %970 = vmatprep.subr.bf16.mxu0 0
      %971 = vmatpush2.bf16.msra.mxu0 0
      %972 = vmatprep.subr.bf16.mxu0 0
      %973 = vmatpush2.bf16.msra.mxu0 0
      %974 = vmatprep.mubr.bf16.mxu0 0
      %975 = vmatmul.mubr.bf16.gmra.mxu0 %v940
      %v976 = vpop.f32.mrf.mxu0
      %v977 = vadd.f32 0.0, %v976
      %v978 = vpop.f32.mrf.mxu0
      %v979 = vpop.f32.mrf.mxu0
      %v980 = vpop.f32.mrf.mxu0
      %981 = vdwg.mxu0
      %v982 = vadd.f32 %v931, %v977
      %v983 = vsel %vm505, %v982, 0.0
      %v984 = vrot.slane %v983, 4
      %v985 = vadd.f32 %v983, %v984
      %v986 = vrot.slane %v985, 2
      %v987 = vadd.f32 %v985, %v986
      %v988 = vrot.slane %v987, 1
      %v989 = vadd.f32 %v987, %v988
      %v990 = vmul.f32 %v982, %v982
      %v991 = vsel %vm505, %v990, 0.0
      %v992 = vrot.slane %v991, 4
      %v993 = vadd.f32 %v991, %v992
      %v994 = vrot.slane %v993, 2
      %v995 = vadd.f32 %v993, %v994
      %v996 = vrot.slane %v995, 1
      %v997 = vadd.f32 %v995, %v996
      %v998 = vmax.f32 %v852, %v982
      %v999 = vmin.f32 %v853, %v982
      %v1000 = vadd.f32 %v854, %v989
      %v1001 = vadd.f32 %v855, %v997
      %1002 = vmatprep.subr.bf16.mxu0 0
      %1003 = vmatpush1.bf16.msra.mxu0 %v594
      %1004 = vmatprep.subr.bf16.mxu0 0
      %1005 = vmatpush1.bf16.msra.mxu0 %v593
      %1006 = vmatprep.subr.bf16.mxu0 0
      %1007 = vmatpush1.bf16.msra.mxu0 %v592
      %1008 = vmatprep.subr.bf16.mxu0 0
      %1009 = vmatpush1.bf16.msra.mxu0 %v591
      %1010 = vmatprep.subr.bf16.mxu0 0
      %1011 = vmatpush1.bf16.msra.mxu0 %v590
      %1012 = vmatprep.subr.bf16.mxu0 0
      %1013 = vmatpush1.bf16.msra.mxu0 %v589
      %1014 = vmatprep.subr.bf16.mxu0 0
      %1015 = vmatpush1.bf16.msra.mxu0 %v588
      %1016 = vmatprep.subr.bf16.mxu0 0
      %1017 = vmatpush1.bf16.msra.mxu0 %v587
      %1018 = vmatprep.subr.bf16.mxu0 0
      %1019 = vmatpush2.bf16.msra.mxu0 0
      %1020 = vmatprep.subr.bf16.mxu0 0
      %1021 = vmatpush2.bf16.msra.mxu0 0
      %1022 = vmatprep.subr.bf16.mxu0 0
      %1023 = vmatpush2.bf16.msra.mxu0 0
      %1024 = vmatprep.subr.bf16.mxu0 0
      %1025 = vmatpush2.bf16.msra.mxu0 0
      %1026 = vmatprep.subr.bf16.mxu0 0
      %1027 = vmatpush2.bf16.msra.mxu0 0
      %1028 = vmatprep.subr.bf16.mxu0 0
      %1029 = vmatpush2.bf16.msra.mxu0 0
      %1030 = vmatprep.subr.bf16.mxu0 0
      %1031 = vmatpush2.bf16.msra.mxu0 0
      %1032 = vmatprep.subr.bf16.mxu0 0
      %1033 = vmatpush2.bf16.msra.mxu0 0
      %1034 = vmatprep.mubr.bf16.mxu0 0
      %1035 = vmatmul.mubr.bf16.gmra.mxu0 %v414
      %v1036 = vpop.f32.mrf.mxu0
      %v1037 = vadd.f32 0.0, %v1036
      %v1038 = vpop.f32.mrf.mxu0
      %v1039 = vpop.f32.mrf.mxu0
      %v1040 = vpop.f32.mrf.mxu0
      %1041 = vdwg.mxu0
      %1042 = vmatprep.subr.bf16.mxu0 0
      %1043 = vmatpush1.bf16.msra.mxu0 %v682
      %1044 = vmatprep.subr.bf16.mxu0 0
      %1045 = vmatpush1.bf16.msra.mxu0 %v681
      %1046 = vmatprep.subr.bf16.mxu0 0
      %1047 = vmatpush1.bf16.msra.mxu0 %v680
      %1048 = vmatprep.subr.bf16.mxu0 0
      %1049 = vmatpush1.bf16.msra.mxu0 %v679
      %1050 = vmatprep.subr.bf16.mxu0 0
      %1051 = vmatpush1.bf16.msra.mxu0 %v678
      %1052 = vmatprep.subr.bf16.mxu0 0
      %1053 = vmatpush1.bf16.msra.mxu0 %v677
      %1054 = vmatprep.subr.bf16.mxu0 0
      %1055 = vmatpush1.bf16.msra.mxu0 %v676
      %1056 = vmatprep.subr.bf16.mxu0 0
      %1057 = vmatpush1.bf16.msra.mxu0 %v675
      %1058 = vmatprep.subr.bf16.mxu0 0
      %1059 = vmatpush2.bf16.msra.mxu0 0
      %1060 = vmatprep.subr.bf16.mxu0 0
      %1061 = vmatpush2.bf16.msra.mxu0 0
      %1062 = vmatprep.subr.bf16.mxu0 0
      %1063 = vmatpush2.bf16.msra.mxu0 0
      %1064 = vmatprep.subr.bf16.mxu0 0
      %1065 = vmatpush2.bf16.msra.mxu0 0
      %1066 = vmatprep.subr.bf16.mxu0 0
      %1067 = vmatpush2.bf16.msra.mxu0 0
      %1068 = vmatprep.subr.bf16.mxu0 0
      %1069 = vmatpush2.bf16.msra.mxu0 0
      %1070 = vmatprep.subr.bf16.mxu0 0
      %1071 = vmatpush2.bf16.msra.mxu0 0
      %1072 = vmatprep.subr.bf16.mxu0 0
      %1073 = vmatpush2.bf16.msra.mxu0 0
      %1074 = vmatprep.mubr.bf16.mxu0 0
      %1075 = vmatmul.mubr.bf16.gmra.mxu0 %v199
      %v1076 = vpop.f32.mrf.mxu0
      %v1077 = vadd.f32 %v1037, %v1076
      %v1078 = vpop.f32.mrf.mxu0
      %v1079 = vpop.f32.mrf.mxu0
      %v1080 = vpop.f32.mrf.mxu0
      %1081 = vdwg.mxu0
      %1082 = vmatprep.subr.bf16.mxu0 0
      %1083 = vmatpush1.bf16.msra.mxu0 %v787
      %1084 = vmatprep.subr.bf16.mxu0 0
      %1085 = vmatpush1.bf16.msra.mxu0 %v786
      %1086 = vmatprep.subr.bf16.mxu0 0
      %1087 = vmatpush1.bf16.msra.mxu0 %v785
      %1088 = vmatprep.subr.bf16.mxu0 0
      %1089 = vmatpush1.bf16.msra.mxu0 %v784
      %1090 = vmatprep.subr.bf16.mxu0 0
      %1091 = vmatpush1.bf16.msra.mxu0 %v783
      %1092 = vmatprep.subr.bf16.mxu0 0
      %1093 = vmatpush1.bf16.msra.mxu0 %v782
      %1094 = vmatprep.subr.bf16.mxu0 0
      %1095 = vmatpush1.bf16.msra.mxu0 %v781
      %1096 = vmatprep.subr.bf16.mxu0 0
      %1097 = vmatpush1.bf16.msra.mxu0 %v780
      %1098 = vmatprep.subr.bf16.mxu0 0
      %1099 = vmatpush2.bf16.msra.mxu0 0
      %1100 = vmatprep.subr.bf16.mxu0 0
      %1101 = vmatpush2.bf16.msra.mxu0 0
      %1102 = vmatprep.subr.bf16.mxu0 0
      %1103 = vmatpush2.bf16.msra.mxu0 0
      %1104 = vmatprep.subr.bf16.mxu0 0
      %1105 = vmatpush2.bf16.msra.mxu0 0
      %1106 = vmatprep.subr.bf16.mxu0 0
      %1107 = vmatpush2.bf16.msra.mxu0 0
      %1108 = vmatprep.subr.bf16.mxu0 0
      %1109 = vmatpush2.bf16.msra.mxu0 0
      %1110 = vmatprep.subr.bf16.mxu0 0
      %1111 = vmatpush2.bf16.msra.mxu0 0
      %1112 = vmatprep.subr.bf16.mxu0 0
      %1113 = vmatpush2.bf16.msra.mxu0 0
      %1114 = vmatprep.mubr.bf16.mxu0 0
      %1115 = vmatmul.mubr.bf16.gmra.mxu0 %v940
      %v1116 = vpop.f32.mrf.mxu0
      %v1117 = vadd.f32 0.0, %v1116
      %v1118 = vpop.f32.mrf.mxu0
      %v1119 = vpop.f32.mrf.mxu0
      %v1120 = vpop.f32.mrf.mxu0
      %1121 = vdwg.mxu0
      %v1122 = vadd.f32 %v1077, %v1117
      %v1123 = vsel %vm505, %v1122, 0.0
      %v1124 = vrot.slane %v1123, 4
      %v1125 = vadd.f32 %v1123, %v1124
      %v1126 = vrot.slane %v1125, 2
      %v1127 = vadd.f32 %v1125, %v1126
      %v1128 = vrot.slane %v1127, 1
      %v1129 = vadd.f32 %v1127, %v1128
      %v1130 = vmul.f32 %v1122, %v1122
      %v1131 = vsel %vm505, %v1130, 0.0
      %v1132 = vrot.slane %v1131, 4
      %v1133 = vadd.f32 %v1131, %v1132
      %v1134 = vrot.slane %v1133, 2
      %v1135 = vadd.f32 %v1133, %v1134
      %v1136 = vrot.slane %v1135, 1
      %v1137 = vadd.f32 %v1135, %v1136
      %v1138 = vmax.f32 %v998, %v1122
      %v1139 = vmin.f32 %v999, %v1122
      %v1140 = vadd.f32 %v1000, %v1129
      %v1141 = vadd.f32 %v1001, %v1137
      %1143 = vrot.lane.b32.xlu0 %v1139, 32
      %v1144 = vpop.permute.xlu0 %1143
      %vm1146 = vcmask 261120
      %v1147 = vsel %vm1146, %v1138, %v1144
      %v1148 = vpack.c.bf16 %v1147, %v1147
      %vm1149 = vcmask 517120
      %1150 = vst.msk [vmem:[%s175] sm:$0x3] %vm1149, %v1148
      %vm1151 = vcmask 1040384
      %v1152 = vsel %vm1151, %v1140, %v1141
      %vm1153 = vcmask 1041408
      %v1154 = vsel %vm1153, %v1152, 0.0
      %1155 = vst.msk [vmem:[%s179] sm:$0xff] %vm1146, %v1154
      %p1156 = scmp.lt.s32.totalorder %s15, 1
      %s1157 = scalar_select %p1156, %s15, 1
      %s1158 = smul.addr %s1157, 2
      %s1159 = scalar_lea.vmem %s2, %s1158
      %p1160 = scmp.lt.s32.totalorder %s15, 1
      %s1161 = scalar_select %p1160, %s15, 1
      %s1162 = smul.addr %s1161, 8
      %s1163 = scalar_lea.vmem %s3, %s1162
      // Predicated region
      $region29: #{cnn4_dsvdd_forward.13} parent=27 // pred_check
        %p1164 = pneg %p80
      $region30: #{cnn4_dsvdd_forward.13} parent=27 // pred_check_branch
        %1166 = sbr.rel (%p1164) target = $region32
      $region31: #{cnn4_dsvdd_forward.13} parent=27 // pred_region
        _
      $region32: #{cnn4_dsvdd_forward.13} parent=27 // pred_fallthru
        _
      // Predicated region
      $region33: #{cnn4_dsvdd_forward.13} parent=27 // pred_check
        %p1167 = pneg %p106
      $region34: #{cnn4_dsvdd_forward.13} parent=27 // pred_check_branch
        %1169 = sbr.rel (%p1167) target = $region36
      $region35: #{cnn4_dsvdd_forward.13} parent=27 // pred_region
        _
      $region36: #{cnn4_dsvdd_forward.13} parent=27 // pred_fallthru
        _
    $region28: #{cnn4_dsvdd_forward.13} parent=5 // pred_fallthru
      _
    %p1170 = scmp.le.s32.totalorder 2, %s10
    // Predicated region
    $region37: #{cnn4_dsvdd_forward.13} parent=5 // pred_check
      %p1171 = pneg %p1170
    $region38: #{cnn4_dsvdd_forward.13} parent=5 // pred_check_branch
      %1173 = sbr.rel (%p1171) target = $region40
    $region39: #{cnn4_dsvdd_forward.13} parent=5 // pred_region
      %s1174 = ssub.s32 %s10, 2
      // Predicated region
      $region41: #{cnn4_dsvdd_forward.13} parent=39 // pred_check
        %p1175 = pneg %p86
      $region42: #{cnn4_dsvdd_forward.13} parent=39 // pred_check_branch
        %1177 = sbr.rel (%p1175) target = $region44
      $region43: #{cnn4_dsvdd_forward.13} parent=39 // pred_region
        %p1178 = scmp.lt.s32.totalorder %s16, 1
        %s1179 = scalar_select %p1178, %s16, 1
        %s1180 = smul.addr %s1179, 2
        %s1181 = scalar_lea.vmem %s2, %s1180
      $region44: #{cnn4_dsvdd_forward.13} parent=39 // pred_fallthru
        _
      // Predicated region
      $region45: #{cnn4_dsvdd_forward.13} parent=39 // pred_check
        %p1182 = pneg %p112
      $region46: #{cnn4_dsvdd_forward.13} parent=39 // pred_check_branch
        %1184 = sbr.rel (%p1182) target = $region48
      $region47: #{cnn4_dsvdd_forward.13} parent=39 // pred_region
        %p1185 = scmp.lt.s32.totalorder %s16, 1
        %s1186 = scalar_select %p1185, %s16, 1
        %s1187 = smul.addr %s1186, 8
        %s1188 = scalar_lea.vmem %s3, %s1187
      $region48: #{cnn4_dsvdd_forward.13} parent=39 // pred_fallthru
        _
    $region40: #{cnn4_dsvdd_forward.13} parent=5 // pred_fallthru
      _
  $region6: #{cnn4_dsvdd_forward.13} parent=0 // loop_footer
    %s14 = sadd.s32 1, %s10
  $region7: #{cnn4_dsvdd_forward.13} parent=0 // loop_footer_branch
    %9 = sbr.rel target = $region3
  $region8: #{cnn4_dsvdd_forward.13} parent=0 // loop_exit
    _

// kernel: cnn4_dsvdd_forward.17
$region0: #{cnn4_dsvdd_forward.17}
  #allocation0 [shape = 'u32[]', space=smem, size = 0x4, offset = 0x4, fixed_abs, tag = 'smem constant byte address 0x4 - core index']
  #allocation1 [shape = 'u32[144,128]{1,0:T(1,128)}', space=vmem, size = 0x12000, scoped, tag = 'internal scratch']
  %s0 = inlined_call_operand.vmem [shape: bf16[2,32], index: 0, kind: input, shape index: {}]
  %s1 = inlined_call_operand.vmem [shape: f32[1,32], index: 1, kind: input, shape index: {}]
  %s2 = inlined_call_operand.vmem [shape: f32[1,32], index: 2, kind: input, shape index: {}]
  %s3 = inlined_call_operand.hbm [shape: f32[2,32], index: 3, kind: output, shape index: {}]
  %s4 = sld [smem:[#allocation0]]
  $region22: #{cnn4_dsvdd_forward.17} parent=0
    _
  %s6 = ssub.s32 1, %s4
  %s7 = scalar_select 0, %s6, %s4
  $region1: #{cnn4_dsvdd_forward.17} parent=0
    #allocation2 [shape = 'u8[1024]{0}', space=vmem, size = 0x400, scoped, tag = 'output window, operand 0, single buffered']
    #allocation3 [shape = 's32[1]{0}', space=sflag, size = 0x4, scoped, tag = 'scoped memory for cnn4_dsvdd_forward.17']
    %8 = vsyncpa [#allocation3], 0
    // Predicated region
    $region2: #{cnn4_dsvdd_forward.17} parent=1 // pred_check
      _
    $region3: #{cnn4_dsvdd_forward.17} parent=1 // pred_check_branch
      %10 = sbr.rel (0) target = $region5
    $region4: #{cnn4_dsvdd_forward.17} parent=1 // pred_region
      _
    $region5: #{cnn4_dsvdd_forward.17} parent=1 // pred_fallthru
      _
    // Predicated region
    $region6: #{cnn4_dsvdd_forward.17} parent=1 // pred_check
      _
    $region7: #{cnn4_dsvdd_forward.17} parent=1 // pred_check_branch
      %12 = sbr.rel (0) target = $region9
    $region8: #{cnn4_dsvdd_forward.17} parent=1 // pred_region
      _
    $region9: #{cnn4_dsvdd_forward.17} parent=1 // pred_fallthru
      _
    // Predicated region
    $region10: #{cnn4_dsvdd_forward.17} parent=1 // pred_check
      _
    $region11: #{cnn4_dsvdd_forward.17} parent=1 // pred_check_branch
      %14 = sbr.rel (0) target = $region13
    $region12: #{cnn4_dsvdd_forward.17} parent=1 // pred_region
      _
    $region13: #{cnn4_dsvdd_forward.17} parent=1 // pred_fallthru
      _
    %v15 = vld [vmem:[%s0] sm:$0x1]
    %v16 = vunpack.c.l.bf16 %v15
    %vm17 = vcmask 254976
    %v18 = vsel %vm17, %v16, 0.0
    %v19 = vrot.slane %v18, 4
    %v20 = vadd.f32 %v18, %v19
    %v21 = vrot.slane %v20, 2
    %v22 = vadd.f32 %v20, %v21
    %v23 = vrot.slane %v22, 1
    %v24 = vadd.f32 %v22, %v23
    %v25 = vrcp.pop 2.0
    %v26 = vmul.f32 %v24, %v25
    %v27 = vsub.f32 %v16, %v26
    %v28 = vmul.f32 %v27, %v27
    %v29 = vsel %vm17, %v28, 0.0
    %v30 = vrot.slane %v29, 4
    %v31 = vadd.f32 %v29, %v30
    %v32 = vrot.slane %v31, 2
    %v33 = vadd.f32 %v31, %v32
    %v34 = vrot.slane %v33, 1
    %v35 = vadd.f32 %v33, %v34
    %v36 = vmul.f32 %v35, %v25
    %v37 = vadd.f32 %v36, 1e-05
    %v38 = vrsqrt.pop %v37
    %v39 = vmul.f32 %v27, %v38
    %v40 = vld [vmem:[%s1] sm:$0x1]
    %v42 = vlaneseq
    %v43 = vshrl.u32 %v42, 7
    %v44 = vsub.s32 0, %v43
    %v45 = vrot.slane %v40, %v44
    %v47 = vmul.f32 %v39, %v45
    %v48 = vld [vmem:[%s2] sm:$0x1]
    %v50 = vlaneseq
    %v51 = vshrl.u32 %v50, 7
    %v52 = vsub.s32 0, %v51
    %v53 = vrot.slane %v48, %v52
    %v55 = vadd.f32 %v47, %v53
    %56 = vst.msk [vmem:[#allocation2] sm:$0x3] %vm17, %v55
    // Predicated region
    $region14: #{cnn4_dsvdd_forward.17} parent=1 // pred_check
      _
    $region15: #{cnn4_dsvdd_forward.17} parent=1 // pred_check_branch
      %58 = sbr.rel (0) target = $region17
    $region16: #{cnn4_dsvdd_forward.17} parent=1 // pred_region
      %s60 = ssub.s32 32, 32
      %61 = vsyncadd [#allocation3], %s60
      %s63 = sshll.u32 [#allocation2], 4
      %s64 = int_to_ptr.vmem [resolvable:$true] %s63
      %66 = dma.vmem_to_hbm [thread:$0]  %s64, 32, %s3, [#allocation3]
    $region17: #{cnn4_dsvdd_forward.17} parent=1 // pred_fallthru
      _
    // Predicated region
    $region18: #{cnn4_dsvdd_forward.17} parent=1 // pred_check
      _
    $region19: #{cnn4_dsvdd_forward.17} parent=1 // pred_check_branch
      %68 = sbr.rel (0) target = $region21
    $region20: #{cnn4_dsvdd_forward.17} parent=1 // pred_region
      %69 = dma.done [#allocation3], 32
    $region21: #{cnn4_dsvdd_forward.17} parent=1 // pred_fallthru
      _
    %70 = vsyncpa [#allocation3], 1

// kernel: cnn4_dsvdd_forward.16
$region0: #{cnn4_dsvdd_forward.16}
  #allocation0 [shape = 'u32[]', space=smem, size = 0x4, offset = 0x4, fixed_abs, tag = 'smem constant byte address 0x4 - core index']
  #allocation1 [shape = 'u32[144,128]{1,0:T(1,128)}', space=vmem, size = 0x12000, scoped, tag = 'internal scratch']
  %s0 = inlined_call_operand.vmem [shape: bf16[2,1,64], index: 0, kind: input, shape index: {}]
  %s1 = inlined_call_operand.vmem [shape: f32[1,32], index: 1, kind: input, shape index: {}]
  %s2 = inlined_call_operand.vmem [shape: f32[1,32], index: 2, kind: input, shape index: {}]
  %s3 = inlined_call_operand.vmem [shape: bf16[2,1,32], index: 3, kind: output, shape index: {}]
  %s4 = sld [smem:[#allocation0]]
  $region45: #{cnn4_dsvdd_forward.16} parent=0
    _
  %s6 = ssub.s32 1, %s4
  %s7 = scalar_select 0, %s6, %s4
  loop: start=0, step=1, limit=4
  $region2: #{cnn4_dsvdd_forward.16} parent=0 // loop_pre_header
    _
  $region3: #{cnn4_dsvdd_forward.16} parent=0 // loop_header
    %s9 = sphi 0, %s13
    %p10 = scmp.ge.s32.totalorder %s9, 4
    %s19 = sphi 0, %s21
    %s22 = sphi 0, %s19
    %s23 = sphi 0, %s22
    %s39 = sphi 0, %s23
    %s43 = sphi 0, %s43
    %s45 = sphi 0, %s43
    %s46 = sphi 0, %s45
    %s60 = sphi 0, %s46
    %s64 = sphi 0, %s64
    %s66 = sphi 0, %s64
    %s67 = sphi 0, %s66
    %s81 = sphi 0, %s67
    %s87 = sphi 0, %s89
    %s90 = sphi 0, %s87
    %s91 = sphi 0, %s90
    %s107 = sphi 0, %s91
  $region4: #{cnn4_dsvdd_forward.16} parent=0 // loop_header_branch
    %12 = sbr.rel (%p10) target = $region8
  $region5: #{cnn4_dsvdd_forward.16} parent=0 // loop_body
    %s14 = ssub.s32 %s9, 1
    %s15 = ssub.s32 %s9, 2
    %s16 = sadd.s32 %s9, 1
    %s17 = ssub.s32 %s9, %s16
    %p18 = scmp.eq.s32.totalorder %s17, 0
    %s20 = sadd.s32 %s19, 1
    %s21 = scalar_select %p18, %s19, %s20
    %p24 = pneg %p18
    %p25 = scmp.eq.s32.totalorder %s9, 1
    %p26 = por %p24, %p25
    %p27 = scmp.ne.s32.totalorder %s19, %s22
    %p28 = scmp.eq.s32.totalorder %s9, 0
    %p29 = por %p27, %p28
    %p30 = scmp.ne.s32.totalorder %s19, %s22
    %p31 = scmp.eq.s32.totalorder %s14, 1
    %p32 = por %p30, %p31
    %p33 = scmp.ne.s32.totalorder %s22, %s23
    %p34 = scmp.eq.s32.totalorder %s14, 0
    %p35 = por %p33, %p34
    %p36 = scmp.ne.s32.totalorder %s22, %s23
    %p37 = scmp.eq.s32.totalorder %s15, 1
    %p38 = por %p36, %p37
    %p40 = scmp.ne.s32.totalorder %s23, %s39
    %p41 = scmp.eq.s32.totalorder %s15, 0
    %p42 = por %p40, %p41
    %s44 = sadd.s32 %s43, 1
    %p47 = scmp.eq.s32.totalorder %s9, 1
    %p48 = scmp.ne.s32.totalorder %s43, %s45
    %p49 = scmp.eq.s32.totalorder %s9, 0
    %p50 = por %p48, %p49
    %p51 = scmp.ne.s32.totalorder %s43, %s45
    %p52 = scmp.eq.s32.totalorder %s14, 1
    %p53 = por %p51, %p52
    %p54 = scmp.ne.s32.totalorder %s45, %s46
    %p55 = scmp.eq.s32.totalorder %s14, 0
    %p56 = por %p54, %p55
    %p57 = scmp.ne.s32.totalorder %s45, %s46
    %p58 = scmp.eq.s32.totalorder %s15, 1
    %p59 = por %p57, %p58
    %p61 = scmp.ne.s32.totalorder %s46, %s60
    %p62 = scmp.eq.s32.totalorder %s15, 0
    %p63 = por %p61, %p62
    %s65 = sadd.s32 %s64, 1
    %p68 = scmp.eq.s32.totalorder %s9, 1
    %p69 = scmp.ne.s32.totalorder %s64, %s66
    %p70 = scmp.eq.s32.totalorder %s9, 0
    %p71 = por %p69, %p70
    %p72 = scmp.ne.s32.totalorder %s64, %s66
    %p73 = scmp.eq.s32.totalorder %s14, 1
    %p74 = por %p72, %p73
    %p75 = scmp.ne.s32.totalorder %s66, %s67
    %p76 = scmp.eq.s32.totalorder %s14, 0
    %p77 = por %p75, %p76
    %p78 = scmp.ne.s32.totalorder %s66, %s67
    %p79 = scmp.eq.s32.totalorder %s15, 1
    %p80 = por %p78, %p79
    %p82 = scmp.ne.s32.totalorder %s67, %s81
    %p83 = scmp.eq.s32.totalorder %s15, 0
    %p84 = por %p82, %p83
    %s85 = ssub.s32 %s9, %s16
    %p86 = scmp.eq.s32.totalorder %s85, 0
    %s88 = sadd.s32 %s87, 1
    %s89 = scalar_select %p86, %s87, %s88
    %p92 = pneg %p86
    %p93 = scmp.eq.s32.totalorder %s9, 1
    %p94 = por %p92, %p93
    %p95 = scmp.ne.s32.totalorder %s87, %s90
    %p96 = scmp.eq.s32.totalorder %s9, 0
    %p97 = por %p95, %p96
    %p98 = scmp.ne.s32.totalorder %s87, %s90
    %p99 = scmp.eq.s32.totalorder %s14, 1
    %p100 = por %p98, %p99
    %p101 = scmp.ne.s32.totalorder %s90, %s91
    %p102 = scmp.eq.s32.totalorder %s14, 0
    %p103 = por %p101, %p102
    %p104 = scmp.ne.s32.totalorder %s90, %s91
    %p105 = scmp.eq.s32.totalorder %s15, 1
    %p106 = por %p104, %p105
    %p108 = scmp.ne.s32.totalorder %s91, %s107
    %p109 = scmp.eq.s32.totalorder %s15, 0
    %p110 = por %p108, %p109
    %p111 = scmp.le.s32.totalorder 1, %s9
    %p112 = scmp.lt.s32.totalorder %s9, 3
    %p113 = pnand %p111, %p112
    %p114 = pneg %p113
    // Predicated region
    $region9: #{cnn4_dsvdd_forward.16} parent=5 // pred_check
      _
    $region10: #{cnn4_dsvdd_forward.16} parent=5 // pred_check_branch
      %116 = sbr.rel (%p113) target = $region12
    $region11: #{cnn4_dsvdd_forward.16} parent=5 // pred_region
      %s117 = ssub.s32 %s9, 1
      // Predicated region
      $region13: #{cnn4_dsvdd_forward.16} parent=11 // pred_check
        %p118 = pneg %p56
      $region14: #{cnn4_dsvdd_forward.16} parent=11 // pred_check_branch
        %120 = sbr.rel (%p118) target = $region16
      $region15: #{cnn4_dsvdd_forward.16} parent=11 // pred_region
        _
      $region16: #{cnn4_dsvdd_forward.16} parent=11 // pred_fallthru
        _
      // Predicated region
      $region17: #{cnn4_dsvdd_forward.16} parent=11 // pred_check
        %p121 = pneg %p77
      $region18: #{cnn4_dsvdd_forward.16} parent=11 // pred_check_branch
        %123 = sbr.rel (%p121) target = $region20
      $region19: #{cnn4_dsvdd_forward.16} parent=11 // pred_region
        _
      $region20: #{cnn4_dsvdd_forward.16} parent=11 // pred_fallthru
        _
    $region12: #{cnn4_dsvdd_forward.16} parent=5 // pred_fallthru
      _
    %p124 = scmp.lt.s32.totalorder %s9, 2
    // Predicated region
    $region21: #{cnn4_dsvdd_forward.16} parent=5 // pred_check
      %p125 = pneg %p124
    $region22: #{cnn4_dsvdd_forward.16} parent=5 // pred_check_branch
      %127 = sbr.rel (%p125) target = $region24
    $region23: #{cnn4_dsvdd_forward.16} parent=5 // pred_region
      // Predicated region
      $region25: #{cnn4_dsvdd_forward.16} parent=23 // pred_check
        %p128 = pneg %p29
      $region26: #{cnn4_dsvdd_forward.16} parent=23 // pred_check_branch
        %130 = sbr.rel (%p128) target = $region28
      $region27: #{cnn4_dsvdd_forward.16} parent=23 // pred_region
        %p131 = scmp.lt.s32.totalorder %s9, 1
        %s132 = scalar_select %p131, %s9, 1
        %s133 = scalar_lea.vmem %s0, %s132
      $region28: #{cnn4_dsvdd_forward.16} parent=23 // pred_fallthru
        _
    $region24: #{cnn4_dsvdd_forward.16} parent=5 // pred_fallthru
      _
    %p134 = scmp.le.s32.totalorder 1, %s9
    %p135 = scmp.lt.s32.totalorder %s9, 3
    %p136 = pnand %p134, %p135
    %p137 = pneg %p136
    // Predicated region
    $region29: #{cnn4_dsvdd_forward.16} parent=5 // pred_check
      _
    $region30: #{cnn4_dsvdd_forward.16} parent=5 // pred_check_branch
      %139 = sbr.rel (%p136) target = $region32
    $region31: #{cnn4_dsvdd_forward.16} parent=5 // pred_region
      %s140 = ssub.s32 %s9, 1
      %p141 = scmp.lt.s32.totalorder %s14, 1
      %s142 = scalar_select %p141, %s14, 1
      %s143 = scalar_lea.vmem %s0, %s142
      %p144 = pneg %p35
      %p145 = pneg %p32
      %p146 = pneg %p56
      %p147 = pneg %p53
      %p148 = pneg %p77
      %p149 = pneg %p74
      %p150 = pneg %p103
      %p151 = pneg %p100
      %p152 = scmp.lt.s32.totalorder %s14, 1
      %s153 = scalar_select %p152, %s14, 1
      %s154 = scalar_lea.vmem %s3, %s153
      %p155 = scmp.lt.s32.totalorder %s14, 1
      %s156 = scalar_select %p155, %s14, 1
      %s157 = scalar_lea.vmem %s0, %s156
      %p158 = scmp.lt.s32.totalorder %s14, 1
      %s159 = scalar_select %p158, %s14, 1
      %s160 = scalar_lea.vmem %s3, %s159
      %v161 = vld [vmem:[%s157] sm:$0x1]
      %v162 = vunpack.c.l.bf16 %v161
      %v163 = vld [vmem:[%s1] sm:$0x1]
      %v164 = vld [vmem:[%s2] sm:$0x1]
      %vm165 = vcmp.ge.f32.partialorder %v163, 0.0
      %v168 = vunpack.c.l.s4 1966171168
      %v169 = vunpack.c.0.s8 %v168
      %v170 = vlaneseq
      %v171 = vshrl.u32 %v170, 7
      %v172 = vsub.s32 %v169, %v171
      %v173 = vrot.slane %v162, %v172
      %174 = vrot.lane.b32.xlu0 %v173, 96
      %v175 = vpop.permute.xlu0 %174
      %v177 = vsel %vm165, %v162, %v175
      %v178 = vmul.f32 %v177, %v163
      %v179 = vadd.f32 %v178, %v164
      %v180 = vmax.f32 %v179, 0.0
      %v181 = vpack.c.bf16 %v180, %v180
      %vm182 = vcmask 253952
      %vm183 = vsmask.f32 256
      %vm184 = vmand %vm182, %vm183
      %v185 = vld [vmem:[%s160] sm:$0x1]
      %v186 = vsel %vm184, %v181, %v185
      %187 = vst [vmem:[%s160] sm:$0x1] %v186
      %p188 = scmp.lt.s32.totalorder %s14, 1
      %s189 = scalar_select %p188, %s14, 1
      %s190 = scalar_lea.vmem %s3, %s189
      // Predicated region
      $region33: #{cnn4_dsvdd_forward.16} parent=31 // pred_check
        %p191 = pneg %p100
      $region34: #{cnn4_dsvdd_forward.16} parent=31 // pred_check_branch
        %193 = sbr.rel (%p191) target = $region36
      $region35: #{cnn4_dsvdd_forward.16} parent=31 // pred_region
        _
      $region36: #{cnn4_dsvdd_forward.16} parent=31 // pred_fallthru
        _
    $region32: #{cnn4_dsvdd_forward.16} parent=5 // pred_fallthru
      _
    %p194 = scmp.le.s32.totalorder 2, %s9
    // Predicated region
    $region37: #{cnn4_dsvdd_forward.16} parent=5 // pred_check
      %p195 = pneg %p194
    $region38: #{cnn4_dsvdd_forward.16} parent=5 // pred_check_branch
      %197 = sbr.rel (%p195) target = $region40
    $region39: #{cnn4_dsvdd_forward.16} parent=5 // pred_region
      %s198 = ssub.s32 %s9, 2
      // Predicated region
      $region41: #{cnn4_dsvdd_forward.16} parent=39 // pred_check
        %p199 = pneg %p106
      $region42: #{cnn4_dsvdd_forward.16} parent=39 // pred_check_branch
        %201 = sbr.rel (%p199) target = $region44
      $region43: #{cnn4_dsvdd_forward.16} parent=39 // pred_region
        %p202 = scmp.lt.s32.totalorder %s15, 1
        %s203 = scalar_select %p202, %s15, 1
        %s204 = scalar_lea.vmem %s3, %s203
      $region44: #{cnn4_dsvdd_forward.16} parent=39 // pred_fallthru
        _
    $region40: #{cnn4_dsvdd_forward.16} parent=5 // pred_fallthru
      _
  $region6: #{cnn4_dsvdd_forward.16} parent=0 // loop_footer
    %s13 = sadd.s32 1, %s9
  $region7: #{cnn4_dsvdd_forward.16} parent=0 // loop_footer_branch
    %8 = sbr.rel target = $region3
  $region8: #{cnn4_dsvdd_forward.16} parent=0 // loop_exit
    _

// kernel: cnn4_dsvdd_forward.15
$region0: #{cnn4_dsvdd_forward.15}
  #allocation0 [shape = 'u32[]', space=smem, size = 0x4, offset = 0x4, fixed_abs, tag = 'smem constant byte address 0x4 - core index']
  #allocation1 [shape = 'u32[144,128]{1,0:T(1,128)}', space=vmem, size = 0x12000, scoped, tag = 'internal scratch']
  %s0 = inlined_call_operand.vmem [shape: bf16[2,2,2,128], index: 0, kind: input, shape index: {}]
  %s1 = inlined_call_operand.vmem [shape: bf16[2,3,128,32], index: 1, kind: input, shape index: {}]
  %s2 = inlined_call_operand.vmem [shape: bf16[2,1,64], index: 2, kind: output, shape index: {0}]
  %s3 = inlined_call_operand.vmem [shape: f32[2,8,32], index: 3, kind: output, shape index: {1}]
  %4 = xla_tuple %s2, %s3
  %s5 = sld [smem:[#allocation0]]
  $region49: #{cnn4_dsvdd_forward.15} parent=0
    _
  %s7 = ssub.s32 1, %s5
  %s8 = scalar_select 0, %s7, %s5
  loop: start=0, step=1, limit=4
  $region2: #{cnn4_dsvdd_forward.15} parent=0 // loop_pre_header
    _
  $region3: #{cnn4_dsvdd_forward.15} parent=0 // loop_header
    %s10 = sphi 0, %s14
    %p11 = scmp.ge.s32.totalorder %s10, 4
    %s20 = sphi 0, %s22
    %s23 = sphi 0, %s20
    %s24 = sphi 0, %s23
    %s40 = sphi 0, %s24
    %s44 = sphi 0, %s44
    %s46 = sphi 0, %s44
    %s47 = sphi 0, %s46
    %s61 = sphi 0, %s47
    %s67 = sphi 0, %s69
    %s70 = sphi 0, %s67
    %s71 = sphi 0, %s70
    %s87 = sphi 0, %s71
    %s93 = sphi 0, %s95
    %s96 = sphi 0, %s93
    %s97 = sphi 0, %s96
    %s113 = sphi 0, %s97
  $region4: #{cnn4_dsvdd_forward.15} parent=0 // loop_header_branch
    %13 = sbr.rel (%p11) target = $region8
  $region5: #{cnn4_dsvdd_forward.15} parent=0 // loop_body
    %s15 = ssub.s32 %s10, 1
    %s16 = ssub.s32 %s10, 2
    %s17 = sadd.s32 %s10, 1
    %s18 = ssub.s32 %s10, %s17
    %p19 = scmp.eq.s32.totalorder %s18, 0
    %s21 = sadd.s32 %s20, 1
    %s22 = scalar_select %p19, %s20, %s21
    %p25 = pneg %p19
    %p26 = scmp.eq.s32.totalorder %s10, 1
    %p27 = por %p25, %p26
    %p28 = scmp.ne.s32.totalorder %s20, %s23
    %p29 = scmp.eq.s32.totalorder %s10, 0
    %p30 = por %p28, %p29
    %p31 = scmp.ne.s32.totalorder %s20, %s23
    %p32 = scmp.eq.s32.totalorder %s15, 1
    %p33 = por %p31, %p32
    %p34 = scmp.ne.s32.totalorder %s23, %s24
    %p35 = scmp.eq.s32.totalorder %s15, 0
    %p36 = por %p34, %p35
    %p37 = scmp.ne.s32.totalorder %s23, %s24
    %p38 = scmp.eq.s32.totalorder %s16, 1
    %p39 = por %p37, %p38
    %p41 = scmp.ne.s32.totalorder %s24, %s40
    %p42 = scmp.eq.s32.totalorder %s16, 0
    %p43 = por %p41, %p42
    %s45 = sadd.s32 %s44, 1
    %p48 = scmp.eq.s32.totalorder %s10, 1
    %p49 = scmp.ne.s32.totalorder %s44, %s46
    %p50 = scmp.eq.s32.totalorder %s10, 0
    %p51 = por %p49, %p50
    %p52 = scmp.ne.s32.totalorder %s44, %s46
    %p53 = scmp.eq.s32.totalorder %s15, 1
    %p54 = por %p52, %p53
    %p55 = scmp.ne.s32.totalorder %s46, %s47
    %p56 = scmp.eq.s32.totalorder %s15, 0
    %p57 = por %p55, %p56
    %p58 = scmp.ne.s32.totalorder %s46, %s47
    %p59 = scmp.eq.s32.totalorder %s16, 1
    %p60 = por %p58, %p59
    %p62 = scmp.ne.s32.totalorder %s47, %s61
    %p63 = scmp.eq.s32.totalorder %s16, 0
    %p64 = por %p62, %p63
    %s65 = ssub.s32 %s10, %s17
    %p66 = scmp.eq.s32.totalorder %s65, 0
    %s68 = sadd.s32 %s67, 1
    %s69 = scalar_select %p66, %s67, %s68
    %p72 = pneg %p66
    %p73 = scmp.eq.s32.totalorder %s10, 1
    %p74 = por %p72, %p73
    %p75 = scmp.ne.s32.totalorder %s67, %s70
    %p76 = scmp.eq.s32.totalorder %s10, 0
    %p77 = por %p75, %p76
    %p78 = scmp.ne.s32.totalorder %s67, %s70
    %p79 = scmp.eq.s32.totalorder %s15, 1
    %p80 = por %p78, %p79
    %p81 = scmp.ne.s32.totalorder %s70, %s71
    %p82 = scmp.eq.s32.totalorder %s15, 0
    %p83 = por %p81, %p82
    %p84 = scmp.ne.s32.totalorder %s70, %s71
    %p85 = scmp.eq.s32.totalorder %s16, 1
    %p86 = por %p84, %p85
    %p88 = scmp.ne.s32.totalorder %s71, %s87
    %p89 = scmp.eq.s32.totalorder %s16, 0
    %p90 = por %p88, %p89
    %s91 = ssub.s32 %s10, %s17
    %p92 = scmp.eq.s32.totalorder %s91, 0
    %s94 = sadd.s32 %s93, 1
    %s95 = scalar_select %p92, %s93, %s94
    %p98 = pneg %p92
    %p99 = scmp.eq.s32.totalorder %s10, 1
    %p100 = por %p98, %p99
    %p101 = scmp.ne.s32.totalorder %s93, %s96
    %p102 = scmp.eq.s32.totalorder %s10, 0
    %p103 = por %p101, %p102
    %p104 = scmp.ne.s32.totalorder %s93, %s96
    %p105 = scmp.eq.s32.totalorder %s15, 1
    %p106 = por %p104, %p105
    %p107 = scmp.ne.s32.totalorder %s96, %s97
    %p108 = scmp.eq.s32.totalorder %s15, 0
    %p109 = por %p107, %p108
    %p110 = scmp.ne.s32.totalorder %s96, %s97
    %p111 = scmp.eq.s32.totalorder %s16, 1
    %p112 = por %p110, %p111
    %p114 = scmp.ne.s32.totalorder %s97, %s113
    %p115 = scmp.eq.s32.totalorder %s16, 0
    %p116 = por %p114, %p115
    %p117 = scmp.le.s32.totalorder 1, %s10
    %p118 = scmp.lt.s32.totalorder %s10, 3
    %p119 = pnand %p117, %p118
    %p120 = pneg %p119
    // Predicated region
    $region9: #{cnn4_dsvdd_forward.15} parent=5 // pred_check
      _
    $region10: #{cnn4_dsvdd_forward.15} parent=5 // pred_check_branch
      %122 = sbr.rel (%p119) target = $region12
    $region11: #{cnn4_dsvdd_forward.15} parent=5 // pred_region
      %s123 = ssub.s32 %s10, 1
      // Predicated region
      $region13: #{cnn4_dsvdd_forward.15} parent=11 // pred_check
        %p124 = pneg %p57
      $region14: #{cnn4_dsvdd_forward.15} parent=11 // pred_check_branch
        %126 = sbr.rel (%p124) target = $region16
      $region15: #{cnn4_dsvdd_forward.15} parent=11 // pred_region
        _
      $region16: #{cnn4_dsvdd_forward.15} parent=11 // pred_fallthru
        _
    $region12: #{cnn4_dsvdd_forward.15} parent=5 // pred_fallthru
      _
    %p127 = scmp.lt.s32.totalorder %s10, 2
    // Predicated region
    $region17: #{cnn4_dsvdd_forward.15} parent=5 // pred_check
      %p128 = pneg %p127
    $region18: #{cnn4_dsvdd_forward.15} parent=5 // pred_check_branch
      %130 = sbr.rel (%p128) target = $region20
    $region19: #{cnn4_dsvdd_forward.15} parent=5 // pred_region
      // Predicated region
      $region21: #{cnn4_dsvdd_forward.15} parent=19 // pred_check
        %p131 = pneg %p30
      $region22: #{cnn4_dsvdd_forward.15} parent=19 // pred_check_branch
        %133 = sbr.rel (%p131) target = $region24
      $region23: #{cnn4_dsvdd_forward.15} parent=19 // pred_region
        %p134 = scmp.lt.s32.totalorder %s10, 1
        %s135 = scalar_select %p134, %s10, 1
        %s136 = smul.addr %s135, 2
        %s137 = scalar_lea.vmem %s0, %s136
      $region24: #{cnn4_dsvdd_forward.15} parent=19 // pred_fallthru
        _
    $region20: #{cnn4_dsvdd_forward.15} parent=5 // pred_fallthru
      _
    %p138 = scmp.le.s32.totalorder 1, %s10
    %p139 = scmp.lt.s32.totalorder %s10, 3
    %p140 = pnand %p138, %p139
    %p141 = pneg %p140
    // Predicated region
    $region25: #{cnn4_dsvdd_forward.15} parent=5 // pred_check
      _
    $region26: #{cnn4_dsvdd_forward.15} parent=5 // pred_check_branch
      %143 = sbr.rel (%p140) target = $region28
    $region27: #{cnn4_dsvdd_forward.15} parent=5 // pred_region
      %s144 = ssub.s32 %s10, 1
      %p145 = scmp.lt.s32.totalorder %s15, 1
      %s146 = scalar_select %p145, %s15, 1
      %s147 = smul.addr %s146, 2
      %s148 = scalar_lea.vmem %s0, %s147
      %p149 = pneg %p36
      %p150 = pneg %p33
      %p151 = pneg %p57
      %p152 = pneg %p54
      %p153 = pneg %p83
      %p154 = pneg %p80
      %p155 = scmp.lt.s32.totalorder %s15, 1
      %s156 = scalar_select %p155, %s15, 1
      %s157 = scalar_lea.vmem %s2, %s156
      %p158 = pneg %p109
      %p159 = pneg %p106
      %p160 = scmp.lt.s32.totalorder %s15, 1
      %s161 = scalar_select %p160, %s15, 1
      %s162 = smul.addr %s161, 8
      %s163 = scalar_lea.vmem %s3, %s162
      %p164 = scmp.lt.s32.totalorder %s15, 1
      %s165 = scalar_select %p164, %s15, 1
      %s166 = smul.addr %s165, 2
      %s167 = scalar_lea.vmem %s0, %s166
      %p168 = scmp.lt.s32.totalorder %s15, 1
      %s169 = scalar_select %p168, %s15, 1
      %s170 = scalar_lea.vmem %s2, %s169
      %p171 = scmp.lt.s32.totalorder %s15, 1
      %s172 = scalar_select %p171, %s15, 1
      %s173 = smul.addr %s172, 8
      %s174 = scalar_lea.vmem %s3, %s173
      %v176 = vld [vmem:[%s167] sm:$0x1]
      %v177 = vld [vmem:[%s1] sm:$0xf]
      %v178 = vld [vmem:[%s1 + $0x4] sm:$0xf]
      %v179 = vld [vmem:[%s1 + $0x8] sm:$0xf]
      %v180 = vld [vmem:[%s1 + $0xc] sm:$0xf]
      %v181 = vld [vmem:[%s1 + $0x10] sm:$0xf]
      %v182 = vld [vmem:[%s1 + $0x14] sm:$0xf]
      %v183 = vld [vmem:[%s1 + $0x18] sm:$0xf]
      %v184 = vld [vmem:[%s1 + $0x1c] sm:$0xf]
      %v185 = vld [vmem:[%s1 + $0x20] sm:$0xf]
      %v186 = vld [vmem:[%s1 + $0x24] sm:$0xf]
      %v187 = vld [vmem:[%s1 + $0x28] sm:$0xf]
      %v188 = vld [vmem:[%s1 + $0x2c] sm:$0xf]
      %v189 = vld [vmem:[%s1 + $0x30] sm:$0xf]
      %v190 = vld [vmem:[%s1 + $0x34] sm:$0xf]
      %v191 = vld [vmem:[%s1 + $0x38] sm:$0xf]
      %v192 = vld [vmem:[%s1 + $0x3c] sm:$0xf]
      %s193 = scalar_lea.vmem %s167, 1
      %v194 = vld [vmem:[%s193] sm:$0x1]
      %s195 = scalar_lea.vmem %s1, 64
      %v196 = vld [vmem:[%s195] sm:$0xf]
      %v197 = vld [vmem:[%s195 + $0x4] sm:$0xf]
      %v198 = vld [vmem:[%s195 + $0x8] sm:$0xf]
      %v199 = vld [vmem:[%s195 + $0xc] sm:$0xf]
      %v200 = vld [vmem:[%s195 + $0x10] sm:$0xf]
      %v201 = vld [vmem:[%s195 + $0x14] sm:$0xf]
      %v202 = vld [vmem:[%s195 + $0x18] sm:$0xf]
      %v203 = vld [vmem:[%s195 + $0x1c] sm:$0xf]
      %v204 = vld [vmem:[%s195 + $0x20] sm:$0xf]
      %v205 = vld [vmem:[%s195 + $0x24] sm:$0xf]
      %v206 = vld [vmem:[%s195 + $0x28] sm:$0xf]
      %v207 = vld [vmem:[%s195 + $0x2c] sm:$0xf]
      %v208 = vld [vmem:[%s195 + $0x30] sm:$0xf]
      %v209 = vld [vmem:[%s195 + $0x34] sm:$0xf]
      %v210 = vld [vmem:[%s195 + $0x38] sm:$0xf]
      %v211 = vld [vmem:[%s195 + $0x3c] sm:$0xf]
      %v228 = vunpack.c.l.b16 %v196
      %v229 = vunpack.c.l.b16 %v197
      %v230 = vunpack.c.l.b16 %v198
      %v231 = vunpack.c.l.b16 %v199
      %v232 = vunpack.c.l.b16 %v200
      %v233 = vunpack.c.l.b16 %v201
      %v234 = vunpack.c.l.b16 %v202
      %v235 = vunpack.c.l.b16 %v203
      %v236 = vunpack.c.l.b16 %v204
      %v237 = vunpack.c.l.b16 %v205
      %v238 = vunpack.c.l.b16 %v206
      %v239 = vunpack.c.l.b16 %v207
      %v240 = vunpack.c.l.b16 %v208
      %v241 = vunpack.c.l.b16 %v209
      %v242 = vunpack.c.l.b16 %v210
      %v243 = vunpack.c.l.b16 %v211
      %v244 = vpack.c.b16 %v229, %v228
      %v245 = vpack.c.b16 %v231, %v230
      %v246 = vpack.c.b16 %v233, %v232
      %v247 = vpack.c.b16 %v235, %v234
      %v248 = vpack.c.b16 %v237, %v236
      %v249 = vpack.c.b16 %v239, %v238
      %v250 = vpack.c.b16 %v241, %v240
      %v251 = vpack.c.b16 %v243, %v242
      %260 = vmatprep.subr.bf16.mxu0 0
      %261 = vmatpush1.bf16.msra.mxu0 %v251
      %262 = vmatprep.subr.bf16.mxu0 0
      %263 = vmatpush1.bf16.msra.mxu0 %v250
      %264 = vmatprep.subr.bf16.mxu0 0
      %265 = vmatpush1.bf16.msra.mxu0 %v249
      %266 = vmatprep.subr.bf16.mxu0 0
      %267 = vmatpush1.bf16.msra.mxu0 %v248
      %268 = vmatprep.subr.bf16.mxu0 0
      %269 = vmatpush1.bf16.msra.mxu0 %v247
      %270 = vmatprep.subr.bf16.mxu0 0
      %271 = vmatpush1.bf16.msra.mxu0 %v246
      %272 = vmatprep.subr.bf16.mxu0 0
      %273 = vmatpush1.bf16.msra.mxu0 %v245
      %274 = vmatprep.subr.bf16.mxu0 0
      %275 = vmatpush1.bf16.msra.mxu0 %v244
      %276 = vmatprep.subr.bf16.mxu0 0
      %277 = vmatpush2.bf16.msra.mxu0 0
      %278 = vmatprep.subr.bf16.mxu0 0
      %279 = vmatpush2.bf16.msra.mxu0 0
      %280 = vmatprep.subr.bf16.mxu0 0
      %281 = vmatpush2.bf16.msra.mxu0 0
      %282 = vmatprep.subr.bf16.mxu0 0
      %283 = vmatpush2.bf16.msra.mxu0 0
      %284 = vmatprep.subr.bf16.mxu0 0
      %285 = vmatpush2.bf16.msra.mxu0 0
      %286 = vmatprep.subr.bf16.mxu0 0
      %287 = vmatpush2.bf16.msra.mxu0 0
      %288 = vmatprep.subr.bf16.mxu0 0
      %289 = vmatpush2.bf16.msra.mxu0 0
      %290 = vmatprep.subr.bf16.mxu0 0
      %291 = vmatpush2.bf16.msra.mxu0 0
      %292 = vmatprep.mubr.bf16.mxu0 0
      %293 = vmatmul.mubr.bf16.gmra.mxu0 %v194
      %v294 = vpop.f32.mrf.mxu0
      %v295 = vadd.f32 0.0, %v294
      %v296 = vpop.f32.mrf.mxu0
      %v297 = vpop.f32.mrf.mxu0
      %v298 = vpop.f32.mrf.mxu0
      %299 = vdwg.mxu0
      %v316 = vunpack.c.l.b16 %v177
      %v317 = vunpack.c.l.b16 %v178
      %v318 = vunpack.c.l.b16 %v179
      %v319 = vunpack.c.l.b16 %v180
      %v320 = vunpack.c.l.b16 %v181
      %v321 = vunpack.c.l.b16 %v182
      %v322 = vunpack.c.l.b16 %v183
      %v323 = vunpack.c.l.b16 %v184
      %v324 = vunpack.c.l.b16 %v185
      %v325 = vunpack.c.l.b16 %v186
      %v326 = vunpack.c.l.b16 %v187
      %v327 = vunpack.c.l.b16 %v188
      %v328 = vunpack.c.l.b16 %v189
      %v329 = vunpack.c.l.b16 %v190
      %v330 = vunpack.c.l.b16 %v191
      %v331 = vunpack.c.l.b16 %v192
      %v332 = vpack.c.b16 %v317, %v316
      %v333 = vpack.c.b16 %v319, %v318
      %v334 = vpack.c.b16 %v321, %v320
      %v335 = vpack.c.b16 %v323, %v322
      %v336 = vpack.c.b16 %v325, %v324
      %v337 = vpack.c.b16 %v327, %v326
      %v338 = vpack.c.b16 %v329, %v328
      %v339 = vpack.c.b16 %v331, %v330
      %348 = vmatprep.subr.bf16.mxu0 0
      %349 = vmatpush1.bf16.msra.mxu0 %v339
      %350 = vmatprep.subr.bf16.mxu0 0
      %351 = vmatpush1.bf16.msra.mxu0 %v338
      %352 = vmatprep.subr.bf16.mxu0 0
      %353 = vmatpush1.bf16.msra.mxu0 %v337
      %354 = vmatprep.subr.bf16.mxu0 0
      %355 = vmatpush1.bf16.msra.mxu0 %v336
      %356 = vmatprep.subr.bf16.mxu0 0
      %357 = vmatpush1.bf16.msra.mxu0 %v335
      %358 = vmatprep.subr.bf16.mxu0 0
      %359 = vmatpush1.bf16.msra.mxu0 %v334
      %360 = vmatprep.subr.bf16.mxu0 0
      %361 = vmatpush1.bf16.msra.mxu0 %v333
      %362 = vmatprep.subr.bf16.mxu0 0
      %363 = vmatpush1.bf16.msra.mxu0 %v332
      %364 = vmatprep.subr.bf16.mxu0 0
      %365 = vmatpush2.bf16.msra.mxu0 0
      %366 = vmatprep.subr.bf16.mxu0 0
      %367 = vmatpush2.bf16.msra.mxu0 0
      %368 = vmatprep.subr.bf16.mxu0 0
      %369 = vmatpush2.bf16.msra.mxu0 0
      %370 = vmatprep.subr.bf16.mxu0 0
      %371 = vmatpush2.bf16.msra.mxu0 0
      %372 = vmatprep.subr.bf16.mxu0 0
      %373 = vmatpush2.bf16.msra.mxu0 0
      %374 = vmatprep.subr.bf16.mxu0 0
      %375 = vmatpush2.bf16.msra.mxu0 0
      %376 = vmatprep.subr.bf16.mxu0 0
      %377 = vmatpush2.bf16.msra.mxu0 0
      %378 = vmatprep.subr.bf16.mxu0 0
      %379 = vmatpush2.bf16.msra.mxu0 0
      %380 = vmatprep.mubr.bf16.mxu0 0
      %381 = vmatmul.mubr.bf16.gmra.mxu0 %v176
      %v382 = vpop.f32.mrf.mxu0
      %v383 = vadd.f32 %v295, %v382
      %v384 = vpop.f32.mrf.mxu0
      %v385 = vpop.f32.mrf.mxu0
      %v386 = vpop.f32.mrf.mxu0
      %387 = vdwg.mxu0
      %s388 = scalar_lea.vmem %s1, 128
      %v389 = vld [vmem:[%s388] sm:$0xf]
      %v390 = vld [vmem:[%s388 + $0x4] sm:$0xf]
      %v391 = vld [vmem:[%s388 + $0x8] sm:$0xf]
      %v392 = vld [vmem:[%s388 + $0xc] sm:$0xf]
      %v393 = vld [vmem:[%s388 + $0x10] sm:$0xf]
      %v394 = vld [vmem:[%s388 + $0x14] sm:$0xf]
      %v395 = vld [vmem:[%s388 + $0x18] sm:$0xf]
      %v396 = vld [vmem:[%s388 + $0x1c] sm:$0xf]
      %v397 = vld [vmem:[%s388 + $0x20] sm:$0xf]
      %v398 = vld [vmem:[%s388 + $0x24] sm:$0xf]
      %v399 = vld [vmem:[%s388 + $0x28] sm:$0xf]
      %v400 = vld [vmem:[%s388 + $0x2c] sm:$0xf]
      %v401 = vld [vmem:[%s388 + $0x30] sm:$0xf]
      %v402 = vld [vmem:[%s388 + $0x34] sm:$0xf]
      %v403 = vld [vmem:[%s388 + $0x38] sm:$0xf]
      %v404 = vld [vmem:[%s388 + $0x3c] sm:$0xf]
      %v407 = vunpack.c.l.s4 1966171168
      %v408 = vunpack.c.0.s8 %v407
      %v409 = vlaneseq
      %v410 = vshrl.u32 %v409, 7
      %v411 = vsub.s32 %v408, %v410
      %v412 = vrot.slane %v176, %v411
      %v414 = vunpack.c.l.s4 1966171168
      %v415 = vunpack.c.0.s8 %v414
      %v416 = vlaneseq
      %v417 = vshrl.u32 %v416, 7
      %v418 = vsub.s32 %v415, %v417
      %v419 = vrot.slane %v412, %v418
      %v421 = vshrl.u32 %v419, 16
      %v440 = vunpack.c.l.b16 %v389
      %v441 = vunpack.c.l.b16 %v390
      %v442 = vunpack.c.l.b16 %v391
      %v443 = vunpack.c.l.b16 %v392
      %v444 = vunpack.c.l.b16 %v393
      %v445 = vunpack.c.l.b16 %v394
      %v446 = vunpack.c.l.b16 %v395
      %v447 = vunpack.c.l.b16 %v396
      %v448 = vunpack.c.l.b16 %v397
      %v449 = vunpack.c.l.b16 %v398
      %v450 = vunpack.c.l.b16 %v399
      %v451 = vunpack.c.l.b16 %v400
      %v452 = vunpack.c.l.b16 %v401
      %v453 = vunpack.c.l.b16 %v402
      %v454 = vunpack.c.l.b16 %v403
      %v455 = vunpack.c.l.b16 %v404
      %v456 = vpack.c.b16 %v441, %v440
      %v457 = vpack.c.b16 %v443, %v442
      %v458 = vpack.c.b16 %v445, %v444
      %v459 = vpack.c.b16 %v447, %v446
      %v460 = vpack.c.b16 %v449, %v448
      %v461 = vpack.c.b16 %v451, %v450
      %v462 = vpack.c.b16 %v453, %v452
      %v463 = vpack.c.b16 %v455, %v454
      %472 = vmatprep.subr.bf16.mxu0 0
      %473 = vmatpush1.bf16.msra.mxu0 %v463
      %474 = vmatprep.subr.bf16.mxu0 0
      %475 = vmatpush1.bf16.msra.mxu0 %v462
      %476 = vmatprep.subr.bf16.mxu0 0
      %477 = vmatpush1.bf16.msra.mxu0 %v461
      %478 = vmatprep.subr.bf16.mxu0 0
      %479 = vmatpush1.bf16.msra.mxu0 %v460
      %480 = vmatprep.subr.bf16.mxu0 0
      %481 = vmatpush1.bf16.msra.mxu0 %v459
      %482 = vmatprep.subr.bf16.mxu0 0
      %483 = vmatpush1.bf16.msra.mxu0 %v458
      %484 = vmatprep.subr.bf16.mxu0 0
      %485 = vmatpush1.bf16.msra.mxu0 %v457
      %486 = vmatprep.subr.bf16.mxu0 0
      %487 = vmatpush1.bf16.msra.mxu0 %v456
      %488 = vmatprep.subr.bf16.mxu0 0
      %489 = vmatpush2.bf16.msra.mxu0 0
      %490 = vmatprep.subr.bf16.mxu0 0
      %491 = vmatpush2.bf16.msra.mxu0 0
      %492 = vmatprep.subr.bf16.mxu0 0
      %493 = vmatpush2.bf16.msra.mxu0 0
      %494 = vmatprep.subr.bf16.mxu0 0
      %495 = vmatpush2.bf16.msra.mxu0 0
      %496 = vmatprep.subr.bf16.mxu0 0
      %497 = vmatpush2.bf16.msra.mxu0 0
      %498 = vmatprep.subr.bf16.mxu0 0
      %499 = vmatpush2.bf16.msra.mxu0 0
      %500 = vmatprep.subr.bf16.mxu0 0
      %501 = vmatpush2.bf16.msra.mxu0 0
      %502 = vmatprep.subr.bf16.mxu0 0
      %503 = vmatpush2.bf16.msra.mxu0 0
      %504 = vmatprep.mubr.bf16.mxu0 0
      %505 = vmatmul.mubr.bf16.gmra.mxu0 %v421
      %v506 = vpop.f32.mrf.mxu0
      %v507 = vadd.f32 0.0, %v506
      %v508 = vpop.f32.mrf.mxu0
      %v509 = vpop.f32.mrf.mxu0
      %v510 = vpop.f32.mrf.mxu0
      %511 = vdwg.mxu0
      %v512 = vadd.f32 %v383, %v507
      %v513 = vadd.f32 %v512, 0.0
      %v514 = vmul.f32 %v512, %v512
      %v515 = vadd.f32 %v514, 0.0
      %s516 = scalar_lea.vmem %s1, 192
      %v517 = vld [vmem:[%s516] sm:$0xf]
      %v518 = vld [vmem:[%s516 + $0x4] sm:$0xf]
      %v519 = vld [vmem:[%s516 + $0x8] sm:$0xf]
      %v520 = vld [vmem:[%s516 + $0xc] sm:$0xf]
      %v521 = vld [vmem:[%s516 + $0x10] sm:$0xf]
      %v522 = vld [vmem:[%s516 + $0x14] sm:$0xf]
      %v523 = vld [vmem:[%s516 + $0x18] sm:$0xf]
      %v524 = vld [vmem:[%s516 + $0x1c] sm:$0xf]
      %v525 = vld [vmem:[%s516 + $0x20] sm:$0xf]
      %v526 = vld [vmem:[%s516 + $0x24] sm:$0xf]
      %v527 = vld [vmem:[%s516 + $0x28] sm:$0xf]
      %v528 = vld [vmem:[%s516 + $0x2c] sm:$0xf]
      %v529 = vld [vmem:[%s516 + $0x30] sm:$0xf]
      %v530 = vld [vmem:[%s516 + $0x34] sm:$0xf]
      %v531 = vld [vmem:[%s516 + $0x38] sm:$0xf]
      %v532 = vld [vmem:[%s516 + $0x3c] sm:$0xf]
      %s533 = scalar_lea.vmem %s1, 256
      %v534 = vld [vmem:[%s533] sm:$0xf]
      %v535 = vld [vmem:[%s533 + $0x4] sm:$0xf]
      %v536 = vld [vmem:[%s533 + $0x8] sm:$0xf]
      %v537 = vld [vmem:[%s533 + $0xc] sm:$0xf]
      %v538 = vld [vmem:[%s533 + $0x10] sm:$0xf]
      %v539 = vld [vmem:[%s533 + $0x14] sm:$0xf]
      %v540 = vld [vmem:[%s533 + $0x18] sm:$0xf]
      %v541 = vld [vmem:[%s533 + $0x1c] sm:$0xf]
      %v542 = vld [vmem:[%s533 + $0x20] sm:$0xf]
      %v543 = vld [vmem:[%s533 + $0x24] sm:$0xf]
      %v544 = vld [vmem:[%s533 + $0x28] sm:$0xf]
      %v545 = vld [vmem:[%s533 + $0x2c] sm:$0xf]
      %v546 = vld [vmem:[%s533 + $0x30] sm:$0xf]
      %v547 = vld [vmem:[%s533 + $0x34] sm:$0xf]
      %v548 = vld [vmem:[%s533 + $0x38] sm:$0xf]
      %v549 = vld [vmem:[%s533 + $0x3c] sm:$0xf]
      %v566 = vunpack.c.l.b16 %v534
      %v567 = vunpack.c.l.b16 %v535
      %v568 = vunpack.c.l.b16 %v536
      %v569 = vunpack.c.l.b16 %v537
      %v570 = vunpack.c.l.b16 %v538
      %v571 = vunpack.c.l.b16 %v539
      %v572 = vunpack.c.l.b16 %v540
      %v573 = vunpack.c.l.b16 %v541
      %v574 = vunpack.c.l.b16 %v542
      %v575 = vunpack.c.l.b16 %v543
      %v576 = vunpack.c.l.b16 %v544
      %v577 = vunpack.c.l.b16 %v545
      %v578 = vunpack.c.l.b16 %v546
      %v579 = vunpack.c.l.b16 %v547
      %v580 = vunpack.c.l.b16 %v548
      %v581 = vunpack.c.l.b16 %v549
      %v582 = vpack.c.b16 %v567, %v566
      %v583 = vpack.c.b16 %v569, %v568
      %v584 = vpack.c.b16 %v571, %v570
      %v585 = vpack.c.b16 %v573, %v572
      %v586 = vpack.c.b16 %v575, %v574
      %v587 = vpack.c.b16 %v577, %v576
      %v588 = vpack.c.b16 %v579, %v578
      %v589 = vpack.c.b16 %v581, %v580
      %598 = vmatprep.subr.bf16.mxu0 0
      %599 = vmatpush1.bf16.msra.mxu0 %v589
      %600 = vmatprep.subr.bf16.mxu0 0
      %601 = vmatpush1.bf16.msra.mxu0 %v588
      %602 = vmatprep.subr.bf16.mxu0 0
      %603 = vmatpush1.bf16.msra.mxu0 %v587
      %604 = vmatprep.subr.bf16.mxu0 0
      %605 = vmatpush1.bf16.msra.mxu0 %v586
      %606 = vmatprep.subr.bf16.mxu0 0
      %607 = vmatpush1.bf16.msra.mxu0 %v585
      %608 = vmatprep.subr.bf16.mxu0 0
      %609 = vmatpush1.bf16.msra.mxu0 %v584
      %610 = vmatprep.subr.bf16.mxu0 0
      %611 = vmatpush1.bf16.msra.mxu0 %v583
      %612 = vmatprep.subr.bf16.mxu0 0
      %613 = vmatpush1.bf16.msra.mxu0 %v582
      %614 = vmatprep.subr.bf16.mxu0 0
      %615 = vmatpush2.bf16.msra.mxu0 0
      %616 = vmatprep.subr.bf16.mxu0 0
      %617 = vmatpush2.bf16.msra.mxu0 0
      %618 = vmatprep.subr.bf16.mxu0 0
      %619 = vmatpush2.bf16.msra.mxu0 0
      %620 = vmatprep.subr.bf16.mxu0 0
      %621 = vmatpush2.bf16.msra.mxu0 0
      %622 = vmatprep.subr.bf16.mxu0 0
      %623 = vmatpush2.bf16.msra.mxu0 0
      %624 = vmatprep.subr.bf16.mxu0 0
      %625 = vmatpush2.bf16.msra.mxu0 0
      %626 = vmatprep.subr.bf16.mxu0 0
      %627 = vmatpush2.bf16.msra.mxu0 0
      %628 = vmatprep.subr.bf16.mxu0 0
      %629 = vmatpush2.bf16.msra.mxu0 0
      %630 = vmatprep.mubr.bf16.mxu0 0
      %631 = vmatmul.mubr.bf16.gmra.mxu0 %v194
      %v632 = vpop.f32.mrf.mxu0
      %v633 = vadd.f32 0.0, %v632
      %v634 = vpop.f32.mrf.mxu0
      %v635 = vpop.f32.mrf.mxu0
      %v636 = vpop.f32.mrf.mxu0
      %637 = vdwg.mxu0
      %v654 = vunpack.c.l.b16 %v517
      %v655 = vunpack.c.l.b16 %v518
      %v656 = vunpack.c.l.b16 %v519
      %v657 = vunpack.c.l.b16 %v520
      %v658 = vunpack.c.l.b16 %v521
      %v659 = vunpack.c.l.b16 %v522
      %v660 = vunpack.c.l.b16 %v523
      %v661 = vunpack.c.l.b16 %v524
      %v662 = vunpack.c.l.b16 %v525
      %v663 = vunpack.c.l.b16 %v526
      %v664 = vunpack.c.l.b16 %v527
      %v665 = vunpack.c.l.b16 %v528
      %v666 = vunpack.c.l.b16 %v529
      %v667 = vunpack.c.l.b16 %v530
      %v668 = vunpack.c.l.b16 %v531
      %v669 = vunpack.c.l.b16 %v532
      %v670 = vpack.c.b16 %v655, %v654
      %v671 = vpack.c.b16 %v657, %v656
      %v672 = vpack.c.b16 %v659, %v658
      %v673 = vpack.c.b16 %v661, %v660
      %v674 = vpack.c.b16 %v663, %v662
      %v675 = vpack.c.b16 %v665, %v664
      %v676 = vpack.c.b16 %v667, %v666
      %v677 = vpack.c.b16 %v669, %v668
      %686 = vmatprep.subr.bf16.mxu0 0
      %687 = vmatpush1.bf16.msra.mxu0 %v677
      %688 = vmatprep.subr.bf16.mxu0 0
      %689 = vmatpush1.bf16.msra.mxu0 %v676
      %690 = vmatprep.subr.bf16.mxu0 0
      %691 = vmatpush1.bf16.msra.mxu0 %v675
      %692 = vmatprep.subr.bf16.mxu0 0
      %693 = vmatpush1.bf16.msra.mxu0 %v674
      %694 = vmatprep.subr.bf16.mxu0 0
      %695 = vmatpush1.bf16.msra.mxu0 %v673
      %696 = vmatprep.subr.bf16.mxu0 0
      %697 = vmatpush1.bf16.msra.mxu0 %v672
      %698 = vmatprep.subr.bf16.mxu0 0
      %699 = vmatpush1.bf16.msra.mxu0 %v671
      %700 = vmatprep.subr.bf16.mxu0 0
      %701 = vmatpush1.bf16.msra.mxu0 %v670
      %702 = vmatprep.subr.bf16.mxu0 0
      %703 = vmatpush2.bf16.msra.mxu0 0
      %704 = vmatprep.subr.bf16.mxu0 0
      %705 = vmatpush2.bf16.msra.mxu0 0
      %706 = vmatprep.subr.bf16.mxu0 0
      %707 = vmatpush2.bf16.msra.mxu0 0
      %708 = vmatprep.subr.bf16.mxu0 0
      %709 = vmatpush2.bf16.msra.mxu0 0
      %710 = vmatprep.subr.bf16.mxu0 0
      %711 = vmatpush2.bf16.msra.mxu0 0
      %712 = vmatprep.subr.bf16.mxu0 0
      %713 = vmatpush2.bf16.msra.mxu0 0
      %714 = vmatprep.subr.bf16.mxu0 0
      %715 = vmatpush2.bf16.msra.mxu0 0
      %716 = vmatprep.subr.bf16.mxu0 0
      %717 = vmatpush2.bf16.msra.mxu0 0
      %718 = vmatprep.mubr.bf16.mxu0 0
      %719 = vmatmul.mubr.bf16.gmra.mxu0 %v176
      %v720 = vpop.f32.mrf.mxu0
      %v721 = vadd.f32 %v633, %v720
      %v722 = vpop.f32.mrf.mxu0
      %v723 = vpop.f32.mrf.mxu0
      %v724 = vpop.f32.mrf.mxu0
      %725 = vdwg.mxu0
      %s726 = scalar_lea.vmem %s1, 320
      %v727 = vld [vmem:[%s726] sm:$0xf]
      %v728 = vld [vmem:[%s726 + $0x4] sm:$0xf]
      %v729 = vld [vmem:[%s726 + $0x8] sm:$0xf]
      %v730 = vld [vmem:[%s726 + $0xc] sm:$0xf]
      %v731 = vld [vmem:[%s726 + $0x10] sm:$0xf]
      %v732 = vld [vmem:[%s726 + $0x14] sm:$0xf]
      %v733 = vld [vmem:[%s726 + $0x18] sm:$0xf]
      %v734 = vld [vmem:[%s726 + $0x1c] sm:$0xf]
      %v735 = vld [vmem:[%s726 + $0x20] sm:$0xf]
      %v736 = vld [vmem:[%s726 + $0x24] sm:$0xf]
      %v737 = vld [vmem:[%s726 + $0x28] sm:$0xf]
      %v738 = vld [vmem:[%s726 + $0x2c] sm:$0xf]
      %v739 = vld [vmem:[%s726 + $0x30] sm:$0xf]
      %v740 = vld [vmem:[%s726 + $0x34] sm:$0xf]
      %v741 = vld [vmem:[%s726 + $0x38] sm:$0xf]
      %v742 = vld [vmem:[%s726 + $0x3c] sm:$0xf]
      %v759 = vunpack.c.l.b16 %v727
      %v760 = vunpack.c.l.b16 %v728
      %v761 = vunpack.c.l.b16 %v729
      %v762 = vunpack.c.l.b16 %v730
      %v763 = vunpack.c.l.b16 %v731
      %v764 = vunpack.c.l.b16 %v732
      %v765 = vunpack.c.l.b16 %v733
      %v766 = vunpack.c.l.b16 %v734
      %v767 = vunpack.c.l.b16 %v735
      %v768 = vunpack.c.l.b16 %v736
      %v769 = vunpack.c.l.b16 %v737
      %v770 = vunpack.c.l.b16 %v738
      %v771 = vunpack.c.l.b16 %v739
      %v772 = vunpack.c.l.b16 %v740
      %v773 = vunpack.c.l.b16 %v741
      %v774 = vunpack.c.l.b16 %v742
      %v775 = vpack.c.b16 %v760, %v759
      %v776 = vpack.c.b16 %v762, %v761
      %v777 = vpack.c.b16 %v764, %v763
      %v778 = vpack.c.b16 %v766, %v765
      %v779 = vpack.c.b16 %v768, %v767
      %v780 = vpack.c.b16 %v770, %v769
      %v781 = vpack.c.b16 %v772, %v771
      %v782 = vpack.c.b16 %v774, %v773
      %791 = vmatprep.subr.bf16.mxu0 0
      %792 = vmatpush1.bf16.msra.mxu0 %v782
      %793 = vmatprep.subr.bf16.mxu0 0
      %794 = vmatpush1.bf16.msra.mxu0 %v781
      %795 = vmatprep.subr.bf16.mxu0 0
      %796 = vmatpush1.bf16.msra.mxu0 %v780
      %797 = vmatprep.subr.bf16.mxu0 0
      %798 = vmatpush1.bf16.msra.mxu0 %v779
      %799 = vmatprep.subr.bf16.mxu0 0
      %800 = vmatpush1.bf16.msra.mxu0 %v778
      %801 = vmatprep.subr.bf16.mxu0 0
      %802 = vmatpush1.bf16.msra.mxu0 %v777
      %803 = vmatprep.subr.bf16.mxu0 0
      %804 = vmatpush1.bf16.msra.mxu0 %v776
      %805 = vmatprep.subr.bf16.mxu0 0
      %806 = vmatpush1.bf16.msra.mxu0 %v775
      %807 = vmatprep.subr.bf16.mxu0 0
      %808 = vmatpush2.bf16.msra.mxu0 0
      %809 = vmatprep.subr.bf16.mxu0 0
      %810 = vmatpush2.bf16.msra.mxu0 0
      %811 = vmatprep.subr.bf16.mxu0 0
      %812 = vmatpush2.bf16.msra.mxu0 0
      %813 = vmatprep.subr.bf16.mxu0 0
      %814 = vmatpush2.bf16.msra.mxu0 0
      %815 = vmatprep.subr.bf16.mxu0 0
      %816 = vmatpush2.bf16.msra.mxu0 0
      %817 = vmatprep.subr.bf16.mxu0 0
      %818 = vmatpush2.bf16.msra.mxu0 0
      %819 = vmatprep.subr.bf16.mxu0 0
      %820 = vmatpush2.bf16.msra.mxu0 0
      %821 = vmatprep.subr.bf16.mxu0 0
      %822 = vmatpush2.bf16.msra.mxu0 0
      %823 = vmatprep.mubr.bf16.mxu0 0
      %824 = vmatmul.mubr.bf16.gmra.mxu0 %v421
      %v825 = vpop.f32.mrf.mxu0
      %v826 = vadd.f32 0.0, %v825
      %v827 = vpop.f32.mrf.mxu0
      %v828 = vpop.f32.mrf.mxu0
      %v829 = vpop.f32.mrf.mxu0
      %830 = vdwg.mxu0
      %v831 = vadd.f32 %v721, %v826
      %v832 = vadd.f32 %v831, 0.0
      %v833 = vmul.f32 %v831, %v831
      %v834 = vadd.f32 %v833, 0.0
      %v835 = vmax.f32 %v512, %v831
      %v836 = vmin.f32 %v512, %v831
      %v837 = vadd.f32 %v513, %v832
      %v838 = vadd.f32 %v515, %v834
      %839 = vmatprep.subr.bf16.mxu0 0
      %840 = vmatpush1.bf16.msra.mxu0 %v251
      %841 = vmatprep.subr.bf16.mxu0 0
      %842 = vmatpush1.bf16.msra.mxu0 %v250
      %843 = vmatprep.subr.bf16.mxu0 0
      %844 = vmatpush1.bf16.msra.mxu0 %v249
      %845 = vmatprep.subr.bf16.mxu0 0
      %846 = vmatpush1.bf16.msra.mxu0 %v248
      %847 = vmatprep.subr.bf16.mxu0 0
      %848 = vmatpush1.bf16.msra.mxu0 %v247
      %849 = vmatprep.subr.bf16.mxu0 0
      %850 = vmatpush1.bf16.msra.mxu0 %v246
      %851 = vmatprep.subr.bf16.mxu0 0
      %852 = vmatpush1.bf16.msra.mxu0 %v245
      %853 = vmatprep.subr.bf16.mxu0 0
      %854 = vmatpush1.bf16.msra.mxu0 %v244
      %855 = vmatprep.subr.bf16.mxu0 0
      %856 = vmatpush2.bf16.msra.mxu0 0
      %857 = vmatprep.subr.bf16.mxu0 0
      %858 = vmatpush2.bf16.msra.mxu0 0
      %859 = vmatprep.subr.bf16.mxu0 0
      %860 = vmatpush2.bf16.msra.mxu0 0
      %861 = vmatprep.subr.bf16.mxu0 0
      %862 = vmatpush2.bf16.msra.mxu0 0
      %863 = vmatprep.subr.bf16.mxu0 0
      %864 = vmatpush2.bf16.msra.mxu0 0
      %865 = vmatprep.subr.bf16.mxu0 0
      %866 = vmatpush2.bf16.msra.mxu0 0
      %867 = vmatprep.subr.bf16.mxu0 0
      %868 = vmatpush2.bf16.msra.mxu0 0
      %869 = vmatprep.subr.bf16.mxu0 0
      %870 = vmatpush2.bf16.msra.mxu0 0
      %871 = vmatprep.mubr.bf16.mxu0 0
      %872 = vmatmul.mubr.bf16.gmra.mxu0 %v421
      %v873 = vpop.f32.mrf.mxu0
      %v874 = vadd.f32 0.0, %v873
      %v875 = vpop.f32.mrf.mxu0
      %v876 = vpop.f32.mrf.mxu0
      %v877 = vpop.f32.mrf.mxu0
      %878 = vdwg.mxu0
      %879 = vmatprep.subr.bf16.mxu0 0
      %880 = vmatpush1.bf16.msra.mxu0 %v339
      %881 = vmatprep.subr.bf16.mxu0 0
      %882 = vmatpush1.bf16.msra.mxu0 %v338
      %883 = vmatprep.subr.bf16.mxu0 0
      %884 = vmatpush1.bf16.msra.mxu0 %v337
      %885 = vmatprep.subr.bf16.mxu0 0
      %886 = vmatpush1.bf16.msra.mxu0 %v336
      %887 = vmatprep.subr.bf16.mxu0 0
      %888 = vmatpush1.bf16.msra.mxu0 %v335
      %889 = vmatprep.subr.bf16.mxu0 0
      %890 = vmatpush1.bf16.msra.mxu0 %v334
      %891 = vmatprep.subr.bf16.mxu0 0
      %892 = vmatpush1.bf16.msra.mxu0 %v333
      %893 = vmatprep.subr.bf16.mxu0 0
      %894 = vmatpush1.bf16.msra.mxu0 %v332
      %895 = vmatprep.subr.bf16.mxu0 0
      %896 = vmatpush2.bf16.msra.mxu0 0
      %897 = vmatprep.subr.bf16.mxu0 0
      %898 = vmatpush2.bf16.msra.mxu0 0
      %899 = vmatprep.subr.bf16.mxu0 0
      %900 = vmatpush2.bf16.msra.mxu0 0
      %901 = vmatprep.subr.bf16.mxu0 0
      %902 = vmatpush2.bf16.msra.mxu0 0
      %903 = vmatprep.subr.bf16.mxu0 0
      %904 = vmatpush2.bf16.msra.mxu0 0
      %905 = vmatprep.subr.bf16.mxu0 0
      %906 = vmatpush2.bf16.msra.mxu0 0
      %907 = vmatprep.subr.bf16.mxu0 0
      %908 = vmatpush2.bf16.msra.mxu0 0
      %909 = vmatprep.subr.bf16.mxu0 0
      %910 = vmatpush2.bf16.msra.mxu0 0
      %911 = vmatprep.mubr.bf16.mxu0 0
      %912 = vmatmul.mubr.bf16.gmra.mxu0 %v194
      %v913 = vpop.f32.mrf.mxu0
      %v914 = vadd.f32 %v874, %v913
      %v915 = vpop.f32.mrf.mxu0
      %v916 = vpop.f32.mrf.mxu0
      %v917 = vpop.f32.mrf.mxu0
      %918 = vdwg.mxu0
      %v919 = vld [vmem:[%s193] sm:$0x1]
      %v922 = vunpack.c.l.s4 1966171168
      %v923 = vunpack.c.0.s8 %v922
      %v924 = vlaneseq
      %v925 = vshrl.u32 %v924, 7
      %v926 = vsub.s32 %v923, %v925
      %v927 = vrot.slane %v919, %v926
      %v929 = vunpack.c.l.s4 1966171168
      %v930 = vunpack.c.0.s8 %v929
      %v931 = vlaneseq
      %v932 = vshrl.u32 %v931, 7
      %v933 = vsub.s32 %v930, %v932
      %v934 = vrot.slane %v927, %v933
      %v936 = vshrl.u32 %v934, 16
      %939 = vmatprep.subr.bf16.mxu0 0
      %940 = vmatpush1.bf16.msra.mxu0 %v463
      %941 = vmatprep.subr.bf16.mxu0 0
      %942 = vmatpush1.bf16.msra.mxu0 %v462
      %943 = vmatprep.subr.bf16.mxu0 0
      %944 = vmatpush1.bf16.msra.mxu0 %v461
      %945 = vmatprep.subr.bf16.mxu0 0
      %946 = vmatpush1.bf16.msra.mxu0 %v460
      %947 = vmatprep.subr.bf16.mxu0 0
      %948 = vmatpush1.bf16.msra.mxu0 %v459
      %949 = vmatprep.subr.bf16.mxu0 0
      %950 = vmatpush1.bf16.msra.mxu0 %v458
      %951 = vmatprep.subr.bf16.mxu0 0
      %952 = vmatpush1.bf16.msra.mxu0 %v457
      %953 = vmatprep.subr.bf16.mxu0 0
      %954 = vmatpush1.bf16.msra.mxu0 %v456
      %955 = vmatprep.subr.bf16.mxu0 0
      %956 = vmatpush2.bf16.msra.mxu0 0
      %957 = vmatprep.subr.bf16.mxu0 0
      %958 = vmatpush2.bf16.msra.mxu0 0
      %959 = vmatprep.subr.bf16.mxu0 0
      %960 = vmatpush2.bf16.msra.mxu0 0
      %961 = vmatprep.subr.bf16.mxu0 0
      %962 = vmatpush2.bf16.msra.mxu0 0
      %963 = vmatprep.subr.bf16.mxu0 0
      %964 = vmatpush2.bf16.msra.mxu0 0
      %965 = vmatprep.subr.bf16.mxu0 0
      %966 = vmatpush2.bf16.msra.mxu0 0
      %967 = vmatprep.subr.bf16.mxu0 0
      %968 = vmatpush2.bf16.msra.mxu0 0
      %969 = vmatprep.subr.bf16.mxu0 0
      %970 = vmatpush2.bf16.msra.mxu0 0
      %971 = vmatprep.mubr.bf16.mxu0 0
      %972 = vmatmul.mubr.bf16.gmra.mxu0 %v936
      %v973 = vpop.f32.mrf.mxu0
      %v974 = vadd.f32 0.0, %v973
      %v975 = vpop.f32.mrf.mxu0
      %v976 = vpop.f32.mrf.mxu0
      %v977 = vpop.f32.mrf.mxu0
      %978 = vdwg.mxu0
      %v979 = vadd.f32 %v914, %v974
      %v980 = vadd.f32 %v979, 0.0
      %v981 = vmul.f32 %v979, %v979
      %v982 = vadd.f32 %v981, 0.0
      %v983 = vmax.f32 %v835, %v979
      %v984 = vmin.f32 %v836, %v979
      %v985 = vadd.f32 %v837, %v980
      %v986 = vadd.f32 %v838, %v982
      %987 = vmatprep.subr.bf16.mxu0 0
      %988 = vmatpush1.bf16.msra.mxu0 %v589
      %989 = vmatprep.subr.bf16.mxu0 0
      %990 = vmatpush1.bf16.msra.mxu0 %v588
      %991 = vmatprep.subr.bf16.mxu0 0
      %992 = vmatpush1.bf16.msra.mxu0 %v587
      %993 = vmatprep.subr.bf16.mxu0 0
      %994 = vmatpush1.bf16.msra.mxu0 %v586
      %995 = vmatprep.subr.bf16.mxu0 0
      %996 = vmatpush1.bf16.msra.mxu0 %v585
      %997 = vmatprep.subr.bf16.mxu0 0
      %998 = vmatpush1.bf16.msra.mxu0 %v584
      %999 = vmatprep.subr.bf16.mxu0 0
      %1000 = vmatpush1.bf16.msra.mxu0 %v583
      %1001 = vmatprep.subr.bf16.mxu0 0
      %1002 = vmatpush1.bf16.msra.mxu0 %v582
      %1003 = vmatprep.subr.bf16.mxu0 0
      %1004 = vmatpush2.bf16.msra.mxu0 0
      %1005 = vmatprep.subr.bf16.mxu0 0
      %1006 = vmatpush2.bf16.msra.mxu0 0
      %1007 = vmatprep.subr.bf16.mxu0 0
      %1008 = vmatpush2.bf16.msra.mxu0 0
      %1009 = vmatprep.subr.bf16.mxu0 0
      %1010 = vmatpush2.bf16.msra.mxu0 0
      %1011 = vmatprep.subr.bf16.mxu0 0
      %1012 = vmatpush2.bf16.msra.mxu0 0
      %1013 = vmatprep.subr.bf16.mxu0 0
      %1014 = vmatpush2.bf16.msra.mxu0 0
      %1015 = vmatprep.subr.bf16.mxu0 0
      %1016 = vmatpush2.bf16.msra.mxu0 0
      %1017 = vmatprep.subr.bf16.mxu0 0
      %1018 = vmatpush2.bf16.msra.mxu0 0
      %1019 = vmatprep.mubr.bf16.mxu0 0
      %1020 = vmatmul.mubr.bf16.gmra.mxu0 %v421
      %v1021 = vpop.f32.mrf.mxu0
      %v1022 = vadd.f32 0.0, %v1021
      %v1023 = vpop.f32.mrf.mxu0
      %v1024 = vpop.f32.mrf.mxu0
      %v1025 = vpop.f32.mrf.mxu0
      %1026 = vdwg.mxu0
      %1027 = vmatprep.subr.bf16.mxu0 0
      %1028 = vmatpush1.bf16.msra.mxu0 %v677
      %1029 = vmatprep.subr.bf16.mxu0 0
      %1030 = vmatpush1.bf16.msra.mxu0 %v676
      %1031 = vmatprep.subr.bf16.mxu0 0
      %1032 = vmatpush1.bf16.msra.mxu0 %v675
      %1033 = vmatprep.subr.bf16.mxu0 0
      %1034 = vmatpush1.bf16.msra.mxu0 %v674
      %1035 = vmatprep.subr.bf16.mxu0 0
      %1036 = vmatpush1.bf16.msra.mxu0 %v673
      %1037 = vmatprep.subr.bf16.mxu0 0
      %1038 = vmatpush1.bf16.msra.mxu0 %v672
      %1039 = vmatprep.subr.bf16.mxu0 0
      %1040 = vmatpush1.bf16.msra.mxu0 %v671
      %1041 = vmatprep.subr.bf16.mxu0 0
      %1042 = vmatpush1.bf16.msra.mxu0 %v670
      %1043 = vmatprep.subr.bf16.mxu0 0
      %1044 = vmatpush2.bf16.msra.mxu0 0
      %1045 = vmatprep.subr.bf16.mxu0 0
      %1046 = vmatpush2.bf16.msra.mxu0 0
      %1047 = vmatprep.subr.bf16.mxu0 0
      %1048 = vmatpush2.bf16.msra.mxu0 0
      %1049 = vmatprep.subr.bf16.mxu0 0
      %1050 = vmatpush2.bf16.msra.mxu0 0
      %1051 = vmatprep.subr.bf16.mxu0 0
      %1052 = vmatpush2.bf16.msra.mxu0 0
      %1053 = vmatprep.subr.bf16.mxu0 0
      %1054 = vmatpush2.bf16.msra.mxu0 0
      %1055 = vmatprep.subr.bf16.mxu0 0
      %1056 = vmatpush2.bf16.msra.mxu0 0
      %1057 = vmatprep.subr.bf16.mxu0 0
      %1058 = vmatpush2.bf16.msra.mxu0 0
      %1059 = vmatprep.mubr.bf16.mxu0 0
      %1060 = vmatmul.mubr.bf16.gmra.mxu0 %v194
      %v1061 = vpop.f32.mrf.mxu0
      %v1062 = vadd.f32 %v1022, %v1061
      %v1063 = vpop.f32.mrf.mxu0
      %v1064 = vpop.f32.mrf.mxu0
      %v1065 = vpop.f32.mrf.mxu0
      %1066 = vdwg.mxu0
      %1067 = vmatprep.subr.bf16.mxu0 0
      %1068 = vmatpush1.bf16.msra.mxu0 %v782
      %1069 = vmatprep.subr.bf16.mxu0 0
      %1070 = vmatpush1.bf16.msra.mxu0 %v781
      %1071 = vmatprep.subr.bf16.mxu0 0
      %1072 = vmatpush1.bf16.msra.mxu0 %v780
      %1073 = vmatprep.subr.bf16.mxu0 0
      %1074 = vmatpush1.bf16.msra.mxu0 %v779
      %1075 = vmatprep.subr.bf16.mxu0 0
      %1076 = vmatpush1.bf16.msra.mxu0 %v778
      %1077 = vmatprep.subr.bf16.mxu0 0
      %1078 = vmatpush1.bf16.msra.mxu0 %v777
      %1079 = vmatprep.subr.bf16.mxu0 0
      %1080 = vmatpush1.bf16.msra.mxu0 %v776
      %1081 = vmatprep.subr.bf16.mxu0 0
      %1082 = vmatpush1.bf16.msra.mxu0 %v775
      %1083 = vmatprep.subr.bf16.mxu0 0
      %1084 = vmatpush2.bf16.msra.mxu0 0
      %1085 = vmatprep.subr.bf16.mxu0 0
      %1086 = vmatpush2.bf16.msra.mxu0 0
      %1087 = vmatprep.subr.bf16.mxu0 0
      %1088 = vmatpush2.bf16.msra.mxu0 0
      %1089 = vmatprep.subr.bf16.mxu0 0
      %1090 = vmatpush2.bf16.msra.mxu0 0
      %1091 = vmatprep.subr.bf16.mxu0 0
      %1092 = vmatpush2.bf16.msra.mxu0 0
      %1093 = vmatprep.subr.bf16.mxu0 0
      %1094 = vmatpush2.bf16.msra.mxu0 0
      %1095 = vmatprep.subr.bf16.mxu0 0
      %1096 = vmatpush2.bf16.msra.mxu0 0
      %1097 = vmatprep.subr.bf16.mxu0 0
      %1098 = vmatpush2.bf16.msra.mxu0 0
      %1099 = vmatprep.mubr.bf16.mxu0 0
      %1100 = vmatmul.mubr.bf16.gmra.mxu0 %v936
      %v1101 = vpop.f32.mrf.mxu0
      %v1102 = vadd.f32 0.0, %v1101
      %v1103 = vpop.f32.mrf.mxu0
      %v1104 = vpop.f32.mrf.mxu0
      %v1105 = vpop.f32.mrf.mxu0
      %1106 = vdwg.mxu0
      %v1107 = vadd.f32 %v1062, %v1102
      %v1108 = vadd.f32 %v1107, 0.0
      %v1109 = vmul.f32 %v1107, %v1107
      %v1110 = vadd.f32 %v1109, 0.0
      %v1111 = vmax.f32 %v983, %v1107
      %v1112 = vmin.f32 %v984, %v1107
      %v1113 = vadd.f32 %v985, %v1108
      %v1114 = vadd.f32 %v986, %v1110
      %1116 = vrot.lane.b32.xlu0 %v1112, 32
      %v1117 = vpop.permute.xlu0 %1116
      %vm1119 = vcmask 261120
      %v1120 = vsel %vm1119, %v1111, %v1117
      %v1121 = vpack.c.bf16 %v1120, %v1120
      %vm1122 = vcmask 516096
      %vm1123 = vsmask.f32 256
      %vm1124 = vmand %vm1122, %vm1123
      %v1125 = vld [vmem:[%s170] sm:$0x1]
      %v1126 = vsel %vm1124, %v1121, %v1125
      %1127 = vst [vmem:[%s170] sm:$0x1] %v1126
      %v1129 = vrot.slane %v1114, 7
      %vm1131 = vcmask 1040384
      %v1132 = vsel %vm1131, %v1113, %v1129
      %vm1133 = vcmask 1041408
      %v1134 = vsel %vm1133, %v1132, 0.0
      %1135 = vst.msk [vmem:[%s174] sm:$0xff] %vm1119, %v1134
      %p1136 = scmp.lt.s32.totalorder %s15, 1
      %s1137 = scalar_select %p1136, %s15, 1
      %s1138 = scalar_lea.vmem %s2, %s1137
      %p1139 = scmp.lt.s32.totalorder %s15, 1
      %s1140 = scalar_select %p1139, %s15, 1
      %s1141 = smul.addr %s1140, 8
      %s1142 = scalar_lea.vmem %s3, %s1141
      // Predicated region
      $region29: #{cnn4_dsvdd_forward.15} parent=27 // pred_check
        %p1143 = pneg %p80
      $region30: #{cnn4_dsvdd_forward.15} parent=27 // pred_check_branch
        %1145 = sbr.rel (%p1143) target = $region32
      $region31: #{cnn4_dsvdd_forward.15} parent=27 // pred_region
        _
      $region32: #{cnn4_dsvdd_forward.15} parent=27 // pred_fallthru
        _
      // Predicated region
      $region33: #{cnn4_dsvdd_forward.15} parent=27 // pred_check
        %p1146 = pneg %p106
      $region34: #{cnn4_dsvdd_forward.15} parent=27 // pred_check_branch
        %1148 = sbr.rel (%p1146) target = $region36
      $region35: #{cnn4_dsvdd_forward.15} parent=27 // pred_region
        _
      $region36: #{cnn4_dsvdd_forward.15} parent=27 // pred_fallthru
        _
    $region28: #{cnn4_dsvdd_forward.15} parent=5 // pred_fallthru
      _
    %p1149 = scmp.le.s32.totalorder 2, %s10
    // Predicated region
    $region37: #{cnn4_dsvdd_forward.15} parent=5 // pred_check
      %p1150 = pneg %p1149
    $region38: #{cnn4_dsvdd_forward.15} parent=5 // pred_check_branch
      %1152 = sbr.rel (%p1150) target = $region40
    $region39: #{cnn4_dsvdd_forward.15} parent=5 // pred_region
      %s1153 = ssub.s32 %s10, 2
      // Predicated region
      $region41: #{cnn4_dsvdd_forward.15} parent=39 // pred_check
        %p1154 = pneg %p86
      $region42: #{cnn4_dsvdd_forward.15} parent=39 // pred_check_branch
        %1156 = sbr.rel (%p1154) target = $region44
      $region43: #{cnn4_dsvdd_forward.15} parent=39 // pred_region
        %p1157 = scmp.lt.s32.totalorder %s16, 1
        %s1158 = scalar_select %p1157, %s16, 1
        %s1159 = scalar_lea.vmem %s2, %s1158
      $region44: #{cnn4_dsvdd_forward.15} parent=39 // pred_fallthru
        _
      // Predicated region
      $region45: #{cnn4_dsvdd_forward.15} parent=39 // pred_check
        %p1160 = pneg %p112
      $region46: #{cnn4_dsvdd_forward.15} parent=39 // pred_check_branch
        %1162 = sbr.rel (%p1160) target = $region48
      $region47: #{cnn4_dsvdd_forward.15} parent=39 // pred_region
        %p1163 = scmp.lt.s32.totalorder %s16, 1
        %s1164 = scalar_select %p1163, %s16, 1
        %s1165 = smul.addr %s1164, 8
        %s1166 = scalar_lea.vmem %s3, %s1165
      $region48: #{cnn4_dsvdd_forward.15} parent=39 // pred_fallthru
        _
    $region40: #{cnn4_dsvdd_forward.15} parent=5 // pred_fallthru
      _
  $region6: #{cnn4_dsvdd_forward.15} parent=0 // loop_footer
    %s14 = sadd.s32 1, %s10
  $region7: #{cnn4_dsvdd_forward.15} parent=0 // loop_footer_branch
    %9 = sbr.rel target = $region3
  $region8: #{cnn4_dsvdd_forward.15} parent=0 // loop_exit
    _

</llo_original>
